<compile_context>
chip_gen: v5e
topology: v5e:2x2
jax: 0.10.0
libtpu: 0.0.40
codegen_flags: <defaults>
</compile_context>

<pallas_src>
import functools

import jax
import jax.numpy as jnp
from jax.experimental import pallas as pl
from jax.experimental.pallas import tpu as pltpu


# ----------------------------------------------------------------------------
# Tiling helpers
# ----------------------------------------------------------------------------
def _round_up(x, m):
    return ((x + m - 1) // m) * m


def _pick_mn_tile(d, max_tile=256):
    """Return (padded_dim, tile).  Full-dim block when small, else max_tile."""
    if d <= max_tile:
        return d, d                     # full-dim block (divisibility exception)
    return _round_up(d, max_tile), max_tile


def _pick_k_tile(k):
    """Return (padded_K, K_tile): full-K block when small, else the largest
    128-multiple divisor of the (128-rounded) K that is <= 1024."""
    if k <= 1024:
        return k, k
    kp = _round_up(k, 128)
    tk = 128
    for cand in range(256, 1025, 128):
        if kp % cand == 0:
            tk = cand
    return kp, tk


# ----------------------------------------------------------------------------
# Pallas kernels
# ----------------------------------------------------------------------------
def _mm_kernel(a_ref, w_ref, s_ref, b_ref, *rest, relu, has_res, nk):
    """o = [relu]( (A @ W) * scale + bias [+ res] ), accumulated over K steps
    directly in the (revisited) f32 output block -- no scratch accumulator."""
    if has_res:
        r_ref, o_ref = rest
    else:
        (o_ref,) = rest
        r_ref = None

    part = jnp.dot(a_ref[...], w_ref[...], preferred_element_type=jnp.float32)

    def epilogue(acc):
        out = acc * s_ref[...] + b_ref[...]
        if r_ref is not None:
            out = out + r_ref[...]
        if relu:
            out = jnp.maximum(out, 0.0)
        return out

    if nk == 1:
        o_ref[...] = epilogue(part)
    else:
        k = pl.program_id(2)

        @pl.when(k == 0)
        def _():
            o_ref[...] = part

        @pl.when((k > 0) & (k < nk - 1))
        def _():
            o_ref[...] += part

        @pl.when(k == nk - 1)
        def _():
            o_ref[...] = epilogue(o_ref[...] + part)


def _maxpool_kernel(x_ref, o_ref):
    """Running max over the tap grid axis; o_ref block is revisited across taps."""
    t = pl.program_id(1)
    win = x_ref[0]

    @pl.when(t == 0)
    def _():
        o_ref[...] = win

    @pl.when(t > 0)
    def _():
        o_ref[...] = jnp.maximum(o_ref[...], win)


# ----------------------------------------------------------------------------
# Pallas wrappers
# ----------------------------------------------------------------------------
def fused_matmul(a, w, scale, bias, residual=None, relu=True):
    """out = [relu]( (a @ w) * scale + bias [+ residual] ); bf16 MXU, f32 epilogue."""
    M, K = a.shape
    _, N = w.shape
    Mp, tm = _pick_mn_tile(M)
    Np, tn = _pick_mn_tile(N)
    Kp, tk = _pick_k_tile(K)

    a = a.astype(jnp.bfloat16)
    w = w.astype(jnp.bfloat16)
    if (Mp, Kp) != (M, K):
        a = jnp.pad(a, ((0, Mp - M), (0, Kp - K)))
    if (Kp, Np) != (K, N):
        w = jnp.pad(w, ((0, Kp - K), (0, Np - N)))

    s2 = scale.reshape(1, N).astype(jnp.float32)
    b2 = bias.reshape(1, N).astype(jnp.float32)
    if Np != N:
        s2 = jnp.pad(s2, ((0, 0), (0, Np - N)))
        b2 = jnp.pad(b2, ((0, 0), (0, Np - N)))

    has_res = residual is not None
    inputs = [a, w, s2, b2]
    in_specs = [
        pl.BlockSpec((tm, tk), lambda i, j, k: (i, k)),
        pl.BlockSpec((tk, tn), lambda i, j, k: (k, j)),
        pl.BlockSpec((1, tn), lambda i, j, k: (0, j)),
        pl.BlockSpec((1, tn), lambda i, j, k: (0, j)),
    ]
    if has_res:
        r = residual.astype(jnp.float32)
        if (Mp, Np) != (M, N):
            r = jnp.pad(r, ((0, Mp - M), (0, Np - N)))
        inputs.append(r)
        in_specs.append(pl.BlockSpec((tm, tn), lambda i, j, k: (i, j)))

    nk = Kp // tk
    kernel = functools.partial(_mm_kernel, relu=relu, has_res=has_res, nk=nk)

    out = pl.pallas_call(
        kernel,
        out_shape=jax.ShapeDtypeStruct((Mp, Np), jnp.float32),
        grid_spec=pltpu.PrefetchScalarGridSpec(
            num_scalar_prefetch=0,
            grid=(Mp // tm, Np // tn, nk),
            in_specs=in_specs,
            out_specs=pl.BlockSpec((tm, tn), lambda i, j, k: (i, j)),
        ),
        compiler_params=pltpu.CompilerParams(
            dimension_semantics=("parallel", "parallel", "arbitrary")),
    )(*inputs)

    if (Mp, Np) != (M, N):
        out = out[:M, :N]
    return out


def conv2d_bn_act(x, w, scale, bias, stride, padding, relu=True, residual=None):
    """x: NHWC.  w: PyTorch layout (OC, IC, KH, KW).  Conv -> folded BN -> (+res) -> (ReLU)."""
    B, H, W_, C = x.shape
    OC, IC, KH, KW = w.shape
    x = x.astype(jnp.bfloat16)          # build im2col directly in bf16 (halves bytes)
    xp = jnp.pad(x, ((0, 0), (padding, padding), (padding, padding), (0, 0)))
    OH = (H + 2 * padding - KH) // stride + 1
    OW = (W_ + 2 * padding - KW) // stride + 1

    # im2col glue: stack the KH*KW shifted/strided views (no conv primitive used)
    patches = []
    for dy in range(KH):
        for dx in range(KW):
            patches.append(xp[:, dy:dy + stride * OH:stride,
                              dx:dx + stride * OW:stride, :])
    a = jnp.stack(patches, axis=3).reshape(B * OH * OW, KH * KW * C)
    wm = jnp.transpose(w, (2, 3, 1, 0)).reshape(KH * KW * IC, OC)

    res2d = None if residual is None else residual.reshape(B * OH * OW, OC)
    out = fused_matmul(a, wm, scale, bias, residual=res2d, relu=relu)
    return out.reshape(B, OH, OW, OC)


def maxpool3x3_s2(x):
    """MaxPool2d(kernel_size=3, stride=2, padding=1) on NHWC via a Pallas running-max."""
    B, H, W_, C = x.shape
    k, s, p = 3, 2, 1
    OH = (H + 2 * p - k) // s + 1
    OW = (W_ + 2 * p - k) // s + 1
    xp = jnp.pad(x, ((0, 0), (p, p), (p, p), (0, 0)), constant_values=-jnp.inf)
    wins = [xp[:, dy:dy + s * OH:s, dx:dx + s * OW:s, :]
            for dy in range(k) for dx in range(k)]
    stacked = jnp.stack(wins, axis=0).reshape(k * k, B * OH * OW, C)
    M = B * OH * OW
    tm = 512 if (M > 1024 and M % 512 == 0) else M

    out = pl.pallas_call(
        _maxpool_kernel,
        out_shape=jax.ShapeDtypeStruct((M, C), jnp.float32),
        grid_spec=pltpu.PrefetchScalarGridSpec(
            num_scalar_prefetch=0,
            grid=(M // tm, k * k),
            in_specs=[pl.BlockSpec((1, tm, C), lambda i, t: (t, i, 0))],
            out_specs=pl.BlockSpec((tm, C), lambda i, t: (i, 0)),
        ),
        compiler_params=pltpu.CompilerParams(
            dimension_semantics=("parallel", "arbitrary")),
    )(stacked)
    return out.reshape(B, OH, OW, C)


# ----------------------------------------------------------------------------
# ResNet (BasicBlock) parameters + forward
# ----------------------------------------------------------------------------
def make_params(key, layers=(1, 1, 1, 1), num_classes=10):
    eps = 1e-5

    def bn_fold(c):
        gamma = jnp.ones((c,), jnp.float32)
        beta = jnp.zeros((c,), jnp.float32)
        mean = jnp.zeros((c,), jnp.float32)
        var = jnp.ones((c,), jnp.float32)
        scale = gamma / jnp.sqrt(var + eps)
        bias = beta - mean * scale
        return scale, bias

    keys = iter(jax.random.split(key, 128))

    def conv_w(oc, ic, kh, kw):
        # kaiming_normal_(mode='fan_out', nonlinearity='relu')
        std = (2.0 / (oc * kh * kw)) ** 0.5
        return std * jax.random.normal(next(keys), (oc, ic, kh, kw), jnp.float32)

    params = {}
    params['conv1_w'] = conv_w(64, 1, 7, 7)
    params['bn1_scale'], params['bn1_bias'] = bn_fold(64)

    inplanes = 64
    params['stages'] = []
    stage_cfg = [(64, layers[0], 1), (128, layers[1], 2),
                 (256, layers[2], 2), (512, layers[3], 2)]
    for planes, nblocks, stride in stage_cfg:
        blocks = []
        for bi in range(nblocks):
            s = stride if bi == 0 else 1
            blk = {}
            blk['conv1_w'] = conv_w(planes, inplanes, 3, 3)
            blk['bn1_scale'], blk['bn1_bias'] = bn_fold(planes)
            blk['conv2_w'] = conv_w(planes, planes, 3, 3)
            blk['bn2_scale'], blk['bn2_bias'] = bn_fold(planes)
            if s != 1 or inplanes != planes:      # downsample = conv1x1 + BN
                blk['down_w'] = conv_w(planes, inplanes, 1, 1)
                blk['dbn_scale'], blk['dbn_bias'] = bn_fold(planes)
            blocks.append(blk)
            inplanes = planes
        params['stages'].append(blocks)

    fan_in = 512  # 512 * BasicBlock.expansion(=1)
    bound = 1.0 / (fan_in ** 0.5)
    params['fc_w'] = jax.random.uniform(next(keys), (num_classes, fan_in),
                                        jnp.float32, -bound, bound)
    params['fc_b'] = jax.random.uniform(next(keys), (num_classes,),
                                        jnp.float32, -bound, bound)
    return params


def basic_block(x, p, stride):
    identity = x
    out = conv2d_bn_act(x, p['conv1_w'], p['bn1_scale'], p['bn1_bias'],
                        stride=stride, padding=1, relu=True)
    if 'down_w' in p:
        identity = conv2d_bn_act(x, p['down_w'], p['dbn_scale'], p['dbn_bias'],
                                 stride=stride, padding=0, relu=False)
    # conv2 + bn2 + residual add + relu fused into one Pallas matmul call
    out = conv2d_bn_act(out, p['conv2_w'], p['bn2_scale'], p['bn2_bias'],
                        stride=1, padding=1, relu=True, residual=identity)
    return out


def resnet_forward(params, x_nchw):
    x = jnp.transpose(x_nchw, (0, 2, 3, 1)).astype(jnp.float32)  # NCHW -> NHWC
    x = conv2d_bn_act(x, params['conv1_w'], params['bn1_scale'],
                      params['bn1_bias'], stride=2, padding=3, relu=True)
    x = maxpool3x3_s2(x)
    for si, blocks in enumerate(params['stages']):
        for bi, blk in enumerate(blocks):
            stride = 2 if (si > 0 and bi == 0) else 1
            x = basic_block(x, blk, stride)
    x = jnp.mean(x, axis=(1, 2))  # AdaptiveAvgPool2d((1,1)) + flatten (glue)
    # Final Linear (M=2, K=512, N=10) left to XLA: lane width 10 would force
    # masked vst, and pallas_call overhead dwarfs this matmul (perf review).
    logits = jnp.dot(x, params['fc_w'].T,
                     preferred_element_type=jnp.float32) + params['fc_b']
    return logits


if __name__ == "__main__":
    key = jax.random.PRNGKey(0)
    pkey, xkey = jax.random.split(key)
    params = make_params(pkey, layers=(1, 1, 1, 1), num_classes=10)
    # input: NCHW, 1 channel (conv1 expects in_channels=1)
    x = jax.random.normal(xkey, (2, 1, 32, 32), jnp.float32)
    fwd = jax.jit(resnet_forward)
    out = fwd(params, x)
    out = jax.block_until_ready(out)
    assert out.shape == (2, 10), out.shape
    assert bool(jnp.all(jnp.isfinite(out)))
    print("KERNEL_OK")
</pallas_src>

<mosaic_0001>
module attributes {stable_mosaic.version = 11 : i64} {
  func.func @_mm_kernel(%arg0: i32, %arg1: i32, %arg2: i32, %arg3: memref<256x49xbf16, #tpu.memory_space<vmem>>, %arg4: memref<49x64xbf16, #tpu.memory_space<vmem>>, %arg5: memref<1x64xf32, #tpu.memory_space<vmem>>, %arg6: memref<1x64xf32, #tpu.memory_space<vmem>>, %arg7: memref<256x64xf32, #tpu.memory_space<vmem>>) attributes {dimension_semantics = [#tpu.dimension_semantics<parallel>, #tpu.dimension_semantics<parallel>, #tpu.dimension_semantics<arbitrary>], iteration_bounds = array<i64: 2, 1, 1>, scalar_prefetch = 0 : i64, scratch_operands = 0 : i64, tpu.core_type = #tpu.core_type<tc>, window_params = [{transform_indices = @transform_0, window_bounds = array<i64: 256, 49>}, {transform_indices = @transform_1, window_bounds = array<i64: 49, 64>}, {transform_indices = @transform_2, window_bounds = array<i64: 1, 64>}, {transform_indices = @transform_3, window_bounds = array<i64: 1, 64>}, {transform_indices = @transform_4, window_bounds = array<i64: 256, 64>}]} {
    %c0 = arith.constant 0 : index
    %c0_0 = arith.constant 0 : index
    %0 = vector.load %arg3[%c0, %c0_0] : memref<256x49xbf16, #tpu.memory_space<vmem>>, vector<256x49xbf16>
    %c0_1 = arith.constant 0 : index
    %c0_2 = arith.constant 0 : index
    %1 = vector.load %arg4[%c0_1, %c0_2] : memref<49x64xbf16, #tpu.memory_space<vmem>>, vector<49x64xbf16>
    %cst = arith.constant dense<0.000000e+00> : vector<256x64xf32>
    %2 = tpu.matmul %0, %1, %cst {dimension_numbers = #tpu.dot_dimension_numbers<[1], [0], [0], [1], [0, 0, 1, 1], [], []>} : vector<256x49xbf16>, vector<49x64xbf16>, vector<256x64xf32> -> vector<256x64xf32>
    %c0_3 = arith.constant 0 : index
    %c0_4 = arith.constant 0 : index
    %3 = vector.load %arg5[%c0_3, %c0_4] : memref<1x64xf32, #tpu.memory_space<vmem>>, vector<1x64xf32>
    %4 = vector.broadcast %3 : vector<1x64xf32> to vector<256x64xf32>
    %5 = arith.mulf %2, %4 : vector<256x64xf32>
    %c0_5 = arith.constant 0 : index
    %c0_6 = arith.constant 0 : index
    %6 = vector.load %arg6[%c0_5, %c0_6] : memref<1x64xf32, #tpu.memory_space<vmem>>, vector<1x64xf32>
    %7 = vector.broadcast %6 : vector<1x64xf32> to vector<256x64xf32>
    %8 = arith.addf %5, %7 : vector<256x64xf32>
    %cst_7 = arith.constant 0.000000e+00 : f32
    %9 = vector.broadcast %cst_7 : f32 to vector<256x64xf32>
    %10 = arith.maximumf %8, %9 : vector<256x64xf32>
    %c0_8 = arith.constant 0 : index
    %c0_9 = arith.constant 0 : index
    %11 = vector.load %arg7[%c0_8, %c0_9] : memref<256x64xf32, #tpu.memory_space<vmem>>, vector<256x64xf32>
    tpu.vector_store %arg7[%c0_8, %c0_9], %10 {strides = array<i32>} : memref<256x64xf32, #tpu.memory_space<vmem>>, vector<256x64xf32>,
    return
  }
  func.func @transform_0(%arg0: i32, %arg1: i32, %arg2: i32) -> (i32, i32) {
    %c0_i32 = arith.constant 0 : i32
    return %arg0, %arg2 : i32, i32
  }
  func.func @transform_1(%arg0: i32, %arg1: i32, %arg2: i32) -> (i32, i32) {
    %c0_i32 = arith.constant 0 : i32
    return %arg2, %arg1 : i32, i32
  }
  func.func @transform_2(%arg0: i32, %arg1: i32, %arg2: i32) -> (i32, i32) {
    %c0_i32 = arith.constant 0 : i32
    %c0_i32_0 = arith.constant 0 : i32
    return %c0_i32, %arg1 : i32, i32
  }
  func.func @transform_3(%arg0: i32, %arg1: i32, %arg2: i32) -> (i32, i32) {
    %c0_i32 = arith.constant 0 : i32
    %c0_i32_0 = arith.constant 0 : i32
    return %c0_i32, %arg1 : i32, i32
  }
  func.func @transform_4(%arg0: i32, %arg1: i32, %arg2: i32) -> (i32, i32) {
    %c0_i32 = arith.constant 0 : i32
    return %arg0, %arg1 : i32, i32
  }
}

module attributes {stable_mosaic.version = 11 : i64} {
  func.func @_maxpool_kernel(%arg0: i32, %arg1: i32, %arg2: memref<1x128x64xf32, #tpu.memory_space<vmem>>, %arg3: memref<128x64xf32, #tpu.memory_space<vmem>>) attributes {dimension_semantics = [#tpu.dimension_semantics<parallel>, #tpu.dimension_semantics<arbitrary>], iteration_bounds = array<i64: 1, 9>, scalar_prefetch = 0 : i64, scratch_operands = 0 : i64, tpu.core_type = #tpu.core_type<tc>, window_params = [{transform_indices = @transform_0, window_bounds = array<i64: 1, 128, 64>}, {transform_indices = @transform_1, window_bounds = array<i64: 128, 64>}]} {
    %c0 = arith.constant 0 : index
    %c0_0 = arith.constant 0 : index
    %c0_1 = arith.constant 0 : index
    %0 = vector.load %arg2[%c0, %c0_0, %c0_1] : memref<1x128x64xf32, #tpu.memory_space<vmem>>, vector<1x128x64xf32>
    %1 = vector.shape_cast %0 : vector<1x128x64xf32> to vector<128x64xf32>
    %c0_i32 = arith.constant 0 : i32
    %2 = arith.cmpi eq, %arg1, %c0_i32 : i32
    %3 = arith.extui %2 : i1 to i32
    %c0_i32_2 = arith.constant 0 : i32
    %4 = arith.cmpi ne, %3, %c0_i32_2 : i32
    scf.if %4 {
      %c0_5 = arith.constant 0 : index
      %c0_6 = arith.constant 0 : index
      %8 = vector.load %arg3[%c0_5, %c0_6] : memref<128x64xf32, #tpu.memory_space<vmem>>, vector<128x64xf32>
      tpu.vector_store %arg3[%c0_5, %c0_6], %1 {strides = array<i32>} : memref<128x64xf32, #tpu.memory_space<vmem>>, vector<128x64xf32>,
    } else {
    }
    %c0_i32_3 = arith.constant 0 : i32
    %5 = arith.cmpi sgt, %arg1, %c0_i32_3 : i32
    %6 = arith.extui %5 : i1 to i32
    %c0_i32_4 = arith.constant 0 : i32
    %7 = arith.cmpi ne, %6, %c0_i32_4 : i32
    scf.if %7 {
      %c0_5 = arith.constant 0 : index
      %c0_6 = arith.constant 0 : index
      %8 = vector.load %arg3[%c0_5, %c0_6] : memref<128x64xf32, #tpu.memory_space<vmem>>, vector<128x64xf32>
      %9 = arith.maximumf %8, %1 : vector<128x64xf32>
      %c0_7 = arith.constant 0 : index
      %c0_8 = arith.constant 0 : index
      %10 = vector.load %arg3[%c0_7, %c0_8] : memref<128x64xf32, #tpu.memory_space<vmem>>, vector<128x64xf32>
      tpu.vector_store %arg3[%c0_7, %c0_8], %9 {strides = array<i32>} : memref<128x64xf32, #tpu.memory_space<vmem>>, vector<128x64xf32>,
    } else {
    }
    return
  }
  func.func @transform_0(%arg0: i32, %arg1: i32) -> (i32, i32, i32) {
    %c0_i32 = arith.constant 0 : i32
    %c0_i32_0 = arith.constant 0 : i32
    return %arg1, %arg0, %c0_i32 : i32, i32, i32
  }
  func.func @transform_1(%arg0: i32, %arg1: i32) -> (i32, i32) {
    %c0_i32 = arith.constant 0 : i32
    %c0_i32_0 = arith.constant 0 : i32
    return %arg0, %c0_i32 : i32, i32
  }
}

module attributes {stable_mosaic.version = 11 : i64} {
  func.func @_mm_kernel(%arg0: i32, %arg1: i32, %arg2: i32, %arg3: memref<128x576xbf16, #tpu.memory_space<vmem>>, %arg4: memref<576x64xbf16, #tpu.memory_space<vmem>>, %arg5: memref<1x64xf32, #tpu.memory_space<vmem>>, %arg6: memref<1x64xf32, #tpu.memory_space<vmem>>, %arg7: memref<128x64xf32, #tpu.memory_space<vmem>>) attributes {dimension_semantics = [#tpu.dimension_semantics<parallel>, #tpu.dimension_semantics<parallel>, #tpu.dimension_semantics<arbitrary>], iteration_bounds = array<i64: 1, 1, 1>, scalar_prefetch = 0 : i64, scratch_operands = 0 : i64, tpu.core_type = #tpu.core_type<tc>, window_params = [{transform_indices = @transform_0, window_bounds = array<i64: 128, 576>}, {transform_indices = @transform_1, window_bounds = array<i64: 576, 64>}, {transform_indices = @transform_2, window_bounds = array<i64: 1, 64>}, {transform_indices = @transform_3, window_bounds = array<i64: 1, 64>}, {transform_indices = @transform_4, window_bounds = array<i64: 128, 64>}]} {
    %c0 = arith.constant 0 : index
    %c0_0 = arith.constant 0 : index
    %0 = vector.load %arg3[%c0, %c0_0] : memref<128x576xbf16, #tpu.memory_space<vmem>>, vector<128x576xbf16>
    %c0_1 = arith.constant 0 : index
    %c0_2 = arith.constant 0 : index
    %1 = vector.load %arg4[%c0_1, %c0_2] : memref<576x64xbf16, #tpu.memory_space<vmem>>, vector<576x64xbf16>
    %cst = arith.constant dense<0.000000e+00> : vector<128x64xf32>
    %2 = tpu.matmul %0, %1, %cst {dimension_numbers = #tpu.dot_dimension_numbers<[1], [0], [0], [1], [0, 0, 1, 1], [], []>} : vector<128x576xbf16>, vector<576x64xbf16>, vector<128x64xf32> -> vector<128x64xf32>
    %c0_3 = arith.constant 0 : index
    %c0_4 = arith.constant 0 : index
    %3 = vector.load %arg5[%c0_3, %c0_4] : memref<1x64xf32, #tpu.memory_space<vmem>>, vector<1x64xf32>
    %4 = vector.broadcast %3 : vector<1x64xf32> to vector<128x64xf32>
    %5 = arith.mulf %2, %4 : vector<128x64xf32>
    %c0_5 = arith.constant 0 : index
    %c0_6 = arith.constant 0 : index
    %6 = vector.load %arg6[%c0_5, %c0_6] : memref<1x64xf32, #tpu.memory_space<vmem>>, vector<1x64xf32>
    %7 = vector.broadcast %6 : vector<1x64xf32> to vector<128x64xf32>
    %8 = arith.addf %5, %7 : vector<128x64xf32>
    %cst_7 = arith.constant 0.000000e+00 : f32
    %9 = vector.broadcast %cst_7 : f32 to vector<128x64xf32>
    %10 = arith.maximumf %8, %9 : vector<128x64xf32>
    %c0_8 = arith.constant 0 : index
    %c0_9 = arith.constant 0 : index
    %11 = vector.load %arg7[%c0_8, %c0_9] : memref<128x64xf32, #tpu.memory_space<vmem>>, vector<128x64xf32>
    tpu.vector_store %arg7[%c0_8, %c0_9], %10 {strides = array<i32>} : memref<128x64xf32, #tpu.memory_space<vmem>>, vector<128x64xf32>,
    return
  }
  func.func @transform_0(%arg0: i32, %arg1: i32, %arg2: i32) -> (i32, i32) {
    %c0_i32 = arith.constant 0 : i32
    return %arg0, %arg2 : i32, i32
  }
  func.func @transform_1(%arg0: i32, %arg1: i32, %arg2: i32) -> (i32, i32) {
    %c0_i32 = arith.constant 0 : i32
    return %arg2, %arg1 : i32, i32
  }
  func.func @transform_2(%arg0: i32, %arg1: i32, %arg2: i32) -> (i32, i32) {
    %c0_i32 = arith.constant 0 : i32
    %c0_i32_0 = arith.constant 0 : i32
    return %c0_i32, %arg1 : i32, i32
  }
  func.func @transform_3(%arg0: i32, %arg1: i32, %arg2: i32) -> (i32, i32) {
    %c0_i32 = arith.constant 0 : i32
    %c0_i32_0 = arith.constant 0 : i32
    return %c0_i32, %arg1 : i32, i32
  }
  func.func @transform_4(%arg0: i32, %arg1: i32, %arg2: i32) -> (i32, i32) {
    %c0_i32 = arith.constant 0 : i32
    return %arg0, %arg1 : i32, i32
  }
}

module attributes {stable_mosaic.version = 11 : i64} {
  func.func @_mm_kernel(%arg0: i32, %arg1: i32, %arg2: i32, %arg3: memref<128x576xbf16, #tpu.memory_space<vmem>>, %arg4: memref<576x64xbf16, #tpu.memory_space<vmem>>, %arg5: memref<1x64xf32, #tpu.memory_space<vmem>>, %arg6: memref<1x64xf32, #tpu.memory_space<vmem>>, %arg7: memref<128x64xf32, #tpu.memory_space<vmem>>, %arg8: memref<128x64xf32, #tpu.memory_space<vmem>>) attributes {dimension_semantics = [#tpu.dimension_semantics<parallel>, #tpu.dimension_semantics<parallel>, #tpu.dimension_semantics<arbitrary>], iteration_bounds = array<i64: 1, 1, 1>, scalar_prefetch = 0 : i64, scratch_operands = 0 : i64, tpu.core_type = #tpu.core_type<tc>, window_params = [{transform_indices = @transform_0, window_bounds = array<i64: 128, 576>}, {transform_indices = @transform_1, window_bounds = array<i64: 576, 64>}, {transform_indices = @transform_2, window_bounds = array<i64: 1, 64>}, {transform_indices = @transform_3, window_bounds = array<i64: 1, 64>}, {transform_indices = @transform_4, window_bounds = array<i64: 128, 64>}, {transform_indices = @transform_5, window_bounds = array<i64: 128, 64>}]} {
    %c0 = arith.constant 0 : index
    %c0_0 = arith.constant 0 : index
    %0 = vector.load %arg3[%c0, %c0_0] : memref<128x576xbf16, #tpu.memory_space<vmem>>, vector<128x576xbf16>
    %c0_1 = arith.constant 0 : index
    %c0_2 = arith.constant 0 : index
    %1 = vector.load %arg4[%c0_1, %c0_2] : memref<576x64xbf16, #tpu.memory_space<vmem>>, vector<576x64xbf16>
    %cst = arith.constant dense<0.000000e+00> : vector<128x64xf32>
    %2 = tpu.matmul %0, %1, %cst {dimension_numbers = #tpu.dot_dimension_numbers<[1], [0], [0], [1], [0, 0, 1, 1], [], []>} : vector<128x576xbf16>, vector<576x64xbf16>, vector<128x64xf32> -> vector<128x64xf32>
    %c0_3 = arith.constant 0 : index
    %c0_4 = arith.constant 0 : index
    %3 = vector.load %arg5[%c0_3, %c0_4] : memref<1x64xf32, #tpu.memory_space<vmem>>, vector<1x64xf32>
    %4 = vector.broadcast %3 : vector<1x64xf32> to vector<128x64xf32>
    %5 = arith.mulf %2, %4 : vector<128x64xf32>
    %c0_5 = arith.constant 0 : index
    %c0_6 = arith.constant 0 : index
    %6 = vector.load %arg6[%c0_5, %c0_6] : memref<1x64xf32, #tpu.memory_space<vmem>>, vector<1x64xf32>
    %7 = vector.broadcast %6 : vector<1x64xf32> to vector<128x64xf32>
    %8 = arith.addf %5, %7 : vector<128x64xf32>
    %c0_7 = arith.constant 0 : index
    %c0_8 = arith.constant 0 : index
    %9 = vector.load %arg7[%c0_7, %c0_8] : memref<128x64xf32, #tpu.memory_space<vmem>>, vector<128x64xf32>
    %10 = arith.addf %8, %9 : vector<128x64xf32>
    %cst_9 = arith.constant 0.000000e+00 : f32
    %11 = vector.broadcast %cst_9 : f32 to vector<128x64xf32>
    %12 = arith.maximumf %10, %11 : vector<128x64xf32>
    %c0_10 = arith.constant 0 : index
    %c0_11 = arith.constant 0 : index
    %13 = vector.load %arg8[%c0_10, %c0_11] : memref<128x64xf32, #tpu.memory_space<vmem>>, vector<128x64xf32>
    tpu.vector_store %arg8[%c0_10, %c0_11], %12 {strides = array<i32>} : memref<128x64xf32, #tpu.memory_space<vmem>>, vector<128x64xf32>,
    return
  }
  func.func @transform_0(%arg0: i32, %arg1: i32, %arg2: i32) -> (i32, i32) {
    %c0_i32 = arith.constant 0 : i32
    return %arg0, %arg2 : i32, i32
  }
  func.func @transform_1(%arg0: i32, %arg1: i32, %arg2: i32) -> (i32, i32) {
    %c0_i32 = arith.constant 0 : i32
    return %arg2, %arg1 : i32, i32
  }
  func.func @transform_2(%arg0: i32, %arg1: i32, %arg2: i32) -> (i32, i32) {
    %c0_i32 = arith.constant 0 : i32
    %c0_i32_0 = arith.constant 0 : i32
    return %c0_i32, %arg1 : i32, i32
  }
  func.func @transform_3(%arg0: i32, %arg1: i32, %arg2: i32) -> (i32, i32) {
    %c0_i32 = arith.constant 0 : i32
    %c0_i32_0 = arith.constant 0 : i32
    return %c0_i32, %arg1 : i32, i32
  }
  func.func @transform_4(%arg0: i32, %arg1: i32, %arg2: i32) -> (i32, i32) {
    %c0_i32 = arith.constant 0 : i32
    return %arg0, %arg1 : i32, i32
  }
  func.func @transform_5(%arg0: i32, %arg1: i32, %arg2: i32) -> (i32, i32) {
    %c0_i32 = arith.constant 0 : i32
    return %arg0, %arg1 : i32, i32
  }
}

module attributes {stable_mosaic.version = 11 : i64} {
  func.func @_mm_kernel(%arg0: i32, %arg1: i32, %arg2: i32, %arg3: memref<32x64xbf16, #tpu.memory_space<vmem>>, %arg4: memref<64x128xbf16, #tpu.memory_space<vmem>>, %arg5: memref<1x128xf32, #tpu.memory_space<vmem>>, %arg6: memref<1x128xf32, #tpu.memory_space<vmem>>, %arg7: memref<32x128xf32, #tpu.memory_space<vmem>>) attributes {dimension_semantics = [#tpu.dimension_semantics<parallel>, #tpu.dimension_semantics<parallel>, #tpu.dimension_semantics<arbitrary>], iteration_bounds = array<i64: 1, 1, 1>, scalar_prefetch = 0 : i64, scratch_operands = 0 : i64, tpu.core_type = #tpu.core_type<tc>, window_params = [{transform_indices = @transform_0, window_bounds = array<i64: 32, 64>}, {transform_indices = @transform_1, window_bounds = array<i64: 64, 128>}, {transform_indices = @transform_2, window_bounds = array<i64: 1, 128>}, {transform_indices = @transform_3, window_bounds = array<i64: 1, 128>}, {transform_indices = @transform_4, window_bounds = array<i64: 32, 128>}]} {
    %c0 = arith.constant 0 : index
    %c0_0 = arith.constant 0 : index
    %0 = vector.load %arg3[%c0, %c0_0] : memref<32x64xbf16, #tpu.memory_space<vmem>>, vector<32x64xbf16>
    %c0_1 = arith.constant 0 : index
    %c0_2 = arith.constant 0 : index
    %1 = vector.load %arg4[%c0_1, %c0_2] : memref<64x128xbf16, #tpu.memory_space<vmem>>, vector<64x128xbf16>
    %cst = arith.constant dense<0.000000e+00> : vector<32x128xf32>
    %2 = tpu.matmul %0, %1, %cst {dimension_numbers = #tpu.dot_dimension_numbers<[1], [0], [0], [1], [0, 0, 1, 1], [], []>} : vector<32x64xbf16>, vector<64x128xbf16>, vector<32x128xf32> -> vector<32x128xf32>
    %c0_3 = arith.constant 0 : index
    %c0_4 = arith.constant 0 : index
    %3 = vector.load %arg5[%c0_3, %c0_4] : memref<1x128xf32, #tpu.memory_space<vmem>>, vector<1x128xf32>
    %4 = vector.broadcast %3 : vector<1x128xf32> to vector<32x128xf32>
    %5 = arith.mulf %2, %4 : vector<32x128xf32>
    %c0_5 = arith.constant 0 : index
    %c0_6 = arith.constant 0 : index
    %6 = vector.load %arg6[%c0_5, %c0_6] : memref<1x128xf32, #tpu.memory_space<vmem>>, vector<1x128xf32>
    %7 = vector.broadcast %6 : vector<1x128xf32> to vector<32x128xf32>
    %8 = arith.addf %5, %7 : vector<32x128xf32>
    %c0_7 = arith.constant 0 : index
    %c0_8 = arith.constant 0 : index
    %9 = vector.load %arg7[%c0_7, %c0_8] : memref<32x128xf32, #tpu.memory_space<vmem>>, vector<32x128xf32>
    tpu.vector_store %arg7[%c0_7, %c0_8], %8 {strides = array<i32>} : memref<32x128xf32, #tpu.memory_space<vmem>>, vector<32x128xf32>,
    return
  }
  func.func @transform_0(%arg0: i32, %arg1: i32, %arg2: i32) -> (i32, i32) {
    %c0_i32 = arith.constant 0 : i32
    return %arg0, %arg2 : i32, i32
  }
  func.func @transform_1(%arg0: i32, %arg1: i32, %arg2: i32) -> (i32, i32) {
    %c0_i32 = arith.constant 0 : i32
    return %arg2, %arg1 : i32, i32
  }
  func.func @transform_2(%arg0: i32, %arg1: i32, %arg2: i32) -> (i32, i32) {
    %c0_i32 = arith.constant 0 : i32
    %c0_i32_0 = arith.constant 0 : i32
    return %c0_i32, %arg1 : i32, i32
  }
  func.func @transform_3(%arg0: i32, %arg1: i32, %arg2: i32) -> (i32, i32) {
    %c0_i32 = arith.constant 0 : i32
    %c0_i32_0 = arith.constant 0 : i32
    return %c0_i32, %arg1 : i32, i32
  }
  func.func @transform_4(%arg0: i32, %arg1: i32, %arg2: i32) -> (i32, i32) {
    %c0_i32 = arith.constant 0 : i32
    return %arg0, %arg1 : i32, i32
  }
}

module attributes {stable_mosaic.version = 11 : i64} {
  func.func @_mm_kernel(%arg0: i32, %arg1: i32, %arg2: i32, %arg3: memref<32x576xbf16, #tpu.memory_space<vmem>>, %arg4: memref<576x128xbf16, #tpu.memory_space<vmem>>, %arg5: memref<1x128xf32, #tpu.memory_space<vmem>>, %arg6: memref<1x128xf32, #tpu.memory_space<vmem>>, %arg7: memref<32x128xf32, #tpu.memory_space<vmem>>) attributes {dimension_semantics = [#tpu.dimension_semantics<parallel>, #tpu.dimension_semantics<parallel>, #tpu.dimension_semantics<arbitrary>], iteration_bounds = array<i64: 1, 1, 1>, scalar_prefetch = 0 : i64, scratch_operands = 0 : i64, tpu.core_type = #tpu.core_type<tc>, window_params = [{transform_indices = @transform_0, window_bounds = array<i64: 32, 576>}, {transform_indices = @transform_1, window_bounds = array<i64: 576, 128>}, {transform_indices = @transform_2, window_bounds = array<i64: 1, 128>}, {transform_indices = @transform_3, window_bounds = array<i64: 1, 128>}, {transform_indices = @transform_4, window_bounds = array<i64: 32, 128>}]} {
    %c0 = arith.constant 0 : index
    %c0_0 = arith.constant 0 : index
    %0 = vector.load %arg3[%c0, %c0_0] : memref<32x576xbf16, #tpu.memory_space<vmem>>, vector<32x576xbf16>
    %c0_1 = arith.constant 0 : index
    %c0_2 = arith.constant 0 : index
    %1 = vector.load %arg4[%c0_1, %c0_2] : memref<576x128xbf16, #tpu.memory_space<vmem>>, vector<576x128xbf16>
    %cst = arith.constant dense<0.000000e+00> : vector<32x128xf32>
    %2 = tpu.matmul %0, %1, %cst {dimension_numbers = #tpu.dot_dimension_numbers<[1], [0], [0], [1], [0, 0, 1, 1], [], []>} : vector<32x576xbf16>, vector<576x128xbf16>, vector<32x128xf32> -> vector<32x128xf32>
    %c0_3 = arith.constant 0 : index
    %c0_4 = arith.constant 0 : index
    %3 = vector.load %arg5[%c0_3, %c0_4] : memref<1x128xf32, #tpu.memory_space<vmem>>, vector<1x128xf32>
    %4 = vector.broadcast %3 : vector<1x128xf32> to vector<32x128xf32>
    %5 = arith.mulf %2, %4 : vector<32x128xf32>
    %c0_5 = arith.constant 0 : index
    %c0_6 = arith.constant 0 : index
    %6 = vector.load %arg6[%c0_5, %c0_6] : memref<1x128xf32, #tpu.memory_space<vmem>>, vector<1x128xf32>
    %7 = vector.broadcast %6 : vector<1x128xf32> to vector<32x128xf32>
    %8 = arith.addf %5, %7 : vector<32x128xf32>
    %cst_7 = arith.constant 0.000000e+00 : f32
    %9 = vector.broadcast %cst_7 : f32 to vector<32x128xf32>
    %10 = arith.maximumf %8, %9 : vector<32x128xf32>
    %c0_8 = arith.constant 0 : index
    %c0_9 = arith.constant 0 : index
    %11 = vector.load %arg7[%c0_8, %c0_9] : memref<32x128xf32, #tpu.memory_space<vmem>>, vector<32x128xf32>
    tpu.vector_store %arg7[%c0_8, %c0_9], %10 {strides = array<i32>} : memref<32x128xf32, #tpu.memory_space<vmem>>, vector<32x128xf32>,
    return
  }
  func.func @transform_0(%arg0: i32, %arg1: i32, %arg2: i32) -> (i32, i32) {
    %c0_i32 = arith.constant 0 : i32
    return %arg0, %arg2 : i32, i32
  }
  func.func @transform_1(%arg0: i32, %arg1: i32, %arg2: i32) -> (i32, i32) {
    %c0_i32 = arith.constant 0 : i32
    return %arg2, %arg1 : i32, i32
  }
  func.func @transform_2(%arg0: i32, %arg1: i32, %arg2: i32) -> (i32, i32) {
    %c0_i32 = arith.constant 0 : i32
    %c0_i32_0 = arith.constant 0 : i32
    return %c0_i32, %arg1 : i32, i32
  }
  func.func @transform_3(%arg0: i32, %arg1: i32, %arg2: i32) -> (i32, i32) {
    %c0_i32 = arith.constant 0 : i32
    %c0_i32_0 = arith.constant 0 : i32
    return %c0_i32, %arg1 : i32, i32
  }
  func.func @transform_4(%arg0: i32, %arg1: i32, %arg2: i32) -> (i32, i32) {
    %c0_i32 = arith.constant 0 : i32
    return %arg0, %arg1 : i32, i32
  }
}

module attributes {stable_mosaic.version = 11 : i64} {
  func.func @_mm_kernel(%arg0: i32, %arg1: i32, %arg2: i32, %arg3: memref<32x384xbf16, #tpu.memory_space<vmem>>, %arg4: memref<384x128xbf16, #tpu.memory_space<vmem>>, %arg5: memref<1x128xf32, #tpu.memory_space<vmem>>, %arg6: memref<1x128xf32, #tpu.memory_space<vmem>>, %arg7: memref<32x128xf32, #tpu.memory_space<vmem>>, %arg8: memref<32x128xf32, #tpu.memory_space<vmem>>) attributes {dimension_semantics = [#tpu.dimension_semantics<parallel>, #tpu.dimension_semantics<parallel>, #tpu.dimension_semantics<arbitrary>], iteration_bounds = array<i64: 1, 1, 3>, scalar_prefetch = 0 : i64, scratch_operands = 0 : i64, tpu.core_type = #tpu.core_type<tc>, window_params = [{transform_indices = @transform_0, window_bounds = array<i64: 32, 384>}, {transform_indices = @transform_1, window_bounds = array<i64: 384, 128>}, {transform_indices = @transform_2, window_bounds = array<i64: 1, 128>}, {transform_indices = @transform_3, window_bounds = array<i64: 1, 128>}, {transform_indices = @transform_4, window_bounds = array<i64: 32, 128>}, {transform_indices = @transform_5, window_bounds = array<i64: 32, 128>}]} {
    %c0 = arith.constant 0 : index
    %c0_0 = arith.constant 0 : index
    %0 = vector.load %arg3[%c0, %c0_0] : memref<32x384xbf16, #tpu.memory_space<vmem>>, vector<32x384xbf16>
    %c0_1 = arith.constant 0 : index
    %c0_2 = arith.constant 0 : index
    %1 = vector.load %arg4[%c0_1, %c0_2] : memref<384x128xbf16, #tpu.memory_space<vmem>>, vector<384x128xbf16>
    %cst = arith.constant dense<0.000000e+00> : vector<32x128xf32>
    %2 = tpu.matmul %0, %1, %cst {dimension_numbers = #tpu.dot_dimension_numbers<[1], [0], [0], [1], [0, 0, 1, 1], [], []>} : vector<32x384xbf16>, vector<384x128xbf16>, vector<32x128xf32> -> vector<32x128xf32>
    %c0_i32 = arith.constant 0 : i32
    %3 = arith.cmpi eq, %arg2, %c0_i32 : i32
    %4 = arith.extui %3 : i1 to i32
    %c0_i32_3 = arith.constant 0 : i32
    %5 = arith.cmpi ne, %4, %c0_i32_3 : i32
    scf.if %5 {
      %c0_8 = arith.constant 0 : index
      %c0_9 = arith.constant 0 : index
      %14 = vector.load %arg8[%c0_8, %c0_9] : memref<32x128xf32, #tpu.memory_space<vmem>>, vector<32x128xf32>
      tpu.vector_store %arg8[%c0_8, %c0_9], %2 {strides = array<i32>} : memref<32x128xf32, #tpu.memory_space<vmem>>, vector<32x128xf32>,
    } else {
    }
    %c0_i32_4 = arith.constant 0 : i32
    %6 = arith.cmpi sgt, %arg2, %c0_i32_4 : i32
    %c2_i32 = arith.constant 2 : i32
    %7 = arith.cmpi slt, %arg2, %c2_i32 : i32
    %8 = arith.andi %6, %7 : i1
    %9 = arith.extui %8 : i1 to i32
    %c0_i32_5 = arith.constant 0 : i32
    %10 = arith.cmpi ne, %9, %c0_i32_5 : i32
    scf.if %10 {
      %c0_8 = arith.constant 0 : index
      %c0_9 = arith.constant 0 : index
      %14 = vector.load %arg8[%c0_8, %c0_9] : memref<32x128xf32, #tpu.memory_space<vmem>>, vector<32x128xf32>
      %15 = arith.addf %14, %2 : vector<32x128xf32>
      %c0_10 = arith.constant 0 : index
      %c0_11 = arith.constant 0 : index
      %16 = vector.load %arg8[%c0_10, %c0_11] : memref<32x128xf32, #tpu.memory_space<vmem>>, vector<32x128xf32>
      tpu.vector_store %arg8[%c0_10, %c0_11], %15 {strides = array<i32>} : memref<32x128xf32, #tpu.memory_space<vmem>>, vector<32x128xf32>,
    } else {
    }
    %c2_i32_6 = arith.constant 2 : i32
    %11 = arith.cmpi eq, %arg2, %c2_i32_6 : i32
    %12 = arith.extui %11 : i1 to i32
    %c0_i32_7 = arith.constant 0 : i32
    %13 = arith.cmpi ne, %12, %c0_i32_7 : i32
    scf.if %13 {
      %c0_8 = arith.constant 0 : index
      %c0_9 = arith.constant 0 : index
      %14 = vector.load %arg8[%c0_8, %c0_9] : memref<32x128xf32, #tpu.memory_space<vmem>>, vector<32x128xf32>
      %15 = arith.addf %14, %2 : vector<32x128xf32>
      %c0_10 = arith.constant 0 : index
      %c0_11 = arith.constant 0 : index
      %16 = vector.load %arg5[%c0_10, %c0_11] : memref<1x128xf32, #tpu.memory_space<vmem>>, vector<1x128xf32>
      %17 = vector.broadcast %16 : vector<1x128xf32> to vector<32x128xf32>
      %18 = arith.mulf %15, %17 : vector<32x128xf32>
      %c0_12 = arith.constant 0 : index
      %c0_13 = arith.constant 0 : index
      %19 = vector.load %arg6[%c0_12, %c0_13] : memref<1x128xf32, #tpu.memory_space<vmem>>, vector<1x128xf32>
      %20 = vector.broadcast %19 : vector<1x128xf32> to vector<32x128xf32>
      %21 = arith.addf %18, %20 : vector<32x128xf32>
      %c0_14 = arith.constant 0 : index
      %c0_15 = arith.constant 0 : index
      %22 = vector.load %arg7[%c0_14, %c0_15] : memref<32x128xf32, #tpu.memory_space<vmem>>, vector<32x128xf32>
      %23 = arith.addf %21, %22 : vector<32x128xf32>
      %cst_16 = arith.constant 0.000000e+00 : f32
      %24 = vector.broadcast %cst_16 : f32 to vector<32x128xf32>
      %25 = arith.maximumf %23, %24 : vector<32x128xf32>
      %c0_17 = arith.constant 0 : index
      %c0_18 = arith.constant 0 : index
      %26 = vector.load %arg8[%c0_17, %c0_18] : memref<32x128xf32, #tpu.memory_space<vmem>>, vector<32x128xf32>
      tpu.vector_store %arg8[%c0_17, %c0_18], %25 {strides = array<i32>} : memref<32x128xf32, #tpu.memory_space<vmem>>, vector<32x128xf32>,
    } else {
    }
    return
  }
  func.func @transform_0(%arg0: i32, %arg1: i32, %arg2: i32) -> (i32, i32) {
    %c0_i32 = arith.constant 0 : i32
    return %arg0, %arg2 : i32, i32
  }
  func.func @transform_1(%arg0: i32, %arg1: i32, %arg2: i32) -> (i32, i32) {
    %c0_i32 = arith.constant 0 : i32
    return %arg2, %arg1 : i32, i32
  }
  func.func @transform_2(%arg0: i32, %arg1: i32, %arg2: i32) -> (i32, i32) {
    %c0_i32 = arith.constant 0 : i32
    %c0_i32_0 = arith.constant 0 : i32
    return %c0_i32, %arg1 : i32, i32
  }
  func.func @transform_3(%arg0: i32, %arg1: i32, %arg2: i32) -> (i32, i32) {
    %c0_i32 = arith.constant 0 : i32
    %c0_i32_0 = arith.constant 0 : i32
    return %c0_i32, %arg1 : i32, i32
  }
  func.func @transform_4(%arg0: i32, %arg1: i32, %arg2: i32) -> (i32, i32) {
    %c0_i32 = arith.constant 0 : i32
    return %arg0, %arg1 : i32, i32
  }
  func.func @transform_5(%arg0: i32, %arg1: i32, %arg2: i32) -> (i32, i32) {
    %c0_i32 = arith.constant 0 : i32
    return %arg0, %arg1 : i32, i32
  }
}

module attributes {stable_mosaic.version = 11 : i64} {
  func.func @_mm_kernel(%arg0: i32, %arg1: i32, %arg2: i32, %arg3: memref<8x128xbf16, #tpu.memory_space<vmem>>, %arg4: memref<128x256xbf16, #tpu.memory_space<vmem>>, %arg5: memref<1x256xf32, #tpu.memory_space<vmem>>, %arg6: memref<1x256xf32, #tpu.memory_space<vmem>>, %arg7: memref<8x256xf32, #tpu.memory_space<vmem>>) attributes {dimension_semantics = [#tpu.dimension_semantics<parallel>, #tpu.dimension_semantics<parallel>, #tpu.dimension_semantics<arbitrary>], iteration_bounds = array<i64: 1, 1, 1>, scalar_prefetch = 0 : i64, scratch_operands = 0 : i64, tpu.core_type = #tpu.core_type<tc>, window_params = [{transform_indices = @transform_0, window_bounds = array<i64: 8, 128>}, {transform_indices = @transform_1, window_bounds = array<i64: 128, 256>}, {transform_indices = @transform_2, window_bounds = array<i64: 1, 256>}, {transform_indices = @transform_3, window_bounds = array<i64: 1, 256>}, {transform_indices = @transform_4, window_bounds = array<i64: 8, 256>}]} {
    %c0 = arith.constant 0 : index
    %c0_0 = arith.constant 0 : index
    %0 = vector.load %arg3[%c0, %c0_0] : memref<8x128xbf16, #tpu.memory_space<vmem>>, vector<8x128xbf16>
    %c0_1 = arith.constant 0 : index
    %c0_2 = arith.constant 0 : index
    %1 = vector.load %arg4[%c0_1, %c0_2] : memref<128x256xbf16, #tpu.memory_space<vmem>>, vector<128x256xbf16>
    %cst = arith.constant dense<0.000000e+00> : vector<8x256xf32>
    %2 = tpu.matmul %0, %1, %cst {dimension_numbers = #tpu.dot_dimension_numbers<[1], [0], [0], [1], [0, 0, 1, 1], [], []>} : vector<8x128xbf16>, vector<128x256xbf16>, vector<8x256xf32> -> vector<8x256xf32>
    %c0_3 = arith.constant 0 : index
    %c0_4 = arith.constant 0 : index
    %3 = vector.load %arg5[%c0_3, %c0_4] : memref<1x256xf32, #tpu.memory_space<vmem>>, vector<1x256xf32>
    %4 = vector.broadcast %3 : vector<1x256xf32> to vector<8x256xf32>
    %5 = arith.mulf %2, %4 : vector<8x256xf32>
    %c0_5 = arith.constant 0 : index
    %c0_6 = arith.constant 0 : index
    %6 = vector.load %arg6[%c0_5, %c0_6] : memref<1x256xf32, #tpu.memory_space<vmem>>, vector<1x256xf32>
    %7 = vector.broadcast %6 : vector<1x256xf32> to vector<8x256xf32>
    %8 = arith.addf %5, %7 : vector<8x256xf32>
    %c0_7 = arith.constant 0 : index
    %c0_8 = arith.constant 0 : index
    %9 = vector.load %arg7[%c0_7, %c0_8] : memref<8x256xf32, #tpu.memory_space<vmem>>, vector<8x256xf32>
    tpu.vector_store %arg7[%c0_7, %c0_8], %8 {strides = array<i32>} : memref<8x256xf32, #tpu.memory_space<vmem>>, vector<8x256xf32>,
    return
  }
  func.func @transform_0(%arg0: i32, %arg1: i32, %arg2: i32) -> (i32, i32) {
    %c0_i32 = arith.constant 0 : i32
    return %arg0, %arg2 : i32, i32
  }
  func.func @transform_1(%arg0: i32, %arg1: i32, %arg2: i32) -> (i32, i32) {
    %c0_i32 = arith.constant 0 : i32
    return %arg2, %arg1 : i32, i32
  }
  func.func @transform_2(%arg0: i32, %arg1: i32, %arg2: i32) -> (i32, i32) {
    %c0_i32 = arith.constant 0 : i32
    %c0_i32_0 = arith.constant 0 : i32
    return %c0_i32, %arg1 : i32, i32
  }
  func.func @transform_3(%arg0: i32, %arg1: i32, %arg2: i32) -> (i32, i32) {
    %c0_i32 = arith.constant 0 : i32
    %c0_i32_0 = arith.constant 0 : i32
    return %c0_i32, %arg1 : i32, i32
  }
  func.func @transform_4(%arg0: i32, %arg1: i32, %arg2: i32) -> (i32, i32) {
    %c0_i32 = arith.constant 0 : i32
    return %arg0, %arg1 : i32, i32
  }
}

module attributes {stable_mosaic.version = 11 : i64} {
  func.func @_mm_kernel(%arg0: i32, %arg1: i32, %arg2: i32, %arg3: memref<8x384xbf16, #tpu.memory_space<vmem>>, %arg4: memref<384x256xbf16, #tpu.memory_space<vmem>>, %arg5: memref<1x256xf32, #tpu.memory_space<vmem>>, %arg6: memref<1x256xf32, #tpu.memory_space<vmem>>, %arg7: memref<8x256xf32, #tpu.memory_space<vmem>>) attributes {dimension_semantics = [#tpu.dimension_semantics<parallel>, #tpu.dimension_semantics<parallel>, #tpu.dimension_semantics<arbitrary>], iteration_bounds = array<i64: 1, 1, 3>, scalar_prefetch = 0 : i64, scratch_operands = 0 : i64, tpu.core_type = #tpu.core_type<tc>, window_params = [{transform_indices = @transform_0, window_bounds = array<i64: 8, 384>}, {transform_indices = @transform_1, window_bounds = array<i64: 384, 256>}, {transform_indices = @transform_2, window_bounds = array<i64: 1, 256>}, {transform_indices = @transform_3, window_bounds = array<i64: 1, 256>}, {transform_indices = @transform_4, window_bounds = array<i64: 8, 256>}]} {
    %c0 = arith.constant 0 : index
    %c0_0 = arith.constant 0 : index
    %0 = vector.load %arg3[%c0, %c0_0] : memref<8x384xbf16, #tpu.memory_space<vmem>>, vector<8x384xbf16>
    %c0_1 = arith.constant 0 : index
    %c0_2 = arith.constant 0 : index
    %1 = vector.load %arg4[%c0_1, %c0_2] : memref<384x256xbf16, #tpu.memory_space<vmem>>, vector<384x256xbf16>
    %cst = arith.constant dense<0.000000e+00> : vector<8x256xf32>
    %2 = tpu.matmul %0, %1, %cst {dimension_numbers = #tpu.dot_dimension_numbers<[1], [0], [0], [1], [0, 0, 1, 1], [], []>} : vector<8x384xbf16>, vector<384x256xbf16>, vector<8x256xf32> -> vector<8x256xf32>
    %c0_i32 = arith.constant 0 : i32
    %3 = arith.cmpi eq, %arg2, %c0_i32 : i32
    %4 = arith.extui %3 : i1 to i32
    %c0_i32_3 = arith.constant 0 : i32
    %5 = arith.cmpi ne, %4, %c0_i32_3 : i32
    scf.if %5 {
      %c0_8 = arith.constant 0 : index
      %c0_9 = arith.constant 0 : index
      %14 = vector.load %arg7[%c0_8, %c0_9] : memref<8x256xf32, #tpu.memory_space<vmem>>, vector<8x256xf32>
      tpu.vector_store %arg7[%c0_8, %c0_9], %2 {strides = array<i32>} : memref<8x256xf32, #tpu.memory_space<vmem>>, vector<8x256xf32>,
    } else {
    }
    %c0_i32_4 = arith.constant 0 : i32
    %6 = arith.cmpi sgt, %arg2, %c0_i32_4 : i32
    %c2_i32 = arith.constant 2 : i32
    %7 = arith.cmpi slt, %arg2, %c2_i32 : i32
    %8 = arith.andi %6, %7 : i1
    %9 = arith.extui %8 : i1 to i32
    %c0_i32_5 = arith.constant 0 : i32
    %10 = arith.cmpi ne, %9, %c0_i32_5 : i32
    scf.if %10 {
      %c0_8 = arith.constant 0 : index
      %c0_9 = arith.constant 0 : index
      %14 = vector.load %arg7[%c0_8, %c0_9] : memref<8x256xf32, #tpu.memory_space<vmem>>, vector<8x256xf32>
      %15 = arith.addf %14, %2 : vector<8x256xf32>
      %c0_10 = arith.constant 0 : index
      %c0_11 = arith.constant 0 : index
      %16 = vector.load %arg7[%c0_10, %c0_11] : memref<8x256xf32, #tpu.memory_space<vmem>>, vector<8x256xf32>
      tpu.vector_store %arg7[%c0_10, %c0_11], %15 {strides = array<i32>} : memref<8x256xf32, #tpu.memory_space<vmem>>, vector<8x256xf32>,
    } else {
    }
    %c2_i32_6 = arith.constant 2 : i32
    %11 = arith.cmpi eq, %arg2, %c2_i32_6 : i32
    %12 = arith.extui %11 : i1 to i32
    %c0_i32_7 = arith.constant 0 : i32
    %13 = arith.cmpi ne, %12, %c0_i32_7 : i32
    scf.if %13 {
      %c0_8 = arith.constant 0 : index
      %c0_9 = arith.constant 0 : index
      %14 = vector.load %arg7[%c0_8, %c0_9] : memref<8x256xf32, #tpu.memory_space<vmem>>, vector<8x256xf32>
      %15 = arith.addf %14, %2 : vector<8x256xf32>
      %c0_10 = arith.constant 0 : index
      %c0_11 = arith.constant 0 : index
      %16 = vector.load %arg5[%c0_10, %c0_11] : memref<1x256xf32, #tpu.memory_space<vmem>>, vector<1x256xf32>
      %17 = vector.broadcast %16 : vector<1x256xf32> to vector<8x256xf32>
      %18 = arith.mulf %15, %17 : vector<8x256xf32>
      %c0_12 = arith.constant 0 : index
      %c0_13 = arith.constant 0 : index
      %19 = vector.load %arg6[%c0_12, %c0_13] : memref<1x256xf32, #tpu.memory_space<vmem>>, vector<1x256xf32>
      %20 = vector.broadcast %19 : vector<1x256xf32> to vector<8x256xf32>
      %21 = arith.addf %18, %20 : vector<8x256xf32>
      %cst_14 = arith.constant 0.000000e+00 : f32
      %22 = vector.broadcast %cst_14 : f32 to vector<8x256xf32>
      %23 = arith.maximumf %21, %22 : vector<8x256xf32>
      %c0_15 = arith.constant 0 : index
      %c0_16 = arith.constant 0 : index
      %24 = vector.load %arg7[%c0_15, %c0_16] : memref<8x256xf32, #tpu.memory_space<vmem>>, vector<8x256xf32>
      tpu.vector_store %arg7[%c0_15, %c0_16], %23 {strides = array<i32>} : memref<8x256xf32, #tpu.memory_space<vmem>>, vector<8x256xf32>,
    } else {
    }
    return
  }
  func.func @transform_0(%arg0: i32, %arg1: i32, %arg2: i32) -> (i32, i32) {
    %c0_i32 = arith.constant 0 : i32
    return %arg0, %arg2 : i32, i32
  }
  func.func @transform_1(%arg0: i32, %arg1: i32, %arg2: i32) -> (i32, i32) {
    %c0_i32 = arith.constant 0 : i32
    return %arg2, %arg1 : i32, i32
  }
  func.func @transform_2(%arg0: i32, %arg1: i32, %arg2: i32) -> (i32, i32) {
    %c0_i32 = arith.constant 0 : i32
    %c0_i32_0 = arith.constant 0 : i32
    return %c0_i32, %arg1 : i32, i32
  }
  func.func @transform_3(%arg0: i32, %arg1: i32, %arg2: i32) -> (i32, i32) {
    %c0_i32 = arith.constant 0 : i32
    %c0_i32_0 = arith.constant 0 : i32
    return %c0_i32, %arg1 : i32, i32
  }
  func.func @transform_4(%arg0: i32, %arg1: i32, %arg2: i32) -> (i32, i32) {
    %c0_i32 = arith.constant 0 : i32
    return %arg0, %arg1 : i32, i32
  }
}

module attributes {stable_mosaic.version = 11 : i64} {
  func.func @_mm_kernel(%arg0: i32, %arg1: i32, %arg2: i32, %arg3: memref<8x768xbf16, #tpu.memory_space<vmem>>, %arg4: memref<768x256xbf16, #tpu.memory_space<vmem>>, %arg5: memref<1x256xf32, #tpu.memory_space<vmem>>, %arg6: memref<1x256xf32, #tpu.memory_space<vmem>>, %arg7: memref<8x256xf32, #tpu.memory_space<vmem>>, %arg8: memref<8x256xf32, #tpu.memory_space<vmem>>) attributes {dimension_semantics = [#tpu.dimension_semantics<parallel>, #tpu.dimension_semantics<parallel>, #tpu.dimension_semantics<arbitrary>], iteration_bounds = array<i64: 1, 1, 3>, scalar_prefetch = 0 : i64, scratch_operands = 0 : i64, tpu.core_type = #tpu.core_type<tc>, window_params = [{transform_indices = @transform_0, window_bounds = array<i64: 8, 768>}, {transform_indices = @transform_1, window_bounds = array<i64: 768, 256>}, {transform_indices = @transform_2, window_bounds = array<i64: 1, 256>}, {transform_indices = @transform_3, window_bounds = array<i64: 1, 256>}, {transform_indices = @transform_4, window_bounds = array<i64: 8, 256>}, {transform_indices = @transform_5, window_bounds = array<i64: 8, 256>}]} {
    %c0 = arith.constant 0 : index
    %c0_0 = arith.constant 0 : index
    %0 = vector.load %arg3[%c0, %c0_0] : memref<8x768xbf16, #tpu.memory_space<vmem>>, vector<8x768xbf16>
    %c0_1 = arith.constant 0 : index
    %c0_2 = arith.constant 0 : index
    %1 = vector.load %arg4[%c0_1, %c0_2] : memref<768x256xbf16, #tpu.memory_space<vmem>>, vector<768x256xbf16>
    %cst = arith.constant dense<0.000000e+00> : vector<8x256xf32>
    %2 = tpu.matmul %0, %1, %cst {dimension_numbers = #tpu.dot_dimension_numbers<[1], [0], [0], [1], [0, 0, 1, 1], [], []>} : vector<8x768xbf16>, vector<768x256xbf16>, vector<8x256xf32> -> vector<8x256xf32>
    %c0_i32 = arith.constant 0 : i32
    %3 = arith.cmpi eq, %arg2, %c0_i32 : i32
    %4 = arith.extui %3 : i1 to i32
    %c0_i32_3 = arith.constant 0 : i32
    %5 = arith.cmpi ne, %4, %c0_i32_3 : i32
    scf.if %5 {
      %c0_8 = arith.constant 0 : index
      %c0_9 = arith.constant 0 : index
      %14 = vector.load %arg8[%c0_8, %c0_9] : memref<8x256xf32, #tpu.memory_space<vmem>>, vector<8x256xf32>
      tpu.vector_store %arg8[%c0_8, %c0_9], %2 {strides = array<i32>} : memref<8x256xf32, #tpu.memory_space<vmem>>, vector<8x256xf32>,
    } else {
    }
    %c0_i32_4 = arith.constant 0 : i32
    %6 = arith.cmpi sgt, %arg2, %c0_i32_4 : i32
    %c2_i32 = arith.constant 2 : i32
    %7 = arith.cmpi slt, %arg2, %c2_i32 : i32
    %8 = arith.andi %6, %7 : i1
    %9 = arith.extui %8 : i1 to i32
    %c0_i32_5 = arith.constant 0 : i32
    %10 = arith.cmpi ne, %9, %c0_i32_5 : i32
    scf.if %10 {
      %c0_8 = arith.constant 0 : index
      %c0_9 = arith.constant 0 : index
      %14 = vector.load %arg8[%c0_8, %c0_9] : memref<8x256xf32, #tpu.memory_space<vmem>>, vector<8x256xf32>
      %15 = arith.addf %14, %2 : vector<8x256xf32>
      %c0_10 = arith.constant 0 : index
      %c0_11 = arith.constant 0 : index
      %16 = vector.load %arg8[%c0_10, %c0_11] : memref<8x256xf32, #tpu.memory_space<vmem>>, vector<8x256xf32>
      tpu.vector_store %arg8[%c0_10, %c0_11], %15 {strides = array<i32>} : memref<8x256xf32, #tpu.memory_space<vmem>>, vector<8x256xf32>,
    } else {
    }
    %c2_i32_6 = arith.constant 2 : i32
    %11 = arith.cmpi eq, %arg2, %c2_i32_6 : i32
    %12 = arith.extui %11 : i1 to i32
    %c0_i32_7 = arith.constant 0 : i32
    %13 = arith.cmpi ne, %12, %c0_i32_7 : i32
    scf.if %13 {
      %c0_8 = arith.constant 0 : index
      %c0_9 = arith.constant 0 : index
      %14 = vector.load %arg8[%c0_8, %c0_9] : memref<8x256xf32, #tpu.memory_space<vmem>>, vector<8x256xf32>
      %15 = arith.addf %14, %2 : vector<8x256xf32>
      %c0_10 = arith.constant 0 : index
      %c0_11 = arith.constant 0 : index
      %16 = vector.load %arg5[%c0_10, %c0_11] : memref<1x256xf32, #tpu.memory_space<vmem>>, vector<1x256xf32>
      %17 = vector.broadcast %16 : vector<1x256xf32> to vector<8x256xf32>
      %18 = arith.mulf %15, %17 : vector<8x256xf32>
      %c0_12 = arith.constant 0 : index
      %c0_13 = arith.constant 0 : index
      %19 = vector.load %arg6[%c0_12, %c0_13] : memref<1x256xf32, #tpu.memory_space<vmem>>, vector<1x256xf32>
      %20 = vector.broadcast %19 : vector<1x256xf32> to vector<8x256xf32>
      %21 = arith.addf %18, %20 : vector<8x256xf32>
      %c0_14 = arith.constant 0 : index
      %c0_15 = arith.constant 0 : index
      %22 = vector.load %arg7[%c0_14, %c0_15] : memref<8x256xf32, #tpu.memory_space<vmem>>, vector<8x256xf32>
      %23 = arith.addf %21, %22 : vector<8x256xf32>
      %cst_16 = arith.constant 0.000000e+00 : f32
      %24 = vector.broadcast %cst_16 : f32 to vector<8x256xf32>
      %25 = arith.maximumf %23, %24 : vector<8x256xf32>
      %c0_17 = arith.constant 0 : index
      %c0_18 = arith.constant 0 : index
      %26 = vector.load %arg8[%c0_17, %c0_18] : memref<8x256xf32, #tpu.memory_space<vmem>>, vector<8x256xf32>
      tpu.vector_store %arg8[%c0_17, %c0_18], %25 {strides = array<i32>} : memref<8x256xf32, #tpu.memory_space<vmem>>, vector<8x256xf32>,
    } else {
    }
    return
  }
  func.func @transform_0(%arg0: i32, %arg1: i32, %arg2: i32) -> (i32, i32) {
    %c0_i32 = arith.constant 0 : i32
    return %arg0, %arg2 : i32, i32
  }
  func.func @transform_1(%arg0: i32, %arg1: i32, %arg2: i32) -> (i32, i32) {
    %c0_i32 = arith.constant 0 : i32
    return %arg2, %arg1 : i32, i32
  }
  func.func @transform_2(%arg0: i32, %arg1: i32, %arg2: i32) -> (i32, i32) {
    %c0_i32 = arith.constant 0 : i32
    %c0_i32_0 = arith.constant 0 : i32
    return %c0_i32, %arg1 : i32, i32
  }
  func.func @transform_3(%arg0: i32, %arg1: i32, %arg2: i32) -> (i32, i32) {
    %c0_i32 = arith.constant 0 : i32
    %c0_i32_0 = arith.constant 0 : i32
    return %c0_i32, %arg1 : i32, i32
  }
  func.func @transform_4(%arg0: i32, %arg1: i32, %arg2: i32) -> (i32, i32) {
    %c0_i32 = arith.constant 0 : i32
    return %arg0, %arg1 : i32, i32
  }
  func.func @transform_5(%arg0: i32, %arg1: i32, %arg2: i32) -> (i32, i32) {
    %c0_i32 = arith.constant 0 : i32
    return %arg0, %arg1 : i32, i32
  }
}

module attributes {stable_mosaic.version = 11 : i64} {
  func.func @_mm_kernel(%arg0: i32, %arg1: i32, %arg2: i32, %arg3: memref<2x256xbf16, #tpu.memory_space<vmem>>, %arg4: memref<256x256xbf16, #tpu.memory_space<vmem>>, %arg5: memref<1x256xf32, #tpu.memory_space<vmem>>, %arg6: memref<1x256xf32, #tpu.memory_space<vmem>>, %arg7: memref<2x256xf32, #tpu.memory_space<vmem>>) attributes {dimension_semantics = [#tpu.dimension_semantics<parallel>, #tpu.dimension_semantics<parallel>, #tpu.dimension_semantics<arbitrary>], iteration_bounds = array<i64: 1, 2, 1>, scalar_prefetch = 0 : i64, scratch_operands = 0 : i64, tpu.core_type = #tpu.core_type<tc>, window_params = [{transform_indices = @transform_0, window_bounds = array<i64: 2, 256>}, {transform_indices = @transform_1, window_bounds = array<i64: 256, 256>}, {transform_indices = @transform_2, window_bounds = array<i64: 1, 256>}, {transform_indices = @transform_3, window_bounds = array<i64: 1, 256>}, {transform_indices = @transform_4, window_bounds = array<i64: 2, 256>}]} {
    %c0 = arith.constant 0 : index
    %c0_0 = arith.constant 0 : index
    %0 = vector.load %arg3[%c0, %c0_0] : memref<2x256xbf16, #tpu.memory_space<vmem>>, vector<2x256xbf16>
    %c0_1 = arith.constant 0 : index
    %c0_2 = arith.constant 0 : index
    %1 = vector.load %arg4[%c0_1, %c0_2] : memref<256x256xbf16, #tpu.memory_space<vmem>>, vector<256x256xbf16>
    %cst = arith.constant dense<0.000000e+00> : vector<2x256xf32>
    %2 = tpu.matmul %0, %1, %cst {dimension_numbers = #tpu.dot_dimension_numbers<[1], [0], [0], [1], [0, 0, 1, 1], [], []>} : vector<2x256xbf16>, vector<256x256xbf16>, vector<2x256xf32> -> vector<2x256xf32>
    %c0_3 = arith.constant 0 : index
    %c0_4 = arith.constant 0 : index
    %3 = vector.load %arg5[%c0_3, %c0_4] : memref<1x256xf32, #tpu.memory_space<vmem>>, vector<1x256xf32>
    %4 = vector.broadcast %3 : vector<1x256xf32> to vector<2x256xf32>
    %5 = arith.mulf %2, %4 : vector<2x256xf32>
    %c0_5 = arith.constant 0 : index
    %c0_6 = arith.constant 0 : index
    %6 = vector.load %arg6[%c0_5, %c0_6] : memref<1x256xf32, #tpu.memory_space<vmem>>, vector<1x256xf32>
    %7 = vector.broadcast %6 : vector<1x256xf32> to vector<2x256xf32>
    %8 = arith.addf %5, %7 : vector<2x256xf32>
    %c0_7 = arith.constant 0 : index
    %c0_8 = arith.constant 0 : index
    %9 = vector.load %arg7[%c0_7, %c0_8] : memref<2x256xf32, #tpu.memory_space<vmem>>, vector<2x256xf32>
    tpu.vector_store %arg7[%c0_7, %c0_8], %8 {strides = array<i32>} : memref<2x256xf32, #tpu.memory_space<vmem>>, vector<2x256xf32>,
    return
  }
  func.func @transform_0(%arg0: i32, %arg1: i32, %arg2: i32) -> (i32, i32) {
    %c0_i32 = arith.constant 0 : i32
    return %arg0, %arg2 : i32, i32
  }
  func.func @transform_1(%arg0: i32, %arg1: i32, %arg2: i32) -> (i32, i32) {
    %c0_i32 = arith.constant 0 : i32
    return %arg2, %arg1 : i32, i32
  }
  func.func @transform_2(%arg0: i32, %arg1: i32, %arg2: i32) -> (i32, i32) {
    %c0_i32 = arith.constant 0 : i32
    %c0_i32_0 = arith.constant 0 : i32
    return %c0_i32, %arg1 : i32, i32
  }
  func.func @transform_3(%arg0: i32, %arg1: i32, %arg2: i32) -> (i32, i32) {
    %c0_i32 = arith.constant 0 : i32
    %c0_i32_0 = arith.constant 0 : i32
    return %c0_i32, %arg1 : i32, i32
  }
  func.func @transform_4(%arg0: i32, %arg1: i32, %arg2: i32) -> (i32, i32) {
    %c0_i32 = arith.constant 0 : i32
    return %arg0, %arg1 : i32, i32
  }
}

module attributes {stable_mosaic.version = 11 : i64} {
  func.func @_mm_kernel(%arg0: i32, %arg1: i32, %arg2: i32, %arg3: memref<2x768xbf16, #tpu.memory_space<vmem>>, %arg4: memref<768x256xbf16, #tpu.memory_space<vmem>>, %arg5: memref<1x256xf32, #tpu.memory_space<vmem>>, %arg6: memref<1x256xf32, #tpu.memory_space<vmem>>, %arg7: memref<2x256xf32, #tpu.memory_space<vmem>>) attributes {dimension_semantics = [#tpu.dimension_semantics<parallel>, #tpu.dimension_semantics<parallel>, #tpu.dimension_semantics<arbitrary>], iteration_bounds = array<i64: 1, 2, 3>, scalar_prefetch = 0 : i64, scratch_operands = 0 : i64, tpu.core_type = #tpu.core_type<tc>, window_params = [{transform_indices = @transform_0, window_bounds = array<i64: 2, 768>}, {transform_indices = @transform_1, window_bounds = array<i64: 768, 256>}, {transform_indices = @transform_2, window_bounds = array<i64: 1, 256>}, {transform_indices = @transform_3, window_bounds = array<i64: 1, 256>}, {transform_indices = @transform_4, window_bounds = array<i64: 2, 256>}]} {
    %c0 = arith.constant 0 : index
    %c0_0 = arith.constant 0 : index
    %0 = vector.load %arg3[%c0, %c0_0] : memref<2x768xbf16, #tpu.memory_space<vmem>>, vector<2x768xbf16>
    %c0_1 = arith.constant 0 : index
    %c0_2 = arith.constant 0 : index
    %1 = vector.load %arg4[%c0_1, %c0_2] : memref<768x256xbf16, #tpu.memory_space<vmem>>, vector<768x256xbf16>
    %cst = arith.constant dense<0.000000e+00> : vector<2x256xf32>
    %2 = tpu.matmul %0, %1, %cst {dimension_numbers = #tpu.dot_dimension_numbers<[1], [0], [0], [1], [0, 0, 1, 1], [], []>} : vector<2x768xbf16>, vector<768x256xbf16>, vector<2x256xf32> -> vector<2x256xf32>
    %c0_i32 = arith.constant 0 : i32
    %3 = arith.cmpi eq, %arg2, %c0_i32 : i32
    %4 = arith.extui %3 : i1 to i32
    %c0_i32_3 = arith.constant 0 : i32
    %5 = arith.cmpi ne, %4, %c0_i32_3 : i32
    scf.if %5 {
      %c0_8 = arith.constant 0 : index
      %c0_9 = arith.constant 0 : index
      %14 = vector.load %arg7[%c0_8, %c0_9] : memref<2x256xf32, #tpu.memory_space<vmem>>, vector<2x256xf32>
      tpu.vector_store %arg7[%c0_8, %c0_9], %2 {strides = array<i32>} : memref<2x256xf32, #tpu.memory_space<vmem>>, vector<2x256xf32>,
    } else {
    }
    %c0_i32_4 = arith.constant 0 : i32
    %6 = arith.cmpi sgt, %arg2, %c0_i32_4 : i32
    %c2_i32 = arith.constant 2 : i32
    %7 = arith.cmpi slt, %arg2, %c2_i32 : i32
    %8 = arith.andi %6, %7 : i1
    %9 = arith.extui %8 : i1 to i32
    %c0_i32_5 = arith.constant 0 : i32
    %10 = arith.cmpi ne, %9, %c0_i32_5 : i32
    scf.if %10 {
      %c0_8 = arith.constant 0 : index
      %c0_9 = arith.constant 0 : index
      %14 = vector.load %arg7[%c0_8, %c0_9] : memref<2x256xf32, #tpu.memory_space<vmem>>, vector<2x256xf32>
      %15 = arith.addf %14, %2 : vector<2x256xf32>
      %c0_10 = arith.constant 0 : index
      %c0_11 = arith.constant 0 : index
      %16 = vector.load %arg7[%c0_10, %c0_11] : memref<2x256xf32, #tpu.memory_space<vmem>>, vector<2x256xf32>
      tpu.vector_store %arg7[%c0_10, %c0_11], %15 {strides = array<i32>} : memref<2x256xf32, #tpu.memory_space<vmem>>, vector<2x256xf32>,
    } else {
    }
    %c2_i32_6 = arith.constant 2 : i32
    %11 = arith.cmpi eq, %arg2, %c2_i32_6 : i32
    %12 = arith.extui %11 : i1 to i32
    %c0_i32_7 = arith.constant 0 : i32
    %13 = arith.cmpi ne, %12, %c0_i32_7 : i32
    scf.if %13 {
      %c0_8 = arith.constant 0 : index
      %c0_9 = arith.constant 0 : index
      %14 = vector.load %arg7[%c0_8, %c0_9] : memref<2x256xf32, #tpu.memory_space<vmem>>, vector<2x256xf32>
      %15 = arith.addf %14, %2 : vector<2x256xf32>
      %c0_10 = arith.constant 0 : index
      %c0_11 = arith.constant 0 : index
      %16 = vector.load %arg5[%c0_10, %c0_11] : memref<1x256xf32, #tpu.memory_space<vmem>>, vector<1x256xf32>
      %17 = vector.broadcast %16 : vector<1x256xf32> to vector<2x256xf32>
      %18 = arith.mulf %15, %17 : vector<2x256xf32>
      %c0_12 = arith.constant 0 : index
      %c0_13 = arith.constant 0 : index
      %19 = vector.load %arg6[%c0_12, %c0_13] : memref<1x256xf32, #tpu.memory_space<vmem>>, vector<1x256xf32>
      %20 = vector.broadcast %19 : vector<1x256xf32> to vector<2x256xf32>
      %21 = arith.addf %18, %20 : vector<2x256xf32>
      %cst_14 = arith.constant 0.000000e+00 : f32
      %22 = vector.broadcast %cst_14 : f32 to vector<2x256xf32>
      %23 = arith.maximumf %21, %22 : vector<2x256xf32>
      %c0_15 = arith.constant 0 : index
      %c0_16 = arith.constant 0 : index
      %24 = vector.load %arg7[%c0_15, %c0_16] : memref<2x256xf32, #tpu.memory_space<vmem>>, vector<2x256xf32>
      tpu.vector_store %arg7[%c0_15, %c0_16], %23 {strides = array<i32>} : memref<2x256xf32, #tpu.memory_space<vmem>>, vector<2x256xf32>,
    } else {
    }
    return
  }
  func.func @transform_0(%arg0: i32, %arg1: i32, %arg2: i32) -> (i32, i32) {
    %c0_i32 = arith.constant 0 : i32
    return %arg0, %arg2 : i32, i32
  }
  func.func @transform_1(%arg0: i32, %arg1: i32, %arg2: i32) -> (i32, i32) {
    %c0_i32 = arith.constant 0 : i32
    return %arg2, %arg1 : i32, i32
  }
  func.func @transform_2(%arg0: i32, %arg1: i32, %arg2: i32) -> (i32, i32) {
    %c0_i32 = arith.constant 0 : i32
    %c0_i32_0 = arith.constant 0 : i32
    return %c0_i32, %arg1 : i32, i32
  }
  func.func @transform_3(%arg0: i32, %arg1: i32, %arg2: i32) -> (i32, i32) {
    %c0_i32 = arith.constant 0 : i32
    %c0_i32_0 = arith.constant 0 : i32
    return %c0_i32, %arg1 : i32, i32
  }
  func.func @transform_4(%arg0: i32, %arg1: i32, %arg2: i32) -> (i32, i32) {
    %c0_i32 = arith.constant 0 : i32
    return %arg0, %arg1 : i32, i32
  }
}

module attributes {stable_mosaic.version = 11 : i64} {
  func.func @_mm_kernel(%arg0: i32, %arg1: i32, %arg2: i32, %arg3: memref<2x768xbf16, #tpu.memory_space<vmem>>, %arg4: memref<768x256xbf16, #tpu.memory_space<vmem>>, %arg5: memref<1x256xf32, #tpu.memory_space<vmem>>, %arg6: memref<1x256xf32, #tpu.memory_space<vmem>>, %arg7: memref<2x256xf32, #tpu.memory_space<vmem>>, %arg8: memref<2x256xf32, #tpu.memory_space<vmem>>) attributes {dimension_semantics = [#tpu.dimension_semantics<parallel>, #tpu.dimension_semantics<parallel>, #tpu.dimension_semantics<arbitrary>], iteration_bounds = array<i64: 1, 2, 6>, scalar_prefetch = 0 : i64, scratch_operands = 0 : i64, tpu.core_type = #tpu.core_type<tc>, window_params = [{transform_indices = @transform_0, window_bounds = array<i64: 2, 768>}, {transform_indices = @transform_1, window_bounds = array<i64: 768, 256>}, {transform_indices = @transform_2, window_bounds = array<i64: 1, 256>}, {transform_indices = @transform_3, window_bounds = array<i64: 1, 256>}, {transform_indices = @transform_4, window_bounds = array<i64: 2, 256>}, {transform_indices = @transform_5, window_bounds = array<i64: 2, 256>}]} {
    %c0 = arith.constant 0 : index
    %c0_0 = arith.constant 0 : index
    %0 = vector.load %arg3[%c0, %c0_0] : memref<2x768xbf16, #tpu.memory_space<vmem>>, vector<2x768xbf16>
    %c0_1 = arith.constant 0 : index
    %c0_2 = arith.constant 0 : index
    %1 = vector.load %arg4[%c0_1, %c0_2] : memref<768x256xbf16, #tpu.memory_space<vmem>>, vector<768x256xbf16>
    %cst = arith.constant dense<0.000000e+00> : vector<2x256xf32>
    %2 = tpu.matmul %0, %1, %cst {dimension_numbers = #tpu.dot_dimension_numbers<[1], [0], [0], [1], [0, 0, 1, 1], [], []>} : vector<2x768xbf16>, vector<768x256xbf16>, vector<2x256xf32> -> vector<2x256xf32>
    %c0_i32 = arith.constant 0 : i32
    %3 = arith.cmpi eq, %arg2, %c0_i32 : i32
    %4 = arith.extui %3 : i1 to i32
    %c0_i32_3 = arith.constant 0 : i32
    %5 = arith.cmpi ne, %4, %c0_i32_3 : i32
    scf.if %5 {
      %c0_8 = arith.constant 0 : index
      %c0_9 = arith.constant 0 : index
      %14 = vector.load %arg8[%c0_8, %c0_9] : memref<2x256xf32, #tpu.memory_space<vmem>>, vector<2x256xf32>
      tpu.vector_store %arg8[%c0_8, %c0_9], %2 {strides = array<i32>} : memref<2x256xf32, #tpu.memory_space<vmem>>, vector<2x256xf32>,
    } else {
    }
    %c0_i32_4 = arith.constant 0 : i32
    %6 = arith.cmpi sgt, %arg2, %c0_i32_4 : i32
    %c5_i32 = arith.constant 5 : i32
    %7 = arith.cmpi slt, %arg2, %c5_i32 : i32
    %8 = arith.andi %6, %7 : i1
    %9 = arith.extui %8 : i1 to i32
    %c0_i32_5 = arith.constant 0 : i32
    %10 = arith.cmpi ne, %9, %c0_i32_5 : i32
    scf.if %10 {
      %c0_8 = arith.constant 0 : index
      %c0_9 = arith.constant 0 : index
      %14 = vector.load %arg8[%c0_8, %c0_9] : memref<2x256xf32, #tpu.memory_space<vmem>>, vector<2x256xf32>
      %15 = arith.addf %14, %2 : vector<2x256xf32>
      %c0_10 = arith.constant 0 : index
      %c0_11 = arith.constant 0 : index
      %16 = vector.load %arg8[%c0_10, %c0_11] : memref<2x256xf32, #tpu.memory_space<vmem>>, vector<2x256xf32>
      tpu.vector_store %arg8[%c0_10, %c0_11], %15 {strides = array<i32>} : memref<2x256xf32, #tpu.memory_space<vmem>>, vector<2x256xf32>,
    } else {
    }
    %c5_i32_6 = arith.constant 5 : i32
    %11 = arith.cmpi eq, %arg2, %c5_i32_6 : i32
    %12 = arith.extui %11 : i1 to i32
    %c0_i32_7 = arith.constant 0 : i32
    %13 = arith.cmpi ne, %12, %c0_i32_7 : i32
    scf.if %13 {
      %c0_8 = arith.constant 0 : index
      %c0_9 = arith.constant 0 : index
      %14 = vector.load %arg8[%c0_8, %c0_9] : memref<2x256xf32, #tpu.memory_space<vmem>>, vector<2x256xf32>
      %15 = arith.addf %14, %2 : vector<2x256xf32>
      %c0_10 = arith.constant 0 : index
      %c0_11 = arith.constant 0 : index
      %16 = vector.load %arg5[%c0_10, %c0_11] : memref<1x256xf32, #tpu.memory_space<vmem>>, vector<1x256xf32>
      %17 = vector.broadcast %16 : vector<1x256xf32> to vector<2x256xf32>
      %18 = arith.mulf %15, %17 : vector<2x256xf32>
      %c0_12 = arith.constant 0 : index
      %c0_13 = arith.constant 0 : index
      %19 = vector.load %arg6[%c0_12, %c0_13] : memref<1x256xf32, #tpu.memory_space<vmem>>, vector<1x256xf32>
      %20 = vector.broadcast %19 : vector<1x256xf32> to vector<2x256xf32>
      %21 = arith.addf %18, %20 : vector<2x256xf32>
      %c0_14 = arith.constant 0 : index
      %c0_15 = arith.constant 0 : index
      %22 = vector.load %arg7[%c0_14, %c0_15] : memref<2x256xf32, #tpu.memory_space<vmem>>, vector<2x256xf32>
      %23 = arith.addf %21, %22 : vector<2x256xf32>
      %cst_16 = arith.constant 0.000000e+00 : f32
      %24 = vector.broadcast %cst_16 : f32 to vector<2x256xf32>
      %25 = arith.maximumf %23, %24 : vector<2x256xf32>
      %c0_17 = arith.constant 0 : index
      %c0_18 = arith.constant 0 : index
      %26 = vector.load %arg8[%c0_17, %c0_18] : memref<2x256xf32, #tpu.memory_space<vmem>>, vector<2x256xf32>
      tpu.vector_store %arg8[%c0_17, %c0_18], %25 {strides = array<i32>} : memref<2x256xf32, #tpu.memory_space<vmem>>, vector<2x256xf32>,
    } else {
    }
    return
  }
  func.func @transform_0(%arg0: i32, %arg1: i32, %arg2: i32) -> (i32, i32) {
    %c0_i32 = arith.constant 0 : i32
    return %arg0, %arg2 : i32, i32
  }
  func.func @transform_1(%arg0: i32, %arg1: i32, %arg2: i32) -> (i32, i32) {
    %c0_i32 = arith.constant 0 : i32
    return %arg2, %arg1 : i32, i32
  }
  func.func @transform_2(%arg0: i32, %arg1: i32, %arg2: i32) -> (i32, i32) {
    %c0_i32 = arith.constant 0 : i32
    %c0_i32_0 = arith.constant 0 : i32
    return %c0_i32, %arg1 : i32, i32
  }
  func.func @transform_3(%arg0: i32, %arg1: i32, %arg2: i32) -> (i32, i32) {
    %c0_i32 = arith.constant 0 : i32
    %c0_i32_0 = arith.constant 0 : i32
    return %c0_i32, %arg1 : i32, i32
  }
  func.func @transform_4(%arg0: i32, %arg1: i32, %arg2: i32) -> (i32, i32) {
    %c0_i32 = arith.constant 0 : i32
    return %arg0, %arg1 : i32, i32
  }
  func.func @transform_5(%arg0: i32, %arg1: i32, %arg2: i32) -> (i32, i32) {
    %c0_i32 = arith.constant 0 : i32
    return %arg0, %arg1 : i32, i32
  }
}

</mosaic_0001>

<llo_original>
// kernel: resnet_forward.13
$region0: #{resnet_forward.13}
  #allocation0 [shape = 'u32[]', space=smem, size = 0x4, offset = 0x4, fixed_abs, tag = 'smem constant byte address 0x4 - core index']
  #allocation1 [shape = 'u32[72,128]{1,0:T(1,128)}', space=vmem, size = 0x9000, scoped, tag = 'internal scratch']
  %s0 = inlined_call_operand.vmem [shape: bf16[512,49], index: 0, kind: input, shape index: {}]
  %s1 = inlined_call_operand.vmem [shape: bf16[49,64], index: 1, kind: input, shape index: {}]
  %s2 = inlined_call_operand.hbm [shape: f32[1,64], index: 2, kind: input, shape index: {}]
  %s3 = inlined_call_operand.hbm [shape: f32[1,64], index: 3, kind: input, shape index: {}]
  %s4 = inlined_call_operand.vmem [shape: f32[512,64], index: 4, kind: output, shape index: {}]
  %s5 = sld [smem:[#allocation0]]
  $region57: #{resnet_forward.13} parent=0
    _
  %s7 = ssub.s32 1, %s5
  %s8 = scalar_select 0, %s7, %s5
  $region1: #{resnet_forward.13} parent=0
    #allocation2 [shape = 'u8[512]{0}', space=vmem, size = 0x400, scoped, tag = 'input window, operand 2, single buffered']
    #allocation3 [shape = 's32[2]{0}', space=sflag, size = 0x8, scoped, tag = 'scoped memory for resnet_forward.13']
    #allocation4 [shape = 'u8[512]{0}', space=vmem, size = 0x400, scoped, tag = 'input window, operand 3, single buffered']
    #allocation5 [shape = 's32[1]{0}', space=sflag, size = 0x4, scoped, tag = 'scoped memory for resnet_forward.13']
    %9 = vsyncpa [#allocation3], 0
    %10 = vsyncpa [#allocation5], 0
    loop: start=0, step=1, limit=4
    $region2: #{resnet_forward.13} parent=1 // loop_pre_header
      _
    $region3: #{resnet_forward.13} parent=1 // loop_header
      %s12 = sphi 0, %s16
      %p13 = scmp.ge.s32.totalorder %s12, 4
      %s19 = sphi 0, %s38
      %s20 = sphi 0, %s34
      %s21 = sphi 0, %s30
      %s22 = sphi 0, %s19
      %s23 = sphi 0, %s20
      %s24 = sphi 0, %s21
      %s25 = sphi 0, %s22
      %s26 = sphi 0, %s23
      %s27 = sphi 0, %s24
      %s43 = sphi 0, %s45
      %s46 = sphi 0, %s43
      %s47 = sphi 0, %s46
      %s63 = sphi 0, %s47
      %s71 = sphi 0, %s73
      %s74 = sphi 0, %s71
      %s75 = sphi 0, %s74
      %s91 = sphi 0, %s75
      %s97 = sphi 0, %s99
      %s100 = sphi 0, %s97
      %s101 = sphi 0, %s100
      %s117 = sphi 0, %s101
      %s123 = sphi 0, %s125
      %s126 = sphi 0, %s123
      %s127 = sphi 0, %s126
      %s143 = sphi 0, %s127
      %s151 = sphi 0, %s153
      %s154 = sphi 0, %s151
      %s155 = sphi 0, %s154
      %s171 = sphi 0, %s155
    $region4: #{resnet_forward.13} parent=1 // loop_header_branch
      %15 = sbr.rel (%p13) target = $region8
    $region5: #{resnet_forward.13} parent=1 // loop_body
      %s17 = ssub.s32 %s12, 1
      %s18 = ssub.s32 %s12, 2
      %s28 = sadd.s32 1, %s21
      %p29 = scmp.ge.s32.totalorder %s28, 1
      %s30 = scalar_select %p29, 0, %s28
      %s31 = sadd.s32 1, %s20
      %s32 = scalar_select %p29, %s31, %s20
      %p33 = scmp.ge.s32.totalorder %s32, 1
      %s34 = scalar_select %p33, 0, %s32
      %s35 = sadd.s32 1, %s19
      %s36 = scalar_select %p33, %s35, %s19
      %p37 = scmp.ge.s32.totalorder %s36, 2
      %s38 = scalar_select %p37, 0, %s36
      %s39 = ssub.s32 %s19, %s38
      %s40 = ssub.s32 %s21, %s30
      %s41 = sor.u32 %s39, %s40
      %p42 = scmp.eq.s32.totalorder %s41, 0
      %s44 = sadd.s32 %s43, 1
      %s45 = scalar_select %p42, %s43, %s44
      %p48 = pneg %p42
      %p49 = scmp.eq.s32.totalorder %s12, 1
      %p50 = por %p48, %p49
      %p51 = scmp.ne.s32.totalorder %s43, %s46
      %p52 = scmp.eq.s32.totalorder %s12, 0
      %p53 = por %p51, %p52
      %p54 = scmp.ne.s32.totalorder %s43, %s46
      %p55 = scmp.eq.s32.totalorder %s17, 1
      %p56 = por %p54, %p55
      %p57 = scmp.ne.s32.totalorder %s46, %s47
      %p58 = scmp.eq.s32.totalorder %s17, 0
      %p59 = por %p57, %p58
      %p60 = scmp.ne.s32.totalorder %s46, %s47
      %p61 = scmp.eq.s32.totalorder %s18, 1
      %p62 = por %p60, %p61
      %p64 = scmp.ne.s32.totalorder %s47, %s63
      %p65 = scmp.eq.s32.totalorder %s18, 0
      %p66 = por %p64, %p65
      %s67 = ssub.s32 %s21, %s30
      %s68 = ssub.s32 %s20, %s34
      %s69 = sor.u32 %s67, %s68
      %p70 = scmp.eq.s32.totalorder %s69, 0
      %s72 = sadd.s32 %s71, 1
      %s73 = scalar_select %p70, %s71, %s72
      %p76 = pneg %p70
      %p77 = scmp.eq.s32.totalorder %s12, 1
      %p78 = por %p76, %p77
      %p79 = scmp.ne.s32.totalorder %s71, %s74
      %p80 = scmp.eq.s32.totalorder %s12, 0
      %p81 = por %p79, %p80
      %p82 = scmp.ne.s32.totalorder %s71, %s74
      %p83 = scmp.eq.s32.totalorder %s17, 1
      %p84 = por %p82, %p83
      %p85 = scmp.ne.s32.totalorder %s74, %s75
      %p86 = scmp.eq.s32.totalorder %s17, 0
      %p87 = por %p85, %p86
      %p88 = scmp.ne.s32.totalorder %s74, %s75
      %p89 = scmp.eq.s32.totalorder %s18, 1
      %p90 = por %p88, %p89
      %p92 = scmp.ne.s32.totalorder %s75, %s91
      %p93 = scmp.eq.s32.totalorder %s18, 0
      %p94 = por %p92, %p93
      %s95 = ssub.s32 %s20, %s34
      %p96 = scmp.eq.s32.totalorder %s95, 0
      %s98 = sadd.s32 %s97, 1
      %s99 = scalar_select %p96, %s97, %s98
      %p102 = pneg %p96
      %p103 = scmp.eq.s32.totalorder %s12, 1
      %p104 = por %p102, %p103
      %p105 = scmp.ne.s32.totalorder %s97, %s100
      %p106 = scmp.eq.s32.totalorder %s12, 0
      %p107 = por %p105, %p106
      %p108 = scmp.ne.s32.totalorder %s97, %s100
      %p109 = scmp.eq.s32.totalorder %s17, 1
      %p110 = por %p108, %p109
      %p111 = scmp.ne.s32.totalorder %s100, %s101
      %p112 = scmp.eq.s32.totalorder %s17, 0
      %p113 = por %p111, %p112
      %p114 = scmp.ne.s32.totalorder %s100, %s101
      %p115 = scmp.eq.s32.totalorder %s18, 1
      %p116 = por %p114, %p115
      %p118 = scmp.ne.s32.totalorder %s101, %s117
      %p119 = scmp.eq.s32.totalorder %s18, 0
      %p120 = por %p118, %p119
      %s121 = ssub.s32 %s20, %s34
      %p122 = scmp.eq.s32.totalorder %s121, 0
      %s124 = sadd.s32 %s123, 1
      %s125 = scalar_select %p122, %s123, %s124
      %p128 = pneg %p122
      %p129 = scmp.eq.s32.totalorder %s12, 1
      %p130 = por %p128, %p129
      %p131 = scmp.ne.s32.totalorder %s123, %s126
      %p132 = scmp.eq.s32.totalorder %s12, 0
      %p133 = por %p131, %p132
      %p134 = scmp.ne.s32.totalorder %s123, %s126
      %p135 = scmp.eq.s32.totalorder %s17, 1
      %p136 = por %p134, %p135
      %p137 = scmp.ne.s32.totalorder %s126, %s127
      %p138 = scmp.eq.s32.totalorder %s17, 0
      %p139 = por %p137, %p138
      %p140 = scmp.ne.s32.totalorder %s126, %s127
      %p141 = scmp.eq.s32.totalorder %s18, 1
      %p142 = por %p140, %p141
      %p144 = scmp.ne.s32.totalorder %s127, %s143
      %p145 = scmp.eq.s32.totalorder %s18, 0
      %p146 = por %p144, %p145
      %s147 = ssub.s32 %s19, %s38
      %s148 = ssub.s32 %s20, %s34
      %s149 = sor.u32 %s147, %s148
      %p150 = scmp.eq.s32.totalorder %s149, 0
      %s152 = sadd.s32 %s151, 1
      %s153 = scalar_select %p150, %s151, %s152
      %p156 = pneg %p150
      %p157 = scmp.eq.s32.totalorder %s12, 1
      %p158 = por %p156, %p157
      %p159 = scmp.ne.s32.totalorder %s151, %s154
      %p160 = scmp.eq.s32.totalorder %s12, 0
      %p161 = por %p159, %p160
      %p162 = scmp.ne.s32.totalorder %s151, %s154
      %p163 = scmp.eq.s32.totalorder %s17, 1
      %p164 = por %p162, %p163
      %p165 = scmp.ne.s32.totalorder %s154, %s155
      %p166 = scmp.eq.s32.totalorder %s17, 0
      %p167 = por %p165, %p166
      %p168 = scmp.ne.s32.totalorder %s154, %s155
      %p169 = scmp.eq.s32.totalorder %s18, 1
      %p170 = por %p168, %p169
      %p172 = scmp.ne.s32.totalorder %s155, %s171
      %p173 = scmp.eq.s32.totalorder %s18, 0
      %p174 = por %p172, %p173
      %p175 = scmp.le.s32.totalorder 1, %s12
      %p176 = scmp.lt.s32.totalorder %s12, 3
      %p177 = pnand %p175, %p176
      %p178 = pneg %p177
      // Predicated region
      $region9: #{resnet_forward.13} parent=5 // pred_check
        _
      $region10: #{resnet_forward.13} parent=5 // pred_check_branch
        %180 = sbr.rel (%p177) target = $region12
      $region11: #{resnet_forward.13} parent=5 // pred_region
        %s181 = ssub.s32 %s12, 1
        // Predicated region
        $region13: #{resnet_forward.13} parent=11 // pred_check
          %p182 = pneg %p87
        $region14: #{resnet_forward.13} parent=11 // pred_check_branch
          %184 = sbr.rel (%p182) target = $region16
        $region15: #{resnet_forward.13} parent=11 // pred_region
          %s185 = smul.u32 7, %s24
          %p186 = scmp.lt.s32.totalorder %s185, 6
          %s187 = scalar_select %p186, %s185, 6
          %p188 = scmp.lt.s32.totalorder %s23, 0
          %s189 = scalar_select %p188, %s23, 0
          %s190 = sadd.s32 %s189, %s187
          %s191 = smul.addr %s190, 4
          %s192 = scalar_lea.vmem %s1, %s191
          %s193 = smul.u32 7, %s24
        $region16: #{resnet_forward.13} parent=11 // pred_fallthru
          _
        // Predicated region
        $region17: #{resnet_forward.13} parent=11 // pred_check
          %p194 = pneg %p113
        $region18: #{resnet_forward.13} parent=11 // pred_check_branch
          %196 = sbr.rel (%p194) target = $region20
        $region19: #{resnet_forward.13} parent=11 // pred_region
          %198 = vsyncadd [#allocation3], 0
          %s199 = scalar_lea.hbm %s2, %s23
          %s201 = sshll.u32 %s199, 4
          %s202 = int_to_ptr.hbm [resolvable:$true] %s201
          %s203 = sshll.u32 [#allocation2], 4
          %s204 = int_to_ptr.vmem [resolvable:$true] %s203
          %206 = dma.hbm_to_vmem [thread:$0]  %s202, 16, %s204, [#allocation3]
        $region20: #{resnet_forward.13} parent=11 // pred_fallthru
          _
        // Predicated region
        $region21: #{resnet_forward.13} parent=11 // pred_check
          %p207 = pneg %p139
        $region22: #{resnet_forward.13} parent=11 // pred_check_branch
          %209 = sbr.rel (%p207) target = $region24
        $region23: #{resnet_forward.13} parent=11 // pred_region
          %211 = vsyncadd [#allocation5], 0
          %s212 = scalar_lea.hbm %s3, %s23
          %s214 = sshll.u32 %s212, 4
          %s215 = int_to_ptr.hbm [resolvable:$true] %s214
          %s216 = sshll.u32 [#allocation4], 4
          %s217 = int_to_ptr.vmem [resolvable:$true] %s216
          %219 = dma.hbm_to_vmem [thread:$0]  %s215, 16, %s217, [#allocation5]
        $region24: #{resnet_forward.13} parent=11 // pred_fallthru
          _
      $region12: #{resnet_forward.13} parent=5 // pred_fallthru
        _
      %p220 = scmp.lt.s32.totalorder %s12, 2
      // Predicated region
      $region25: #{resnet_forward.13} parent=5 // pred_check
        %p221 = pneg %p220
      $region26: #{resnet_forward.13} parent=5 // pred_check_branch
        %223 = sbr.rel (%p221) target = $region28
      $region27: #{resnet_forward.13} parent=5 // pred_region
        // Predicated region
        $region29: #{resnet_forward.13} parent=27 // pred_check
          %p224 = pneg %p53
        $region30: #{resnet_forward.13} parent=27 // pred_check_branch
          %226 = sbr.rel (%p224) target = $region32
        $region31: #{resnet_forward.13} parent=27 // pred_region
          %s227 = smul.u32 32, %s19
          %p228 = scmp.lt.s32.totalorder %s227, 63
          %s229 = scalar_select %p228, %s227, 63
          %p230 = scmp.lt.s32.totalorder %s21, 0
          %s231 = scalar_select %p230, %s21, 0
          %s232 = sadd.s32 %s231, %s229
          %s233 = smul.addr %s232, 4
          %s234 = scalar_lea.vmem %s0, %s233
          %s235 = smul.u32 32, %s19
        $region32: #{resnet_forward.13} parent=27 // pred_fallthru
          _
      $region28: #{resnet_forward.13} parent=5 // pred_fallthru
        _
      %p236 = scmp.le.s32.totalorder 1, %s12
      %p237 = scmp.lt.s32.totalorder %s12, 3
      %p238 = pnand %p236, %p237
      %p239 = pneg %p238
      // Predicated region
      $region33: #{resnet_forward.13} parent=5 // pred_check
        _
      $region34: #{resnet_forward.13} parent=5 // pred_check_branch
        %241 = sbr.rel (%p238) target = $region36
      $region35: #{resnet_forward.13} parent=5 // pred_region
        %s242 = ssub.s32 %s12, 1
        // Predicated region
        $region37: #{resnet_forward.13} parent=35 // pred_check
          %p243 = pneg %p113
        $region38: #{resnet_forward.13} parent=35 // pred_check_branch
          %245 = sbr.rel (%p243) target = $region40
        $region39: #{resnet_forward.13} parent=35 // pred_region
          %247 = dma.done [#allocation3], 16
        $region40: #{resnet_forward.13} parent=35 // pred_fallthru
          _
        // Predicated region
        $region41: #{resnet_forward.13} parent=35 // pred_check
          %p248 = pneg %p139
        $region42: #{resnet_forward.13} parent=35 // pred_check_branch
          %250 = sbr.rel (%p248) target = $region44
        $region43: #{resnet_forward.13} parent=35 // pred_region
          %252 = dma.done [#allocation5], 16
        $region44: #{resnet_forward.13} parent=35 // pred_fallthru
          _
        %s253 = smul.u32 32, %s22
        %p254 = scmp.lt.s32.totalorder %s253, 63
        %s255 = scalar_select %p254, %s253, 63
        %p256 = scmp.lt.s32.totalorder %s24, 0
        %s257 = scalar_select %p256, %s24, 0
        %s258 = sadd.s32 %s257, %s255
        %s259 = smul.addr %s258, 4
        %s260 = scalar_lea.vmem %s0, %s259
        %p261 = pneg %p59
        %p262 = pneg %p56
        %s263 = smul.u32 7, %s24
        %p264 = scmp.lt.s32.totalorder %s263, 6
        %s265 = scalar_select %p264, %s263, 6
        %p266 = scmp.lt.s32.totalorder %s23, 0
        %s267 = scalar_select %p266, %s23, 0
        %s268 = sadd.s32 %s267, %s265
        %s269 = smul.addr %s268, 4
        %s270 = scalar_lea.vmem %s1, %s269
        %p271 = pneg %p87
        %p272 = pneg %p84
        %p273 = pneg %p113
        %p274 = pneg %p110
        %p275 = pneg %p139
        %p276 = pneg %p136
        %p277 = pneg %p167
        %p278 = pneg %p164
        %s279 = smul.u32 32, %s22
        %p280 = scmp.lt.s32.totalorder %s279, 63
        %s281 = scalar_select %p280, %s279, 63
        %p282 = scmp.lt.s32.totalorder %s23, 0
        %s283 = scalar_select %p282, %s23, 0
        %s284 = sadd.s32 %s283, %s281
        %s285 = smul.addr %s284, 8
        %s286 = scalar_lea.vmem %s4, %s285
        %s287 = smul.u32 32, %s22
        %p288 = scmp.lt.s32.totalorder %s287, 63
        %s289 = scalar_select %p288, %s287, 63
        %p290 = scmp.lt.s32.totalorder %s24, 0
        %s291 = scalar_select %p290, %s24, 0
        %s292 = sadd.s32 %s291, %s289
        %s293 = smul.addr %s292, 4
        %s294 = scalar_lea.vmem %s0, %s293
        %s295 = smul.u32 32, %s22
        %s296 = smul.u32 7, %s24
        %p297 = scmp.lt.s32.totalorder %s296, 6
        %s298 = scalar_select %p297, %s296, 6
        %p299 = scmp.lt.s32.totalorder %s23, 0
        %s300 = scalar_select %p299, %s23, 0
        %s301 = sadd.s32 %s300, %s298
        %s302 = smul.addr %s301, 4
        %s303 = scalar_lea.vmem %s1, %s302
        %s304 = smul.u32 7, %s24
        %s305 = smul.u32 32, %s22
        %p306 = scmp.lt.s32.totalorder %s305, 63
        %s307 = scalar_select %p306, %s305, 63
        %p308 = scmp.lt.s32.totalorder %s23, 0
        %s309 = scalar_select %p308, %s23, 0
        %s310 = sadd.s32 %s309, %s307
        %s311 = smul.addr %s310, 8
        %s312 = scalar_lea.vmem %s4, %s311
        %s313 = smul.u32 32, %s22
        %v315 = vld [vmem:[%s294] sm:$0xf]
        %v316 = vld [vmem:[%s294 + $0x4] sm:$0xf]
        %v317 = vld [vmem:[%s294 + $0x8] sm:$0xf]
        %v318 = vld [vmem:[%s294 + $0xc] sm:$0xf]
        %v319 = vld [vmem:[%s294 + $0x10] sm:$0xf]
        %v320 = vld [vmem:[%s294 + $0x14] sm:$0xf]
        %v321 = vld [vmem:[%s294 + $0x18] sm:$0xf]
        %v322 = vld [vmem:[%s294 + $0x1c] sm:$0xf]
        %v323 = vld [vmem:[%s294 + $0x20] sm:$0xf]
        %v324 = vld [vmem:[%s294 + $0x24] sm:$0xf]
        %v325 = vld [vmem:[%s294 + $0x28] sm:$0xf]
        %v326 = vld [vmem:[%s294 + $0x2c] sm:$0xf]
        %v327 = vld [vmem:[%s294 + $0x30] sm:$0xf]
        %v328 = vld [vmem:[%s294 + $0x34] sm:$0xf]
        %v329 = vld [vmem:[%s294 + $0x38] sm:$0xf]
        %v330 = vld [vmem:[%s294 + $0x3c] sm:$0xf]
        %v331 = vld [vmem:[%s294 + $0x40] sm:$0xf]
        %v332 = vld [vmem:[%s294 + $0x44] sm:$0xf]
        %v333 = vld [vmem:[%s294 + $0x48] sm:$0xf]
        %v334 = vld [vmem:[%s294 + $0x4c] sm:$0xf]
        %v335 = vld [vmem:[%s294 + $0x50] sm:$0xf]
        %v336 = vld [vmem:[%s294 + $0x54] sm:$0xf]
        %v337 = vld [vmem:[%s294 + $0x58] sm:$0xf]
        %v338 = vld [vmem:[%s294 + $0x5c] sm:$0xf]
        %v339 = vld [vmem:[%s294 + $0x60] sm:$0xf]
        %v340 = vld [vmem:[%s294 + $0x64] sm:$0xf]
        %v341 = vld [vmem:[%s294 + $0x68] sm:$0xf]
        %v342 = vld [vmem:[%s294 + $0x6c] sm:$0xf]
        %v343 = vld [vmem:[%s294 + $0x70] sm:$0xf]
        %v344 = vld [vmem:[%s294 + $0x74] sm:$0xf]
        %v345 = vld [vmem:[%s294 + $0x78] sm:$0xf]
        %v346 = vld [vmem:[%s294 + $0x7c] sm:$0xf]
        %v347 = vld [vmem:[%s303] sm:$0xf]
        %v348 = vld [vmem:[%s303 + $0x4] sm:$0xf]
        %v349 = vld [vmem:[%s303 + $0x8] sm:$0xf]
        %v350 = vld [vmem:[%s303 + $0xc] sm:$0xf]
        %v351 = vld [vmem:[%s303 + $0x10] sm:$0xf]
        %v352 = vld [vmem:[%s303 + $0x14] sm:$0xf]
        %v353 = vld [vmem:[%s303 + $0x18] sm:$0x1]
        %v386 = vunpack.c.l.b16 %v315
        %v387 = vunpack.c.l.b16 %v316
        %v388 = vunpack.c.l.b16 %v317
        %v389 = vunpack.c.l.b16 %v318
        %v390 = vunpack.c.l.b16 %v319
        %v391 = vunpack.c.l.b16 %v320
        %v392 = vunpack.c.l.b16 %v321
        %v393 = vunpack.c.l.b16 %v322
        %v394 = vunpack.c.l.b16 %v323
        %v395 = vunpack.c.l.b16 %v324
        %v396 = vunpack.c.l.b16 %v325
        %v397 = vunpack.c.l.b16 %v326
        %v398 = vunpack.c.l.b16 %v327
        %v399 = vunpack.c.l.b16 %v328
        %v400 = vunpack.c.l.b16 %v329
        %v401 = vunpack.c.l.b16 %v330
        %v402 = vunpack.c.l.b16 %v331
        %v403 = vunpack.c.l.b16 %v332
        %v404 = vunpack.c.l.b16 %v333
        %v405 = vunpack.c.l.b16 %v334
        %v406 = vunpack.c.l.b16 %v335
        %v407 = vunpack.c.l.b16 %v336
        %v408 = vunpack.c.l.b16 %v337
        %v409 = vunpack.c.l.b16 %v338
        %v410 = vunpack.c.l.b16 %v339
        %v411 = vunpack.c.l.b16 %v340
        %v412 = vunpack.c.l.b16 %v341
        %v413 = vunpack.c.l.b16 %v342
        %v414 = vunpack.c.l.b16 %v343
        %v415 = vunpack.c.l.b16 %v344
        %v416 = vunpack.c.l.b16 %v345
        %v417 = vunpack.c.l.b16 %v346
        %v418 = vpack.c.b16 %v387, %v386
        %v419 = vpack.c.b16 %v389, %v388
        %v420 = vpack.c.b16 %v391, %v390
        %v421 = vpack.c.b16 %v393, %v392
        %v422 = vpack.c.b16 %v395, %v394
        %v423 = vpack.c.b16 %v397, %v396
        %v424 = vpack.c.b16 %v399, %v398
        %v425 = vpack.c.b16 %v401, %v400
        %v426 = vpack.c.b16 %v403, %v402
        %v427 = vpack.c.b16 %v405, %v404
        %v428 = vpack.c.b16 %v407, %v406
        %v429 = vpack.c.b16 %v409, %v408
        %v430 = vpack.c.b16 %v411, %v410
        %v431 = vpack.c.b16 %v413, %v412
        %v432 = vpack.c.b16 %v415, %v414
        %v433 = vpack.c.b16 %v417, %v416
        %v441 = vunpack.c.l.b16 %v347
        %v442 = vunpack.c.l.b16 %v348
        %v443 = vunpack.c.l.b16 %v349
        %v444 = vunpack.c.l.b16 %v350
        %v445 = vunpack.c.l.b16 %v351
        %v446 = vunpack.c.l.b16 %v352
        %v447 = vunpack.c.l.b16 %v353
        %v448 = vpack.c.b16 %v442, %v441
        %v449 = vpack.c.b16 %v444, %v443
        %v450 = vpack.c.b16 %v446, %v445
        %v451 = vpack.c.b16 %v447, %v447
        %vm455 = vcmask 400384
        %v457 = vsel %vm455, %v418, 0
        %v460 = vsel %vm455, %v419, 0
        %v463 = vsel %vm455, %v420, 0
        %v466 = vsel %vm455, %v421, 0
        %v469 = vsel %vm455, %v422, 0
        %v472 = vsel %vm455, %v423, 0
        %v475 = vsel %vm455, %v424, 0
        %v478 = vsel %vm455, %v425, 0
        %v481 = vsel %vm455, %v426, 0
        %v484 = vsel %vm455, %v427, 0
        %v487 = vsel %vm455, %v428, 0
        %v490 = vsel %vm455, %v429, 0
        %v493 = vsel %vm455, %v430, 0
        %v496 = vsel %vm455, %v431, 0
        %v499 = vsel %vm455, %v432, 0
        %v502 = vsel %vm455, %v433, 0
        %vm504 = vcmask 1040384
        %v505 = vsel 0, 4294967295, 65535
        %v506 = vsel %vm504, %v505, 0
        %v508 = vand.u32 %v451, %v506
        %510 = vmatpush.bf16.msra.mxu0 0
        %511 = vmatpush.bf16.msra.mxu0 0
        %512 = vmatpush.bf16.msra.mxu0 0
        %513 = vmatpush.bf16.msra.mxu0 0
        %514 = vmatpush.bf16.msra.mxu0 %v508
        %515 = vmatpush.bf16.msra.mxu0 %v450
        %516 = vmatpush.bf16.msra.mxu0 %v449
        %517 = vmatpush.bf16.msra.mxu0 %v448
        %518 = vmatmul.bf16.gmra.mxu0 %v457
        %v519 = vpop.f32.mrf.mxu0
        %v520 = vadd.f32 0.0, %v519
        %v521 = vpop.f32.mrf.mxu0
        %v522 = vadd.f32 0.0, %v521
        %523 = vmatmul.bf16.gmra.mxu0 %v460
        %v524 = vpop.f32.mrf.mxu0
        %v525 = vadd.f32 0.0, %v524
        %v526 = vpop.f32.mrf.mxu0
        %v527 = vadd.f32 0.0, %v526
        %528 = vmatmul.bf16.gmra.mxu0 %v463
        %v529 = vpop.f32.mrf.mxu0
        %v530 = vadd.f32 0.0, %v529
        %v531 = vpop.f32.mrf.mxu0
        %v532 = vadd.f32 0.0, %v531
        %533 = vmatmul.bf16.gmra.mxu0 %v466
        %v534 = vpop.f32.mrf.mxu0
        %v535 = vadd.f32 0.0, %v534
        %v536 = vpop.f32.mrf.mxu0
        %v537 = vadd.f32 0.0, %v536
        %538 = vmatmul.bf16.gmra.mxu0 %v469
        %v539 = vpop.f32.mrf.mxu0
        %v540 = vadd.f32 0.0, %v539
        %v541 = vpop.f32.mrf.mxu0
        %v542 = vadd.f32 0.0, %v541
        %543 = vmatmul.bf16.gmra.mxu0 %v472
        %v544 = vpop.f32.mrf.mxu0
        %v545 = vadd.f32 0.0, %v544
        %v546 = vpop.f32.mrf.mxu0
        %v547 = vadd.f32 0.0, %v546
        %548 = vmatmul.bf16.gmra.mxu0 %v475
        %v549 = vpop.f32.mrf.mxu0
        %v550 = vadd.f32 0.0, %v549
        %v551 = vpop.f32.mrf.mxu0
        %v552 = vadd.f32 0.0, %v551
        %553 = vmatmul.bf16.gmra.mxu0 %v478
        %v554 = vpop.f32.mrf.mxu0
        %v555 = vadd.f32 0.0, %v554
        %v556 = vpop.f32.mrf.mxu0
        %v557 = vadd.f32 0.0, %v556
        %558 = vmatmul.bf16.gmra.mxu0 %v481
        %v559 = vpop.f32.mrf.mxu0
        %v560 = vadd.f32 0.0, %v559
        %v561 = vpop.f32.mrf.mxu0
        %v562 = vadd.f32 0.0, %v561
        %563 = vmatmul.bf16.gmra.mxu0 %v484
        %v564 = vpop.f32.mrf.mxu0
        %v565 = vadd.f32 0.0, %v564
        %v566 = vpop.f32.mrf.mxu0
        %v567 = vadd.f32 0.0, %v566
        %568 = vmatmul.bf16.gmra.mxu0 %v487
        %v569 = vpop.f32.mrf.mxu0
        %v570 = vadd.f32 0.0, %v569
        %v571 = vpop.f32.mrf.mxu0
        %v572 = vadd.f32 0.0, %v571
        %573 = vmatmul.bf16.gmra.mxu0 %v490
        %v574 = vpop.f32.mrf.mxu0
        %v575 = vadd.f32 0.0, %v574
        %v576 = vpop.f32.mrf.mxu0
        %v577 = vadd.f32 0.0, %v576
        %578 = vmatmul.bf16.gmra.mxu0 %v493
        %v579 = vpop.f32.mrf.mxu0
        %v580 = vadd.f32 0.0, %v579
        %v581 = vpop.f32.mrf.mxu0
        %v582 = vadd.f32 0.0, %v581
        %583 = vmatmul.bf16.gmra.mxu0 %v496
        %v584 = vpop.f32.mrf.mxu0
        %v585 = vadd.f32 0.0, %v584
        %v586 = vpop.f32.mrf.mxu0
        %v587 = vadd.f32 0.0, %v586
        %588 = vmatmul.bf16.gmra.mxu0 %v499
        %v589 = vpop.f32.mrf.mxu0
        %v590 = vadd.f32 0.0, %v589
        %v591 = vpop.f32.mrf.mxu0
        %v592 = vadd.f32 0.0, %v591
        %593 = vmatmul.bf16.gmra.mxu0 %v502
        %v594 = vpop.f32.mrf.mxu0
        %v595 = vadd.f32 0.0, %v594
        %v596 = vpop.f32.mrf.mxu0
        %v597 = vadd.f32 0.0, %v596
        %598 = vdwg.mxu0
        %v599 = vld [vmem:[#allocation2] sm:$0x1]
        %v601 = vperm.slane %v599, 0
        %v603 = vmul.f32 %v520, %v601
        %v604 = vmul.f32 %v522, %v601
        %v605 = vmul.f32 %v525, %v601
        %v606 = vmul.f32 %v527, %v601
        %v607 = vmul.f32 %v530, %v601
        %v608 = vmul.f32 %v532, %v601
        %v609 = vmul.f32 %v535, %v601
        %v610 = vmul.f32 %v537, %v601
        %v611 = vmul.f32 %v540, %v601
        %v612 = vmul.f32 %v542, %v601
        %v613 = vmul.f32 %v545, %v601
        %v614 = vmul.f32 %v547, %v601
        %v615 = vmul.f32 %v550, %v601
        %v616 = vmul.f32 %v552, %v601
        %v617 = vmul.f32 %v555, %v601
        %v618 = vmul.f32 %v557, %v601
        %v619 = vmul.f32 %v560, %v601
        %v620 = vmul.f32 %v562, %v601
        %v621 = vmul.f32 %v565, %v601
        %v622 = vmul.f32 %v567, %v601
        %v623 = vmul.f32 %v570, %v601
        %v624 = vmul.f32 %v572, %v601
        %v625 = vmul.f32 %v575, %v601
        %v626 = vmul.f32 %v577, %v601
        %v627 = vmul.f32 %v580, %v601
        %v628 = vmul.f32 %v582, %v601
        %v629 = vmul.f32 %v585, %v601
        %v630 = vmul.f32 %v587, %v601
        %v631 = vmul.f32 %v590, %v601
        %v632 = vmul.f32 %v592, %v601
        %v633 = vmul.f32 %v595, %v601
        %v634 = vmul.f32 %v597, %v601
        %v635 = vld [vmem:[#allocation4] sm:$0x1]
        %v637 = vperm.slane %v635, 0
        %v639 = vadd.f32 %v603, %v637
        %v640 = vadd.f32 %v604, %v637
        %v641 = vadd.f32 %v605, %v637
        %v642 = vadd.f32 %v606, %v637
        %v643 = vadd.f32 %v607, %v637
        %v644 = vadd.f32 %v608, %v637
        %v645 = vadd.f32 %v609, %v637
        %v646 = vadd.f32 %v610, %v637
        %v647 = vadd.f32 %v611, %v637
        %v648 = vadd.f32 %v612, %v637
        %v649 = vadd.f32 %v613, %v637
        %v650 = vadd.f32 %v614, %v637
        %v651 = vadd.f32 %v615, %v637
        %v652 = vadd.f32 %v616, %v637
        %v653 = vadd.f32 %v617, %v637
        %v654 = vadd.f32 %v618, %v637
        %v655 = vadd.f32 %v619, %v637
        %v656 = vadd.f32 %v620, %v637
        %v657 = vadd.f32 %v621, %v637
        %v658 = vadd.f32 %v622, %v637
        %v659 = vadd.f32 %v623, %v637
        %v660 = vadd.f32 %v624, %v637
        %v661 = vadd.f32 %v625, %v637
        %v662 = vadd.f32 %v626, %v637
        %v663 = vadd.f32 %v627, %v637
        %v664 = vadd.f32 %v628, %v637
        %v665 = vadd.f32 %v629, %v637
        %v666 = vadd.f32 %v630, %v637
        %v667 = vadd.f32 %v631, %v637
        %v668 = vadd.f32 %v632, %v637
        %v669 = vadd.f32 %v633, %v637
        %v670 = vadd.f32 %v634, %v637
        %v671 = vmax.f32 %v639, 0.0
        %v672 = vmax.f32 %v640, 0.0
        %v673 = vmax.f32 %v641, 0.0
        %v674 = vmax.f32 %v642, 0.0
        %v675 = vmax.f32 %v643, 0.0
        %v676 = vmax.f32 %v644, 0.0
        %v677 = vmax.f32 %v645, 0.0
        %v678 = vmax.f32 %v646, 0.0
        %v679 = vmax.f32 %v647, 0.0
        %v680 = vmax.f32 %v648, 0.0
        %v681 = vmax.f32 %v649, 0.0
        %v682 = vmax.f32 %v650, 0.0
        %v683 = vmax.f32 %v651, 0.0
        %v684 = vmax.f32 %v652, 0.0
        %v685 = vmax.f32 %v653, 0.0
        %v686 = vmax.f32 %v654, 0.0
        %v687 = vmax.f32 %v655, 0.0
        %v688 = vmax.f32 %v656, 0.0
        %v689 = vmax.f32 %v657, 0.0
        %v690 = vmax.f32 %v658, 0.0
        %v691 = vmax.f32 %v659, 0.0
        %v692 = vmax.f32 %v660, 0.0
        %v693 = vmax.f32 %v661, 0.0
        %v694 = vmax.f32 %v662, 0.0
        %v695 = vmax.f32 %v663, 0.0
        %v696 = vmax.f32 %v664, 0.0
        %v697 = vmax.f32 %v665, 0.0
        %v698 = vmax.f32 %v666, 0.0
        %v699 = vmax.f32 %v667, 0.0
        %v700 = vmax.f32 %v668, 0.0
        %v701 = vmax.f32 %v669, 0.0
        %v702 = vmax.f32 %v670, 0.0
        %vm703 = vcmask 523264
        %704 = vst.msk [vmem:[%s312] sm:$0xff] %vm703, %v671
        %705 = vst.msk [vmem:[%s312 + $0x8] sm:$0xff] %vm703, %v672
        %706 = vst.msk [vmem:[%s312 + $0x10] sm:$0xff] %vm703, %v673
        %707 = vst.msk [vmem:[%s312 + $0x18] sm:$0xff] %vm703, %v674
        %708 = vst.msk [vmem:[%s312 + $0x20] sm:$0xff] %vm703, %v675
        %709 = vst.msk [vmem:[%s312 + $0x28] sm:$0xff] %vm703, %v676
        %710 = vst.msk [vmem:[%s312 + $0x30] sm:$0xff] %vm703, %v677
        %711 = vst.msk [vmem:[%s312 + $0x38] sm:$0xff] %vm703, %v678
        %712 = vst.msk [vmem:[%s312 + $0x40] sm:$0xff] %vm703, %v679
        %713 = vst.msk [vmem:[%s312 + $0x48] sm:$0xff] %vm703, %v680
        %714 = vst.msk [vmem:[%s312 + $0x50] sm:$0xff] %vm703, %v681
        %715 = vst.msk [vmem:[%s312 + $0x58] sm:$0xff] %vm703, %v682
        %716 = vst.msk [vmem:[%s312 + $0x60] sm:$0xff] %vm703, %v683
        %717 = vst.msk [vmem:[%s312 + $0x68] sm:$0xff] %vm703, %v684
        %718 = vst.msk [vmem:[%s312 + $0x70] sm:$0xff] %vm703, %v685
        %719 = vst.msk [vmem:[%s312 + $0x78] sm:$0xff] %vm703, %v686
        %720 = vst.msk [vmem:[%s312 + $0x80] sm:$0xff] %vm703, %v687
        %721 = vst.msk [vmem:[%s312 + $0x88] sm:$0xff] %vm703, %v688
        %722 = vst.msk [vmem:[%s312 + $0x90] sm:$0xff] %vm703, %v689
        %723 = vst.msk [vmem:[%s312 + $0x98] sm:$0xff] %vm703, %v690
        %724 = vst.msk [vmem:[%s312 + $0xa0] sm:$0xff] %vm703, %v691
        %725 = vst.msk [vmem:[%s312 + $0xa8] sm:$0xff] %vm703, %v692
        %726 = vst.msk [vmem:[%s312 + $0xb0] sm:$0xff] %vm703, %v693
        %727 = vst.msk [vmem:[%s312 + $0xb8] sm:$0xff] %vm703, %v694
        %728 = vst.msk [vmem:[%s312 + $0xc0] sm:$0xff] %vm703, %v695
        %729 = vst.msk [vmem:[%s312 + $0xc8] sm:$0xff] %vm703, %v696
        %730 = vst.msk [vmem:[%s312 + $0xd0] sm:$0xff] %vm703, %v697
        %731 = vst.msk [vmem:[%s312 + $0xd8] sm:$0xff] %vm703, %v698
        %732 = vst.msk [vmem:[%s312 + $0xe0] sm:$0xff] %vm703, %v699
        %733 = vst.msk [vmem:[%s312 + $0xe8] sm:$0xff] %vm703, %v700
        %734 = vst.msk [vmem:[%s312 + $0xf0] sm:$0xff] %vm703, %v701
        %735 = vst.msk [vmem:[%s312 + $0xf8] sm:$0xff] %vm703, %v702
        %s736 = smul.u32 32, %s22
        %p737 = scmp.lt.s32.totalorder %s736, 63
        %s738 = scalar_select %p737, %s736, 63
        %p739 = scmp.lt.s32.totalorder %s23, 0
        %s740 = scalar_select %p739, %s23, 0
        %s741 = sadd.s32 %s740, %s738
        %s742 = smul.addr %s741, 8
        %s743 = scalar_lea.vmem %s4, %s742
        // Predicated region
        $region45: #{resnet_forward.13} parent=35 // pred_check
          %p744 = pneg %p164
        $region46: #{resnet_forward.13} parent=35 // pred_check_branch
          %746 = sbr.rel (%p744) target = $region48
        $region47: #{resnet_forward.13} parent=35 // pred_region
          %s747 = smul.u32 32, %s22
        $region48: #{resnet_forward.13} parent=35 // pred_fallthru
          _
      $region36: #{resnet_forward.13} parent=5 // pred_fallthru
        _
      %p748 = scmp.le.s32.totalorder 2, %s12
      // Predicated region
      $region49: #{resnet_forward.13} parent=5 // pred_check
        %p749 = pneg %p748
      $region50: #{resnet_forward.13} parent=5 // pred_check_branch
        %751 = sbr.rel (%p749) target = $region52
      $region51: #{resnet_forward.13} parent=5 // pred_region
        %s752 = ssub.s32 %s12, 2
        // Predicated region
        $region53: #{resnet_forward.13} parent=51 // pred_check
          %p753 = pneg %p170
        $region54: #{resnet_forward.13} parent=51 // pred_check_branch
          %755 = sbr.rel (%p753) target = $region56
        $region55: #{resnet_forward.13} parent=51 // pred_region
          %s756 = smul.u32 32, %s25
          %p757 = scmp.lt.s32.totalorder %s756, 63
          %s758 = scalar_select %p757, %s756, 63
          %p759 = scmp.lt.s32.totalorder %s26, 0
          %s760 = scalar_select %p759, %s26, 0
          %s761 = sadd.s32 %s760, %s758
          %s762 = smul.addr %s761, 8
          %s763 = scalar_lea.vmem %s4, %s762
        $region56: #{resnet_forward.13} parent=51 // pred_fallthru
          _
      $region52: #{resnet_forward.13} parent=5 // pred_fallthru
        _
    $region6: #{resnet_forward.13} parent=1 // loop_footer
      %s16 = sadd.s32 1, %s12
    $region7: #{resnet_forward.13} parent=1 // loop_footer_branch
      %11 = sbr.rel target = $region3
    $region8: #{resnet_forward.13} parent=1 // loop_exit
      _
    %764 = vsyncpa [#allocation3], 1
    %s765 = scalar_lea.sflag [#allocation3], 1
    %766 = vsyncpa %s765, 1
    %767 = vsyncpa [#allocation5], 1

// kernel: resnet_forward.14
$region0: #{resnet_forward.14}
  #allocation0 [shape = 'u32[]', space=smem, size = 0x4, offset = 0x4, fixed_abs, tag = 'smem constant byte address 0x4 - core index']
  #allocation1 [shape = 'u32[72,128]{1,0:T(1,128)}', space=vmem, size = 0x9000, scoped, tag = 'internal scratch']
  %s0 = inlined_call_operand.vmem [shape: f32[9,128,64], index: 0, kind: input, shape index: {}]
  %s1 = inlined_call_operand.vmem [shape: f32[128,64], index: 1, kind: output, shape index: {}]
  %s2 = sld [smem:[#allocation0]]
  $region45: #{resnet_forward.14} parent=0
    _
  %s4 = ssub.s32 1, %s2
  %s5 = scalar_select 0, %s4, %s2
  loop: start=0, step=1, limit=11
  $region2: #{resnet_forward.14} parent=0 // loop_pre_header
    _
  $region3: #{resnet_forward.14} parent=0 // loop_header
    %s7 = sphi 0, %s11
    %p8 = scmp.ge.s32.totalorder %s7, 11
    %s14 = sphi 0, %s26
    %s15 = sphi 0, %s22
    %s16 = sphi 0, %s14
    %s17 = sphi 0, %s15
    %s18 = sphi 0, %s16
    %s19 = sphi 0, %s17
    %s31 = sphi 0, %s33
    %s34 = sphi 0, %s31
    %s35 = sphi 0, %s34
    %s51 = sphi 0, %s35
    %s57 = sphi 0, %s59
    %s60 = sphi 0, %s57
    %s61 = sphi 0, %s60
    %s77 = sphi 0, %s61
  $region4: #{resnet_forward.14} parent=0 // loop_header_branch
    %10 = sbr.rel (%p8) target = $region8
  $region5: #{resnet_forward.14} parent=0 // loop_body
    %s12 = ssub.s32 %s7, 1
    %s13 = ssub.s32 %s7, 2
    %s20 = sadd.s32 1, %s15
    %p21 = scmp.ge.s32.totalorder %s20, 9
    %s22 = scalar_select %p21, 0, %s20
    %s23 = sadd.s32 1, %s14
    %s24 = scalar_select %p21, %s23, %s14
    %p25 = scmp.ge.s32.totalorder %s24, 1
    %s26 = scalar_select %p25, 0, %s24
    %s27 = ssub.s32 %s15, %s22
    %s28 = ssub.s32 %s14, %s26
    %s29 = sor.u32 %s27, %s28
    %p30 = scmp.eq.s32.totalorder %s29, 0
    %s32 = sadd.s32 %s31, 1
    %s33 = scalar_select %p30, %s31, %s32
    %p36 = pneg %p30
    %p37 = scmp.eq.s32.totalorder %s7, 8
    %p38 = por %p36, %p37
    %p39 = scmp.ne.s32.totalorder %s31, %s34
    %p40 = scmp.eq.s32.totalorder %s7, 0
    %p41 = por %p39, %p40
    %p42 = scmp.ne.s32.totalorder %s31, %s34
    %p43 = scmp.eq.s32.totalorder %s12, 8
    %p44 = por %p42, %p43
    %p45 = scmp.ne.s32.totalorder %s34, %s35
    %p46 = scmp.eq.s32.totalorder %s12, 0
    %p47 = por %p45, %p46
    %p48 = scmp.ne.s32.totalorder %s34, %s35
    %p49 = scmp.eq.s32.totalorder %s13, 8
    %p50 = por %p48, %p49
    %p52 = scmp.ne.s32.totalorder %s35, %s51
    %p53 = scmp.eq.s32.totalorder %s13, 0
    %p54 = por %p52, %p53
    %s55 = ssub.s32 %s14, %s26
    %p56 = scmp.eq.s32.totalorder %s55, 0
    %s58 = sadd.s32 %s57, 1
    %s59 = scalar_select %p56, %s57, %s58
    %p62 = pneg %p56
    %p63 = scmp.eq.s32.totalorder %s7, 8
    %p64 = por %p62, %p63
    %p65 = scmp.ne.s32.totalorder %s57, %s60
    %p66 = scmp.eq.s32.totalorder %s7, 0
    %p67 = por %p65, %p66
    %p68 = scmp.ne.s32.totalorder %s57, %s60
    %p69 = scmp.eq.s32.totalorder %s12, 8
    %p70 = por %p68, %p69
    %p71 = scmp.ne.s32.totalorder %s60, %s61
    %p72 = scmp.eq.s32.totalorder %s12, 0
    %p73 = por %p71, %p72
    %p74 = scmp.ne.s32.totalorder %s60, %s61
    %p75 = scmp.eq.s32.totalorder %s13, 8
    %p76 = por %p74, %p75
    %p78 = scmp.ne.s32.totalorder %s61, %s77
    %p79 = scmp.eq.s32.totalorder %s13, 0
    %p80 = por %p78, %p79
    %p81 = scmp.le.s32.totalorder 1, %s7
    %p82 = scmp.lt.s32.totalorder %s7, 10
    %p83 = pnand %p81, %p82
    %p84 = pneg %p83
    // Predicated region
    $region9: #{resnet_forward.14} parent=5 // pred_check
      _
    $region10: #{resnet_forward.14} parent=5 // pred_check_branch
      %86 = sbr.rel (%p83) target = $region12
    $region11: #{resnet_forward.14} parent=5 // pred_region
      %s87 = ssub.s32 %s7, 1
    $region12: #{resnet_forward.14} parent=5 // pred_fallthru
      _
    %p88 = scmp.lt.s32.totalorder %s7, 9
    // Predicated region
    $region13: #{resnet_forward.14} parent=5 // pred_check
      %p89 = pneg %p88
    $region14: #{resnet_forward.14} parent=5 // pred_check_branch
      %91 = sbr.rel (%p89) target = $region16
    $region15: #{resnet_forward.14} parent=5 // pred_region
      // Predicated region
      $region17: #{resnet_forward.14} parent=15 // pred_check
        %p92 = pneg %p41
      $region18: #{resnet_forward.14} parent=15 // pred_check_branch
        %94 = sbr.rel (%p92) target = $region20
      $region19: #{resnet_forward.14} parent=15 // pred_region
        %s95 = smul.u32 16, %s14
        %p96 = scmp.lt.s32.totalorder %s15, 8
        %s97 = scalar_select %p96, %s15, 8
        %p98 = scmp.lt.s32.totalorder %s95, 15
        %s99 = scalar_select %p98, %s95, 15
        %s100 = smul.addr %s97, 16
        %s101 = sadd.s32 %s99, %s100
        %s102 = smul.addr %s101, 8
        %s103 = scalar_lea.vmem %s0, %s102
        %s104 = smul.u32 16, %s14
      $region20: #{resnet_forward.14} parent=15 // pred_fallthru
        _
    $region16: #{resnet_forward.14} parent=5 // pred_fallthru
      _
    %p105 = scmp.le.s32.totalorder 1, %s7
    %p106 = scmp.lt.s32.totalorder %s7, 10
    %p107 = pnand %p105, %p106
    %p108 = pneg %p107
    // Predicated region
    $region21: #{resnet_forward.14} parent=5 // pred_check
      _
    $region22: #{resnet_forward.14} parent=5 // pred_check_branch
      %110 = sbr.rel (%p107) target = $region24
    $region23: #{resnet_forward.14} parent=5 // pred_region
      %s111 = ssub.s32 %s7, 1
      %s112 = smul.u32 16, %s16
      %p113 = scmp.lt.s32.totalorder %s17, 8
      %s114 = scalar_select %p113, %s17, 8
      %p115 = scmp.lt.s32.totalorder %s112, 15
      %s116 = scalar_select %p115, %s112, 15
      %s117 = smul.addr %s114, 16
      %s118 = sadd.s32 %s116, %s117
      %s119 = smul.addr %s118, 8
      %s120 = scalar_lea.vmem %s0, %s119
      %p121 = pneg %p47
      %p122 = pneg %p44
      %p123 = pneg %p73
      %p124 = pneg %p70
      %s125 = smul.u32 16, %s16
      %p126 = scmp.lt.s32.totalorder %s125, 15
      %s127 = scalar_select %p126, %s125, 15
      %s128 = smul.addr %s127, 8
      %s129 = scalar_lea.vmem %s1, %s128
      %s130 = smul.u32 16, %s16
      %p131 = scmp.lt.s32.totalorder %s17, 8
      %s132 = scalar_select %p131, %s17, 8
      %p133 = scmp.lt.s32.totalorder %s130, 15
      %s134 = scalar_select %p133, %s130, 15
      %s135 = smul.addr %s132, 16
      %s136 = sadd.s32 %s134, %s135
      %s137 = smul.addr %s136, 8
      %s138 = scalar_lea.vmem %s0, %s137
      %s139 = smul.u32 16, %s16
      %s140 = smul.u32 16, %s16
      %p141 = scmp.lt.s32.totalorder %s140, 15
      %s142 = scalar_select %p141, %s140, 15
      %s143 = smul.addr %s142, 8
      %s144 = scalar_lea.vmem %s1, %s143
      %s145 = smul.u32 16, %s16
      %v146 = vld [vmem:[%s138] sm:$0xff]
      %v147 = vld [vmem:[%s138 + $0x8] sm:$0xff]
      %v148 = vld [vmem:[%s138 + $0x10] sm:$0xff]
      %v149 = vld [vmem:[%s138 + $0x18] sm:$0xff]
      %v150 = vld [vmem:[%s138 + $0x20] sm:$0xff]
      %v151 = vld [vmem:[%s138 + $0x28] sm:$0xff]
      %v152 = vld [vmem:[%s138 + $0x30] sm:$0xff]
      %v153 = vld [vmem:[%s138 + $0x38] sm:$0xff]
      %v154 = vld [vmem:[%s138 + $0x40] sm:$0xff]
      %v155 = vld [vmem:[%s138 + $0x48] sm:$0xff]
      %v156 = vld [vmem:[%s138 + $0x50] sm:$0xff]
      %v157 = vld [vmem:[%s138 + $0x58] sm:$0xff]
      %v158 = vld [vmem:[%s138 + $0x60] sm:$0xff]
      %v159 = vld [vmem:[%s138 + $0x68] sm:$0xff]
      %v160 = vld [vmem:[%s138 + $0x70] sm:$0xff]
      %v161 = vld [vmem:[%s138 + $0x78] sm:$0xff]
      %p162 = scmp.eq.s32.totalorder %s17, 0
      // Predicated region
      $region25: #{resnet_forward.14} parent=23 // pred_check
        %p163 = pneg %p162
      $region26: #{resnet_forward.14} parent=23 // pred_check_branch
        %165 = sbr.rel (%p163) target = $region28
      $region27: #{resnet_forward.14} parent=23 // pred_region
        %vm166 = vcmask 523264
        %167 = vst.msk [vmem:[%s144] sm:$0xff] %vm166, %v146
        %168 = vst.msk [vmem:[%s144 + $0x8] sm:$0xff] %vm166, %v147
        %169 = vst.msk [vmem:[%s144 + $0x10] sm:$0xff] %vm166, %v148
        %170 = vst.msk [vmem:[%s144 + $0x18] sm:$0xff] %vm166, %v149
        %171 = vst.msk [vmem:[%s144 + $0x20] sm:$0xff] %vm166, %v150
        %172 = vst.msk [vmem:[%s144 + $0x28] sm:$0xff] %vm166, %v151
        %173 = vst.msk [vmem:[%s144 + $0x30] sm:$0xff] %vm166, %v152
        %174 = vst.msk [vmem:[%s144 + $0x38] sm:$0xff] %vm166, %v153
        %175 = vst.msk [vmem:[%s144 + $0x40] sm:$0xff] %vm166, %v154
        %176 = vst.msk [vmem:[%s144 + $0x48] sm:$0xff] %vm166, %v155
        %177 = vst.msk [vmem:[%s144 + $0x50] sm:$0xff] %vm166, %v156
        %178 = vst.msk [vmem:[%s144 + $0x58] sm:$0xff] %vm166, %v157
        %179 = vst.msk [vmem:[%s144 + $0x60] sm:$0xff] %vm166, %v158
        %180 = vst.msk [vmem:[%s144 + $0x68] sm:$0xff] %vm166, %v159
        %181 = vst.msk [vmem:[%s144 + $0x70] sm:$0xff] %vm166, %v160
        %182 = vst.msk [vmem:[%s144 + $0x78] sm:$0xff] %vm166, %v161
      $region28: #{resnet_forward.14} parent=23 // pred_fallthru
        _
      %p183 = scmp.gt.s32.totalorder %s17, 0
      // Predicated region
      $region29: #{resnet_forward.14} parent=23 // pred_check
        %p184 = pneg %p183
      $region30: #{resnet_forward.14} parent=23 // pred_check_branch
        %186 = sbr.rel (%p184) target = $region32
      $region31: #{resnet_forward.14} parent=23 // pred_region
        %v187 = vld [vmem:[%s144] sm:$0xff]
        %v188 = vld [vmem:[%s144 + $0x8] sm:$0xff]
        %v189 = vld [vmem:[%s144 + $0x10] sm:$0xff]
        %v190 = vld [vmem:[%s144 + $0x18] sm:$0xff]
        %v191 = vld [vmem:[%s144 + $0x20] sm:$0xff]
        %v192 = vld [vmem:[%s144 + $0x28] sm:$0xff]
        %v193 = vld [vmem:[%s144 + $0x30] sm:$0xff]
        %v194 = vld [vmem:[%s144 + $0x38] sm:$0xff]
        %v195 = vld [vmem:[%s144 + $0x40] sm:$0xff]
        %v196 = vld [vmem:[%s144 + $0x48] sm:$0xff]
        %v197 = vld [vmem:[%s144 + $0x50] sm:$0xff]
        %v198 = vld [vmem:[%s144 + $0x58] sm:$0xff]
        %v199 = vld [vmem:[%s144 + $0x60] sm:$0xff]
        %v200 = vld [vmem:[%s144 + $0x68] sm:$0xff]
        %v201 = vld [vmem:[%s144 + $0x70] sm:$0xff]
        %v202 = vld [vmem:[%s144 + $0x78] sm:$0xff]
        %v203 = vmax.f32 %v187, %v146
        %v204 = vmax.f32 %v188, %v147
        %v205 = vmax.f32 %v189, %v148
        %v206 = vmax.f32 %v190, %v149
        %v207 = vmax.f32 %v191, %v150
        %v208 = vmax.f32 %v192, %v151
        %v209 = vmax.f32 %v193, %v152
        %v210 = vmax.f32 %v194, %v153
        %v211 = vmax.f32 %v195, %v154
        %v212 = vmax.f32 %v196, %v155
        %v213 = vmax.f32 %v197, %v156
        %v214 = vmax.f32 %v198, %v157
        %v215 = vmax.f32 %v199, %v158
        %v216 = vmax.f32 %v200, %v159
        %v217 = vmax.f32 %v201, %v160
        %v218 = vmax.f32 %v202, %v161
        %vm219 = vcmask 523264
        %220 = vst.msk [vmem:[%s144] sm:$0xff] %vm219, %v203
        %221 = vst.msk [vmem:[%s144 + $0x8] sm:$0xff] %vm219, %v204
        %222 = vst.msk [vmem:[%s144 + $0x10] sm:$0xff] %vm219, %v205
        %223 = vst.msk [vmem:[%s144 + $0x18] sm:$0xff] %vm219, %v206
        %224 = vst.msk [vmem:[%s144 + $0x20] sm:$0xff] %vm219, %v207
        %225 = vst.msk [vmem:[%s144 + $0x28] sm:$0xff] %vm219, %v208
        %226 = vst.msk [vmem:[%s144 + $0x30] sm:$0xff] %vm219, %v209
        %227 = vst.msk [vmem:[%s144 + $0x38] sm:$0xff] %vm219, %v210
        %228 = vst.msk [vmem:[%s144 + $0x40] sm:$0xff] %vm219, %v211
        %229 = vst.msk [vmem:[%s144 + $0x48] sm:$0xff] %vm219, %v212
        %230 = vst.msk [vmem:[%s144 + $0x50] sm:$0xff] %vm219, %v213
        %231 = vst.msk [vmem:[%s144 + $0x58] sm:$0xff] %vm219, %v214
        %232 = vst.msk [vmem:[%s144 + $0x60] sm:$0xff] %vm219, %v215
        %233 = vst.msk [vmem:[%s144 + $0x68] sm:$0xff] %vm219, %v216
        %234 = vst.msk [vmem:[%s144 + $0x70] sm:$0xff] %vm219, %v217
        %235 = vst.msk [vmem:[%s144 + $0x78] sm:$0xff] %vm219, %v218
      $region32: #{resnet_forward.14} parent=23 // pred_fallthru
        _
      %s236 = smul.u32 16, %s16
      %p237 = scmp.lt.s32.totalorder %s236, 15
      %s238 = scalar_select %p237, %s236, 15
      %s239 = smul.addr %s238, 8
      %s240 = scalar_lea.vmem %s1, %s239
      // Predicated region
      $region33: #{resnet_forward.14} parent=23 // pred_check
        %p241 = pneg %p70
      $region34: #{resnet_forward.14} parent=23 // pred_check_branch
        %243 = sbr.rel (%p241) target = $region36
      $region35: #{resnet_forward.14} parent=23 // pred_region
        %s244 = smul.u32 16, %s16
      $region36: #{resnet_forward.14} parent=23 // pred_fallthru
        _
      // Predicated region
      $region37: #{resnet_forward.14} parent=23 // pred_check
        %p245 = pneg %p70
      $region38: #{resnet_forward.14} parent=23 // pred_check_branch
        %247 = sbr.rel (%p245) target = $region40
      $region39: #{resnet_forward.14} parent=23 // pred_region
        %s248 = smul.u32 16, %s16
        %p249 = scmp.lt.s32.totalorder %s248, 15
        %s250 = scalar_select %p249, %s248, 15
        %s251 = smul.addr %s250, 8
        %s252 = scalar_lea.vmem %s1, %s251
      $region40: #{resnet_forward.14} parent=23 // pred_fallthru
        _
    $region24: #{resnet_forward.14} parent=5 // pred_fallthru
      _
    %p253 = scmp.le.s32.totalorder 2, %s7
    // Predicated region
    $region41: #{resnet_forward.14} parent=5 // pred_check
      %p254 = pneg %p253
    $region42: #{resnet_forward.14} parent=5 // pred_check_branch
      %256 = sbr.rel (%p254) target = $region44
    $region43: #{resnet_forward.14} parent=5 // pred_region
      %s257 = ssub.s32 %s7, 2
    $region44: #{resnet_forward.14} parent=5 // pred_fallthru
      _
  $region6: #{resnet_forward.14} parent=0 // loop_footer
    %s11 = sadd.s32 1, %s7
  $region7: #{resnet_forward.14} parent=0 // loop_footer_branch
    %6 = sbr.rel target = $region3
  $region8: #{resnet_forward.14} parent=0 // loop_exit
    _

// kernel: resnet_forward.15
$region0: #{resnet_forward.15}
  #allocation0 [shape = 'u32[]', space=smem, size = 0x4, offset = 0x4, fixed_abs, tag = 'smem constant byte address 0x4 - core index']
  #allocation1 [shape = 'u32[72,128]{1,0:T(1,128)}', space=vmem, size = 0x9000, scoped, tag = 'internal scratch']
  %s0 = inlined_call_operand.vmem [shape: bf16[128,576], index: 0, kind: input, shape index: {}]
  %s1 = inlined_call_operand.vmem [shape: bf16[576,64], index: 1, kind: input, shape index: {}]
  %s2 = inlined_call_operand.vmem [shape: f32[1,64], index: 2, kind: input, shape index: {}]
  %s3 = inlined_call_operand.vmem [shape: f32[1,64], index: 3, kind: input, shape index: {}]
  %s4 = inlined_call_operand.vmem [shape: f32[128,64], index: 4, kind: output, shape index: {}]
  %s5 = sld [smem:[#allocation0]]
  $region26: #{resnet_forward.15} parent=0
    _
  %s7 = ssub.s32 1, %s5
  %s8 = scalar_select 0, %s7, %s5
  // Predicated region
  $region2: #{resnet_forward.15} parent=0 // pred_check
    _
  $region3: #{resnet_forward.15} parent=0 // pred_check_branch
    %10 = sbr.rel (0) target = $region5
  $region4: #{resnet_forward.15} parent=0 // pred_region
    _
  $region5: #{resnet_forward.15} parent=0 // pred_fallthru
    _
  // Predicated region
  $region6: #{resnet_forward.15} parent=0 // pred_check
    _
  $region7: #{resnet_forward.15} parent=0 // pred_check_branch
    %12 = sbr.rel (0) target = $region9
  $region8: #{resnet_forward.15} parent=0 // pred_region
    _
  $region9: #{resnet_forward.15} parent=0 // pred_fallthru
    _
  // Predicated region
  $region10: #{resnet_forward.15} parent=0 // pred_check
    _
  $region11: #{resnet_forward.15} parent=0 // pred_check_branch
    %14 = sbr.rel (0) target = $region13
  $region12: #{resnet_forward.15} parent=0 // pred_region
    _
  $region13: #{resnet_forward.15} parent=0 // pred_fallthru
    _
  // Predicated region
  $region14: #{resnet_forward.15} parent=0 // pred_check
    _
  $region15: #{resnet_forward.15} parent=0 // pred_check_branch
    %16 = sbr.rel (0) target = $region17
  $region16: #{resnet_forward.15} parent=0 // pred_region
    _
  $region17: #{resnet_forward.15} parent=0 // pred_fallthru
    _
  %v18 = vld [vmem:[%s0] sm:$0xff]
  %v19 = vld [vmem:[%s0 + $0x8] sm:$0xff]
  %v20 = vld [vmem:[%s0 + $0x10] sm:$0xf]
  %v21 = vld [vmem:[%s0 + $0x14] sm:$0xff]
  %v22 = vld [vmem:[%s0 + $0x1c] sm:$0xff]
  %v23 = vld [vmem:[%s0 + $0x24] sm:$0xf]
  %v24 = vld [vmem:[%s0 + $0x28] sm:$0xff]
  %v25 = vld [vmem:[%s0 + $0x30] sm:$0xff]
  %v26 = vld [vmem:[%s0 + $0x38] sm:$0xf]
  %v27 = vld [vmem:[%s0 + $0x3c] sm:$0xff]
  %v28 = vld [vmem:[%s0 + $0x44] sm:$0xff]
  %v29 = vld [vmem:[%s0 + $0x4c] sm:$0xf]
  %v30 = vld [vmem:[%s0 + $0x50] sm:$0xff]
  %v31 = vld [vmem:[%s0 + $0x58] sm:$0xff]
  %v32 = vld [vmem:[%s0 + $0x60] sm:$0xf]
  %v33 = vld [vmem:[%s0 + $0x64] sm:$0xff]
  %v34 = vld [vmem:[%s0 + $0x6c] sm:$0xff]
  %v35 = vld [vmem:[%s0 + $0x74] sm:$0xf]
  %v36 = vld [vmem:[%s0 + $0x78] sm:$0xff]
  %v37 = vld [vmem:[%s0 + $0x80] sm:$0xff]
  %v38 = vld [vmem:[%s0 + $0x88] sm:$0xf]
  %v39 = vld [vmem:[%s0 + $0x8c] sm:$0xff]
  %v40 = vld [vmem:[%s0 + $0x94] sm:$0xff]
  %v41 = vld [vmem:[%s0 + $0x9c] sm:$0xf]
  %v42 = vld [vmem:[%s0 + $0xa0] sm:$0xff]
  %v43 = vld [vmem:[%s0 + $0xa8] sm:$0xff]
  %v44 = vld [vmem:[%s0 + $0xb0] sm:$0xf]
  %v45 = vld [vmem:[%s0 + $0xb4] sm:$0xff]
  %v46 = vld [vmem:[%s0 + $0xbc] sm:$0xff]
  %v47 = vld [vmem:[%s0 + $0xc4] sm:$0xf]
  %v48 = vld [vmem:[%s0 + $0xc8] sm:$0xff]
  %v49 = vld [vmem:[%s0 + $0xd0] sm:$0xff]
  %v50 = vld [vmem:[%s0 + $0xd8] sm:$0xf]
  %v51 = vld [vmem:[%s0 + $0xdc] sm:$0xff]
  %v52 = vld [vmem:[%s0 + $0xe4] sm:$0xff]
  %v53 = vld [vmem:[%s0 + $0xec] sm:$0xf]
  %v54 = vld [vmem:[%s0 + $0xf0] sm:$0xff]
  %v55 = vld [vmem:[%s0 + $0xf8] sm:$0xff]
  %v56 = vld [vmem:[%s0 + $0x100] sm:$0xf]
  %v57 = vld [vmem:[%s0 + $0x104] sm:$0xff]
  %v58 = vld [vmem:[%s0 + $0x10c] sm:$0xff]
  %v59 = vld [vmem:[%s0 + $0x114] sm:$0xf]
  %v60 = vld [vmem:[%s0 + $0x118] sm:$0xff]
  %v61 = vld [vmem:[%s0 + $0x120] sm:$0xff]
  %v62 = vld [vmem:[%s0 + $0x128] sm:$0xf]
  %v63 = vld [vmem:[%s0 + $0x12c] sm:$0xff]
  %v64 = vld [vmem:[%s0 + $0x134] sm:$0xff]
  %v65 = vld [vmem:[%s0 + $0x13c] sm:$0xf]
  %v66 = vld [vmem:[%s1] sm:$0xf]
  %v67 = vld [vmem:[%s1 + $0x4] sm:$0xf]
  %v68 = vld [vmem:[%s1 + $0x8] sm:$0xf]
  %v69 = vld [vmem:[%s1 + $0xc] sm:$0xf]
  %v70 = vld [vmem:[%s1 + $0x10] sm:$0xf]
  %v71 = vld [vmem:[%s1 + $0x14] sm:$0xf]
  %v72 = vld [vmem:[%s1 + $0x18] sm:$0xf]
  %v73 = vld [vmem:[%s1 + $0x1c] sm:$0xf]
  %v74 = vld [vmem:[%s1 + $0x20] sm:$0xf]
  %v75 = vld [vmem:[%s1 + $0x24] sm:$0xf]
  %v76 = vld [vmem:[%s1 + $0x28] sm:$0xf]
  %v77 = vld [vmem:[%s1 + $0x2c] sm:$0xf]
  %v78 = vld [vmem:[%s1 + $0x30] sm:$0xf]
  %v79 = vld [vmem:[%s1 + $0x34] sm:$0xf]
  %v80 = vld [vmem:[%s1 + $0x38] sm:$0xf]
  %v81 = vld [vmem:[%s1 + $0x3c] sm:$0xf]
  %v82 = vld [vmem:[%s1 + $0x40] sm:$0xf]
  %v83 = vld [vmem:[%s1 + $0x44] sm:$0xf]
  %v84 = vld [vmem:[%s1 + $0x48] sm:$0xf]
  %v85 = vld [vmem:[%s1 + $0x4c] sm:$0xf]
  %v86 = vld [vmem:[%s1 + $0x50] sm:$0xf]
  %v87 = vld [vmem:[%s1 + $0x54] sm:$0xf]
  %v88 = vld [vmem:[%s1 + $0x58] sm:$0xf]
  %v89 = vld [vmem:[%s1 + $0x5c] sm:$0xf]
  %v90 = vld [vmem:[%s1 + $0x60] sm:$0xf]
  %v91 = vld [vmem:[%s1 + $0x64] sm:$0xf]
  %v92 = vld [vmem:[%s1 + $0x68] sm:$0xf]
  %v93 = vld [vmem:[%s1 + $0x6c] sm:$0xf]
  %v94 = vld [vmem:[%s1 + $0x70] sm:$0xf]
  %v95 = vld [vmem:[%s1 + $0x74] sm:$0xf]
  %v96 = vld [vmem:[%s1 + $0x78] sm:$0xf]
  %v97 = vld [vmem:[%s1 + $0x7c] sm:$0xf]
  %v98 = vld [vmem:[%s1 + $0x80] sm:$0xf]
  %v99 = vld [vmem:[%s1 + $0x84] sm:$0xf]
  %v100 = vld [vmem:[%s1 + $0x88] sm:$0xf]
  %v101 = vld [vmem:[%s1 + $0x8c] sm:$0xf]
  %v102 = vld [vmem:[%s1 + $0x90] sm:$0xf]
  %v103 = vld [vmem:[%s1 + $0x94] sm:$0xf]
  %v104 = vld [vmem:[%s1 + $0x98] sm:$0xf]
  %v105 = vld [vmem:[%s1 + $0x9c] sm:$0xf]
  %v106 = vld [vmem:[%s1 + $0xa0] sm:$0xf]
  %v107 = vld [vmem:[%s1 + $0xa4] sm:$0xf]
  %v108 = vld [vmem:[%s1 + $0xa8] sm:$0xf]
  %v109 = vld [vmem:[%s1 + $0xac] sm:$0xf]
  %v110 = vld [vmem:[%s1 + $0xb0] sm:$0xf]
  %v111 = vld [vmem:[%s1 + $0xb4] sm:$0xf]
  %v112 = vld [vmem:[%s1 + $0xb8] sm:$0xf]
  %v113 = vld [vmem:[%s1 + $0xbc] sm:$0xf]
  %v114 = vld [vmem:[%s1 + $0xc0] sm:$0xf]
  %v115 = vld [vmem:[%s1 + $0xc4] sm:$0xf]
  %v116 = vld [vmem:[%s1 + $0xc8] sm:$0xf]
  %v117 = vld [vmem:[%s1 + $0xcc] sm:$0xf]
  %v118 = vld [vmem:[%s1 + $0xd0] sm:$0xf]
  %v119 = vld [vmem:[%s1 + $0xd4] sm:$0xf]
  %v120 = vld [vmem:[%s1 + $0xd8] sm:$0xf]
  %v121 = vld [vmem:[%s1 + $0xdc] sm:$0xf]
  %v122 = vld [vmem:[%s1 + $0xe0] sm:$0xf]
  %v123 = vld [vmem:[%s1 + $0xe4] sm:$0xf]
  %v124 = vld [vmem:[%s1 + $0xe8] sm:$0xf]
  %v125 = vld [vmem:[%s1 + $0xec] sm:$0xf]
  %v126 = vld [vmem:[%s1 + $0xf0] sm:$0xf]
  %v127 = vld [vmem:[%s1 + $0xf4] sm:$0xf]
  %v128 = vld [vmem:[%s1 + $0xf8] sm:$0xf]
  %v129 = vld [vmem:[%s1 + $0xfc] sm:$0xf]
  %v130 = vld [vmem:[%s1 + $0x100] sm:$0xf]
  %v131 = vld [vmem:[%s1 + $0x104] sm:$0xf]
  %v132 = vld [vmem:[%s1 + $0x108] sm:$0xf]
  %v133 = vld [vmem:[%s1 + $0x10c] sm:$0xf]
  %v134 = vld [vmem:[%s1 + $0x110] sm:$0xf]
  %v135 = vld [vmem:[%s1 + $0x114] sm:$0xf]
  %v136 = vld [vmem:[%s1 + $0x118] sm:$0xf]
  %v137 = vld [vmem:[%s1 + $0x11c] sm:$0xf]
  %v186 = vunpack.c.l.b16 %v18
  %v187 = vunpack.c.h.b16 %v18
  %v188 = vunpack.c.l.b16 %v19
  %v189 = vunpack.c.h.b16 %v19
  %v190 = vunpack.c.l.b16 %v20
  %v191 = vunpack.c.l.b16 %v21
  %v192 = vunpack.c.h.b16 %v21
  %v193 = vunpack.c.l.b16 %v22
  %v194 = vunpack.c.h.b16 %v22
  %v195 = vunpack.c.l.b16 %v23
  %v196 = vunpack.c.l.b16 %v24
  %v197 = vunpack.c.h.b16 %v24
  %v198 = vunpack.c.l.b16 %v25
  %v199 = vunpack.c.h.b16 %v25
  %v200 = vunpack.c.l.b16 %v26
  %v201 = vunpack.c.l.b16 %v27
  %v202 = vunpack.c.h.b16 %v27
  %v203 = vunpack.c.l.b16 %v28
  %v204 = vunpack.c.h.b16 %v28
  %v205 = vunpack.c.l.b16 %v29
  %v206 = vunpack.c.l.b16 %v30
  %v207 = vunpack.c.h.b16 %v30
  %v208 = vunpack.c.l.b16 %v31
  %v209 = vunpack.c.h.b16 %v31
  %v210 = vunpack.c.l.b16 %v32
  %v211 = vunpack.c.l.b16 %v33
  %v212 = vunpack.c.h.b16 %v33
  %v213 = vunpack.c.l.b16 %v34
  %v214 = vunpack.c.h.b16 %v34
  %v215 = vunpack.c.l.b16 %v35
  %v216 = vunpack.c.l.b16 %v36
  %v217 = vunpack.c.h.b16 %v36
  %v218 = vunpack.c.l.b16 %v37
  %v219 = vunpack.c.h.b16 %v37
  %v220 = vunpack.c.l.b16 %v38
  %v221 = vunpack.c.l.b16 %v39
  %v222 = vunpack.c.h.b16 %v39
  %v223 = vunpack.c.l.b16 %v40
  %v224 = vunpack.c.h.b16 %v40
  %v225 = vunpack.c.l.b16 %v41
  %v226 = vunpack.c.l.b16 %v42
  %v227 = vunpack.c.h.b16 %v42
  %v228 = vunpack.c.l.b16 %v43
  %v229 = vunpack.c.h.b16 %v43
  %v230 = vunpack.c.l.b16 %v44
  %v231 = vunpack.c.l.b16 %v45
  %v232 = vunpack.c.h.b16 %v45
  %v233 = vunpack.c.l.b16 %v46
  %v234 = vunpack.c.h.b16 %v46
  %v235 = vunpack.c.l.b16 %v47
  %v236 = vunpack.c.l.b16 %v48
  %v237 = vunpack.c.h.b16 %v48
  %v238 = vunpack.c.l.b16 %v49
  %v239 = vunpack.c.h.b16 %v49
  %v240 = vunpack.c.l.b16 %v50
  %v241 = vunpack.c.l.b16 %v51
  %v242 = vunpack.c.h.b16 %v51
  %v243 = vunpack.c.l.b16 %v52
  %v244 = vunpack.c.h.b16 %v52
  %v245 = vunpack.c.l.b16 %v53
  %v246 = vunpack.c.l.b16 %v54
  %v247 = vunpack.c.h.b16 %v54
  %v248 = vunpack.c.l.b16 %v55
  %v249 = vunpack.c.h.b16 %v55
  %v250 = vunpack.c.l.b16 %v56
  %v251 = vunpack.c.l.b16 %v57
  %v252 = vunpack.c.h.b16 %v57
  %v253 = vunpack.c.l.b16 %v58
  %v254 = vunpack.c.h.b16 %v58
  %v255 = vunpack.c.l.b16 %v59
  %v256 = vunpack.c.l.b16 %v60
  %v257 = vunpack.c.h.b16 %v60
  %v258 = vunpack.c.l.b16 %v61
  %v259 = vunpack.c.h.b16 %v61
  %v260 = vunpack.c.l.b16 %v62
  %v261 = vunpack.c.l.b16 %v63
  %v262 = vunpack.c.h.b16 %v63
  %v263 = vunpack.c.l.b16 %v64
  %v264 = vunpack.c.h.b16 %v64
  %v265 = vunpack.c.l.b16 %v65
  %v266 = vpack.c.b16 %v191, %v186
  %v267 = vpack.c.b16 %v192, %v187
  %v268 = vpack.c.b16 %v193, %v188
  %v269 = vpack.c.b16 %v194, %v189
  %v270 = vpack.c.b16 %v195, %v190
  %v271 = vpack.c.b16 %v201, %v196
  %v272 = vpack.c.b16 %v202, %v197
  %v273 = vpack.c.b16 %v203, %v198
  %v274 = vpack.c.b16 %v204, %v199
  %v275 = vpack.c.b16 %v205, %v200
  %v276 = vpack.c.b16 %v211, %v206
  %v277 = vpack.c.b16 %v212, %v207
  %v278 = vpack.c.b16 %v213, %v208
  %v279 = vpack.c.b16 %v214, %v209
  %v280 = vpack.c.b16 %v215, %v210
  %v281 = vpack.c.b16 %v221, %v216
  %v282 = vpack.c.b16 %v222, %v217
  %v283 = vpack.c.b16 %v223, %v218
  %v284 = vpack.c.b16 %v224, %v219
  %v285 = vpack.c.b16 %v225, %v220
  %v286 = vpack.c.b16 %v231, %v226
  %v287 = vpack.c.b16 %v232, %v227
  %v288 = vpack.c.b16 %v233, %v228
  %v289 = vpack.c.b16 %v234, %v229
  %v290 = vpack.c.b16 %v235, %v230
  %v291 = vpack.c.b16 %v241, %v236
  %v292 = vpack.c.b16 %v242, %v237
  %v293 = vpack.c.b16 %v243, %v238
  %v294 = vpack.c.b16 %v244, %v239
  %v295 = vpack.c.b16 %v245, %v240
  %v296 = vpack.c.b16 %v251, %v246
  %v297 = vpack.c.b16 %v252, %v247
  %v298 = vpack.c.b16 %v253, %v248
  %v299 = vpack.c.b16 %v254, %v249
  %v300 = vpack.c.b16 %v255, %v250
  %v301 = vpack.c.b16 %v261, %v256
  %v302 = vpack.c.b16 %v262, %v257
  %v303 = vpack.c.b16 %v263, %v258
  %v304 = vpack.c.b16 %v264, %v259
  %v305 = vpack.c.b16 %v265, %v260
  %v410 = vunpack.c.l.b16 %v66
  %v411 = vunpack.c.l.b16 %v67
  %v412 = vunpack.c.l.b16 %v68
  %v413 = vunpack.c.l.b16 %v69
  %v414 = vunpack.c.l.b16 %v70
  %v415 = vunpack.c.l.b16 %v71
  %v416 = vunpack.c.l.b16 %v72
  %v417 = vunpack.c.l.b16 %v73
  %v418 = vunpack.c.l.b16 %v74
  %v419 = vunpack.c.l.b16 %v75
  %v420 = vunpack.c.l.b16 %v76
  %v421 = vunpack.c.l.b16 %v77
  %v422 = vunpack.c.l.b16 %v78
  %v423 = vunpack.c.l.b16 %v79
  %v424 = vunpack.c.l.b16 %v80
  %v425 = vunpack.c.l.b16 %v81
  %v426 = vunpack.c.l.b16 %v82
  %v427 = vunpack.c.l.b16 %v83
  %v428 = vunpack.c.l.b16 %v84
  %v429 = vunpack.c.l.b16 %v85
  %v430 = vunpack.c.l.b16 %v86
  %v431 = vunpack.c.l.b16 %v87
  %v432 = vunpack.c.l.b16 %v88
  %v433 = vunpack.c.l.b16 %v89
  %v434 = vunpack.c.l.b16 %v90
  %v435 = vunpack.c.l.b16 %v91
  %v436 = vunpack.c.l.b16 %v92
  %v437 = vunpack.c.l.b16 %v93
  %v438 = vunpack.c.l.b16 %v94
  %v439 = vunpack.c.l.b16 %v95
  %v440 = vunpack.c.l.b16 %v96
  %v441 = vunpack.c.l.b16 %v97
  %v442 = vunpack.c.l.b16 %v98
  %v443 = vunpack.c.l.b16 %v99
  %v444 = vunpack.c.l.b16 %v100
  %v445 = vunpack.c.l.b16 %v101
  %v446 = vunpack.c.l.b16 %v102
  %v447 = vunpack.c.l.b16 %v103
  %v448 = vunpack.c.l.b16 %v104
  %v449 = vunpack.c.l.b16 %v105
  %v450 = vunpack.c.l.b16 %v106
  %v451 = vunpack.c.l.b16 %v107
  %v452 = vunpack.c.l.b16 %v108
  %v453 = vunpack.c.l.b16 %v109
  %v454 = vunpack.c.l.b16 %v110
  %v455 = vunpack.c.l.b16 %v111
  %v456 = vunpack.c.l.b16 %v112
  %v457 = vunpack.c.l.b16 %v113
  %v458 = vunpack.c.l.b16 %v114
  %v459 = vunpack.c.l.b16 %v115
  %v460 = vunpack.c.l.b16 %v116
  %v461 = vunpack.c.l.b16 %v117
  %v462 = vunpack.c.l.b16 %v118
  %v463 = vunpack.c.l.b16 %v119
  %v464 = vunpack.c.l.b16 %v120
  %v465 = vunpack.c.l.b16 %v121
  %v466 = vunpack.c.l.b16 %v122
  %v467 = vunpack.c.l.b16 %v123
  %v468 = vunpack.c.l.b16 %v124
  %v469 = vunpack.c.l.b16 %v125
  %v470 = vunpack.c.l.b16 %v126
  %v471 = vunpack.c.l.b16 %v127
  %v472 = vunpack.c.l.b16 %v128
  %v473 = vunpack.c.l.b16 %v129
  %v474 = vunpack.c.l.b16 %v130
  %v475 = vunpack.c.l.b16 %v131
  %v476 = vunpack.c.l.b16 %v132
  %v477 = vunpack.c.l.b16 %v133
  %v478 = vunpack.c.l.b16 %v134
  %v479 = vunpack.c.l.b16 %v135
  %v480 = vunpack.c.l.b16 %v136
  %v481 = vunpack.c.l.b16 %v137
  %v482 = vpack.c.b16 %v411, %v410
  %v483 = vpack.c.b16 %v413, %v412
  %v484 = vpack.c.b16 %v415, %v414
  %v485 = vpack.c.b16 %v417, %v416
  %v486 = vpack.c.b16 %v419, %v418
  %v487 = vpack.c.b16 %v421, %v420
  %v488 = vpack.c.b16 %v423, %v422
  %v489 = vpack.c.b16 %v425, %v424
  %v490 = vpack.c.b16 %v427, %v426
  %v491 = vpack.c.b16 %v429, %v428
  %v492 = vpack.c.b16 %v431, %v430
  %v493 = vpack.c.b16 %v433, %v432
  %v494 = vpack.c.b16 %v435, %v434
  %v495 = vpack.c.b16 %v437, %v436
  %v496 = vpack.c.b16 %v439, %v438
  %v497 = vpack.c.b16 %v441, %v440
  %v498 = vpack.c.b16 %v443, %v442
  %v499 = vpack.c.b16 %v445, %v444
  %v500 = vpack.c.b16 %v447, %v446
  %v501 = vpack.c.b16 %v449, %v448
  %v502 = vpack.c.b16 %v451, %v450
  %v503 = vpack.c.b16 %v453, %v452
  %v504 = vpack.c.b16 %v455, %v454
  %v505 = vpack.c.b16 %v457, %v456
  %v506 = vpack.c.b16 %v459, %v458
  %v507 = vpack.c.b16 %v461, %v460
  %v508 = vpack.c.b16 %v463, %v462
  %v509 = vpack.c.b16 %v465, %v464
  %v510 = vpack.c.b16 %v467, %v466
  %v511 = vpack.c.b16 %v469, %v468
  %v512 = vpack.c.b16 %v471, %v470
  %v513 = vpack.c.b16 %v473, %v472
  %v514 = vpack.c.b16 %v475, %v474
  %v515 = vpack.c.b16 %v477, %v476
  %v516 = vpack.c.b16 %v479, %v478
  %v517 = vpack.c.b16 %v481, %v480
  %vm554 = vcmask 523264
  %v556 = vsel %vm554, %v270, 0
  %v559 = vsel %vm554, %v275, 0
  %v562 = vsel %vm554, %v280, 0
  %v565 = vsel %vm554, %v285, 0
  %v568 = vsel %vm554, %v290, 0
  %v571 = vsel %vm554, %v295, 0
  %v574 = vsel %vm554, %v300, 0
  %v577 = vsel %vm554, %v305, 0
  %579 = vmatpush.bf16.msra.mxu0 %v489
  %580 = vmatpush.bf16.msra.mxu0 %v488
  %581 = vmatpush.bf16.msra.mxu0 %v487
  %582 = vmatpush.bf16.msra.mxu0 %v486
  %583 = vmatpush.bf16.msra.mxu0 %v485
  %584 = vmatpush.bf16.msra.mxu0 %v484
  %585 = vmatpush.bf16.msra.mxu0 %v483
  %586 = vmatpush.bf16.msra.mxu0 %v482
  %587 = vmatmul.bf16.gmra.mxu0 %v266
  %v588 = vpop.f32.mrf.mxu0
  %v589 = vadd.f32 0.0, %v588
  %v590 = vpop.f32.mrf.mxu0
  %v591 = vadd.f32 0.0, %v590
  %592 = vmatmul.bf16.gmra.mxu0 %v271
  %v593 = vpop.f32.mrf.mxu0
  %v594 = vadd.f32 0.0, %v593
  %v595 = vpop.f32.mrf.mxu0
  %v596 = vadd.f32 0.0, %v595
  %597 = vmatmul.bf16.gmra.mxu0 %v276
  %v598 = vpop.f32.mrf.mxu0
  %v599 = vadd.f32 0.0, %v598
  %v600 = vpop.f32.mrf.mxu0
  %v601 = vadd.f32 0.0, %v600
  %602 = vmatmul.bf16.gmra.mxu0 %v281
  %v603 = vpop.f32.mrf.mxu0
  %v604 = vadd.f32 0.0, %v603
  %v605 = vpop.f32.mrf.mxu0
  %v606 = vadd.f32 0.0, %v605
  %607 = vmatmul.bf16.gmra.mxu0 %v286
  %v608 = vpop.f32.mrf.mxu0
  %v609 = vadd.f32 0.0, %v608
  %v610 = vpop.f32.mrf.mxu0
  %v611 = vadd.f32 0.0, %v610
  %612 = vmatmul.bf16.gmra.mxu0 %v291
  %v613 = vpop.f32.mrf.mxu0
  %v614 = vadd.f32 0.0, %v613
  %v615 = vpop.f32.mrf.mxu0
  %v616 = vadd.f32 0.0, %v615
  %617 = vmatmul.bf16.gmra.mxu0 %v296
  %v618 = vpop.f32.mrf.mxu0
  %v619 = vadd.f32 0.0, %v618
  %v620 = vpop.f32.mrf.mxu0
  %v621 = vadd.f32 0.0, %v620
  %622 = vmatmul.bf16.gmra.mxu0 %v301
  %v623 = vpop.f32.mrf.mxu0
  %v624 = vadd.f32 0.0, %v623
  %v625 = vpop.f32.mrf.mxu0
  %v626 = vadd.f32 0.0, %v625
  %627 = vdwg.mxu0
  %628 = vmatpush.bf16.msra.mxu0 %v497
  %629 = vmatpush.bf16.msra.mxu0 %v496
  %630 = vmatpush.bf16.msra.mxu0 %v495
  %631 = vmatpush.bf16.msra.mxu0 %v494
  %632 = vmatpush.bf16.msra.mxu0 %v493
  %633 = vmatpush.bf16.msra.mxu0 %v492
  %634 = vmatpush.bf16.msra.mxu0 %v491
  %635 = vmatpush.bf16.msra.mxu0 %v490
  %636 = vmatmul.bf16.gmra.mxu0 %v267
  %v637 = vpop.f32.mrf.mxu0
  %v638 = vadd.f32 %v589, %v637
  %v639 = vpop.f32.mrf.mxu0
  %v640 = vadd.f32 %v591, %v639
  %641 = vmatmul.bf16.gmra.mxu0 %v272
  %v642 = vpop.f32.mrf.mxu0
  %v643 = vadd.f32 %v594, %v642
  %v644 = vpop.f32.mrf.mxu0
  %v645 = vadd.f32 %v596, %v644
  %646 = vmatmul.bf16.gmra.mxu0 %v277
  %v647 = vpop.f32.mrf.mxu0
  %v648 = vadd.f32 %v599, %v647
  %v649 = vpop.f32.mrf.mxu0
  %v650 = vadd.f32 %v601, %v649
  %651 = vmatmul.bf16.gmra.mxu0 %v282
  %v652 = vpop.f32.mrf.mxu0
  %v653 = vadd.f32 %v604, %v652
  %v654 = vpop.f32.mrf.mxu0
  %v655 = vadd.f32 %v606, %v654
  %656 = vmatmul.bf16.gmra.mxu0 %v287
  %v657 = vpop.f32.mrf.mxu0
  %v658 = vadd.f32 %v609, %v657
  %v659 = vpop.f32.mrf.mxu0
  %v660 = vadd.f32 %v611, %v659
  %661 = vmatmul.bf16.gmra.mxu0 %v292
  %v662 = vpop.f32.mrf.mxu0
  %v663 = vadd.f32 %v614, %v662
  %v664 = vpop.f32.mrf.mxu0
  %v665 = vadd.f32 %v616, %v664
  %666 = vmatmul.bf16.gmra.mxu0 %v297
  %v667 = vpop.f32.mrf.mxu0
  %v668 = vadd.f32 %v619, %v667
  %v669 = vpop.f32.mrf.mxu0
  %v670 = vadd.f32 %v621, %v669
  %671 = vmatmul.bf16.gmra.mxu0 %v302
  %v672 = vpop.f32.mrf.mxu0
  %v673 = vadd.f32 %v624, %v672
  %v674 = vpop.f32.mrf.mxu0
  %v675 = vadd.f32 %v626, %v674
  %676 = vdwg.mxu0
  %677 = vmatpush.bf16.msra.mxu0 %v505
  %678 = vmatpush.bf16.msra.mxu0 %v504
  %679 = vmatpush.bf16.msra.mxu0 %v503
  %680 = vmatpush.bf16.msra.mxu0 %v502
  %681 = vmatpush.bf16.msra.mxu0 %v501
  %682 = vmatpush.bf16.msra.mxu0 %v500
  %683 = vmatpush.bf16.msra.mxu0 %v499
  %684 = vmatpush.bf16.msra.mxu0 %v498
  %685 = vmatmul.bf16.gmra.mxu0 %v268
  %v686 = vpop.f32.mrf.mxu0
  %v687 = vadd.f32 %v638, %v686
  %v688 = vpop.f32.mrf.mxu0
  %v689 = vadd.f32 %v640, %v688
  %690 = vmatmul.bf16.gmra.mxu0 %v273
  %v691 = vpop.f32.mrf.mxu0
  %v692 = vadd.f32 %v643, %v691
  %v693 = vpop.f32.mrf.mxu0
  %v694 = vadd.f32 %v645, %v693
  %695 = vmatmul.bf16.gmra.mxu0 %v278
  %v696 = vpop.f32.mrf.mxu0
  %v697 = vadd.f32 %v648, %v696
  %v698 = vpop.f32.mrf.mxu0
  %v699 = vadd.f32 %v650, %v698
  %700 = vmatmul.bf16.gmra.mxu0 %v283
  %v701 = vpop.f32.mrf.mxu0
  %v702 = vadd.f32 %v653, %v701
  %v703 = vpop.f32.mrf.mxu0
  %v704 = vadd.f32 %v655, %v703
  %705 = vmatmul.bf16.gmra.mxu0 %v288
  %v706 = vpop.f32.mrf.mxu0
  %v707 = vadd.f32 %v658, %v706
  %v708 = vpop.f32.mrf.mxu0
  %v709 = vadd.f32 %v660, %v708
  %710 = vmatmul.bf16.gmra.mxu0 %v293
  %v711 = vpop.f32.mrf.mxu0
  %v712 = vadd.f32 %v663, %v711
  %v713 = vpop.f32.mrf.mxu0
  %v714 = vadd.f32 %v665, %v713
  %715 = vmatmul.bf16.gmra.mxu0 %v298
  %v716 = vpop.f32.mrf.mxu0
  %v717 = vadd.f32 %v668, %v716
  %v718 = vpop.f32.mrf.mxu0
  %v719 = vadd.f32 %v670, %v718
  %720 = vmatmul.bf16.gmra.mxu0 %v303
  %v721 = vpop.f32.mrf.mxu0
  %v722 = vadd.f32 %v673, %v721
  %v723 = vpop.f32.mrf.mxu0
  %v724 = vadd.f32 %v675, %v723
  %725 = vdwg.mxu0
  %726 = vmatpush.bf16.msra.mxu0 %v513
  %727 = vmatpush.bf16.msra.mxu0 %v512
  %728 = vmatpush.bf16.msra.mxu0 %v511
  %729 = vmatpush.bf16.msra.mxu0 %v510
  %730 = vmatpush.bf16.msra.mxu0 %v509
  %731 = vmatpush.bf16.msra.mxu0 %v508
  %732 = vmatpush.bf16.msra.mxu0 %v507
  %733 = vmatpush.bf16.msra.mxu0 %v506
  %734 = vmatmul.bf16.gmra.mxu0 %v269
  %v735 = vpop.f32.mrf.mxu0
  %v736 = vadd.f32 %v687, %v735
  %v737 = vpop.f32.mrf.mxu0
  %v738 = vadd.f32 %v689, %v737
  %739 = vmatmul.bf16.gmra.mxu0 %v274
  %v740 = vpop.f32.mrf.mxu0
  %v741 = vadd.f32 %v692, %v740
  %v742 = vpop.f32.mrf.mxu0
  %v743 = vadd.f32 %v694, %v742
  %744 = vmatmul.bf16.gmra.mxu0 %v279
  %v745 = vpop.f32.mrf.mxu0
  %v746 = vadd.f32 %v697, %v745
  %v747 = vpop.f32.mrf.mxu0
  %v748 = vadd.f32 %v699, %v747
  %749 = vmatmul.bf16.gmra.mxu0 %v284
  %v750 = vpop.f32.mrf.mxu0
  %v751 = vadd.f32 %v702, %v750
  %v752 = vpop.f32.mrf.mxu0
  %v753 = vadd.f32 %v704, %v752
  %754 = vmatmul.bf16.gmra.mxu0 %v289
  %v755 = vpop.f32.mrf.mxu0
  %v756 = vadd.f32 %v707, %v755
  %v757 = vpop.f32.mrf.mxu0
  %v758 = vadd.f32 %v709, %v757
  %759 = vmatmul.bf16.gmra.mxu0 %v294
  %v760 = vpop.f32.mrf.mxu0
  %v761 = vadd.f32 %v712, %v760
  %v762 = vpop.f32.mrf.mxu0
  %v763 = vadd.f32 %v714, %v762
  %764 = vmatmul.bf16.gmra.mxu0 %v299
  %v765 = vpop.f32.mrf.mxu0
  %v766 = vadd.f32 %v717, %v765
  %v767 = vpop.f32.mrf.mxu0
  %v768 = vadd.f32 %v719, %v767
  %769 = vmatmul.bf16.gmra.mxu0 %v304
  %v770 = vpop.f32.mrf.mxu0
  %v771 = vadd.f32 %v722, %v770
  %v772 = vpop.f32.mrf.mxu0
  %v773 = vadd.f32 %v724, %v772
  %774 = vdwg.mxu0
  %775 = vmatpush.bf16.msra.mxu0 0
  %776 = vmatpush.bf16.msra.mxu0 0
  %777 = vmatpush.bf16.msra.mxu0 0
  %778 = vmatpush.bf16.msra.mxu0 0
  %779 = vmatpush.bf16.msra.mxu0 %v517
  %780 = vmatpush.bf16.msra.mxu0 %v516
  %781 = vmatpush.bf16.msra.mxu0 %v515
  %782 = vmatpush.bf16.msra.mxu0 %v514
  %783 = vmatmul.bf16.gmra.mxu0 %v556
  %v784 = vpop.f32.mrf.mxu0
  %v785 = vadd.f32 %v736, %v784
  %v786 = vpop.f32.mrf.mxu0
  %v787 = vadd.f32 %v738, %v786
  %788 = vmatmul.bf16.gmra.mxu0 %v559
  %v789 = vpop.f32.mrf.mxu0
  %v790 = vadd.f32 %v741, %v789
  %v791 = vpop.f32.mrf.mxu0
  %v792 = vadd.f32 %v743, %v791
  %793 = vmatmul.bf16.gmra.mxu0 %v562
  %v794 = vpop.f32.mrf.mxu0
  %v795 = vadd.f32 %v746, %v794
  %v796 = vpop.f32.mrf.mxu0
  %v797 = vadd.f32 %v748, %v796
  %798 = vmatmul.bf16.gmra.mxu0 %v565
  %v799 = vpop.f32.mrf.mxu0
  %v800 = vadd.f32 %v751, %v799
  %v801 = vpop.f32.mrf.mxu0
  %v802 = vadd.f32 %v753, %v801
  %803 = vmatmul.bf16.gmra.mxu0 %v568
  %v804 = vpop.f32.mrf.mxu0
  %v805 = vadd.f32 %v756, %v804
  %v806 = vpop.f32.mrf.mxu0
  %v807 = vadd.f32 %v758, %v806
  %808 = vmatmul.bf16.gmra.mxu0 %v571
  %v809 = vpop.f32.mrf.mxu0
  %v810 = vadd.f32 %v761, %v809
  %v811 = vpop.f32.mrf.mxu0
  %v812 = vadd.f32 %v763, %v811
  %813 = vmatmul.bf16.gmra.mxu0 %v574
  %v814 = vpop.f32.mrf.mxu0
  %v815 = vadd.f32 %v766, %v814
  %v816 = vpop.f32.mrf.mxu0
  %v817 = vadd.f32 %v768, %v816
  %818 = vmatmul.bf16.gmra.mxu0 %v577
  %v819 = vpop.f32.mrf.mxu0
  %v820 = vadd.f32 %v771, %v819
  %v821 = vpop.f32.mrf.mxu0
  %v822 = vadd.f32 %v773, %v821
  %823 = vdwg.mxu0
  %v824 = vld [vmem:[%s2] sm:$0x1]
  %v826 = vperm.slane %v824, 0
  %v828 = vmul.f32 %v785, %v826
  %v829 = vmul.f32 %v787, %v826
  %v830 = vmul.f32 %v790, %v826
  %v831 = vmul.f32 %v792, %v826
  %v832 = vmul.f32 %v795, %v826
  %v833 = vmul.f32 %v797, %v826
  %v834 = vmul.f32 %v800, %v826
  %v835 = vmul.f32 %v802, %v826
  %v836 = vmul.f32 %v805, %v826
  %v837 = vmul.f32 %v807, %v826
  %v838 = vmul.f32 %v810, %v826
  %v839 = vmul.f32 %v812, %v826
  %v840 = vmul.f32 %v815, %v826
  %v841 = vmul.f32 %v817, %v826
  %v842 = vmul.f32 %v820, %v826
  %v843 = vmul.f32 %v822, %v826
  %v844 = vld [vmem:[%s3] sm:$0x1]
  %v846 = vperm.slane %v844, 0
  %v848 = vadd.f32 %v828, %v846
  %v849 = vadd.f32 %v829, %v846
  %v850 = vadd.f32 %v830, %v846
  %v851 = vadd.f32 %v831, %v846
  %v852 = vadd.f32 %v832, %v846
  %v853 = vadd.f32 %v833, %v846
  %v854 = vadd.f32 %v834, %v846
  %v855 = vadd.f32 %v835, %v846
  %v856 = vadd.f32 %v836, %v846
  %v857 = vadd.f32 %v837, %v846
  %v858 = vadd.f32 %v838, %v846
  %v859 = vadd.f32 %v839, %v846
  %v860 = vadd.f32 %v840, %v846
  %v861 = vadd.f32 %v841, %v846
  %v862 = vadd.f32 %v842, %v846
  %v863 = vadd.f32 %v843, %v846
  %v864 = vmax.f32 %v848, 0.0
  %v865 = vmax.f32 %v849, 0.0
  %v866 = vmax.f32 %v850, 0.0
  %v867 = vmax.f32 %v851, 0.0
  %v868 = vmax.f32 %v852, 0.0
  %v869 = vmax.f32 %v853, 0.0
  %v870 = vmax.f32 %v854, 0.0
  %v871 = vmax.f32 %v855, 0.0
  %v872 = vmax.f32 %v856, 0.0
  %v873 = vmax.f32 %v857, 0.0
  %v874 = vmax.f32 %v858, 0.0
  %v875 = vmax.f32 %v859, 0.0
  %v876 = vmax.f32 %v860, 0.0
  %v877 = vmax.f32 %v861, 0.0
  %v878 = vmax.f32 %v862, 0.0
  %v879 = vmax.f32 %v863, 0.0
  %880 = vst.msk [vmem:[%s4] sm:$0xff] %vm554, %v864
  %881 = vst.msk [vmem:[%s4 + $0x8] sm:$0xff] %vm554, %v865
  %882 = vst.msk [vmem:[%s4 + $0x10] sm:$0xff] %vm554, %v866
  %883 = vst.msk [vmem:[%s4 + $0x18] sm:$0xff] %vm554, %v867
  %884 = vst.msk [vmem:[%s4 + $0x20] sm:$0xff] %vm554, %v868
  %885 = vst.msk [vmem:[%s4 + $0x28] sm:$0xff] %vm554, %v869
  %886 = vst.msk [vmem:[%s4 + $0x30] sm:$0xff] %vm554, %v870
  %887 = vst.msk [vmem:[%s4 + $0x38] sm:$0xff] %vm554, %v871
  %888 = vst.msk [vmem:[%s4 + $0x40] sm:$0xff] %vm554, %v872
  %889 = vst.msk [vmem:[%s4 + $0x48] sm:$0xff] %vm554, %v873
  %890 = vst.msk [vmem:[%s4 + $0x50] sm:$0xff] %vm554, %v874
  %891 = vst.msk [vmem:[%s4 + $0x58] sm:$0xff] %vm554, %v875
  %892 = vst.msk [vmem:[%s4 + $0x60] sm:$0xff] %vm554, %v876
  %893 = vst.msk [vmem:[%s4 + $0x68] sm:$0xff] %vm554, %v877
  %894 = vst.msk [vmem:[%s4 + $0x70] sm:$0xff] %vm554, %v878
  %895 = vst.msk [vmem:[%s4 + $0x78] sm:$0xff] %vm554, %v879
  // Predicated region
  $region18: #{resnet_forward.15} parent=0 // pred_check
    _
  $region19: #{resnet_forward.15} parent=0 // pred_check_branch
    %897 = sbr.rel (0) target = $region21
  $region20: #{resnet_forward.15} parent=0 // pred_region
    _
  $region21: #{resnet_forward.15} parent=0 // pred_fallthru
    _
  // Predicated region
  $region22: #{resnet_forward.15} parent=0 // pred_check
    _
  $region23: #{resnet_forward.15} parent=0 // pred_check_branch
    %899 = sbr.rel (0) target = $region25
  $region24: #{resnet_forward.15} parent=0 // pred_region
    _
  $region25: #{resnet_forward.15} parent=0 // pred_fallthru
    _

// kernel: resnet_forward.16
$region0: #{resnet_forward.16}
  #allocation0 [shape = 'u32[]', space=smem, size = 0x4, offset = 0x4, fixed_abs, tag = 'smem constant byte address 0x4 - core index']
  #allocation1 [shape = 'u32[72,128]{1,0:T(1,128)}', space=vmem, size = 0x9000, scoped, tag = 'internal scratch']
  %s0 = inlined_call_operand.vmem [shape: bf16[128,576], index: 0, kind: input, shape index: {}]
  %s1 = inlined_call_operand.vmem [shape: bf16[576,64], index: 1, kind: input, shape index: {}]
  %s2 = inlined_call_operand.vmem [shape: f32[1,64], index: 2, kind: input, shape index: {}]
  %s3 = inlined_call_operand.vmem [shape: f32[1,64], index: 3, kind: input, shape index: {}]
  %s4 = inlined_call_operand.vmem [shape: f32[128,64], index: 4, kind: input, shape index: {}]
  %s5 = inlined_call_operand.vmem [shape: f32[128,64], index: 5, kind: output, shape index: {}]
  %s6 = sld [smem:[#allocation0]]
  $region30: #{resnet_forward.16} parent=0
    _
  %s8 = ssub.s32 1, %s6
  %s9 = scalar_select 0, %s8, %s6
  // Predicated region
  $region2: #{resnet_forward.16} parent=0 // pred_check
    _
  $region3: #{resnet_forward.16} parent=0 // pred_check_branch
    %11 = sbr.rel (0) target = $region5
  $region4: #{resnet_forward.16} parent=0 // pred_region
    _
  $region5: #{resnet_forward.16} parent=0 // pred_fallthru
    _
  // Predicated region
  $region6: #{resnet_forward.16} parent=0 // pred_check
    _
  $region7: #{resnet_forward.16} parent=0 // pred_check_branch
    %13 = sbr.rel (0) target = $region9
  $region8: #{resnet_forward.16} parent=0 // pred_region
    _
  $region9: #{resnet_forward.16} parent=0 // pred_fallthru
    _
  // Predicated region
  $region10: #{resnet_forward.16} parent=0 // pred_check
    _
  $region11: #{resnet_forward.16} parent=0 // pred_check_branch
    %15 = sbr.rel (0) target = $region13
  $region12: #{resnet_forward.16} parent=0 // pred_region
    _
  $region13: #{resnet_forward.16} parent=0 // pred_fallthru
    _
  // Predicated region
  $region14: #{resnet_forward.16} parent=0 // pred_check
    _
  $region15: #{resnet_forward.16} parent=0 // pred_check_branch
    %17 = sbr.rel (0) target = $region17
  $region16: #{resnet_forward.16} parent=0 // pred_region
    _
  $region17: #{resnet_forward.16} parent=0 // pred_fallthru
    _
  // Predicated region
  $region18: #{resnet_forward.16} parent=0 // pred_check
    _
  $region19: #{resnet_forward.16} parent=0 // pred_check_branch
    %19 = sbr.rel (0) target = $region21
  $region20: #{resnet_forward.16} parent=0 // pred_region
    _
  $region21: #{resnet_forward.16} parent=0 // pred_fallthru
    _
  %v21 = vld [vmem:[%s0] sm:$0xff]
  %v22 = vld [vmem:[%s0 + $0x8] sm:$0xff]
  %v23 = vld [vmem:[%s0 + $0x10] sm:$0xf]
  %v24 = vld [vmem:[%s0 + $0x14] sm:$0xff]
  %v25 = vld [vmem:[%s0 + $0x1c] sm:$0xff]
  %v26 = vld [vmem:[%s0 + $0x24] sm:$0xf]
  %v27 = vld [vmem:[%s0 + $0x28] sm:$0xff]
  %v28 = vld [vmem:[%s0 + $0x30] sm:$0xff]
  %v29 = vld [vmem:[%s0 + $0x38] sm:$0xf]
  %v30 = vld [vmem:[%s0 + $0x3c] sm:$0xff]
  %v31 = vld [vmem:[%s0 + $0x44] sm:$0xff]
  %v32 = vld [vmem:[%s0 + $0x4c] sm:$0xf]
  %v33 = vld [vmem:[%s0 + $0x50] sm:$0xff]
  %v34 = vld [vmem:[%s0 + $0x58] sm:$0xff]
  %v35 = vld [vmem:[%s0 + $0x60] sm:$0xf]
  %v36 = vld [vmem:[%s0 + $0x64] sm:$0xff]
  %v37 = vld [vmem:[%s0 + $0x6c] sm:$0xff]
  %v38 = vld [vmem:[%s0 + $0x74] sm:$0xf]
  %v39 = vld [vmem:[%s0 + $0x78] sm:$0xff]
  %v40 = vld [vmem:[%s0 + $0x80] sm:$0xff]
  %v41 = vld [vmem:[%s0 + $0x88] sm:$0xf]
  %v42 = vld [vmem:[%s0 + $0x8c] sm:$0xff]
  %v43 = vld [vmem:[%s0 + $0x94] sm:$0xff]
  %v44 = vld [vmem:[%s0 + $0x9c] sm:$0xf]
  %v45 = vld [vmem:[%s0 + $0xa0] sm:$0xff]
  %v46 = vld [vmem:[%s0 + $0xa8] sm:$0xff]
  %v47 = vld [vmem:[%s0 + $0xb0] sm:$0xf]
  %v48 = vld [vmem:[%s0 + $0xb4] sm:$0xff]
  %v49 = vld [vmem:[%s0 + $0xbc] sm:$0xff]
  %v50 = vld [vmem:[%s0 + $0xc4] sm:$0xf]
  %v51 = vld [vmem:[%s0 + $0xc8] sm:$0xff]
  %v52 = vld [vmem:[%s0 + $0xd0] sm:$0xff]
  %v53 = vld [vmem:[%s0 + $0xd8] sm:$0xf]
  %v54 = vld [vmem:[%s0 + $0xdc] sm:$0xff]
  %v55 = vld [vmem:[%s0 + $0xe4] sm:$0xff]
  %v56 = vld [vmem:[%s0 + $0xec] sm:$0xf]
  %v57 = vld [vmem:[%s0 + $0xf0] sm:$0xff]
  %v58 = vld [vmem:[%s0 + $0xf8] sm:$0xff]
  %v59 = vld [vmem:[%s0 + $0x100] sm:$0xf]
  %v60 = vld [vmem:[%s0 + $0x104] sm:$0xff]
  %v61 = vld [vmem:[%s0 + $0x10c] sm:$0xff]
  %v62 = vld [vmem:[%s0 + $0x114] sm:$0xf]
  %v63 = vld [vmem:[%s0 + $0x118] sm:$0xff]
  %v64 = vld [vmem:[%s0 + $0x120] sm:$0xff]
  %v65 = vld [vmem:[%s0 + $0x128] sm:$0xf]
  %v66 = vld [vmem:[%s0 + $0x12c] sm:$0xff]
  %v67 = vld [vmem:[%s0 + $0x134] sm:$0xff]
  %v68 = vld [vmem:[%s0 + $0x13c] sm:$0xf]
  %v69 = vld [vmem:[%s1] sm:$0xf]
  %v70 = vld [vmem:[%s1 + $0x4] sm:$0xf]
  %v71 = vld [vmem:[%s1 + $0x8] sm:$0xf]
  %v72 = vld [vmem:[%s1 + $0xc] sm:$0xf]
  %v73 = vld [vmem:[%s1 + $0x10] sm:$0xf]
  %v74 = vld [vmem:[%s1 + $0x14] sm:$0xf]
  %v75 = vld [vmem:[%s1 + $0x18] sm:$0xf]
  %v76 = vld [vmem:[%s1 + $0x1c] sm:$0xf]
  %v77 = vld [vmem:[%s1 + $0x20] sm:$0xf]
  %v78 = vld [vmem:[%s1 + $0x24] sm:$0xf]
  %v79 = vld [vmem:[%s1 + $0x28] sm:$0xf]
  %v80 = vld [vmem:[%s1 + $0x2c] sm:$0xf]
  %v81 = vld [vmem:[%s1 + $0x30] sm:$0xf]
  %v82 = vld [vmem:[%s1 + $0x34] sm:$0xf]
  %v83 = vld [vmem:[%s1 + $0x38] sm:$0xf]
  %v84 = vld [vmem:[%s1 + $0x3c] sm:$0xf]
  %v85 = vld [vmem:[%s1 + $0x40] sm:$0xf]
  %v86 = vld [vmem:[%s1 + $0x44] sm:$0xf]
  %v87 = vld [vmem:[%s1 + $0x48] sm:$0xf]
  %v88 = vld [vmem:[%s1 + $0x4c] sm:$0xf]
  %v89 = vld [vmem:[%s1 + $0x50] sm:$0xf]
  %v90 = vld [vmem:[%s1 + $0x54] sm:$0xf]
  %v91 = vld [vmem:[%s1 + $0x58] sm:$0xf]
  %v92 = vld [vmem:[%s1 + $0x5c] sm:$0xf]
  %v93 = vld [vmem:[%s1 + $0x60] sm:$0xf]
  %v94 = vld [vmem:[%s1 + $0x64] sm:$0xf]
  %v95 = vld [vmem:[%s1 + $0x68] sm:$0xf]
  %v96 = vld [vmem:[%s1 + $0x6c] sm:$0xf]
  %v97 = vld [vmem:[%s1 + $0x70] sm:$0xf]
  %v98 = vld [vmem:[%s1 + $0x74] sm:$0xf]
  %v99 = vld [vmem:[%s1 + $0x78] sm:$0xf]
  %v100 = vld [vmem:[%s1 + $0x7c] sm:$0xf]
  %v101 = vld [vmem:[%s1 + $0x80] sm:$0xf]
  %v102 = vld [vmem:[%s1 + $0x84] sm:$0xf]
  %v103 = vld [vmem:[%s1 + $0x88] sm:$0xf]
  %v104 = vld [vmem:[%s1 + $0x8c] sm:$0xf]
  %v105 = vld [vmem:[%s1 + $0x90] sm:$0xf]
  %v106 = vld [vmem:[%s1 + $0x94] sm:$0xf]
  %v107 = vld [vmem:[%s1 + $0x98] sm:$0xf]
  %v108 = vld [vmem:[%s1 + $0x9c] sm:$0xf]
  %v109 = vld [vmem:[%s1 + $0xa0] sm:$0xf]
  %v110 = vld [vmem:[%s1 + $0xa4] sm:$0xf]
  %v111 = vld [vmem:[%s1 + $0xa8] sm:$0xf]
  %v112 = vld [vmem:[%s1 + $0xac] sm:$0xf]
  %v113 = vld [vmem:[%s1 + $0xb0] sm:$0xf]
  %v114 = vld [vmem:[%s1 + $0xb4] sm:$0xf]
  %v115 = vld [vmem:[%s1 + $0xb8] sm:$0xf]
  %v116 = vld [vmem:[%s1 + $0xbc] sm:$0xf]
  %v117 = vld [vmem:[%s1 + $0xc0] sm:$0xf]
  %v118 = vld [vmem:[%s1 + $0xc4] sm:$0xf]
  %v119 = vld [vmem:[%s1 + $0xc8] sm:$0xf]
  %v120 = vld [vmem:[%s1 + $0xcc] sm:$0xf]
  %v121 = vld [vmem:[%s1 + $0xd0] sm:$0xf]
  %v122 = vld [vmem:[%s1 + $0xd4] sm:$0xf]
  %v123 = vld [vmem:[%s1 + $0xd8] sm:$0xf]
  %v124 = vld [vmem:[%s1 + $0xdc] sm:$0xf]
  %v125 = vld [vmem:[%s1 + $0xe0] sm:$0xf]
  %v126 = vld [vmem:[%s1 + $0xe4] sm:$0xf]
  %v127 = vld [vmem:[%s1 + $0xe8] sm:$0xf]
  %v128 = vld [vmem:[%s1 + $0xec] sm:$0xf]
  %v129 = vld [vmem:[%s1 + $0xf0] sm:$0xf]
  %v130 = vld [vmem:[%s1 + $0xf4] sm:$0xf]
  %v131 = vld [vmem:[%s1 + $0xf8] sm:$0xf]
  %v132 = vld [vmem:[%s1 + $0xfc] sm:$0xf]
  %v133 = vld [vmem:[%s1 + $0x100] sm:$0xf]
  %v134 = vld [vmem:[%s1 + $0x104] sm:$0xf]
  %v135 = vld [vmem:[%s1 + $0x108] sm:$0xf]
  %v136 = vld [vmem:[%s1 + $0x10c] sm:$0xf]
  %v137 = vld [vmem:[%s1 + $0x110] sm:$0xf]
  %v138 = vld [vmem:[%s1 + $0x114] sm:$0xf]
  %v139 = vld [vmem:[%s1 + $0x118] sm:$0xf]
  %v140 = vld [vmem:[%s1 + $0x11c] sm:$0xf]
  %v189 = vunpack.c.l.b16 %v21
  %v190 = vunpack.c.h.b16 %v21
  %v191 = vunpack.c.l.b16 %v22
  %v192 = vunpack.c.h.b16 %v22
  %v193 = vunpack.c.l.b16 %v23
  %v194 = vunpack.c.l.b16 %v24
  %v195 = vunpack.c.h.b16 %v24
  %v196 = vunpack.c.l.b16 %v25
  %v197 = vunpack.c.h.b16 %v25
  %v198 = vunpack.c.l.b16 %v26
  %v199 = vunpack.c.l.b16 %v27
  %v200 = vunpack.c.h.b16 %v27
  %v201 = vunpack.c.l.b16 %v28
  %v202 = vunpack.c.h.b16 %v28
  %v203 = vunpack.c.l.b16 %v29
  %v204 = vunpack.c.l.b16 %v30
  %v205 = vunpack.c.h.b16 %v30
  %v206 = vunpack.c.l.b16 %v31
  %v207 = vunpack.c.h.b16 %v31
  %v208 = vunpack.c.l.b16 %v32
  %v209 = vunpack.c.l.b16 %v33
  %v210 = vunpack.c.h.b16 %v33
  %v211 = vunpack.c.l.b16 %v34
  %v212 = vunpack.c.h.b16 %v34
  %v213 = vunpack.c.l.b16 %v35
  %v214 = vunpack.c.l.b16 %v36
  %v215 = vunpack.c.h.b16 %v36
  %v216 = vunpack.c.l.b16 %v37
  %v217 = vunpack.c.h.b16 %v37
  %v218 = vunpack.c.l.b16 %v38
  %v219 = vunpack.c.l.b16 %v39
  %v220 = vunpack.c.h.b16 %v39
  %v221 = vunpack.c.l.b16 %v40
  %v222 = vunpack.c.h.b16 %v40
  %v223 = vunpack.c.l.b16 %v41
  %v224 = vunpack.c.l.b16 %v42
  %v225 = vunpack.c.h.b16 %v42
  %v226 = vunpack.c.l.b16 %v43
  %v227 = vunpack.c.h.b16 %v43
  %v228 = vunpack.c.l.b16 %v44
  %v229 = vunpack.c.l.b16 %v45
  %v230 = vunpack.c.h.b16 %v45
  %v231 = vunpack.c.l.b16 %v46
  %v232 = vunpack.c.h.b16 %v46
  %v233 = vunpack.c.l.b16 %v47
  %v234 = vunpack.c.l.b16 %v48
  %v235 = vunpack.c.h.b16 %v48
  %v236 = vunpack.c.l.b16 %v49
  %v237 = vunpack.c.h.b16 %v49
  %v238 = vunpack.c.l.b16 %v50
  %v239 = vunpack.c.l.b16 %v51
  %v240 = vunpack.c.h.b16 %v51
  %v241 = vunpack.c.l.b16 %v52
  %v242 = vunpack.c.h.b16 %v52
  %v243 = vunpack.c.l.b16 %v53
  %v244 = vunpack.c.l.b16 %v54
  %v245 = vunpack.c.h.b16 %v54
  %v246 = vunpack.c.l.b16 %v55
  %v247 = vunpack.c.h.b16 %v55
  %v248 = vunpack.c.l.b16 %v56
  %v249 = vunpack.c.l.b16 %v57
  %v250 = vunpack.c.h.b16 %v57
  %v251 = vunpack.c.l.b16 %v58
  %v252 = vunpack.c.h.b16 %v58
  %v253 = vunpack.c.l.b16 %v59
  %v254 = vunpack.c.l.b16 %v60
  %v255 = vunpack.c.h.b16 %v60
  %v256 = vunpack.c.l.b16 %v61
  %v257 = vunpack.c.h.b16 %v61
  %v258 = vunpack.c.l.b16 %v62
  %v259 = vunpack.c.l.b16 %v63
  %v260 = vunpack.c.h.b16 %v63
  %v261 = vunpack.c.l.b16 %v64
  %v262 = vunpack.c.h.b16 %v64
  %v263 = vunpack.c.l.b16 %v65
  %v264 = vunpack.c.l.b16 %v66
  %v265 = vunpack.c.h.b16 %v66
  %v266 = vunpack.c.l.b16 %v67
  %v267 = vunpack.c.h.b16 %v67
  %v268 = vunpack.c.l.b16 %v68
  %v269 = vpack.c.b16 %v194, %v189
  %v270 = vpack.c.b16 %v195, %v190
  %v271 = vpack.c.b16 %v196, %v191
  %v272 = vpack.c.b16 %v197, %v192
  %v273 = vpack.c.b16 %v198, %v193
  %v274 = vpack.c.b16 %v204, %v199
  %v275 = vpack.c.b16 %v205, %v200
  %v276 = vpack.c.b16 %v206, %v201
  %v277 = vpack.c.b16 %v207, %v202
  %v278 = vpack.c.b16 %v208, %v203
  %v279 = vpack.c.b16 %v214, %v209
  %v280 = vpack.c.b16 %v215, %v210
  %v281 = vpack.c.b16 %v216, %v211
  %v282 = vpack.c.b16 %v217, %v212
  %v283 = vpack.c.b16 %v218, %v213
  %v284 = vpack.c.b16 %v224, %v219
  %v285 = vpack.c.b16 %v225, %v220
  %v286 = vpack.c.b16 %v226, %v221
  %v287 = vpack.c.b16 %v227, %v222
  %v288 = vpack.c.b16 %v228, %v223
  %v289 = vpack.c.b16 %v234, %v229
  %v290 = vpack.c.b16 %v235, %v230
  %v291 = vpack.c.b16 %v236, %v231
  %v292 = vpack.c.b16 %v237, %v232
  %v293 = vpack.c.b16 %v238, %v233
  %v294 = vpack.c.b16 %v244, %v239
  %v295 = vpack.c.b16 %v245, %v240
  %v296 = vpack.c.b16 %v246, %v241
  %v297 = vpack.c.b16 %v247, %v242
  %v298 = vpack.c.b16 %v248, %v243
  %v299 = vpack.c.b16 %v254, %v249
  %v300 = vpack.c.b16 %v255, %v250
  %v301 = vpack.c.b16 %v256, %v251
  %v302 = vpack.c.b16 %v257, %v252
  %v303 = vpack.c.b16 %v258, %v253
  %v304 = vpack.c.b16 %v264, %v259
  %v305 = vpack.c.b16 %v265, %v260
  %v306 = vpack.c.b16 %v266, %v261
  %v307 = vpack.c.b16 %v267, %v262
  %v308 = vpack.c.b16 %v268, %v263
  %v413 = vunpack.c.l.b16 %v69
  %v414 = vunpack.c.l.b16 %v70
  %v415 = vunpack.c.l.b16 %v71
  %v416 = vunpack.c.l.b16 %v72
  %v417 = vunpack.c.l.b16 %v73
  %v418 = vunpack.c.l.b16 %v74
  %v419 = vunpack.c.l.b16 %v75
  %v420 = vunpack.c.l.b16 %v76
  %v421 = vunpack.c.l.b16 %v77
  %v422 = vunpack.c.l.b16 %v78
  %v423 = vunpack.c.l.b16 %v79
  %v424 = vunpack.c.l.b16 %v80
  %v425 = vunpack.c.l.b16 %v81
  %v426 = vunpack.c.l.b16 %v82
  %v427 = vunpack.c.l.b16 %v83
  %v428 = vunpack.c.l.b16 %v84
  %v429 = vunpack.c.l.b16 %v85
  %v430 = vunpack.c.l.b16 %v86
  %v431 = vunpack.c.l.b16 %v87
  %v432 = vunpack.c.l.b16 %v88
  %v433 = vunpack.c.l.b16 %v89
  %v434 = vunpack.c.l.b16 %v90
  %v435 = vunpack.c.l.b16 %v91
  %v436 = vunpack.c.l.b16 %v92
  %v437 = vunpack.c.l.b16 %v93
  %v438 = vunpack.c.l.b16 %v94
  %v439 = vunpack.c.l.b16 %v95
  %v440 = vunpack.c.l.b16 %v96
  %v441 = vunpack.c.l.b16 %v97
  %v442 = vunpack.c.l.b16 %v98
  %v443 = vunpack.c.l.b16 %v99
  %v444 = vunpack.c.l.b16 %v100
  %v445 = vunpack.c.l.b16 %v101
  %v446 = vunpack.c.l.b16 %v102
  %v447 = vunpack.c.l.b16 %v103
  %v448 = vunpack.c.l.b16 %v104
  %v449 = vunpack.c.l.b16 %v105
  %v450 = vunpack.c.l.b16 %v106
  %v451 = vunpack.c.l.b16 %v107
  %v452 = vunpack.c.l.b16 %v108
  %v453 = vunpack.c.l.b16 %v109
  %v454 = vunpack.c.l.b16 %v110
  %v455 = vunpack.c.l.b16 %v111
  %v456 = vunpack.c.l.b16 %v112
  %v457 = vunpack.c.l.b16 %v113
  %v458 = vunpack.c.l.b16 %v114
  %v459 = vunpack.c.l.b16 %v115
  %v460 = vunpack.c.l.b16 %v116
  %v461 = vunpack.c.l.b16 %v117
  %v462 = vunpack.c.l.b16 %v118
  %v463 = vunpack.c.l.b16 %v119
  %v464 = vunpack.c.l.b16 %v120
  %v465 = vunpack.c.l.b16 %v121
  %v466 = vunpack.c.l.b16 %v122
  %v467 = vunpack.c.l.b16 %v123
  %v468 = vunpack.c.l.b16 %v124
  %v469 = vunpack.c.l.b16 %v125
  %v470 = vunpack.c.l.b16 %v126
  %v471 = vunpack.c.l.b16 %v127
  %v472 = vunpack.c.l.b16 %v128
  %v473 = vunpack.c.l.b16 %v129
  %v474 = vunpack.c.l.b16 %v130
  %v475 = vunpack.c.l.b16 %v131
  %v476 = vunpack.c.l.b16 %v132
  %v477 = vunpack.c.l.b16 %v133
  %v478 = vunpack.c.l.b16 %v134
  %v479 = vunpack.c.l.b16 %v135
  %v480 = vunpack.c.l.b16 %v136
  %v481 = vunpack.c.l.b16 %v137
  %v482 = vunpack.c.l.b16 %v138
  %v483 = vunpack.c.l.b16 %v139
  %v484 = vunpack.c.l.b16 %v140
  %v485 = vpack.c.b16 %v414, %v413
  %v486 = vpack.c.b16 %v416, %v415
  %v487 = vpack.c.b16 %v418, %v417
  %v488 = vpack.c.b16 %v420, %v419
  %v489 = vpack.c.b16 %v422, %v421
  %v490 = vpack.c.b16 %v424, %v423
  %v491 = vpack.c.b16 %v426, %v425
  %v492 = vpack.c.b16 %v428, %v427
  %v493 = vpack.c.b16 %v430, %v429
  %v494 = vpack.c.b16 %v432, %v431
  %v495 = vpack.c.b16 %v434, %v433
  %v496 = vpack.c.b16 %v436, %v435
  %v497 = vpack.c.b16 %v438, %v437
  %v498 = vpack.c.b16 %v440, %v439
  %v499 = vpack.c.b16 %v442, %v441
  %v500 = vpack.c.b16 %v444, %v443
  %v501 = vpack.c.b16 %v446, %v445
  %v502 = vpack.c.b16 %v448, %v447
  %v503 = vpack.c.b16 %v450, %v449
  %v504 = vpack.c.b16 %v452, %v451
  %v505 = vpack.c.b16 %v454, %v453
  %v506 = vpack.c.b16 %v456, %v455
  %v507 = vpack.c.b16 %v458, %v457
  %v508 = vpack.c.b16 %v460, %v459
  %v509 = vpack.c.b16 %v462, %v461
  %v510 = vpack.c.b16 %v464, %v463
  %v511 = vpack.c.b16 %v466, %v465
  %v512 = vpack.c.b16 %v468, %v467
  %v513 = vpack.c.b16 %v470, %v469
  %v514 = vpack.c.b16 %v472, %v471
  %v515 = vpack.c.b16 %v474, %v473
  %v516 = vpack.c.b16 %v476, %v475
  %v517 = vpack.c.b16 %v478, %v477
  %v518 = vpack.c.b16 %v480, %v479
  %v519 = vpack.c.b16 %v482, %v481
  %v520 = vpack.c.b16 %v484, %v483
  %vm557 = vcmask 523264
  %v559 = vsel %vm557, %v273, 0
  %v562 = vsel %vm557, %v278, 0
  %v565 = vsel %vm557, %v283, 0
  %v568 = vsel %vm557, %v288, 0
  %v571 = vsel %vm557, %v293, 0
  %v574 = vsel %vm557, %v298, 0
  %v577 = vsel %vm557, %v303, 0
  %v580 = vsel %vm557, %v308, 0
  %582 = vmatpush.bf16.msra.mxu0 %v492
  %583 = vmatpush.bf16.msra.mxu0 %v491
  %584 = vmatpush.bf16.msra.mxu0 %v490
  %585 = vmatpush.bf16.msra.mxu0 %v489
  %586 = vmatpush.bf16.msra.mxu0 %v488
  %587 = vmatpush.bf16.msra.mxu0 %v487
  %588 = vmatpush.bf16.msra.mxu0 %v486
  %589 = vmatpush.bf16.msra.mxu0 %v485
  %590 = vmatmul.bf16.gmra.mxu0 %v269
  %v591 = vpop.f32.mrf.mxu0
  %v592 = vadd.f32 0.0, %v591
  %v593 = vpop.f32.mrf.mxu0
  %v594 = vadd.f32 0.0, %v593
  %595 = vmatmul.bf16.gmra.mxu0 %v274
  %v596 = vpop.f32.mrf.mxu0
  %v597 = vadd.f32 0.0, %v596
  %v598 = vpop.f32.mrf.mxu0
  %v599 = vadd.f32 0.0, %v598
  %600 = vmatmul.bf16.gmra.mxu0 %v279
  %v601 = vpop.f32.mrf.mxu0
  %v602 = vadd.f32 0.0, %v601
  %v603 = vpop.f32.mrf.mxu0
  %v604 = vadd.f32 0.0, %v603
  %605 = vmatmul.bf16.gmra.mxu0 %v284
  %v606 = vpop.f32.mrf.mxu0
  %v607 = vadd.f32 0.0, %v606
  %v608 = vpop.f32.mrf.mxu0
  %v609 = vadd.f32 0.0, %v608
  %610 = vmatmul.bf16.gmra.mxu0 %v289
  %v611 = vpop.f32.mrf.mxu0
  %v612 = vadd.f32 0.0, %v611
  %v613 = vpop.f32.mrf.mxu0
  %v614 = vadd.f32 0.0, %v613
  %615 = vmatmul.bf16.gmra.mxu0 %v294
  %v616 = vpop.f32.mrf.mxu0
  %v617 = vadd.f32 0.0, %v616
  %v618 = vpop.f32.mrf.mxu0
  %v619 = vadd.f32 0.0, %v618
  %620 = vmatmul.bf16.gmra.mxu0 %v299
  %v621 = vpop.f32.mrf.mxu0
  %v622 = vadd.f32 0.0, %v621
  %v623 = vpop.f32.mrf.mxu0
  %v624 = vadd.f32 0.0, %v623
  %625 = vmatmul.bf16.gmra.mxu0 %v304
  %v626 = vpop.f32.mrf.mxu0
  %v627 = vadd.f32 0.0, %v626
  %v628 = vpop.f32.mrf.mxu0
  %v629 = vadd.f32 0.0, %v628
  %630 = vdwg.mxu0
  %631 = vmatpush.bf16.msra.mxu0 %v500
  %632 = vmatpush.bf16.msra.mxu0 %v499
  %633 = vmatpush.bf16.msra.mxu0 %v498
  %634 = vmatpush.bf16.msra.mxu0 %v497
  %635 = vmatpush.bf16.msra.mxu0 %v496
  %636 = vmatpush.bf16.msra.mxu0 %v495
  %637 = vmatpush.bf16.msra.mxu0 %v494
  %638 = vmatpush.bf16.msra.mxu0 %v493
  %639 = vmatmul.bf16.gmra.mxu0 %v270
  %v640 = vpop.f32.mrf.mxu0
  %v641 = vadd.f32 %v592, %v640
  %v642 = vpop.f32.mrf.mxu0
  %v643 = vadd.f32 %v594, %v642
  %644 = vmatmul.bf16.gmra.mxu0 %v275
  %v645 = vpop.f32.mrf.mxu0
  %v646 = vadd.f32 %v597, %v645
  %v647 = vpop.f32.mrf.mxu0
  %v648 = vadd.f32 %v599, %v647
  %649 = vmatmul.bf16.gmra.mxu0 %v280
  %v650 = vpop.f32.mrf.mxu0
  %v651 = vadd.f32 %v602, %v650
  %v652 = vpop.f32.mrf.mxu0
  %v653 = vadd.f32 %v604, %v652
  %654 = vmatmul.bf16.gmra.mxu0 %v285
  %v655 = vpop.f32.mrf.mxu0
  %v656 = vadd.f32 %v607, %v655
  %v657 = vpop.f32.mrf.mxu0
  %v658 = vadd.f32 %v609, %v657
  %659 = vmatmul.bf16.gmra.mxu0 %v290
  %v660 = vpop.f32.mrf.mxu0
  %v661 = vadd.f32 %v612, %v660
  %v662 = vpop.f32.mrf.mxu0
  %v663 = vadd.f32 %v614, %v662
  %664 = vmatmul.bf16.gmra.mxu0 %v295
  %v665 = vpop.f32.mrf.mxu0
  %v666 = vadd.f32 %v617, %v665
  %v667 = vpop.f32.mrf.mxu0
  %v668 = vadd.f32 %v619, %v667
  %669 = vmatmul.bf16.gmra.mxu0 %v300
  %v670 = vpop.f32.mrf.mxu0
  %v671 = vadd.f32 %v622, %v670
  %v672 = vpop.f32.mrf.mxu0
  %v673 = vadd.f32 %v624, %v672
  %674 = vmatmul.bf16.gmra.mxu0 %v305
  %v675 = vpop.f32.mrf.mxu0
  %v676 = vadd.f32 %v627, %v675
  %v677 = vpop.f32.mrf.mxu0
  %v678 = vadd.f32 %v629, %v677
  %679 = vdwg.mxu0
  %680 = vmatpush.bf16.msra.mxu0 %v508
  %681 = vmatpush.bf16.msra.mxu0 %v507
  %682 = vmatpush.bf16.msra.mxu0 %v506
  %683 = vmatpush.bf16.msra.mxu0 %v505
  %684 = vmatpush.bf16.msra.mxu0 %v504
  %685 = vmatpush.bf16.msra.mxu0 %v503
  %686 = vmatpush.bf16.msra.mxu0 %v502
  %687 = vmatpush.bf16.msra.mxu0 %v501
  %688 = vmatmul.bf16.gmra.mxu0 %v271
  %v689 = vpop.f32.mrf.mxu0
  %v690 = vadd.f32 %v641, %v689
  %v691 = vpop.f32.mrf.mxu0
  %v692 = vadd.f32 %v643, %v691
  %693 = vmatmul.bf16.gmra.mxu0 %v276
  %v694 = vpop.f32.mrf.mxu0
  %v695 = vadd.f32 %v646, %v694
  %v696 = vpop.f32.mrf.mxu0
  %v697 = vadd.f32 %v648, %v696
  %698 = vmatmul.bf16.gmra.mxu0 %v281
  %v699 = vpop.f32.mrf.mxu0
  %v700 = vadd.f32 %v651, %v699
  %v701 = vpop.f32.mrf.mxu0
  %v702 = vadd.f32 %v653, %v701
  %703 = vmatmul.bf16.gmra.mxu0 %v286
  %v704 = vpop.f32.mrf.mxu0
  %v705 = vadd.f32 %v656, %v704
  %v706 = vpop.f32.mrf.mxu0
  %v707 = vadd.f32 %v658, %v706
  %708 = vmatmul.bf16.gmra.mxu0 %v291
  %v709 = vpop.f32.mrf.mxu0
  %v710 = vadd.f32 %v661, %v709
  %v711 = vpop.f32.mrf.mxu0
  %v712 = vadd.f32 %v663, %v711
  %713 = vmatmul.bf16.gmra.mxu0 %v296
  %v714 = vpop.f32.mrf.mxu0
  %v715 = vadd.f32 %v666, %v714
  %v716 = vpop.f32.mrf.mxu0
  %v717 = vadd.f32 %v668, %v716
  %718 = vmatmul.bf16.gmra.mxu0 %v301
  %v719 = vpop.f32.mrf.mxu0
  %v720 = vadd.f32 %v671, %v719
  %v721 = vpop.f32.mrf.mxu0
  %v722 = vadd.f32 %v673, %v721
  %723 = vmatmul.bf16.gmra.mxu0 %v306
  %v724 = vpop.f32.mrf.mxu0
  %v725 = vadd.f32 %v676, %v724
  %v726 = vpop.f32.mrf.mxu0
  %v727 = vadd.f32 %v678, %v726
  %728 = vdwg.mxu0
  %729 = vmatpush.bf16.msra.mxu0 %v516
  %730 = vmatpush.bf16.msra.mxu0 %v515
  %731 = vmatpush.bf16.msra.mxu0 %v514
  %732 = vmatpush.bf16.msra.mxu0 %v513
  %733 = vmatpush.bf16.msra.mxu0 %v512
  %734 = vmatpush.bf16.msra.mxu0 %v511
  %735 = vmatpush.bf16.msra.mxu0 %v510
  %736 = vmatpush.bf16.msra.mxu0 %v509
  %737 = vmatmul.bf16.gmra.mxu0 %v272
  %v738 = vpop.f32.mrf.mxu0
  %v739 = vadd.f32 %v690, %v738
  %v740 = vpop.f32.mrf.mxu0
  %v741 = vadd.f32 %v692, %v740
  %742 = vmatmul.bf16.gmra.mxu0 %v277
  %v743 = vpop.f32.mrf.mxu0
  %v744 = vadd.f32 %v695, %v743
  %v745 = vpop.f32.mrf.mxu0
  %v746 = vadd.f32 %v697, %v745
  %747 = vmatmul.bf16.gmra.mxu0 %v282
  %v748 = vpop.f32.mrf.mxu0
  %v749 = vadd.f32 %v700, %v748
  %v750 = vpop.f32.mrf.mxu0
  %v751 = vadd.f32 %v702, %v750
  %752 = vmatmul.bf16.gmra.mxu0 %v287
  %v753 = vpop.f32.mrf.mxu0
  %v754 = vadd.f32 %v705, %v753
  %v755 = vpop.f32.mrf.mxu0
  %v756 = vadd.f32 %v707, %v755
  %757 = vmatmul.bf16.gmra.mxu0 %v292
  %v758 = vpop.f32.mrf.mxu0
  %v759 = vadd.f32 %v710, %v758
  %v760 = vpop.f32.mrf.mxu0
  %v761 = vadd.f32 %v712, %v760
  %762 = vmatmul.bf16.gmra.mxu0 %v297
  %v763 = vpop.f32.mrf.mxu0
  %v764 = vadd.f32 %v715, %v763
  %v765 = vpop.f32.mrf.mxu0
  %v766 = vadd.f32 %v717, %v765
  %767 = vmatmul.bf16.gmra.mxu0 %v302
  %v768 = vpop.f32.mrf.mxu0
  %v769 = vadd.f32 %v720, %v768
  %v770 = vpop.f32.mrf.mxu0
  %v771 = vadd.f32 %v722, %v770
  %772 = vmatmul.bf16.gmra.mxu0 %v307
  %v773 = vpop.f32.mrf.mxu0
  %v774 = vadd.f32 %v725, %v773
  %v775 = vpop.f32.mrf.mxu0
  %v776 = vadd.f32 %v727, %v775
  %777 = vdwg.mxu0
  %778 = vmatpush.bf16.msra.mxu0 0
  %779 = vmatpush.bf16.msra.mxu0 0
  %780 = vmatpush.bf16.msra.mxu0 0
  %781 = vmatpush.bf16.msra.mxu0 0
  %782 = vmatpush.bf16.msra.mxu0 %v520
  %783 = vmatpush.bf16.msra.mxu0 %v519
  %784 = vmatpush.bf16.msra.mxu0 %v518
  %785 = vmatpush.bf16.msra.mxu0 %v517
  %786 = vmatmul.bf16.gmra.mxu0 %v559
  %v787 = vpop.f32.mrf.mxu0
  %v788 = vadd.f32 %v739, %v787
  %v789 = vpop.f32.mrf.mxu0
  %v790 = vadd.f32 %v741, %v789
  %791 = vmatmul.bf16.gmra.mxu0 %v562
  %v792 = vpop.f32.mrf.mxu0
  %v793 = vadd.f32 %v744, %v792
  %v794 = vpop.f32.mrf.mxu0
  %v795 = vadd.f32 %v746, %v794
  %796 = vmatmul.bf16.gmra.mxu0 %v565
  %v797 = vpop.f32.mrf.mxu0
  %v798 = vadd.f32 %v749, %v797
  %v799 = vpop.f32.mrf.mxu0
  %v800 = vadd.f32 %v751, %v799
  %801 = vmatmul.bf16.gmra.mxu0 %v568
  %v802 = vpop.f32.mrf.mxu0
  %v803 = vadd.f32 %v754, %v802
  %v804 = vpop.f32.mrf.mxu0
  %v805 = vadd.f32 %v756, %v804
  %806 = vmatmul.bf16.gmra.mxu0 %v571
  %v807 = vpop.f32.mrf.mxu0
  %v808 = vadd.f32 %v759, %v807
  %v809 = vpop.f32.mrf.mxu0
  %v810 = vadd.f32 %v761, %v809
  %811 = vmatmul.bf16.gmra.mxu0 %v574
  %v812 = vpop.f32.mrf.mxu0
  %v813 = vadd.f32 %v764, %v812
  %v814 = vpop.f32.mrf.mxu0
  %v815 = vadd.f32 %v766, %v814
  %816 = vmatmul.bf16.gmra.mxu0 %v577
  %v817 = vpop.f32.mrf.mxu0
  %v818 = vadd.f32 %v769, %v817
  %v819 = vpop.f32.mrf.mxu0
  %v820 = vadd.f32 %v771, %v819
  %821 = vmatmul.bf16.gmra.mxu0 %v580
  %v822 = vpop.f32.mrf.mxu0
  %v823 = vadd.f32 %v774, %v822
  %v824 = vpop.f32.mrf.mxu0
  %v825 = vadd.f32 %v776, %v824
  %826 = vdwg.mxu0
  %v827 = vld [vmem:[%s2] sm:$0x1]
  %v829 = vperm.slane %v827, 0
  %v831 = vmul.f32 %v788, %v829
  %v832 = vmul.f32 %v790, %v829
  %v833 = vmul.f32 %v793, %v829
  %v834 = vmul.f32 %v795, %v829
  %v835 = vmul.f32 %v798, %v829
  %v836 = vmul.f32 %v800, %v829
  %v837 = vmul.f32 %v803, %v829
  %v838 = vmul.f32 %v805, %v829
  %v839 = vmul.f32 %v808, %v829
  %v840 = vmul.f32 %v810, %v829
  %v841 = vmul.f32 %v813, %v829
  %v842 = vmul.f32 %v815, %v829
  %v843 = vmul.f32 %v818, %v829
  %v844 = vmul.f32 %v820, %v829
  %v845 = vmul.f32 %v823, %v829
  %v846 = vmul.f32 %v825, %v829
  %v847 = vld [vmem:[%s3] sm:$0x1]
  %v849 = vperm.slane %v847, 0
  %v851 = vadd.f32 %v831, %v849
  %v852 = vadd.f32 %v832, %v849
  %v853 = vadd.f32 %v833, %v849
  %v854 = vadd.f32 %v834, %v849
  %v855 = vadd.f32 %v835, %v849
  %v856 = vadd.f32 %v836, %v849
  %v857 = vadd.f32 %v837, %v849
  %v858 = vadd.f32 %v838, %v849
  %v859 = vadd.f32 %v839, %v849
  %v860 = vadd.f32 %v840, %v849
  %v861 = vadd.f32 %v841, %v849
  %v862 = vadd.f32 %v842, %v849
  %v863 = vadd.f32 %v843, %v849
  %v864 = vadd.f32 %v844, %v849
  %v865 = vadd.f32 %v845, %v849
  %v866 = vadd.f32 %v846, %v849
  %v867 = vld [vmem:[%s4] sm:$0xff]
  %v868 = vld [vmem:[%s4 + $0x8] sm:$0xff]
  %v869 = vld [vmem:[%s4 + $0x10] sm:$0xff]
  %v870 = vld [vmem:[%s4 + $0x18] sm:$0xff]
  %v871 = vld [vmem:[%s4 + $0x20] sm:$0xff]
  %v872 = vld [vmem:[%s4 + $0x28] sm:$0xff]
  %v873 = vld [vmem:[%s4 + $0x30] sm:$0xff]
  %v874 = vld [vmem:[%s4 + $0x38] sm:$0xff]
  %v875 = vld [vmem:[%s4 + $0x40] sm:$0xff]
  %v876 = vld [vmem:[%s4 + $0x48] sm:$0xff]
  %v877 = vld [vmem:[%s4 + $0x50] sm:$0xff]
  %v878 = vld [vmem:[%s4 + $0x58] sm:$0xff]
  %v879 = vld [vmem:[%s4 + $0x60] sm:$0xff]
  %v880 = vld [vmem:[%s4 + $0x68] sm:$0xff]
  %v881 = vld [vmem:[%s4 + $0x70] sm:$0xff]
  %v882 = vld [vmem:[%s4 + $0x78] sm:$0xff]
  %v883 = vadd.f32 %v851, %v867
  %v884 = vadd.f32 %v852, %v868
  %v885 = vadd.f32 %v853, %v869
  %v886 = vadd.f32 %v854, %v870
  %v887 = vadd.f32 %v855, %v871
  %v888 = vadd.f32 %v856, %v872
  %v889 = vadd.f32 %v857, %v873
  %v890 = vadd.f32 %v858, %v874
  %v891 = vadd.f32 %v859, %v875
  %v892 = vadd.f32 %v860, %v876
  %v893 = vadd.f32 %v861, %v877
  %v894 = vadd.f32 %v862, %v878
  %v895 = vadd.f32 %v863, %v879
  %v896 = vadd.f32 %v864, %v880
  %v897 = vadd.f32 %v865, %v881
  %v898 = vadd.f32 %v866, %v882
  %v899 = vmax.f32 %v883, 0.0
  %v900 = vmax.f32 %v884, 0.0
  %v901 = vmax.f32 %v885, 0.0
  %v902 = vmax.f32 %v886, 0.0
  %v903 = vmax.f32 %v887, 0.0
  %v904 = vmax.f32 %v888, 0.0
  %v905 = vmax.f32 %v889, 0.0
  %v906 = vmax.f32 %v890, 0.0
  %v907 = vmax.f32 %v891, 0.0
  %v908 = vmax.f32 %v892, 0.0
  %v909 = vmax.f32 %v893, 0.0
  %v910 = vmax.f32 %v894, 0.0
  %v911 = vmax.f32 %v895, 0.0
  %v912 = vmax.f32 %v896, 0.0
  %v913 = vmax.f32 %v897, 0.0
  %v914 = vmax.f32 %v898, 0.0
  %915 = vst.msk [vmem:[%s5] sm:$0xff] %vm557, %v899
  %916 = vst.msk [vmem:[%s5 + $0x8] sm:$0xff] %vm557, %v900
  %917 = vst.msk [vmem:[%s5 + $0x10] sm:$0xff] %vm557, %v901
  %918 = vst.msk [vmem:[%s5 + $0x18] sm:$0xff] %vm557, %v902
  %919 = vst.msk [vmem:[%s5 + $0x20] sm:$0xff] %vm557, %v903
  %920 = vst.msk [vmem:[%s5 + $0x28] sm:$0xff] %vm557, %v904
  %921 = vst.msk [vmem:[%s5 + $0x30] sm:$0xff] %vm557, %v905
  %922 = vst.msk [vmem:[%s5 + $0x38] sm:$0xff] %vm557, %v906
  %923 = vst.msk [vmem:[%s5 + $0x40] sm:$0xff] %vm557, %v907
  %924 = vst.msk [vmem:[%s5 + $0x48] sm:$0xff] %vm557, %v908
  %925 = vst.msk [vmem:[%s5 + $0x50] sm:$0xff] %vm557, %v909
  %926 = vst.msk [vmem:[%s5 + $0x58] sm:$0xff] %vm557, %v910
  %927 = vst.msk [vmem:[%s5 + $0x60] sm:$0xff] %vm557, %v911
  %928 = vst.msk [vmem:[%s5 + $0x68] sm:$0xff] %vm557, %v912
  %929 = vst.msk [vmem:[%s5 + $0x70] sm:$0xff] %vm557, %v913
  %930 = vst.msk [vmem:[%s5 + $0x78] sm:$0xff] %vm557, %v914
  // Predicated region
  $region22: #{resnet_forward.16} parent=0 // pred_check
    _
  $region23: #{resnet_forward.16} parent=0 // pred_check_branch
    %932 = sbr.rel (0) target = $region25
  $region24: #{resnet_forward.16} parent=0 // pred_region
    _
  $region25: #{resnet_forward.16} parent=0 // pred_fallthru
    _
  // Predicated region
  $region26: #{resnet_forward.16} parent=0 // pred_check
    _
  $region27: #{resnet_forward.16} parent=0 // pred_check_branch
    %934 = sbr.rel (0) target = $region29
  $region28: #{resnet_forward.16} parent=0 // pred_region
    _
  $region29: #{resnet_forward.16} parent=0 // pred_fallthru
    _

// kernel: resnet_forward.18
$region0: #{resnet_forward.18}
  #allocation0 [shape = 'u32[]', space=smem, size = 0x4, offset = 0x4, fixed_abs, tag = 'smem constant byte address 0x4 - core index']
  #allocation1 [shape = 'u32[72,128]{1,0:T(1,128)}', space=vmem, size = 0x9000, scoped, tag = 'internal scratch']
  %s0 = inlined_call_operand.vmem [shape: bf16[32,64], index: 0, kind: input, shape index: {}]
  %s1 = inlined_call_operand.vmem [shape: bf16[64,128], index: 1, kind: input, shape index: {}]
  %s2 = inlined_call_operand.vmem [shape: f32[1,128], index: 2, kind: input, shape index: {}]
  %s3 = inlined_call_operand.vmem [shape: f32[1,128], index: 3, kind: input, shape index: {}]
  %s4 = inlined_call_operand.vmem [shape: f32[32,128], index: 4, kind: output, shape index: {}]
  %s5 = sld [smem:[#allocation0]]
  $region26: #{resnet_forward.18} parent=0
    _
  %s7 = ssub.s32 1, %s5
  %s8 = scalar_select 0, %s7, %s5
  // Predicated region
  $region2: #{resnet_forward.18} parent=0 // pred_check
    _
  $region3: #{resnet_forward.18} parent=0 // pred_check_branch
    %10 = sbr.rel (0) target = $region5
  $region4: #{resnet_forward.18} parent=0 // pred_region
    _
  $region5: #{resnet_forward.18} parent=0 // pred_fallthru
    _
  // Predicated region
  $region6: #{resnet_forward.18} parent=0 // pred_check
    _
  $region7: #{resnet_forward.18} parent=0 // pred_check_branch
    %12 = sbr.rel (0) target = $region9
  $region8: #{resnet_forward.18} parent=0 // pred_region
    _
  $region9: #{resnet_forward.18} parent=0 // pred_fallthru
    _
  // Predicated region
  $region10: #{resnet_forward.18} parent=0 // pred_check
    _
  $region11: #{resnet_forward.18} parent=0 // pred_check_branch
    %14 = sbr.rel (0) target = $region13
  $region12: #{resnet_forward.18} parent=0 // pred_region
    _
  $region13: #{resnet_forward.18} parent=0 // pred_fallthru
    _
  // Predicated region
  $region14: #{resnet_forward.18} parent=0 // pred_check
    _
  $region15: #{resnet_forward.18} parent=0 // pred_check_branch
    %16 = sbr.rel (0) target = $region17
  $region16: #{resnet_forward.18} parent=0 // pred_region
    _
  $region17: #{resnet_forward.18} parent=0 // pred_fallthru
    _
  %v18 = vld [vmem:[%s0] sm:$0xf]
  %v19 = vld [vmem:[%s0 + $0x4] sm:$0xf]
  %v20 = vld [vmem:[%s0 + $0x8] sm:$0xf]
  %v21 = vld [vmem:[%s0 + $0xc] sm:$0xf]
  %v22 = vld [vmem:[%s1] sm:$0xf]
  %v23 = vld [vmem:[%s1 + $0x4] sm:$0xf]
  %v24 = vld [vmem:[%s1 + $0x8] sm:$0xf]
  %v25 = vld [vmem:[%s1 + $0xc] sm:$0xf]
  %v26 = vld [vmem:[%s1 + $0x10] sm:$0xf]
  %v27 = vld [vmem:[%s1 + $0x14] sm:$0xf]
  %v28 = vld [vmem:[%s1 + $0x18] sm:$0xf]
  %v29 = vld [vmem:[%s1 + $0x1c] sm:$0xf]
  %v34 = vunpack.c.l.b16 %v18
  %v35 = vunpack.c.l.b16 %v19
  %v36 = vunpack.c.l.b16 %v20
  %v37 = vunpack.c.l.b16 %v21
  %v38 = vpack.c.b16 %v35, %v34
  %v39 = vpack.c.b16 %v37, %v36
  %v48 = vunpack.c.l.b16 %v22
  %v49 = vunpack.c.l.b16 %v23
  %v50 = vunpack.c.l.b16 %v24
  %v51 = vunpack.c.l.b16 %v25
  %v52 = vunpack.c.l.b16 %v26
  %v53 = vunpack.c.l.b16 %v27
  %v54 = vunpack.c.l.b16 %v28
  %v55 = vunpack.c.l.b16 %v29
  %v56 = vpack.c.b16 %v49, %v48
  %v57 = vpack.c.b16 %v51, %v50
  %v58 = vpack.c.b16 %v53, %v52
  %v59 = vpack.c.b16 %v55, %v54
  %vm64 = vcmask 523264
  %v66 = vsel %vm64, %v38, 0
  %v69 = vsel %vm64, %v39, 0
  %71 = vmatpush.bf16.msra.mxu0 0
  %72 = vmatpush.bf16.msra.mxu0 0
  %73 = vmatpush.bf16.msra.mxu0 0
  %74 = vmatpush.bf16.msra.mxu0 0
  %75 = vmatpush.bf16.msra.mxu0 %v59
  %76 = vmatpush.bf16.msra.mxu0 %v58
  %77 = vmatpush.bf16.msra.mxu0 %v57
  %78 = vmatpush.bf16.msra.mxu0 %v56
  %79 = vmatmul.bf16.gmra.mxu0 %v66
  %v80 = vpop.f32.mrf.mxu0
  %v81 = vadd.f32 0.0, %v80
  %v82 = vpop.f32.mrf.mxu0
  %v83 = vadd.f32 0.0, %v82
  %84 = vmatmul.bf16.gmra.mxu0 %v69
  %v85 = vpop.f32.mrf.mxu0
  %v86 = vadd.f32 0.0, %v85
  %v87 = vpop.f32.mrf.mxu0
  %v88 = vadd.f32 0.0, %v87
  %89 = vdwg.mxu0
  %v90 = vld [vmem:[%s2] sm:$0x1]
  %v92 = vperm.slane %v90, 0
  %v94 = vmul.f32 %v81, %v92
  %v95 = vmul.f32 %v83, %v92
  %v96 = vmul.f32 %v86, %v92
  %v97 = vmul.f32 %v88, %v92
  %v98 = vld [vmem:[%s3] sm:$0x1]
  %v100 = vperm.slane %v98, 0
  %v102 = vadd.f32 %v94, %v100
  %v103 = vadd.f32 %v95, %v100
  %v104 = vadd.f32 %v96, %v100
  %v105 = vadd.f32 %v97, %v100
  %106 = vst [vmem:[%s4] sm:$0xff] %v102
  %107 = vst [vmem:[%s4 + $0x8] sm:$0xff] %v103
  %108 = vst [vmem:[%s4 + $0x10] sm:$0xff] %v104
  %109 = vst [vmem:[%s4 + $0x18] sm:$0xff] %v105
  // Predicated region
  $region18: #{resnet_forward.18} parent=0 // pred_check
    _
  $region19: #{resnet_forward.18} parent=0 // pred_check_branch
    %111 = sbr.rel (0) target = $region21
  $region20: #{resnet_forward.18} parent=0 // pred_region
    _
  $region21: #{resnet_forward.18} parent=0 // pred_fallthru
    _
  // Predicated region
  $region22: #{resnet_forward.18} parent=0 // pred_check
    _
  $region23: #{resnet_forward.18} parent=0 // pred_check_branch
    %113 = sbr.rel (0) target = $region25
  $region24: #{resnet_forward.18} parent=0 // pred_region
    _
  $region25: #{resnet_forward.18} parent=0 // pred_fallthru
    _

// kernel: resnet_forward.17
$region0: #{resnet_forward.17}
  #allocation0 [shape = 'u32[]', space=smem, size = 0x4, offset = 0x4, fixed_abs, tag = 'smem constant byte address 0x4 - core index']
  #allocation1 [shape = 'u32[72,128]{1,0:T(1,128)}', space=vmem, size = 0x9000, scoped, tag = 'internal scratch']
  %s0 = inlined_call_operand.vmem [shape: bf16[32,576], index: 0, kind: input, shape index: {}]
  %s1 = inlined_call_operand.vmem [shape: bf16[576,128], index: 1, kind: input, shape index: {}]
  %s2 = inlined_call_operand.vmem [shape: f32[1,128], index: 2, kind: input, shape index: {}]
  %s3 = inlined_call_operand.vmem [shape: f32[1,128], index: 3, kind: input, shape index: {}]
  %s4 = inlined_call_operand.vmem [shape: f32[32,128], index: 4, kind: output, shape index: {}]
  %s5 = sld [smem:[#allocation0]]
  $region26: #{resnet_forward.17} parent=0
    _
  %s7 = ssub.s32 1, %s5
  %s8 = scalar_select 0, %s7, %s5
  // Predicated region
  $region2: #{resnet_forward.17} parent=0 // pred_check
    _
  $region3: #{resnet_forward.17} parent=0 // pred_check_branch
    %10 = sbr.rel (0) target = $region5
  $region4: #{resnet_forward.17} parent=0 // pred_region
    _
  $region5: #{resnet_forward.17} parent=0 // pred_fallthru
    _
  // Predicated region
  $region6: #{resnet_forward.17} parent=0 // pred_check
    _
  $region7: #{resnet_forward.17} parent=0 // pred_check_branch
    %12 = sbr.rel (0) target = $region9
  $region8: #{resnet_forward.17} parent=0 // pred_region
    _
  $region9: #{resnet_forward.17} parent=0 // pred_fallthru
    _
  // Predicated region
  $region10: #{resnet_forward.17} parent=0 // pred_check
    _
  $region11: #{resnet_forward.17} parent=0 // pred_check_branch
    %14 = sbr.rel (0) target = $region13
  $region12: #{resnet_forward.17} parent=0 // pred_region
    _
  $region13: #{resnet_forward.17} parent=0 // pred_fallthru
    _
  // Predicated region
  $region14: #{resnet_forward.17} parent=0 // pred_check
    _
  $region15: #{resnet_forward.17} parent=0 // pred_check_branch
    %16 = sbr.rel (0) target = $region17
  $region16: #{resnet_forward.17} parent=0 // pred_region
    _
  $region17: #{resnet_forward.17} parent=0 // pred_fallthru
    _
  %v18 = vld [vmem:[%s0] sm:$0xff]
  %v19 = vld [vmem:[%s0 + $0x8] sm:$0xff]
  %v20 = vld [vmem:[%s0 + $0x10] sm:$0xf]
  %v21 = vld [vmem:[%s0 + $0x14] sm:$0xff]
  %v22 = vld [vmem:[%s0 + $0x1c] sm:$0xff]
  %v23 = vld [vmem:[%s0 + $0x24] sm:$0xf]
  %v24 = vld [vmem:[%s0 + $0x28] sm:$0xff]
  %v25 = vld [vmem:[%s0 + $0x30] sm:$0xff]
  %v26 = vld [vmem:[%s0 + $0x38] sm:$0xf]
  %v27 = vld [vmem:[%s0 + $0x3c] sm:$0xff]
  %v28 = vld [vmem:[%s0 + $0x44] sm:$0xff]
  %v29 = vld [vmem:[%s0 + $0x4c] sm:$0xf]
  %v30 = vld [vmem:[%s1] sm:$0xf]
  %v31 = vld [vmem:[%s1 + $0x4] sm:$0xf]
  %v32 = vld [vmem:[%s1 + $0x8] sm:$0xf]
  %v33 = vld [vmem:[%s1 + $0xc] sm:$0xf]
  %v34 = vld [vmem:[%s1 + $0x10] sm:$0xf]
  %v35 = vld [vmem:[%s1 + $0x14] sm:$0xf]
  %v36 = vld [vmem:[%s1 + $0x18] sm:$0xf]
  %v37 = vld [vmem:[%s1 + $0x1c] sm:$0xf]
  %v38 = vld [vmem:[%s1 + $0x20] sm:$0xf]
  %v39 = vld [vmem:[%s1 + $0x24] sm:$0xf]
  %v40 = vld [vmem:[%s1 + $0x28] sm:$0xf]
  %v41 = vld [vmem:[%s1 + $0x2c] sm:$0xf]
  %v42 = vld [vmem:[%s1 + $0x30] sm:$0xf]
  %v43 = vld [vmem:[%s1 + $0x34] sm:$0xf]
  %v44 = vld [vmem:[%s1 + $0x38] sm:$0xf]
  %v45 = vld [vmem:[%s1 + $0x3c] sm:$0xf]
  %v46 = vld [vmem:[%s1 + $0x40] sm:$0xf]
  %v47 = vld [vmem:[%s1 + $0x44] sm:$0xf]
  %v48 = vld [vmem:[%s1 + $0x48] sm:$0xf]
  %v49 = vld [vmem:[%s1 + $0x4c] sm:$0xf]
  %v50 = vld [vmem:[%s1 + $0x50] sm:$0xf]
  %v51 = vld [vmem:[%s1 + $0x54] sm:$0xf]
  %v52 = vld [vmem:[%s1 + $0x58] sm:$0xf]
  %v53 = vld [vmem:[%s1 + $0x5c] sm:$0xf]
  %v54 = vld [vmem:[%s1 + $0x60] sm:$0xf]
  %v55 = vld [vmem:[%s1 + $0x64] sm:$0xf]
  %v56 = vld [vmem:[%s1 + $0x68] sm:$0xf]
  %v57 = vld [vmem:[%s1 + $0x6c] sm:$0xf]
  %v58 = vld [vmem:[%s1 + $0x70] sm:$0xf]
  %v59 = vld [vmem:[%s1 + $0x74] sm:$0xf]
  %v60 = vld [vmem:[%s1 + $0x78] sm:$0xf]
  %v61 = vld [vmem:[%s1 + $0x7c] sm:$0xf]
  %v62 = vld [vmem:[%s1 + $0x80] sm:$0xf]
  %v63 = vld [vmem:[%s1 + $0x84] sm:$0xf]
  %v64 = vld [vmem:[%s1 + $0x88] sm:$0xf]
  %v65 = vld [vmem:[%s1 + $0x8c] sm:$0xf]
  %v66 = vld [vmem:[%s1 + $0x90] sm:$0xf]
  %v67 = vld [vmem:[%s1 + $0x94] sm:$0xf]
  %v68 = vld [vmem:[%s1 + $0x98] sm:$0xf]
  %v69 = vld [vmem:[%s1 + $0x9c] sm:$0xf]
  %v70 = vld [vmem:[%s1 + $0xa0] sm:$0xf]
  %v71 = vld [vmem:[%s1 + $0xa4] sm:$0xf]
  %v72 = vld [vmem:[%s1 + $0xa8] sm:$0xf]
  %v73 = vld [vmem:[%s1 + $0xac] sm:$0xf]
  %v74 = vld [vmem:[%s1 + $0xb0] sm:$0xf]
  %v75 = vld [vmem:[%s1 + $0xb4] sm:$0xf]
  %v76 = vld [vmem:[%s1 + $0xb8] sm:$0xf]
  %v77 = vld [vmem:[%s1 + $0xbc] sm:$0xf]
  %v78 = vld [vmem:[%s1 + $0xc0] sm:$0xf]
  %v79 = vld [vmem:[%s1 + $0xc4] sm:$0xf]
  %v80 = vld [vmem:[%s1 + $0xc8] sm:$0xf]
  %v81 = vld [vmem:[%s1 + $0xcc] sm:$0xf]
  %v82 = vld [vmem:[%s1 + $0xd0] sm:$0xf]
  %v83 = vld [vmem:[%s1 + $0xd4] sm:$0xf]
  %v84 = vld [vmem:[%s1 + $0xd8] sm:$0xf]
  %v85 = vld [vmem:[%s1 + $0xdc] sm:$0xf]
  %v86 = vld [vmem:[%s1 + $0xe0] sm:$0xf]
  %v87 = vld [vmem:[%s1 + $0xe4] sm:$0xf]
  %v88 = vld [vmem:[%s1 + $0xe8] sm:$0xf]
  %v89 = vld [vmem:[%s1 + $0xec] sm:$0xf]
  %v90 = vld [vmem:[%s1 + $0xf0] sm:$0xf]
  %v91 = vld [vmem:[%s1 + $0xf4] sm:$0xf]
  %v92 = vld [vmem:[%s1 + $0xf8] sm:$0xf]
  %v93 = vld [vmem:[%s1 + $0xfc] sm:$0xf]
  %v94 = vld [vmem:[%s1 + $0x100] sm:$0xf]
  %v95 = vld [vmem:[%s1 + $0x104] sm:$0xf]
  %v96 = vld [vmem:[%s1 + $0x108] sm:$0xf]
  %v97 = vld [vmem:[%s1 + $0x10c] sm:$0xf]
  %v98 = vld [vmem:[%s1 + $0x110] sm:$0xf]
  %v99 = vld [vmem:[%s1 + $0x114] sm:$0xf]
  %v100 = vld [vmem:[%s1 + $0x118] sm:$0xf]
  %v101 = vld [vmem:[%s1 + $0x11c] sm:$0xf]
  %v114 = vunpack.c.l.b16 %v18
  %v115 = vunpack.c.h.b16 %v18
  %v116 = vunpack.c.l.b16 %v19
  %v117 = vunpack.c.h.b16 %v19
  %v118 = vunpack.c.l.b16 %v20
  %v119 = vunpack.c.l.b16 %v21
  %v120 = vunpack.c.h.b16 %v21
  %v121 = vunpack.c.l.b16 %v22
  %v122 = vunpack.c.h.b16 %v22
  %v123 = vunpack.c.l.b16 %v23
  %v124 = vunpack.c.l.b16 %v24
  %v125 = vunpack.c.h.b16 %v24
  %v126 = vunpack.c.l.b16 %v25
  %v127 = vunpack.c.h.b16 %v25
  %v128 = vunpack.c.l.b16 %v26
  %v129 = vunpack.c.l.b16 %v27
  %v130 = vunpack.c.h.b16 %v27
  %v131 = vunpack.c.l.b16 %v28
  %v132 = vunpack.c.h.b16 %v28
  %v133 = vunpack.c.l.b16 %v29
  %v134 = vpack.c.b16 %v119, %v114
  %v135 = vpack.c.b16 %v120, %v115
  %v136 = vpack.c.b16 %v121, %v116
  %v137 = vpack.c.b16 %v122, %v117
  %v138 = vpack.c.b16 %v123, %v118
  %v139 = vpack.c.b16 %v129, %v124
  %v140 = vpack.c.b16 %v130, %v125
  %v141 = vpack.c.b16 %v131, %v126
  %v142 = vpack.c.b16 %v132, %v127
  %v143 = vpack.c.b16 %v133, %v128
  %v224 = vunpack.c.l.b16 %v30
  %v225 = vunpack.c.l.b16 %v31
  %v226 = vunpack.c.l.b16 %v32
  %v227 = vunpack.c.l.b16 %v33
  %v228 = vunpack.c.l.b16 %v34
  %v229 = vunpack.c.l.b16 %v35
  %v230 = vunpack.c.l.b16 %v36
  %v231 = vunpack.c.l.b16 %v37
  %v232 = vunpack.c.l.b16 %v38
  %v233 = vunpack.c.l.b16 %v39
  %v234 = vunpack.c.l.b16 %v40
  %v235 = vunpack.c.l.b16 %v41
  %v236 = vunpack.c.l.b16 %v42
  %v237 = vunpack.c.l.b16 %v43
  %v238 = vunpack.c.l.b16 %v44
  %v239 = vunpack.c.l.b16 %v45
  %v240 = vunpack.c.l.b16 %v46
  %v241 = vunpack.c.l.b16 %v47
  %v242 = vunpack.c.l.b16 %v48
  %v243 = vunpack.c.l.b16 %v49
  %v244 = vunpack.c.l.b16 %v50
  %v245 = vunpack.c.l.b16 %v51
  %v246 = vunpack.c.l.b16 %v52
  %v247 = vunpack.c.l.b16 %v53
  %v248 = vunpack.c.l.b16 %v54
  %v249 = vunpack.c.l.b16 %v55
  %v250 = vunpack.c.l.b16 %v56
  %v251 = vunpack.c.l.b16 %v57
  %v252 = vunpack.c.l.b16 %v58
  %v253 = vunpack.c.l.b16 %v59
  %v254 = vunpack.c.l.b16 %v60
  %v255 = vunpack.c.l.b16 %v61
  %v256 = vunpack.c.l.b16 %v62
  %v257 = vunpack.c.l.b16 %v63
  %v258 = vunpack.c.l.b16 %v64
  %v259 = vunpack.c.l.b16 %v65
  %v260 = vunpack.c.l.b16 %v66
  %v261 = vunpack.c.l.b16 %v67
  %v262 = vunpack.c.l.b16 %v68
  %v263 = vunpack.c.l.b16 %v69
  %v264 = vunpack.c.l.b16 %v70
  %v265 = vunpack.c.l.b16 %v71
  %v266 = vunpack.c.l.b16 %v72
  %v267 = vunpack.c.l.b16 %v73
  %v268 = vunpack.c.l.b16 %v74
  %v269 = vunpack.c.l.b16 %v75
  %v270 = vunpack.c.l.b16 %v76
  %v271 = vunpack.c.l.b16 %v77
  %v272 = vunpack.c.l.b16 %v78
  %v273 = vunpack.c.l.b16 %v79
  %v274 = vunpack.c.l.b16 %v80
  %v275 = vunpack.c.l.b16 %v81
  %v276 = vunpack.c.l.b16 %v82
  %v277 = vunpack.c.l.b16 %v83
  %v278 = vunpack.c.l.b16 %v84
  %v279 = vunpack.c.l.b16 %v85
  %v280 = vunpack.c.l.b16 %v86
  %v281 = vunpack.c.l.b16 %v87
  %v282 = vunpack.c.l.b16 %v88
  %v283 = vunpack.c.l.b16 %v89
  %v284 = vunpack.c.l.b16 %v90
  %v285 = vunpack.c.l.b16 %v91
  %v286 = vunpack.c.l.b16 %v92
  %v287 = vunpack.c.l.b16 %v93
  %v288 = vunpack.c.l.b16 %v94
  %v289 = vunpack.c.l.b16 %v95
  %v290 = vunpack.c.l.b16 %v96
  %v291 = vunpack.c.l.b16 %v97
  %v292 = vunpack.c.l.b16 %v98
  %v293 = vunpack.c.l.b16 %v99
  %v294 = vunpack.c.l.b16 %v100
  %v295 = vunpack.c.l.b16 %v101
  %v296 = vpack.c.b16 %v225, %v224
  %v297 = vpack.c.b16 %v227, %v226
  %v298 = vpack.c.b16 %v229, %v228
  %v299 = vpack.c.b16 %v231, %v230
  %v300 = vpack.c.b16 %v233, %v232
  %v301 = vpack.c.b16 %v235, %v234
  %v302 = vpack.c.b16 %v237, %v236
  %v303 = vpack.c.b16 %v239, %v238
  %v304 = vpack.c.b16 %v241, %v240
  %v305 = vpack.c.b16 %v243, %v242
  %v306 = vpack.c.b16 %v245, %v244
  %v307 = vpack.c.b16 %v247, %v246
  %v308 = vpack.c.b16 %v249, %v248
  %v309 = vpack.c.b16 %v251, %v250
  %v310 = vpack.c.b16 %v253, %v252
  %v311 = vpack.c.b16 %v255, %v254
  %v312 = vpack.c.b16 %v257, %v256
  %v313 = vpack.c.b16 %v259, %v258
  %v314 = vpack.c.b16 %v261, %v260
  %v315 = vpack.c.b16 %v263, %v262
  %v316 = vpack.c.b16 %v265, %v264
  %v317 = vpack.c.b16 %v267, %v266
  %v318 = vpack.c.b16 %v269, %v268
  %v319 = vpack.c.b16 %v271, %v270
  %v320 = vpack.c.b16 %v273, %v272
  %v321 = vpack.c.b16 %v275, %v274
  %v322 = vpack.c.b16 %v277, %v276
  %v323 = vpack.c.b16 %v279, %v278
  %v324 = vpack.c.b16 %v281, %v280
  %v325 = vpack.c.b16 %v283, %v282
  %v326 = vpack.c.b16 %v285, %v284
  %v327 = vpack.c.b16 %v287, %v286
  %v328 = vpack.c.b16 %v289, %v288
  %v329 = vpack.c.b16 %v291, %v290
  %v330 = vpack.c.b16 %v293, %v292
  %v331 = vpack.c.b16 %v295, %v294
  %vm368 = vcmask 523264
  %v370 = vsel %vm368, %v138, 0
  %v373 = vsel %vm368, %v143, 0
  %375 = vmatpush.bf16.msra.mxu0 %v303
  %376 = vmatpush.bf16.msra.mxu0 %v302
  %377 = vmatpush.bf16.msra.mxu0 %v301
  %378 = vmatpush.bf16.msra.mxu0 %v300
  %379 = vmatpush.bf16.msra.mxu0 %v299
  %380 = vmatpush.bf16.msra.mxu0 %v298
  %381 = vmatpush.bf16.msra.mxu0 %v297
  %382 = vmatpush.bf16.msra.mxu0 %v296
  %383 = vmatmul.bf16.gmra.mxu0 %v134
  %v384 = vpop.f32.mrf.mxu0
  %v385 = vadd.f32 0.0, %v384
  %v386 = vpop.f32.mrf.mxu0
  %v387 = vadd.f32 0.0, %v386
  %388 = vmatmul.bf16.gmra.mxu0 %v139
  %v389 = vpop.f32.mrf.mxu0
  %v390 = vadd.f32 0.0, %v389
  %v391 = vpop.f32.mrf.mxu0
  %v392 = vadd.f32 0.0, %v391
  %393 = vdwg.mxu0
  %394 = vmatpush.bf16.msra.mxu0 %v311
  %395 = vmatpush.bf16.msra.mxu0 %v310
  %396 = vmatpush.bf16.msra.mxu0 %v309
  %397 = vmatpush.bf16.msra.mxu0 %v308
  %398 = vmatpush.bf16.msra.mxu0 %v307
  %399 = vmatpush.bf16.msra.mxu0 %v306
  %400 = vmatpush.bf16.msra.mxu0 %v305
  %401 = vmatpush.bf16.msra.mxu0 %v304
  %402 = vmatmul.bf16.gmra.mxu0 %v135
  %v403 = vpop.f32.mrf.mxu0
  %v404 = vadd.f32 %v385, %v403
  %v405 = vpop.f32.mrf.mxu0
  %v406 = vadd.f32 %v387, %v405
  %407 = vmatmul.bf16.gmra.mxu0 %v140
  %v408 = vpop.f32.mrf.mxu0
  %v409 = vadd.f32 %v390, %v408
  %v410 = vpop.f32.mrf.mxu0
  %v411 = vadd.f32 %v392, %v410
  %412 = vdwg.mxu0
  %413 = vmatpush.bf16.msra.mxu0 %v319
  %414 = vmatpush.bf16.msra.mxu0 %v318
  %415 = vmatpush.bf16.msra.mxu0 %v317
  %416 = vmatpush.bf16.msra.mxu0 %v316
  %417 = vmatpush.bf16.msra.mxu0 %v315
  %418 = vmatpush.bf16.msra.mxu0 %v314
  %419 = vmatpush.bf16.msra.mxu0 %v313
  %420 = vmatpush.bf16.msra.mxu0 %v312
  %421 = vmatmul.bf16.gmra.mxu0 %v136
  %v422 = vpop.f32.mrf.mxu0
  %v423 = vadd.f32 %v404, %v422
  %v424 = vpop.f32.mrf.mxu0
  %v425 = vadd.f32 %v406, %v424
  %426 = vmatmul.bf16.gmra.mxu0 %v141
  %v427 = vpop.f32.mrf.mxu0
  %v428 = vadd.f32 %v409, %v427
  %v429 = vpop.f32.mrf.mxu0
  %v430 = vadd.f32 %v411, %v429
  %431 = vdwg.mxu0
  %432 = vmatpush.bf16.msra.mxu0 %v327
  %433 = vmatpush.bf16.msra.mxu0 %v326
  %434 = vmatpush.bf16.msra.mxu0 %v325
  %435 = vmatpush.bf16.msra.mxu0 %v324
  %436 = vmatpush.bf16.msra.mxu0 %v323
  %437 = vmatpush.bf16.msra.mxu0 %v322
  %438 = vmatpush.bf16.msra.mxu0 %v321
  %439 = vmatpush.bf16.msra.mxu0 %v320
  %440 = vmatmul.bf16.gmra.mxu0 %v137
  %v441 = vpop.f32.mrf.mxu0
  %v442 = vadd.f32 %v423, %v441
  %v443 = vpop.f32.mrf.mxu0
  %v444 = vadd.f32 %v425, %v443
  %445 = vmatmul.bf16.gmra.mxu0 %v142
  %v446 = vpop.f32.mrf.mxu0
  %v447 = vadd.f32 %v428, %v446
  %v448 = vpop.f32.mrf.mxu0
  %v449 = vadd.f32 %v430, %v448
  %450 = vdwg.mxu0
  %451 = vmatpush.bf16.msra.mxu0 0
  %452 = vmatpush.bf16.msra.mxu0 0
  %453 = vmatpush.bf16.msra.mxu0 0
  %454 = vmatpush.bf16.msra.mxu0 0
  %455 = vmatpush.bf16.msra.mxu0 %v331
  %456 = vmatpush.bf16.msra.mxu0 %v330
  %457 = vmatpush.bf16.msra.mxu0 %v329
  %458 = vmatpush.bf16.msra.mxu0 %v328
  %459 = vmatmul.bf16.gmra.mxu0 %v370
  %v460 = vpop.f32.mrf.mxu0
  %v461 = vadd.f32 %v442, %v460
  %v462 = vpop.f32.mrf.mxu0
  %v463 = vadd.f32 %v444, %v462
  %464 = vmatmul.bf16.gmra.mxu0 %v373
  %v465 = vpop.f32.mrf.mxu0
  %v466 = vadd.f32 %v447, %v465
  %v467 = vpop.f32.mrf.mxu0
  %v468 = vadd.f32 %v449, %v467
  %469 = vdwg.mxu0
  %v470 = vld [vmem:[%s2] sm:$0x1]
  %v472 = vperm.slane %v470, 0
  %v474 = vmul.f32 %v461, %v472
  %v475 = vmul.f32 %v463, %v472
  %v476 = vmul.f32 %v466, %v472
  %v477 = vmul.f32 %v468, %v472
  %v478 = vld [vmem:[%s3] sm:$0x1]
  %v480 = vperm.slane %v478, 0
  %v482 = vadd.f32 %v474, %v480
  %v483 = vadd.f32 %v475, %v480
  %v484 = vadd.f32 %v476, %v480
  %v485 = vadd.f32 %v477, %v480
  %v486 = vmax.f32 %v482, 0.0
  %v487 = vmax.f32 %v483, 0.0
  %v488 = vmax.f32 %v484, 0.0
  %v489 = vmax.f32 %v485, 0.0
  %490 = vst [vmem:[%s4] sm:$0xff] %v486
  %491 = vst [vmem:[%s4 + $0x8] sm:$0xff] %v487
  %492 = vst [vmem:[%s4 + $0x10] sm:$0xff] %v488
  %493 = vst [vmem:[%s4 + $0x18] sm:$0xff] %v489
  // Predicated region
  $region18: #{resnet_forward.17} parent=0 // pred_check
    _
  $region19: #{resnet_forward.17} parent=0 // pred_check_branch
    %495 = sbr.rel (0) target = $region21
  $region20: #{resnet_forward.17} parent=0 // pred_region
    _
  $region21: #{resnet_forward.17} parent=0 // pred_fallthru
    _
  // Predicated region
  $region22: #{resnet_forward.17} parent=0 // pred_check
    _
  $region23: #{resnet_forward.17} parent=0 // pred_check_branch
    %497 = sbr.rel (0) target = $region25
  $region24: #{resnet_forward.17} parent=0 // pred_region
    _
  $region25: #{resnet_forward.17} parent=0 // pred_fallthru
    _

// kernel: resnet_forward.19
$region0: #{resnet_forward.19}
  #allocation0 [shape = 'u32[]', space=smem, size = 0x4, offset = 0x4, fixed_abs, tag = 'smem constant byte address 0x4 - core index']
  #allocation1 [shape = 'u32[72,128]{1,0:T(1,128)}', space=vmem, size = 0x9000, scoped, tag = 'internal scratch']
  %s0 = inlined_call_operand.vmem [shape: bf16[32,1152], index: 0, kind: input, shape index: {}]
  %s1 = inlined_call_operand.vmem [shape: bf16[1152,128], index: 1, kind: input, shape index: {}]
  %s2 = inlined_call_operand.vmem [shape: f32[1,128], index: 2, kind: input, shape index: {}]
  %s3 = inlined_call_operand.vmem [shape: f32[1,128], index: 3, kind: input, shape index: {}]
  %s4 = inlined_call_operand.vmem [shape: f32[32,128], index: 4, kind: input, shape index: {}]
  %s5 = inlined_call_operand.vmem [shape: f32[32,128], index: 5, kind: output, shape index: {}]
  %s6 = sld [smem:[#allocation0]]
  $region91: #{resnet_forward.19} parent=0
    _
  %s8 = ssub.s32 1, %s6
  %s9 = scalar_select 0, %s8, %s6
  $region1: #{resnet_forward.19} parent=0
    #allocation2 [shape = 'u8[49152]{0}', space=vmem, size = 0xc000, scoped, tag = 'input window, operand 0']
    loop: start=0, step=1, limit=5
    $region2: #{resnet_forward.19} parent=1 // loop_pre_header
      _
    $region3: #{resnet_forward.19} parent=1 // loop_header
      %s11 = sphi 0, %s15
      %p12 = scmp.ge.s32.totalorder %s11, 5
      %s18 = sphi 0, %s37
      %s19 = sphi 0, %s33
      %s20 = sphi 0, %s29
      %s21 = sphi 0, %s18
      %s22 = sphi 0, %s19
      %s23 = sphi 0, %s20
      %s24 = sphi 0, %s21
      %s25 = sphi 0, %s22
      %s26 = sphi 0, %s23
      %s42 = sphi 0, %s44
      %s45 = sphi 0, %s42
      %s46 = sphi 0, %s45
      %s62 = sphi 0, %s46
      %s70 = sphi 0, %s72
      %s73 = sphi 0, %s70
      %s74 = sphi 0, %s73
      %s90 = sphi 0, %s74
      %s96 = sphi 0, %s98
      %s99 = sphi 0, %s96
      %s100 = sphi 0, %s99
      %s116 = sphi 0, %s100
      %s122 = sphi 0, %s124
      %s125 = sphi 0, %s122
      %s126 = sphi 0, %s125
      %s142 = sphi 0, %s126
      %s150 = sphi 0, %s152
      %s153 = sphi 0, %s150
      %s154 = sphi 0, %s153
      %s170 = sphi 0, %s154
      %s178 = sphi 0, %s180
      %s181 = sphi 0, %s178
      %s182 = sphi 0, %s181
      %s198 = sphi 0, %s182
    $region4: #{resnet_forward.19} parent=1 // loop_header_branch
      %14 = sbr.rel (%p12) target = $region8
    $region5: #{resnet_forward.19} parent=1 // loop_body
      %s16 = ssub.s32 %s11, 1
      %s17 = ssub.s32 %s11, 2
      %s27 = sadd.s32 1, %s20
      %p28 = scmp.ge.s32.totalorder %s27, 3
      %s29 = scalar_select %p28, 0, %s27
      %s30 = sadd.s32 1, %s19
      %s31 = scalar_select %p28, %s30, %s19
      %p32 = scmp.ge.s32.totalorder %s31, 1
      %s33 = scalar_select %p32, 0, %s31
      %s34 = sadd.s32 1, %s18
      %s35 = scalar_select %p32, %s34, %s18
      %p36 = scmp.ge.s32.totalorder %s35, 1
      %s37 = scalar_select %p36, 0, %s35
      %s38 = ssub.s32 %s18, %s37
      %s39 = ssub.s32 %s20, %s29
      %s40 = sor.u32 %s38, %s39
      %p41 = scmp.eq.s32.totalorder %s40, 0
      %s43 = sadd.s32 %s42, 1
      %s44 = scalar_select %p41, %s42, %s43
      %p47 = pneg %p41
      %p48 = scmp.eq.s32.totalorder %s11, 2
      %p49 = por %p47, %p48
      %p50 = scmp.ne.s32.totalorder %s42, %s45
      %p51 = scmp.eq.s32.totalorder %s11, 0
      %p52 = por %p50, %p51
      %p53 = scmp.ne.s32.totalorder %s42, %s45
      %p54 = scmp.eq.s32.totalorder %s16, 2
      %p55 = por %p53, %p54
      %p56 = scmp.ne.s32.totalorder %s45, %s46
      %p57 = scmp.eq.s32.totalorder %s16, 0
      %p58 = por %p56, %p57
      %p59 = scmp.ne.s32.totalorder %s45, %s46
      %p60 = scmp.eq.s32.totalorder %s17, 2
      %p61 = por %p59, %p60
      %p63 = scmp.ne.s32.totalorder %s46, %s62
      %p64 = scmp.eq.s32.totalorder %s17, 0
      %p65 = por %p63, %p64
      %s66 = ssub.s32 %s20, %s29
      %s67 = ssub.s32 %s19, %s33
      %s68 = sor.u32 %s66, %s67
      %p69 = scmp.eq.s32.totalorder %s68, 0
      %s71 = sadd.s32 %s70, 1
      %s72 = scalar_select %p69, %s70, %s71
      %p75 = pneg %p69
      %p76 = scmp.eq.s32.totalorder %s11, 2
      %p77 = por %p75, %p76
      %p78 = scmp.ne.s32.totalorder %s70, %s73
      %p79 = scmp.eq.s32.totalorder %s11, 0
      %p80 = por %p78, %p79
      %p81 = scmp.ne.s32.totalorder %s70, %s73
      %p82 = scmp.eq.s32.totalorder %s16, 2
      %p83 = por %p81, %p82
      %p84 = scmp.ne.s32.totalorder %s73, %s74
      %p85 = scmp.eq.s32.totalorder %s16, 0
      %p86 = por %p84, %p85
      %p87 = scmp.ne.s32.totalorder %s73, %s74
      %p88 = scmp.eq.s32.totalorder %s17, 2
      %p89 = por %p87, %p88
      %p91 = scmp.ne.s32.totalorder %s74, %s90
      %p92 = scmp.eq.s32.totalorder %s17, 0
      %p93 = por %p91, %p92
      %s94 = ssub.s32 %s19, %s33
      %p95 = scmp.eq.s32.totalorder %s94, 0
      %s97 = sadd.s32 %s96, 1
      %s98 = scalar_select %p95, %s96, %s97
      %p101 = pneg %p95
      %p102 = scmp.eq.s32.totalorder %s11, 2
      %p103 = por %p101, %p102
      %p104 = scmp.ne.s32.totalorder %s96, %s99
      %p105 = scmp.eq.s32.totalorder %s11, 0
      %p106 = por %p104, %p105
      %p107 = scmp.ne.s32.totalorder %s96, %s99
      %p108 = scmp.eq.s32.totalorder %s16, 2
      %p109 = por %p107, %p108
      %p110 = scmp.ne.s32.totalorder %s99, %s100
      %p111 = scmp.eq.s32.totalorder %s16, 0
      %p112 = por %p110, %p111
      %p113 = scmp.ne.s32.totalorder %s99, %s100
      %p114 = scmp.eq.s32.totalorder %s17, 2
      %p115 = por %p113, %p114
      %p117 = scmp.ne.s32.totalorder %s100, %s116
      %p118 = scmp.eq.s32.totalorder %s17, 0
      %p119 = por %p117, %p118
      %s120 = ssub.s32 %s19, %s33
      %p121 = scmp.eq.s32.totalorder %s120, 0
      %s123 = sadd.s32 %s122, 1
      %s124 = scalar_select %p121, %s122, %s123
      %p127 = pneg %p121
      %p128 = scmp.eq.s32.totalorder %s11, 2
      %p129 = por %p127, %p128
      %p130 = scmp.ne.s32.totalorder %s122, %s125
      %p131 = scmp.eq.s32.totalorder %s11, 0
      %p132 = por %p130, %p131
      %p133 = scmp.ne.s32.totalorder %s122, %s125
      %p134 = scmp.eq.s32.totalorder %s16, 2
      %p135 = por %p133, %p134
      %p136 = scmp.ne.s32.totalorder %s125, %s126
      %p137 = scmp.eq.s32.totalorder %s16, 0
      %p138 = por %p136, %p137
      %p139 = scmp.ne.s32.totalorder %s125, %s126
      %p140 = scmp.eq.s32.totalorder %s17, 2
      %p141 = por %p139, %p140
      %p143 = scmp.ne.s32.totalorder %s126, %s142
      %p144 = scmp.eq.s32.totalorder %s17, 0
      %p145 = por %p143, %p144
      %s146 = ssub.s32 %s18, %s37
      %s147 = ssub.s32 %s19, %s33
      %s148 = sor.u32 %s146, %s147
      %p149 = scmp.eq.s32.totalorder %s148, 0
      %s151 = sadd.s32 %s150, 1
      %s152 = scalar_select %p149, %s150, %s151
      %p155 = pneg %p149
      %p156 = scmp.eq.s32.totalorder %s11, 2
      %p157 = por %p155, %p156
      %p158 = scmp.ne.s32.totalorder %s150, %s153
      %p159 = scmp.eq.s32.totalorder %s11, 0
      %p160 = por %p158, %p159
      %p161 = scmp.ne.s32.totalorder %s150, %s153
      %p162 = scmp.eq.s32.totalorder %s16, 2
      %p163 = por %p161, %p162
      %p164 = scmp.ne.s32.totalorder %s153, %s154
      %p165 = scmp.eq.s32.totalorder %s16, 0
      %p166 = por %p164, %p165
      %p167 = scmp.ne.s32.totalorder %s153, %s154
      %p168 = scmp.eq.s32.totalorder %s17, 2
      %p169 = por %p167, %p168
      %p171 = scmp.ne.s32.totalorder %s154, %s170
      %p172 = scmp.eq.s32.totalorder %s17, 0
      %p173 = por %p171, %p172
      %s174 = ssub.s32 %s18, %s37
      %s175 = ssub.s32 %s19, %s33
      %s176 = sor.u32 %s174, %s175
      %p177 = scmp.eq.s32.totalorder %s176, 0
      %s179 = sadd.s32 %s178, 1
      %s180 = scalar_select %p177, %s178, %s179
      %p183 = pneg %p177
      %p184 = scmp.eq.s32.totalorder %s11, 2
      %p185 = por %p183, %p184
      %p186 = scmp.ne.s32.totalorder %s178, %s181
      %p187 = scmp.eq.s32.totalorder %s11, 0
      %p188 = por %p186, %p187
      %p189 = scmp.ne.s32.totalorder %s178, %s181
      %p190 = scmp.eq.s32.totalorder %s16, 2
      %p191 = por %p189, %p190
      %p192 = scmp.ne.s32.totalorder %s181, %s182
      %p193 = scmp.eq.s32.totalorder %s16, 0
      %p194 = por %p192, %p193
      %p195 = scmp.ne.s32.totalorder %s181, %s182
      %p196 = scmp.eq.s32.totalorder %s17, 2
      %p197 = por %p195, %p196
      %p199 = scmp.ne.s32.totalorder %s182, %s198
      %p200 = scmp.eq.s32.totalorder %s17, 0
      %p201 = por %p199, %p200
      %p202 = scmp.le.s32.totalorder 1, %s11
      %p203 = scmp.lt.s32.totalorder %s11, 4
      %p204 = pnand %p202, %p203
      %p205 = pneg %p204
      // Predicated region
      $region9: #{resnet_forward.19} parent=5 // pred_check
        _
      $region10: #{resnet_forward.19} parent=5 // pred_check_branch
        %207 = sbr.rel (%p204) target = $region12
      $region11: #{resnet_forward.19} parent=5 // pred_region
        %s208 = ssub.s32 %s11, 1
        // Predicated region
        $region13: #{resnet_forward.19} parent=11 // pred_check
          %p209 = pneg %p112
        $region14: #{resnet_forward.19} parent=11 // pred_check_branch
          %211 = sbr.rel (%p209) target = $region16
        $region15: #{resnet_forward.19} parent=11 // pred_region
          %p212 = scmp.lt.s32.totalorder %s22, 0
          %s213 = scalar_select %p212, %s22, 0
          %s214 = scalar_lea.vmem %s2, %s213
        $region16: #{resnet_forward.19} parent=11 // pred_fallthru
          _
        // Predicated region
        $region17: #{resnet_forward.19} parent=11 // pred_check
          %p215 = pneg %p138
        $region18: #{resnet_forward.19} parent=11 // pred_check_branch
          %217 = sbr.rel (%p215) target = $region20
        $region19: #{resnet_forward.19} parent=11 // pred_region
          %p218 = scmp.lt.s32.totalorder %s22, 0
          %s219 = scalar_select %p218, %s22, 0
          %s220 = scalar_lea.vmem %s3, %s219
        $region20: #{resnet_forward.19} parent=11 // pred_fallthru
          _
        // Predicated region
        $region21: #{resnet_forward.19} parent=11 // pred_check
          %p221 = pneg %p166
        $region22: #{resnet_forward.19} parent=11 // pred_check_branch
          %223 = sbr.rel (%p221) target = $region24
        $region23: #{resnet_forward.19} parent=11 // pred_region
          %s224 = smul.u32 4, %s21
          %p225 = scmp.lt.s32.totalorder %s224, 3
          %s226 = scalar_select %p225, %s224, 3
          %p227 = scmp.lt.s32.totalorder %s22, 0
          %s228 = scalar_select %p227, %s22, 0
          %s229 = sadd.s32 %s228, %s226
          %s230 = smul.addr %s229, 8
          %s231 = scalar_lea.vmem %s4, %s230
          %s232 = smul.u32 4, %s21
        $region24: #{resnet_forward.19} parent=11 // pred_fallthru
          _
      $region12: #{resnet_forward.19} parent=5 // pred_fallthru
        _
      %p233 = scmp.lt.s32.totalorder %s11, 3
      // Predicated region
      $region25: #{resnet_forward.19} parent=5 // pred_check
        %p234 = pneg %p233
      $region26: #{resnet_forward.19} parent=5 // pred_check_branch
        %236 = sbr.rel (%p234) target = $region28
      $region27: #{resnet_forward.19} parent=5 // pred_region
        // Predicated region
        $region29: #{resnet_forward.19} parent=27 // pred_check
          %p237 = pneg %p52
        $region30: #{resnet_forward.19} parent=27 // pred_check_branch
          %239 = sbr.rel (%p237) target = $region32
        $region31: #{resnet_forward.19} parent=27 // pred_region
          %s240 = sand.u32 %s42, 1
          %s241 = sand.u32 %s42, 1
          %s242 = smul.addr %s241, 48
          %s243 = scalar_lea.vmem [#allocation2], %s242
          %s244 = smul.u32 4, %s18
          %s245 = smul.u32 3, %s20
          %s246 = smul.addr %s244, 9
          %s247 = sadd.s32 %s245, %s246
          %s248 = smul.addr %s247, 4
          %s249 = scalar_lea.vmem %s0, %s248
          // Predicated region
          $region33: #{resnet_forward.19} parent=31 // pred_check
            _
          $region34: #{resnet_forward.19} parent=31 // pred_check_branch
            %251 = sbr.rel (0) target = $region36
          $region35: #{resnet_forward.19} parent=31 // pred_region
            // Predicated region
            $region37: #{resnet_forward.19} parent=35 // pred_check
              _
            $region38: #{resnet_forward.19} parent=35 // pred_check_branch
              %253 = sbr.rel (0) target = $region40
            $region39: #{resnet_forward.19} parent=35 // pred_region
              %s254 = scalar_lea.vmem %s249, 8
              %s255 = scalar_lea.vmem %s243, 8 [#allocation2]
              loop: start=0, step=1, limit=1
              $region41: #{resnet_forward.19} parent=39 // loop_pre_header
                _
              $region42: #{resnet_forward.19} parent=39 // loop_header
                %s257 = sphi 0, %s261
                %p258 = scmp.ge.s32.totalorder %s257, 1
                %s262 = sphi %s249, %s249
                %s263 = sphi %s243, %s243
              $region43: #{resnet_forward.19} parent=39 // loop_header_branch
                %260 = sbr.rel (%p258) target = $region47
              $region44: #{resnet_forward.19} parent=39 // loop_body
                %v264 = vld [vmem:[%s262] sm:$0xff]
                %265 = vst [vmem:[%s263] sm:$0xff] %v264
                %v266 = vld [vmem:[%s262 + $0x24] sm:$0xff]
                %267 = vst [vmem:[%s263 + $0xc] sm:$0xff] %v266
                %v268 = vld [vmem:[%s262 + $0x48] sm:$0xff]
                %269 = vst [vmem:[%s263 + $0x18] sm:$0xff] %v268
                %v270 = vld [vmem:[%s262 + $0x6c] sm:$0xff]
                %271 = vst [vmem:[%s263 + $0x24] sm:$0xff] %v270
              $region45: #{resnet_forward.19} parent=39 // loop_footer
                %s261 = sadd.s32 1, %s257
              $region46: #{resnet_forward.19} parent=39 // loop_footer_branch
                %256 = sbr.rel target = $region42
              $region47: #{resnet_forward.19} parent=39 // loop_exit
                _
              %s273 = ssub.s32 16, 1
              loop: start=0, step=1, limit=1
              $region48: #{resnet_forward.19} parent=39 // loop_pre_header
                _
              $region49: #{resnet_forward.19} parent=39 // loop_header
                %s275 = sphi 0, %s279
                %p276 = scmp.ge.s32.totalorder %s275, 1
                %s280 = sphi %s254, %s254
                %s281 = sphi %s255, %s255
              $region50: #{resnet_forward.19} parent=39 // loop_header_branch
                %278 = sbr.rel (%p276) target = $region54
              $region51: #{resnet_forward.19} parent=39 // loop_body
                %v282 = vld [vmem:[%s280] sm:%s273]
                %283 = vst [vmem:[%s281] sm:%s273] %v282
                %v284 = vld [vmem:[%s280 + $0x24] sm:%s273]
                %285 = vst [vmem:[%s281 + $0xc] sm:%s273] %v284
                %v286 = vld [vmem:[%s280 + $0x48] sm:%s273]
                %287 = vst [vmem:[%s281 + $0x18] sm:%s273] %v286
                %v288 = vld [vmem:[%s280 + $0x6c] sm:%s273]
                %289 = vst [vmem:[%s281 + $0x24] sm:%s273] %v288
              $region52: #{resnet_forward.19} parent=39 // loop_footer
                %s279 = sadd.s32 1, %s275
              $region53: #{resnet_forward.19} parent=39 // loop_footer_branch
                %274 = sbr.rel target = $region49
              $region54: #{resnet_forward.19} parent=39 // loop_exit
                _
            $region40: #{resnet_forward.19} parent=35 // pred_fallthru
              _
          $region36: #{resnet_forward.19} parent=31 // pred_fallthru
            _
          %290 = vnop
        $region32: #{resnet_forward.19} parent=27 // pred_fallthru
          _
        // Predicated region
        $region55: #{resnet_forward.19} parent=27 // pred_check
          %p291 = pneg %p80
        $region56: #{resnet_forward.19} parent=27 // pred_check_branch
          %293 = sbr.rel (%p291) target = $region58
        $region57: #{resnet_forward.19} parent=27 // pred_region
          %s294 = smul.u32 48, %s20
          %p295 = scmp.lt.s32.totalorder %s294, 143
          %s296 = scalar_select %p295, %s294, 143
          %p297 = scmp.lt.s32.totalorder %s19, 0
          %s298 = scalar_select %p297, %s19, 0
          %s299 = sadd.s32 %s298, %s296
          %s300 = smul.addr %s299, 4
          %s301 = scalar_lea.vmem %s1, %s300
          %s302 = smul.u32 48, %s20
        $region58: #{resnet_forward.19} parent=27 // pred_fallthru
          _
      $region28: #{resnet_forward.19} parent=5 // pred_fallthru
        _
      %p303 = scmp.le.s32.totalorder 1, %s11
      %p304 = scmp.lt.s32.totalorder %s11, 4
      %p305 = pnand %p303, %p304
      %p306 = pneg %p305
      // Predicated region
      $region59: #{resnet_forward.19} parent=5 // pred_check
        _
      $region60: #{resnet_forward.19} parent=5 // pred_check_branch
        %308 = sbr.rel (%p305) target = $region62
      $region61: #{resnet_forward.19} parent=5 // pred_region
        %s309 = ssub.s32 %s11, 1
        %s310 = sand.u32 %s45, 1
        %s311 = sand.u32 %s45, 1
        %s312 = smul.addr %s311, 48
        %s313 = scalar_lea.vmem [#allocation2], %s312
        // Predicated region
        $region63: #{resnet_forward.19} parent=61 // pred_check
          %p314 = pneg %p58
        $region64: #{resnet_forward.19} parent=61 // pred_check_branch
          %316 = sbr.rel (%p314) target = $region66
        $region65: #{resnet_forward.19} parent=61 // pred_region
          _
        $region66: #{resnet_forward.19} parent=61 // pred_fallthru
          _
        %s317 = sand.u32 %s45, 1
        %s318 = sand.u32 %s45, 1
        %s319 = smul.addr %s318, 48
        %s320 = scalar_lea.vmem [#allocation2], %s319
        %p321 = pneg %p58
        %p322 = pneg %p55
        %s323 = smul.u32 48, %s23
        %p324 = scmp.lt.s32.totalorder %s323, 143
        %s325 = scalar_select %p324, %s323, 143
        %p326 = scmp.lt.s32.totalorder %s22, 0
        %s327 = scalar_select %p326, %s22, 0
        %s328 = sadd.s32 %s327, %s325
        %s329 = smul.addr %s328, 4
        %s330 = scalar_lea.vmem %s1, %s329
        %p331 = pneg %p86
        %p332 = pneg %p83
        %p333 = scmp.lt.s32.totalorder %s22, 0
        %s334 = scalar_select %p333, %s22, 0
        %s335 = scalar_lea.vmem %s2, %s334
        %p336 = pneg %p112
        %p337 = pneg %p109
        %p338 = scmp.lt.s32.totalorder %s22, 0
        %s339 = scalar_select %p338, %s22, 0
        %s340 = scalar_lea.vmem %s3, %s339
        %p341 = pneg %p138
        %p342 = pneg %p135
        %s343 = smul.u32 4, %s21
        %p344 = scmp.lt.s32.totalorder %s343, 3
        %s345 = scalar_select %p344, %s343, 3
        %p346 = scmp.lt.s32.totalorder %s22, 0
        %s347 = scalar_select %p346, %s22, 0
        %s348 = sadd.s32 %s347, %s345
        %s349 = smul.addr %s348, 8
        %s350 = scalar_lea.vmem %s4, %s349
        %p351 = pneg %p166
        %p352 = pneg %p163
        %p353 = pneg %p194
        %p354 = pneg %p191
        %s355 = smul.u32 4, %s21
        %p356 = scmp.lt.s32.totalorder %s355, 3
        %s357 = scalar_select %p356, %s355, 3
        %p358 = scmp.lt.s32.totalorder %s22, 0
        %s359 = scalar_select %p358, %s22, 0
        %s360 = sadd.s32 %s359, %s357
        %s361 = smul.addr %s360, 8
        %s362 = scalar_lea.vmem %s5, %s361
        %s363 = smul.u32 4, %s21
        %s364 = smul.u32 3, %s23
        %s365 = smul.u32 48, %s23
        %p366 = scmp.lt.s32.totalorder %s365, 143
        %s367 = scalar_select %p366, %s365, 143
        %p368 = scmp.lt.s32.totalorder %s22, 0
        %s369 = scalar_select %p368, %s22, 0
        %s370 = sadd.s32 %s369, %s367
        %s371 = smul.addr %s370, 4
        %s372 = scalar_lea.vmem %s1, %s371
        %s373 = smul.u32 48, %s23
        %p374 = scmp.lt.s32.totalorder %s22, 0
        %s375 = scalar_select %p374, %s22, 0
        %s376 = scalar_lea.vmem %s2, %s375
        %p377 = scmp.lt.s32.totalorder %s22, 0
        %s378 = scalar_select %p377, %s22, 0
        %s379 = scalar_lea.vmem %s3, %s378
        %s380 = smul.u32 4, %s21
        %p381 = scmp.lt.s32.totalorder %s380, 3
        %s382 = scalar_select %p381, %s380, 3
        %p383 = scmp.lt.s32.totalorder %s22, 0
        %s384 = scalar_select %p383, %s22, 0
        %s385 = sadd.s32 %s384, %s382
        %s386 = smul.addr %s385, 8
        %s387 = scalar_lea.vmem %s4, %s386
        %s388 = smul.u32 4, %s21
        %s389 = smul.u32 4, %s21
        %p390 = scmp.lt.s32.totalorder %s389, 3
        %s391 = scalar_select %p390, %s389, 3
        %p392 = scmp.lt.s32.totalorder %s22, 0
        %s393 = scalar_select %p392, %s22, 0
        %s394 = sadd.s32 %s393, %s391
        %s395 = smul.addr %s394, 8
        %s396 = scalar_lea.vmem %s5, %s395
        %s397 = smul.u32 4, %s21
        %v398 = vld [vmem:[%s313] sm:$0xff]
        %v399 = vld [vmem:[%s313 + $0x8] sm:$0xf]
        %v400 = vld [vmem:[%s313 + $0xc] sm:$0xff]
        %v401 = vld [vmem:[%s313 + $0x14] sm:$0xf]
        %v402 = vld [vmem:[%s313 + $0x18] sm:$0xff]
        %v403 = vld [vmem:[%s313 + $0x20] sm:$0xf]
        %v404 = vld [vmem:[%s313 + $0x24] sm:$0xff]
        %v405 = vld [vmem:[%s313 + $0x2c] sm:$0xf]
        %v406 = vld [vmem:[%s372] sm:$0xf]
        %v407 = vld [vmem:[%s372 + $0x4] sm:$0xf]
        %v408 = vld [vmem:[%s372 + $0x8] sm:$0xf]
        %v409 = vld [vmem:[%s372 + $0xc] sm:$0xf]
        %v410 = vld [vmem:[%s372 + $0x10] sm:$0xf]
        %v411 = vld [vmem:[%s372 + $0x14] sm:$0xf]
        %v412 = vld [vmem:[%s372 + $0x18] sm:$0xf]
        %v413 = vld [vmem:[%s372 + $0x1c] sm:$0xf]
        %v414 = vld [vmem:[%s372 + $0x20] sm:$0xf]
        %v415 = vld [vmem:[%s372 + $0x24] sm:$0xf]
        %v416 = vld [vmem:[%s372 + $0x28] sm:$0xf]
        %v417 = vld [vmem:[%s372 + $0x2c] sm:$0xf]
        %v418 = vld [vmem:[%s372 + $0x30] sm:$0xf]
        %v419 = vld [vmem:[%s372 + $0x34] sm:$0xf]
        %v420 = vld [vmem:[%s372 + $0x38] sm:$0xf]
        %v421 = vld [vmem:[%s372 + $0x3c] sm:$0xf]
        %v422 = vld [vmem:[%s372 + $0x40] sm:$0xf]
        %v423 = vld [vmem:[%s372 + $0x44] sm:$0xf]
        %v424 = vld [vmem:[%s372 + $0x48] sm:$0xf]
        %v425 = vld [vmem:[%s372 + $0x4c] sm:$0xf]
        %v426 = vld [vmem:[%s372 + $0x50] sm:$0xf]
        %v427 = vld [vmem:[%s372 + $0x54] sm:$0xf]
        %v428 = vld [vmem:[%s372 + $0x58] sm:$0xf]
        %v429 = vld [vmem:[%s372 + $0x5c] sm:$0xf]
        %v430 = vld [vmem:[%s372 + $0x60] sm:$0xf]
        %v431 = vld [vmem:[%s372 + $0x64] sm:$0xf]
        %v432 = vld [vmem:[%s372 + $0x68] sm:$0xf]
        %v433 = vld [vmem:[%s372 + $0x6c] sm:$0xf]
        %v434 = vld [vmem:[%s372 + $0x70] sm:$0xf]
        %v435 = vld [vmem:[%s372 + $0x74] sm:$0xf]
        %v436 = vld [vmem:[%s372 + $0x78] sm:$0xf]
        %v437 = vld [vmem:[%s372 + $0x7c] sm:$0xf]
        %v438 = vld [vmem:[%s372 + $0x80] sm:$0xf]
        %v439 = vld [vmem:[%s372 + $0x84] sm:$0xf]
        %v440 = vld [vmem:[%s372 + $0x88] sm:$0xf]
        %v441 = vld [vmem:[%s372 + $0x8c] sm:$0xf]
        %v442 = vld [vmem:[%s372 + $0x90] sm:$0xf]
        %v443 = vld [vmem:[%s372 + $0x94] sm:$0xf]
        %v444 = vld [vmem:[%s372 + $0x98] sm:$0xf]
        %v445 = vld [vmem:[%s372 + $0x9c] sm:$0xf]
        %v446 = vld [vmem:[%s372 + $0xa0] sm:$0xf]
        %v447 = vld [vmem:[%s372 + $0xa4] sm:$0xf]
        %v448 = vld [vmem:[%s372 + $0xa8] sm:$0xf]
        %v449 = vld [vmem:[%s372 + $0xac] sm:$0xf]
        %v450 = vld [vmem:[%s372 + $0xb0] sm:$0xf]
        %v451 = vld [vmem:[%s372 + $0xb4] sm:$0xf]
        %v452 = vld [vmem:[%s372 + $0xb8] sm:$0xf]
        %v453 = vld [vmem:[%s372 + $0xbc] sm:$0xf]
        %v462 = vunpack.c.l.b16 %v398
        %v463 = vunpack.c.h.b16 %v398
        %v464 = vunpack.c.l.b16 %v399
        %v465 = vunpack.c.l.b16 %v400
        %v466 = vunpack.c.h.b16 %v400
        %v467 = vunpack.c.l.b16 %v401
        %v468 = vunpack.c.l.b16 %v402
        %v469 = vunpack.c.h.b16 %v402
        %v470 = vunpack.c.l.b16 %v403
        %v471 = vunpack.c.l.b16 %v404
        %v472 = vunpack.c.h.b16 %v404
        %v473 = vunpack.c.l.b16 %v405
        %v474 = vpack.c.b16 %v465, %v462
        %v475 = vpack.c.b16 %v466, %v463
        %v476 = vpack.c.b16 %v467, %v464
        %v477 = vpack.c.b16 %v471, %v468
        %v478 = vpack.c.b16 %v472, %v469
        %v479 = vpack.c.b16 %v473, %v470
        %v534 = vunpack.c.l.b16 %v406
        %v535 = vunpack.c.l.b16 %v407
        %v536 = vunpack.c.l.b16 %v408
        %v537 = vunpack.c.l.b16 %v409
        %v538 = vunpack.c.l.b16 %v410
        %v539 = vunpack.c.l.b16 %v411
        %v540 = vunpack.c.l.b16 %v412
        %v541 = vunpack.c.l.b16 %v413
        %v542 = vunpack.c.l.b16 %v414
        %v543 = vunpack.c.l.b16 %v415
        %v544 = vunpack.c.l.b16 %v416
        %v545 = vunpack.c.l.b16 %v417
        %v546 = vunpack.c.l.b16 %v418
        %v547 = vunpack.c.l.b16 %v419
        %v548 = vunpack.c.l.b16 %v420
        %v549 = vunpack.c.l.b16 %v421
        %v550 = vunpack.c.l.b16 %v422
        %v551 = vunpack.c.l.b16 %v423
        %v552 = vunpack.c.l.b16 %v424
        %v553 = vunpack.c.l.b16 %v425
        %v554 = vunpack.c.l.b16 %v426
        %v555 = vunpack.c.l.b16 %v427
        %v556 = vunpack.c.l.b16 %v428
        %v557 = vunpack.c.l.b16 %v429
        %v558 = vunpack.c.l.b16 %v430
        %v559 = vunpack.c.l.b16 %v431
        %v560 = vunpack.c.l.b16 %v432
        %v561 = vunpack.c.l.b16 %v433
        %v562 = vunpack.c.l.b16 %v434
        %v563 = vunpack.c.l.b16 %v435
        %v564 = vunpack.c.l.b16 %v436
        %v565 = vunpack.c.l.b16 %v437
        %v566 = vunpack.c.l.b16 %v438
        %v567 = vunpack.c.l.b16 %v439
        %v568 = vunpack.c.l.b16 %v440
        %v569 = vunpack.c.l.b16 %v441
        %v570 = vunpack.c.l.b16 %v442
        %v571 = vunpack.c.l.b16 %v443
        %v572 = vunpack.c.l.b16 %v444
        %v573 = vunpack.c.l.b16 %v445
        %v574 = vunpack.c.l.b16 %v446
        %v575 = vunpack.c.l.b16 %v447
        %v576 = vunpack.c.l.b16 %v448
        %v577 = vunpack.c.l.b16 %v449
        %v578 = vunpack.c.l.b16 %v450
        %v579 = vunpack.c.l.b16 %v451
        %v580 = vunpack.c.l.b16 %v452
        %v581 = vunpack.c.l.b16 %v453
        %v582 = vpack.c.b16 %v535, %v534
        %v583 = vpack.c.b16 %v537, %v536
        %v584 = vpack.c.b16 %v539, %v538
        %v585 = vpack.c.b16 %v541, %v540
        %v586 = vpack.c.b16 %v543, %v542
        %v587 = vpack.c.b16 %v545, %v544
        %v588 = vpack.c.b16 %v547, %v546
        %v589 = vpack.c.b16 %v549, %v548
        %v590 = vpack.c.b16 %v551, %v550
        %v591 = vpack.c.b16 %v553, %v552
        %v592 = vpack.c.b16 %v555, %v554
        %v593 = vpack.c.b16 %v557, %v556
        %v594 = vpack.c.b16 %v559, %v558
        %v595 = vpack.c.b16 %v561, %v560
        %v596 = vpack.c.b16 %v563, %v562
        %v597 = vpack.c.b16 %v565, %v564
        %v598 = vpack.c.b16 %v567, %v566
        %v599 = vpack.c.b16 %v569, %v568
        %v600 = vpack.c.b16 %v571, %v570
        %v601 = vpack.c.b16 %v573, %v572
        %v602 = vpack.c.b16 %v575, %v574
        %v603 = vpack.c.b16 %v577, %v576
        %v604 = vpack.c.b16 %v579, %v578
        %v605 = vpack.c.b16 %v581, %v580
        %630 = vmatpush.bf16.msra.mxu0 %v589
        %631 = vmatpush.bf16.msra.mxu0 %v588
        %632 = vmatpush.bf16.msra.mxu0 %v587
        %633 = vmatpush.bf16.msra.mxu0 %v586
        %634 = vmatpush.bf16.msra.mxu0 %v585
        %635 = vmatpush.bf16.msra.mxu0 %v584
        %636 = vmatpush.bf16.msra.mxu0 %v583
        %637 = vmatpush.bf16.msra.mxu0 %v582
        %638 = vmatmul.bf16.gmra.mxu0 %v474
        %v639 = vpop.f32.mrf.mxu0
        %v640 = vadd.f32 0.0, %v639
        %v641 = vpop.f32.mrf.mxu0
        %v642 = vadd.f32 0.0, %v641
        %643 = vmatmul.bf16.gmra.mxu0 %v477
        %v644 = vpop.f32.mrf.mxu0
        %v645 = vadd.f32 0.0, %v644
        %v646 = vpop.f32.mrf.mxu0
        %v647 = vadd.f32 0.0, %v646
        %648 = vdwg.mxu0
        %649 = vmatpush.bf16.msra.mxu0 %v597
        %650 = vmatpush.bf16.msra.mxu0 %v596
        %651 = vmatpush.bf16.msra.mxu0 %v595
        %652 = vmatpush.bf16.msra.mxu0 %v594
        %653 = vmatpush.bf16.msra.mxu0 %v593
        %654 = vmatpush.bf16.msra.mxu0 %v592
        %655 = vmatpush.bf16.msra.mxu0 %v591
        %656 = vmatpush.bf16.msra.mxu0 %v590
        %657 = vmatmul.bf16.gmra.mxu0 %v475
        %v658 = vpop.f32.mrf.mxu0
        %v659 = vadd.f32 %v640, %v658
        %v660 = vpop.f32.mrf.mxu0
        %v661 = vadd.f32 %v642, %v660
        %662 = vmatmul.bf16.gmra.mxu0 %v478
        %v663 = vpop.f32.mrf.mxu0
        %v664 = vadd.f32 %v645, %v663
        %v665 = vpop.f32.mrf.mxu0
        %v666 = vadd.f32 %v647, %v665
        %667 = vdwg.mxu0
        %668 = vmatpush.bf16.msra.mxu0 %v605
        %669 = vmatpush.bf16.msra.mxu0 %v604
        %670 = vmatpush.bf16.msra.mxu0 %v603
        %671 = vmatpush.bf16.msra.mxu0 %v602
        %672 = vmatpush.bf16.msra.mxu0 %v601
        %673 = vmatpush.bf16.msra.mxu0 %v600
        %674 = vmatpush.bf16.msra.mxu0 %v599
        %675 = vmatpush.bf16.msra.mxu0 %v598
        %676 = vmatmul.bf16.gmra.mxu0 %v476
        %v677 = vpop.f32.mrf.mxu0
        %v678 = vadd.f32 %v659, %v677
        %v679 = vpop.f32.mrf.mxu0
        %v680 = vadd.f32 %v661, %v679
        %681 = vmatmul.bf16.gmra.mxu0 %v479
        %v682 = vpop.f32.mrf.mxu0
        %v683 = vadd.f32 %v664, %v682
        %v684 = vpop.f32.mrf.mxu0
        %v685 = vadd.f32 %v666, %v684
        %686 = vdwg.mxu0
        %p687 = scmp.eq.s32.totalorder %s23, 0
        // Predicated region
        $region67: #{resnet_forward.19} parent=61 // pred_check
          %p688 = pneg %p687
        $region68: #{resnet_forward.19} parent=61 // pred_check_branch
          %690 = sbr.rel (%p688) target = $region70
        $region69: #{resnet_forward.19} parent=61 // pred_region
          %691 = vst [vmem:[%s396] sm:$0xff] %v678
          %692 = vst [vmem:[%s396 + $0x8] sm:$0xff] %v680
          %693 = vst [vmem:[%s396 + $0x10] sm:$0xff] %v683
          %694 = vst [vmem:[%s396 + $0x18] sm:$0xff] %v685
        $region70: #{resnet_forward.19} parent=61 // pred_fallthru
          _
        %p695 = scmp.gt.s32.totalorder %s23, 0
        %p696 = scmp.lt.s32.totalorder %s23, 2
        %p697 = pnand %p695, %p696
        %p698 = pneg %p697
        // Predicated region
        $region71: #{resnet_forward.19} parent=61 // pred_check
          _
        $region72: #{resnet_forward.19} parent=61 // pred_check_branch
          %700 = sbr.rel (%p697) target = $region74
        $region73: #{resnet_forward.19} parent=61 // pred_region
          %v701 = vld [vmem:[%s396] sm:$0xff]
          %v702 = vld [vmem:[%s396 + $0x8] sm:$0xff]
          %v703 = vld [vmem:[%s396 + $0x10] sm:$0xff]
          %v704 = vld [vmem:[%s396 + $0x18] sm:$0xff]
          %v705 = vadd.f32 %v701, %v678
          %v706 = vadd.f32 %v702, %v680
          %v707 = vadd.f32 %v703, %v683
          %v708 = vadd.f32 %v704, %v685
          %709 = vst [vmem:[%s396] sm:$0xff] %v705
          %710 = vst [vmem:[%s396 + $0x8] sm:$0xff] %v706
          %711 = vst [vmem:[%s396 + $0x10] sm:$0xff] %v707
          %712 = vst [vmem:[%s396 + $0x18] sm:$0xff] %v708
        $region74: #{resnet_forward.19} parent=61 // pred_fallthru
          _
        %p713 = scmp.eq.s32.totalorder %s23, 2
        // Predicated region
        $region75: #{resnet_forward.19} parent=61 // pred_check
          %p714 = pneg %p713
        $region76: #{resnet_forward.19} parent=61 // pred_check_branch
          %716 = sbr.rel (%p714) target = $region78
        $region77: #{resnet_forward.19} parent=61 // pred_region
          %v717 = vld [vmem:[%s396] sm:$0xff]
          %v718 = vld [vmem:[%s396 + $0x8] sm:$0xff]
          %v719 = vld [vmem:[%s396 + $0x10] sm:$0xff]
          %v720 = vld [vmem:[%s396 + $0x18] sm:$0xff]
          %v721 = vadd.f32 %v717, %v678
          %v722 = vadd.f32 %v718, %v680
          %v723 = vadd.f32 %v719, %v683
          %v724 = vadd.f32 %v720, %v685
          %v725 = vld [vmem:[%s376] sm:$0x1]
          %v727 = vperm.slane %v725, 0
          %v729 = vmul.f32 %v721, %v727
          %v730 = vmul.f32 %v722, %v727
          %v731 = vmul.f32 %v723, %v727
          %v732 = vmul.f32 %v724, %v727
          %v733 = vld [vmem:[%s379] sm:$0x1]
          %v735 = vperm.slane %v733, 0
          %v737 = vadd.f32 %v729, %v735
          %v738 = vadd.f32 %v730, %v735
          %v739 = vadd.f32 %v731, %v735
          %v740 = vadd.f32 %v732, %v735
          %v741 = vld [vmem:[%s387] sm:$0xff]
          %v742 = vld [vmem:[%s387 + $0x8] sm:$0xff]
          %v743 = vld [vmem:[%s387 + $0x10] sm:$0xff]
          %v744 = vld [vmem:[%s387 + $0x18] sm:$0xff]
          %v745 = vadd.f32 %v737, %v741
          %v746 = vadd.f32 %v738, %v742
          %v747 = vadd.f32 %v739, %v743
          %v748 = vadd.f32 %v740, %v744
          %v749 = vmax.f32 %v745, 0.0
          %v750 = vmax.f32 %v746, 0.0
          %v751 = vmax.f32 %v747, 0.0
          %v752 = vmax.f32 %v748, 0.0
          %753 = vst [vmem:[%s396] sm:$0xff] %v749
          %754 = vst [vmem:[%s396 + $0x8] sm:$0xff] %v750
          %755 = vst [vmem:[%s396 + $0x10] sm:$0xff] %v751
          %756 = vst [vmem:[%s396 + $0x18] sm:$0xff] %v752
        $region78: #{resnet_forward.19} parent=61 // pred_fallthru
          _
        %s757 = smul.u32 4, %s21
        %p758 = scmp.lt.s32.totalorder %s757, 3
        %s759 = scalar_select %p758, %s757, 3
        %p760 = scmp.lt.s32.totalorder %s22, 0
        %s761 = scalar_select %p760, %s22, 0
        %s762 = sadd.s32 %s761, %s759
        %s763 = smul.addr %s762, 8
        %s764 = scalar_lea.vmem %s5, %s763
        // Predicated region
        $region79: #{resnet_forward.19} parent=61 // pred_check
          %p765 = pneg %p191
        $region80: #{resnet_forward.19} parent=61 // pred_check_branch
          %767 = sbr.rel (%p765) target = $region82
        $region81: #{resnet_forward.19} parent=61 // pred_region
          %s768 = smul.u32 4, %s21
        $region82: #{resnet_forward.19} parent=61 // pred_fallthru
          _
        // Predicated region
        $region83: #{resnet_forward.19} parent=61 // pred_check
          %p769 = pneg %p191
        $region84: #{resnet_forward.19} parent=61 // pred_check_branch
          %771 = sbr.rel (%p769) target = $region86
        $region85: #{resnet_forward.19} parent=61 // pred_region
          %s772 = smul.u32 4, %s21
          %p773 = scmp.lt.s32.totalorder %s772, 3
          %s774 = scalar_select %p773, %s772, 3
          %p775 = scmp.lt.s32.totalorder %s22, 0
          %s776 = scalar_select %p775, %s22, 0
          %s777 = sadd.s32 %s776, %s774
          %s778 = smul.addr %s777, 8
          %s779 = scalar_lea.vmem %s5, %s778
        $region86: #{resnet_forward.19} parent=61 // pred_fallthru
          _
      $region62: #{resnet_forward.19} parent=5 // pred_fallthru
        _
      %p780 = scmp.le.s32.totalorder 2, %s11
      // Predicated region
      $region87: #{resnet_forward.19} parent=5 // pred_check
        %p781 = pneg %p780
      $region88: #{resnet_forward.19} parent=5 // pred_check_branch
        %783 = sbr.rel (%p781) target = $region90
      $region89: #{resnet_forward.19} parent=5 // pred_region
        %s784 = ssub.s32 %s11, 2
      $region90: #{resnet_forward.19} parent=5 // pred_fallthru
        _
    $region6: #{resnet_forward.19} parent=1 // loop_footer
      %s15 = sadd.s32 1, %s11
    $region7: #{resnet_forward.19} parent=1 // loop_footer_branch
      %10 = sbr.rel target = $region3
    $region8: #{resnet_forward.19} parent=1 // loop_exit
      _

// kernel: resnet_forward.21
$region0: #{resnet_forward.21}
  #allocation0 [shape = 'u32[]', space=smem, size = 0x4, offset = 0x4, fixed_abs, tag = 'smem constant byte address 0x4 - core index']
  #allocation1 [shape = 'u32[72,128]{1,0:T(1,128)}', space=vmem, size = 0x9000, scoped, tag = 'internal scratch']
  %s0 = inlined_call_operand.vmem [shape: bf16[8,128], index: 0, kind: input, shape index: {}]
  %s1 = inlined_call_operand.vmem [shape: bf16[128,256], index: 1, kind: input, shape index: {}]
  %s2 = inlined_call_operand.vmem [shape: f32[1,256], index: 2, kind: input, shape index: {}]
  %s3 = inlined_call_operand.vmem [shape: f32[1,256], index: 3, kind: input, shape index: {}]
  %s4 = inlined_call_operand.vmem [shape: f32[8,256], index: 4, kind: output, shape index: {}]
  %s5 = sld [smem:[#allocation0]]
  $region26: #{resnet_forward.21} parent=0
    _
  %s7 = ssub.s32 1, %s5
  %s8 = scalar_select 0, %s7, %s5
  // Predicated region
  $region2: #{resnet_forward.21} parent=0 // pred_check
    _
  $region3: #{resnet_forward.21} parent=0 // pred_check_branch
    %10 = sbr.rel (0) target = $region5
  $region4: #{resnet_forward.21} parent=0 // pred_region
    _
  $region5: #{resnet_forward.21} parent=0 // pred_fallthru
    _
  // Predicated region
  $region6: #{resnet_forward.21} parent=0 // pred_check
    _
  $region7: #{resnet_forward.21} parent=0 // pred_check_branch
    %12 = sbr.rel (0) target = $region9
  $region8: #{resnet_forward.21} parent=0 // pred_region
    _
  $region9: #{resnet_forward.21} parent=0 // pred_fallthru
    _
  // Predicated region
  $region10: #{resnet_forward.21} parent=0 // pred_check
    _
  $region11: #{resnet_forward.21} parent=0 // pred_check_branch
    %14 = sbr.rel (0) target = $region13
  $region12: #{resnet_forward.21} parent=0 // pred_region
    _
  $region13: #{resnet_forward.21} parent=0 // pred_fallthru
    _
  // Predicated region
  $region14: #{resnet_forward.21} parent=0 // pred_check
    _
  $region15: #{resnet_forward.21} parent=0 // pred_check_branch
    %16 = sbr.rel (0) target = $region17
  $region16: #{resnet_forward.21} parent=0 // pred_region
    _
  $region17: #{resnet_forward.21} parent=0 // pred_fallthru
    _
  %v17 = vld [vmem:[%s0] sm:$0xf]
  %v18 = vld [vmem:[%s1] sm:$0xff]
  %v19 = vld [vmem:[%s1 + $0x8] sm:$0xff]
  %v20 = vld [vmem:[%s1 + $0x10] sm:$0xff]
  %v21 = vld [vmem:[%s1 + $0x18] sm:$0xff]
  %v22 = vld [vmem:[%s1 + $0x20] sm:$0xff]
  %v23 = vld [vmem:[%s1 + $0x28] sm:$0xff]
  %v24 = vld [vmem:[%s1 + $0x30] sm:$0xff]
  %v25 = vld [vmem:[%s1 + $0x38] sm:$0xff]
  %v26 = vld [vmem:[%s1 + $0x40] sm:$0xff]
  %v27 = vld [vmem:[%s1 + $0x48] sm:$0xff]
  %v28 = vld [vmem:[%s1 + $0x50] sm:$0xff]
  %v29 = vld [vmem:[%s1 + $0x58] sm:$0xff]
  %v30 = vld [vmem:[%s1 + $0x60] sm:$0xff]
  %v31 = vld [vmem:[%s1 + $0x68] sm:$0xff]
  %v32 = vld [vmem:[%s1 + $0x70] sm:$0xff]
  %v33 = vld [vmem:[%s1 + $0x78] sm:$0xff]
  %v50 = vunpack.c.l.b16 %v18
  %v51 = vunpack.c.h.b16 %v18
  %v52 = vunpack.c.l.b16 %v19
  %v53 = vunpack.c.h.b16 %v19
  %v54 = vunpack.c.l.b16 %v20
  %v55 = vunpack.c.h.b16 %v20
  %v56 = vunpack.c.l.b16 %v21
  %v57 = vunpack.c.h.b16 %v21
  %v58 = vunpack.c.l.b16 %v22
  %v59 = vunpack.c.h.b16 %v22
  %v60 = vunpack.c.l.b16 %v23
  %v61 = vunpack.c.h.b16 %v23
  %v62 = vunpack.c.l.b16 %v24
  %v63 = vunpack.c.h.b16 %v24
  %v64 = vunpack.c.l.b16 %v25
  %v65 = vunpack.c.h.b16 %v25
  %v66 = vunpack.c.l.b16 %v26
  %v67 = vunpack.c.h.b16 %v26
  %v68 = vunpack.c.l.b16 %v27
  %v69 = vunpack.c.h.b16 %v27
  %v70 = vunpack.c.l.b16 %v28
  %v71 = vunpack.c.h.b16 %v28
  %v72 = vunpack.c.l.b16 %v29
  %v73 = vunpack.c.h.b16 %v29
  %v74 = vunpack.c.l.b16 %v30
  %v75 = vunpack.c.h.b16 %v30
  %v76 = vunpack.c.l.b16 %v31
  %v77 = vunpack.c.h.b16 %v31
  %v78 = vunpack.c.l.b16 %v32
  %v79 = vunpack.c.h.b16 %v32
  %v80 = vunpack.c.l.b16 %v33
  %v81 = vunpack.c.h.b16 %v33
  %v82 = vpack.c.b16 %v52, %v50
  %v83 = vpack.c.b16 %v53, %v51
  %v84 = vpack.c.b16 %v56, %v54
  %v85 = vpack.c.b16 %v57, %v55
  %v86 = vpack.c.b16 %v60, %v58
  %v87 = vpack.c.b16 %v61, %v59
  %v88 = vpack.c.b16 %v64, %v62
  %v89 = vpack.c.b16 %v65, %v63
  %v90 = vpack.c.b16 %v68, %v66
  %v91 = vpack.c.b16 %v69, %v67
  %v92 = vpack.c.b16 %v72, %v70
  %v93 = vpack.c.b16 %v73, %v71
  %v94 = vpack.c.b16 %v76, %v74
  %v95 = vpack.c.b16 %v77, %v75
  %v96 = vpack.c.b16 %v80, %v78
  %v97 = vpack.c.b16 %v81, %v79
  %114 = vmatpush.bf16.msra.mxu0 %v96
  %115 = vmatpush.bf16.msra.mxu0 %v94
  %116 = vmatpush.bf16.msra.mxu0 %v92
  %117 = vmatpush.bf16.msra.mxu0 %v90
  %118 = vmatpush.bf16.msra.mxu0 %v88
  %119 = vmatpush.bf16.msra.mxu0 %v86
  %120 = vmatpush.bf16.msra.mxu0 %v84
  %121 = vmatpush.bf16.msra.mxu0 %v82
  %122 = vmatmul.bf16.gmra.mxu0 %v17
  %v123 = vpop.f32.mrf.mxu0
  %v124 = vadd.f32 0.0, %v123
  %v125 = vpop.f32.mrf.mxu0
  %126 = vdwg.mxu0
  %127 = vmatpush.bf16.msra.mxu0 %v97
  %128 = vmatpush.bf16.msra.mxu0 %v95
  %129 = vmatpush.bf16.msra.mxu0 %v93
  %130 = vmatpush.bf16.msra.mxu0 %v91
  %131 = vmatpush.bf16.msra.mxu0 %v89
  %132 = vmatpush.bf16.msra.mxu0 %v87
  %133 = vmatpush.bf16.msra.mxu0 %v85
  %134 = vmatpush.bf16.msra.mxu0 %v83
  %135 = vmatmul.bf16.gmra.mxu0 %v17
  %v136 = vpop.f32.mrf.mxu0
  %v137 = vadd.f32 0.0, %v136
  %v138 = vpop.f32.mrf.mxu0
  %139 = vdwg.mxu0
  %v140 = vld [vmem:[%s2] sm:$0x3]
  %v142 = vperm.slane %v140, 0
  %v143 = vperm.slane %v140, 1
  %v146 = vmul.f32 %v124, %v142
  %v147 = vmul.f32 %v137, %v143
  %v148 = vld [vmem:[%s3] sm:$0x3]
  %v150 = vperm.slane %v148, 0
  %v151 = vperm.slane %v148, 1
  %v154 = vadd.f32 %v146, %v150
  %v155 = vadd.f32 %v147, %v151
  %156 = vst [vmem:[%s4] sm:$0xff] %v154
  %157 = vst [vmem:[%s4 + $0x8] sm:$0xff] %v155
  // Predicated region
  $region18: #{resnet_forward.21} parent=0 // pred_check
    _
  $region19: #{resnet_forward.21} parent=0 // pred_check_branch
    %159 = sbr.rel (0) target = $region21
  $region20: #{resnet_forward.21} parent=0 // pred_region
    _
  $region21: #{resnet_forward.21} parent=0 // pred_fallthru
    _
  // Predicated region
  $region22: #{resnet_forward.21} parent=0 // pred_check
    _
  $region23: #{resnet_forward.21} parent=0 // pred_check_branch
    %161 = sbr.rel (0) target = $region25
  $region24: #{resnet_forward.21} parent=0 // pred_region
    _
  $region25: #{resnet_forward.21} parent=0 // pred_fallthru
    _

// kernel: resnet_forward.20
$region0: #{resnet_forward.20}
  #allocation0 [shape = 'u32[]', space=smem, size = 0x4, offset = 0x4, fixed_abs, tag = 'smem constant byte address 0x4 - core index']
  #allocation1 [shape = 'u32[72,128]{1,0:T(1,128)}', space=vmem, size = 0x9000, scoped, tag = 'internal scratch']
  %s0 = inlined_call_operand.vmem [shape: bf16[8,1152], index: 0, kind: input, shape index: {}]
  %s1 = inlined_call_operand.vmem [shape: bf16[1152,256], index: 1, kind: input, shape index: {}]
  %s2 = inlined_call_operand.vmem [shape: f32[1,256], index: 2, kind: input, shape index: {}]
  %s3 = inlined_call_operand.vmem [shape: f32[1,256], index: 3, kind: input, shape index: {}]
  %s4 = inlined_call_operand.vmem [shape: f32[8,256], index: 4, kind: output, shape index: {}]
  %s5 = sld [smem:[#allocation0]]
  $region61: #{resnet_forward.20} parent=0
    _
  %s7 = ssub.s32 1, %s5
  %s8 = scalar_select 0, %s7, %s5
  loop: start=0, step=1, limit=5
  $region2: #{resnet_forward.20} parent=0 // loop_pre_header
    _
  $region3: #{resnet_forward.20} parent=0 // loop_header
    %s10 = sphi 0, %s14
    %p11 = scmp.ge.s32.totalorder %s10, 5
    %s17 = sphi 0, %s36
    %s18 = sphi 0, %s32
    %s19 = sphi 0, %s28
    %s20 = sphi 0, %s17
    %s21 = sphi 0, %s18
    %s22 = sphi 0, %s19
    %s23 = sphi 0, %s20
    %s24 = sphi 0, %s21
    %s25 = sphi 0, %s22
    %s41 = sphi 0, %s43
    %s44 = sphi 0, %s41
    %s45 = sphi 0, %s44
    %s61 = sphi 0, %s45
    %s69 = sphi 0, %s71
    %s72 = sphi 0, %s69
    %s73 = sphi 0, %s72
    %s89 = sphi 0, %s73
    %s95 = sphi 0, %s97
    %s98 = sphi 0, %s95
    %s99 = sphi 0, %s98
    %s115 = sphi 0, %s99
    %s121 = sphi 0, %s123
    %s124 = sphi 0, %s121
    %s125 = sphi 0, %s124
    %s141 = sphi 0, %s125
    %s149 = sphi 0, %s151
    %s152 = sphi 0, %s149
    %s153 = sphi 0, %s152
    %s169 = sphi 0, %s153
  $region4: #{resnet_forward.20} parent=0 // loop_header_branch
    %13 = sbr.rel (%p11) target = $region8
  $region5: #{resnet_forward.20} parent=0 // loop_body
    %s15 = ssub.s32 %s10, 1
    %s16 = ssub.s32 %s10, 2
    %s26 = sadd.s32 1, %s19
    %p27 = scmp.ge.s32.totalorder %s26, 3
    %s28 = scalar_select %p27, 0, %s26
    %s29 = sadd.s32 1, %s18
    %s30 = scalar_select %p27, %s29, %s18
    %p31 = scmp.ge.s32.totalorder %s30, 1
    %s32 = scalar_select %p31, 0, %s30
    %s33 = sadd.s32 1, %s17
    %s34 = scalar_select %p31, %s33, %s17
    %p35 = scmp.ge.s32.totalorder %s34, 1
    %s36 = scalar_select %p35, 0, %s34
    %s37 = ssub.s32 %s17, %s36
    %s38 = ssub.s32 %s19, %s28
    %s39 = sor.u32 %s37, %s38
    %p40 = scmp.eq.s32.totalorder %s39, 0
    %s42 = sadd.s32 %s41, 1
    %s43 = scalar_select %p40, %s41, %s42
    %p46 = pneg %p40
    %p47 = scmp.eq.s32.totalorder %s10, 2
    %p48 = por %p46, %p47
    %p49 = scmp.ne.s32.totalorder %s41, %s44
    %p50 = scmp.eq.s32.totalorder %s10, 0
    %p51 = por %p49, %p50
    %p52 = scmp.ne.s32.totalorder %s41, %s44
    %p53 = scmp.eq.s32.totalorder %s15, 2
    %p54 = por %p52, %p53
    %p55 = scmp.ne.s32.totalorder %s44, %s45
    %p56 = scmp.eq.s32.totalorder %s15, 0
    %p57 = por %p55, %p56
    %p58 = scmp.ne.s32.totalorder %s44, %s45
    %p59 = scmp.eq.s32.totalorder %s16, 2
    %p60 = por %p58, %p59
    %p62 = scmp.ne.s32.totalorder %s45, %s61
    %p63 = scmp.eq.s32.totalorder %s16, 0
    %p64 = por %p62, %p63
    %s65 = ssub.s32 %s19, %s28
    %s66 = ssub.s32 %s18, %s32
    %s67 = sor.u32 %s65, %s66
    %p68 = scmp.eq.s32.totalorder %s67, 0
    %s70 = sadd.s32 %s69, 1
    %s71 = scalar_select %p68, %s69, %s70
    %p74 = pneg %p68
    %p75 = scmp.eq.s32.totalorder %s10, 2
    %p76 = por %p74, %p75
    %p77 = scmp.ne.s32.totalorder %s69, %s72
    %p78 = scmp.eq.s32.totalorder %s10, 0
    %p79 = por %p77, %p78
    %p80 = scmp.ne.s32.totalorder %s69, %s72
    %p81 = scmp.eq.s32.totalorder %s15, 2
    %p82 = por %p80, %p81
    %p83 = scmp.ne.s32.totalorder %s72, %s73
    %p84 = scmp.eq.s32.totalorder %s15, 0
    %p85 = por %p83, %p84
    %p86 = scmp.ne.s32.totalorder %s72, %s73
    %p87 = scmp.eq.s32.totalorder %s16, 2
    %p88 = por %p86, %p87
    %p90 = scmp.ne.s32.totalorder %s73, %s89
    %p91 = scmp.eq.s32.totalorder %s16, 0
    %p92 = por %p90, %p91
    %s93 = ssub.s32 %s18, %s32
    %p94 = scmp.eq.s32.totalorder %s93, 0
    %s96 = sadd.s32 %s95, 1
    %s97 = scalar_select %p94, %s95, %s96
    %p100 = pneg %p94
    %p101 = scmp.eq.s32.totalorder %s10, 2
    %p102 = por %p100, %p101
    %p103 = scmp.ne.s32.totalorder %s95, %s98
    %p104 = scmp.eq.s32.totalorder %s10, 0
    %p105 = por %p103, %p104
    %p106 = scmp.ne.s32.totalorder %s95, %s98
    %p107 = scmp.eq.s32.totalorder %s15, 2
    %p108 = por %p106, %p107
    %p109 = scmp.ne.s32.totalorder %s98, %s99
    %p110 = scmp.eq.s32.totalorder %s15, 0
    %p111 = por %p109, %p110
    %p112 = scmp.ne.s32.totalorder %s98, %s99
    %p113 = scmp.eq.s32.totalorder %s16, 2
    %p114 = por %p112, %p113
    %p116 = scmp.ne.s32.totalorder %s99, %s115
    %p117 = scmp.eq.s32.totalorder %s16, 0
    %p118 = por %p116, %p117
    %s119 = ssub.s32 %s18, %s32
    %p120 = scmp.eq.s32.totalorder %s119, 0
    %s122 = sadd.s32 %s121, 1
    %s123 = scalar_select %p120, %s121, %s122
    %p126 = pneg %p120
    %p127 = scmp.eq.s32.totalorder %s10, 2
    %p128 = por %p126, %p127
    %p129 = scmp.ne.s32.totalorder %s121, %s124
    %p130 = scmp.eq.s32.totalorder %s10, 0
    %p131 = por %p129, %p130
    %p132 = scmp.ne.s32.totalorder %s121, %s124
    %p133 = scmp.eq.s32.totalorder %s15, 2
    %p134 = por %p132, %p133
    %p135 = scmp.ne.s32.totalorder %s124, %s125
    %p136 = scmp.eq.s32.totalorder %s15, 0
    %p137 = por %p135, %p136
    %p138 = scmp.ne.s32.totalorder %s124, %s125
    %p139 = scmp.eq.s32.totalorder %s16, 2
    %p140 = por %p138, %p139
    %p142 = scmp.ne.s32.totalorder %s125, %s141
    %p143 = scmp.eq.s32.totalorder %s16, 0
    %p144 = por %p142, %p143
    %s145 = ssub.s32 %s17, %s36
    %s146 = ssub.s32 %s18, %s32
    %s147 = sor.u32 %s145, %s146
    %p148 = scmp.eq.s32.totalorder %s147, 0
    %s150 = sadd.s32 %s149, 1
    %s151 = scalar_select %p148, %s149, %s150
    %p154 = pneg %p148
    %p155 = scmp.eq.s32.totalorder %s10, 2
    %p156 = por %p154, %p155
    %p157 = scmp.ne.s32.totalorder %s149, %s152
    %p158 = scmp.eq.s32.totalorder %s10, 0
    %p159 = por %p157, %p158
    %p160 = scmp.ne.s32.totalorder %s149, %s152
    %p161 = scmp.eq.s32.totalorder %s15, 2
    %p162 = por %p160, %p161
    %p163 = scmp.ne.s32.totalorder %s152, %s153
    %p164 = scmp.eq.s32.totalorder %s15, 0
    %p165 = por %p163, %p164
    %p166 = scmp.ne.s32.totalorder %s152, %s153
    %p167 = scmp.eq.s32.totalorder %s16, 2
    %p168 = por %p166, %p167
    %p170 = scmp.ne.s32.totalorder %s153, %s169
    %p171 = scmp.eq.s32.totalorder %s16, 0
    %p172 = por %p170, %p171
    %p173 = scmp.le.s32.totalorder 1, %s10
    %p174 = scmp.lt.s32.totalorder %s10, 4
    %p175 = pnand %p173, %p174
    %p176 = pneg %p175
    // Predicated region
    $region9: #{resnet_forward.20} parent=5 // pred_check
      _
    $region10: #{resnet_forward.20} parent=5 // pred_check_branch
      %178 = sbr.rel (%p175) target = $region12
    $region11: #{resnet_forward.20} parent=5 // pred_region
      %s179 = ssub.s32 %s10, 1
      // Predicated region
      $region13: #{resnet_forward.20} parent=11 // pred_check
        %p180 = pneg %p111
      $region14: #{resnet_forward.20} parent=11 // pred_check_branch
        %182 = sbr.rel (%p180) target = $region16
      $region15: #{resnet_forward.20} parent=11 // pred_region
        %s183 = smul.u32 2, %s21
        %p184 = scmp.lt.s32.totalorder %s183, 1
        %s185 = scalar_select %p184, %s183, 1
        %s186 = scalar_lea.vmem %s2, %s185
        %s187 = smul.u32 2, %s21
      $region16: #{resnet_forward.20} parent=11 // pred_fallthru
        _
      // Predicated region
      $region17: #{resnet_forward.20} parent=11 // pred_check
        %p188 = pneg %p137
      $region18: #{resnet_forward.20} parent=11 // pred_check_branch
        %190 = sbr.rel (%p188) target = $region20
      $region19: #{resnet_forward.20} parent=11 // pred_region
        %s191 = smul.u32 2, %s21
        %p192 = scmp.lt.s32.totalorder %s191, 1
        %s193 = scalar_select %p192, %s191, 1
        %s194 = scalar_lea.vmem %s3, %s193
        %s195 = smul.u32 2, %s21
      $region20: #{resnet_forward.20} parent=11 // pred_fallthru
        _
    $region12: #{resnet_forward.20} parent=5 // pred_fallthru
      _
    %p196 = scmp.lt.s32.totalorder %s10, 3
    // Predicated region
    $region21: #{resnet_forward.20} parent=5 // pred_check
      %p197 = pneg %p196
    $region22: #{resnet_forward.20} parent=5 // pred_check_branch
      %199 = sbr.rel (%p197) target = $region24
    $region23: #{resnet_forward.20} parent=5 // pred_region
      // Predicated region
      $region25: #{resnet_forward.20} parent=23 // pred_check
        %p200 = pneg %p51
      $region26: #{resnet_forward.20} parent=23 // pred_check_branch
        %202 = sbr.rel (%p200) target = $region28
      $region27: #{resnet_forward.20} parent=23 // pred_region
        %s203 = smul.u32 3, %s19
        %p204 = scmp.lt.s32.totalorder %s17, 0
        %s205 = scalar_select %p204, %s17, 0
        %p206 = scmp.lt.s32.totalorder %s203, 8
        %s207 = scalar_select %p206, %s203, 8
        %s208 = smul.addr %s205, 9
        %s209 = sadd.s32 %s207, %s208
        %s210 = smul.addr %s209, 4
        %s211 = scalar_lea.vmem %s0, %s210
        %s212 = smul.u32 3, %s19
      $region28: #{resnet_forward.20} parent=23 // pred_fallthru
        _
      // Predicated region
      $region29: #{resnet_forward.20} parent=23 // pred_check
        %p213 = pneg %p79
      $region30: #{resnet_forward.20} parent=23 // pred_check_branch
        %215 = sbr.rel (%p213) target = $region32
      $region31: #{resnet_forward.20} parent=23 // pred_region
        %s216 = smul.u32 48, %s19
        %s217 = smul.u32 2, %s18
        %p218 = scmp.lt.s32.totalorder %s216, 143
        %s219 = scalar_select %p218, %s216, 143
        %p220 = scmp.lt.s32.totalorder %s217, 1
        %s221 = scalar_select %p220, %s217, 1
        %s222 = smul.addr %s219, 2
        %s223 = sadd.s32 %s221, %s222
        %s224 = smul.addr %s223, 4
        %s225 = scalar_lea.vmem %s1, %s224
        %s226 = smul.u32 48, %s19
        %s227 = smul.u32 2, %s18
      $region32: #{resnet_forward.20} parent=23 // pred_fallthru
        _
    $region24: #{resnet_forward.20} parent=5 // pred_fallthru
      _
    %p228 = scmp.le.s32.totalorder 1, %s10
    %p229 = scmp.lt.s32.totalorder %s10, 4
    %p230 = pnand %p228, %p229
    %p231 = pneg %p230
    // Predicated region
    $region33: #{resnet_forward.20} parent=5 // pred_check
      _
    $region34: #{resnet_forward.20} parent=5 // pred_check_branch
      %233 = sbr.rel (%p230) target = $region36
    $region35: #{resnet_forward.20} parent=5 // pred_region
      %s234 = ssub.s32 %s10, 1
      %s235 = smul.u32 3, %s22
      %p236 = scmp.lt.s32.totalorder %s20, 0
      %s237 = scalar_select %p236, %s20, 0
      %p238 = scmp.lt.s32.totalorder %s235, 8
      %s239 = scalar_select %p238, %s235, 8
      %s240 = smul.addr %s237, 9
      %s241 = sadd.s32 %s239, %s240
      %s242 = smul.addr %s241, 4
      %s243 = scalar_lea.vmem %s0, %s242
      %p244 = pneg %p57
      %p245 = pneg %p54
      %s246 = smul.u32 48, %s22
      %s247 = smul.u32 2, %s21
      %p248 = scmp.lt.s32.totalorder %s246, 143
      %s249 = scalar_select %p248, %s246, 143
      %p250 = scmp.lt.s32.totalorder %s247, 1
      %s251 = scalar_select %p250, %s247, 1
      %s252 = smul.addr %s249, 2
      %s253 = sadd.s32 %s251, %s252
      %s254 = smul.addr %s253, 4
      %s255 = scalar_lea.vmem %s1, %s254
      %p256 = pneg %p85
      %p257 = pneg %p82
      %s258 = smul.u32 2, %s21
      %p259 = scmp.lt.s32.totalorder %s258, 1
      %s260 = scalar_select %p259, %s258, 1
      %s261 = scalar_lea.vmem %s2, %s260
      %p262 = pneg %p111
      %p263 = pneg %p108
      %s264 = smul.u32 2, %s21
      %p265 = scmp.lt.s32.totalorder %s264, 1
      %s266 = scalar_select %p265, %s264, 1
      %s267 = scalar_lea.vmem %s3, %s266
      %p268 = pneg %p137
      %p269 = pneg %p134
      %p270 = pneg %p165
      %p271 = pneg %p162
      %s272 = smul.u32 2, %s21
      %p273 = scmp.lt.s32.totalorder %s20, 0
      %s274 = scalar_select %p273, %s20, 0
      %p275 = scmp.lt.s32.totalorder %s272, 1
      %s276 = scalar_select %p275, %s272, 1
      %s277 = smul.addr %s274, 2
      %s278 = sadd.s32 %s276, %s277
      %s279 = smul.addr %s278, 8
      %s280 = scalar_lea.vmem %s4, %s279
      %s281 = smul.u32 3, %s22
      %p282 = scmp.lt.s32.totalorder %s20, 0
      %s283 = scalar_select %p282, %s20, 0
      %p284 = scmp.lt.s32.totalorder %s281, 8
      %s285 = scalar_select %p284, %s281, 8
      %s286 = smul.addr %s283, 9
      %s287 = sadd.s32 %s285, %s286
      %s288 = smul.addr %s287, 4
      %s289 = scalar_lea.vmem %s0, %s288
      %s290 = smul.u32 3, %s22
      %s291 = smul.u32 48, %s22
      %s292 = smul.u32 2, %s21
      %p293 = scmp.lt.s32.totalorder %s291, 143
      %s294 = scalar_select %p293, %s291, 143
      %p295 = scmp.lt.s32.totalorder %s292, 1
      %s296 = scalar_select %p295, %s292, 1
      %s297 = smul.addr %s294, 2
      %s298 = sadd.s32 %s296, %s297
      %s299 = smul.addr %s298, 4
      %s300 = scalar_lea.vmem %s1, %s299
      %s301 = smul.u32 48, %s22
      %s302 = smul.u32 2, %s21
      %s303 = smul.u32 2, %s21
      %p304 = scmp.lt.s32.totalorder %s303, 1
      %s305 = scalar_select %p304, %s303, 1
      %s306 = scalar_lea.vmem %s2, %s305
      %s307 = smul.u32 2, %s21
      %s308 = smul.u32 2, %s21
      %p309 = scmp.lt.s32.totalorder %s308, 1
      %s310 = scalar_select %p309, %s308, 1
      %s311 = scalar_lea.vmem %s3, %s310
      %s312 = smul.u32 2, %s21
      %s313 = smul.u32 2, %s21
      %p314 = scmp.lt.s32.totalorder %s20, 0
      %s315 = scalar_select %p314, %s20, 0
      %p316 = scmp.lt.s32.totalorder %s313, 1
      %s317 = scalar_select %p316, %s313, 1
      %s318 = smul.addr %s315, 2
      %s319 = sadd.s32 %s317, %s318
      %s320 = smul.addr %s319, 8
      %s321 = scalar_lea.vmem %s4, %s320
      %s322 = smul.u32 2, %s21
      %v323 = vld [vmem:[%s289] sm:$0xff]
      %v324 = vld [vmem:[%s289 + $0x8] sm:$0xf]
      %v325 = vld [vmem:[%s300] sm:$0xff]
      %v326 = vld [vmem:[%s300 + $0x8] sm:$0xff]
      %v327 = vld [vmem:[%s300 + $0x10] sm:$0xff]
      %v328 = vld [vmem:[%s300 + $0x18] sm:$0xff]
      %v329 = vld [vmem:[%s300 + $0x20] sm:$0xff]
      %v330 = vld [vmem:[%s300 + $0x28] sm:$0xff]
      %v331 = vld [vmem:[%s300 + $0x30] sm:$0xff]
      %v332 = vld [vmem:[%s300 + $0x38] sm:$0xff]
      %v333 = vld [vmem:[%s300 + $0x40] sm:$0xff]
      %v334 = vld [vmem:[%s300 + $0x48] sm:$0xff]
      %v335 = vld [vmem:[%s300 + $0x50] sm:$0xff]
      %v336 = vld [vmem:[%s300 + $0x58] sm:$0xff]
      %v337 = vld [vmem:[%s300 + $0x60] sm:$0xff]
      %v338 = vld [vmem:[%s300 + $0x68] sm:$0xff]
      %v339 = vld [vmem:[%s300 + $0x70] sm:$0xff]
      %v340 = vld [vmem:[%s300 + $0x78] sm:$0xff]
      %v341 = vld [vmem:[%s300 + $0x80] sm:$0xff]
      %v342 = vld [vmem:[%s300 + $0x88] sm:$0xff]
      %v343 = vld [vmem:[%s300 + $0x90] sm:$0xff]
      %v344 = vld [vmem:[%s300 + $0x98] sm:$0xff]
      %v345 = vld [vmem:[%s300 + $0xa0] sm:$0xff]
      %v346 = vld [vmem:[%s300 + $0xa8] sm:$0xff]
      %v347 = vld [vmem:[%s300 + $0xb0] sm:$0xff]
      %v348 = vld [vmem:[%s300 + $0xb8] sm:$0xff]
      %v349 = vld [vmem:[%s300 + $0xc0] sm:$0xff]
      %v350 = vld [vmem:[%s300 + $0xc8] sm:$0xff]
      %v351 = vld [vmem:[%s300 + $0xd0] sm:$0xff]
      %v352 = vld [vmem:[%s300 + $0xd8] sm:$0xff]
      %v353 = vld [vmem:[%s300 + $0xe0] sm:$0xff]
      %v354 = vld [vmem:[%s300 + $0xe8] sm:$0xff]
      %v355 = vld [vmem:[%s300 + $0xf0] sm:$0xff]
      %v356 = vld [vmem:[%s300 + $0xf8] sm:$0xff]
      %v357 = vld [vmem:[%s300 + $0x100] sm:$0xff]
      %v358 = vld [vmem:[%s300 + $0x108] sm:$0xff]
      %v359 = vld [vmem:[%s300 + $0x110] sm:$0xff]
      %v360 = vld [vmem:[%s300 + $0x118] sm:$0xff]
      %v361 = vld [vmem:[%s300 + $0x120] sm:$0xff]
      %v362 = vld [vmem:[%s300 + $0x128] sm:$0xff]
      %v363 = vld [vmem:[%s300 + $0x130] sm:$0xff]
      %v364 = vld [vmem:[%s300 + $0x138] sm:$0xff]
      %v365 = vld [vmem:[%s300 + $0x140] sm:$0xff]
      %v366 = vld [vmem:[%s300 + $0x148] sm:$0xff]
      %v367 = vld [vmem:[%s300 + $0x150] sm:$0xff]
      %v368 = vld [vmem:[%s300 + $0x158] sm:$0xff]
      %v369 = vld [vmem:[%s300 + $0x160] sm:$0xff]
      %v370 = vld [vmem:[%s300 + $0x168] sm:$0xff]
      %v371 = vld [vmem:[%s300 + $0x170] sm:$0xff]
      %v372 = vld [vmem:[%s300 + $0x178] sm:$0xff]
      %v375 = vunpack.c.l.b16 %v323
      %v376 = vunpack.c.h.b16 %v323
      %v377 = vunpack.c.l.b16 %v324
      %v378 = vpack.c.b16 %v375, %v375
      %v379 = vpack.c.b16 %v376, %v376
      %v380 = vpack.c.b16 %v377, %v377
      %v432 = vunpack.c.l.b16 %v325
      %v433 = vunpack.c.h.b16 %v325
      %v434 = vunpack.c.l.b16 %v326
      %v435 = vunpack.c.h.b16 %v326
      %v436 = vunpack.c.l.b16 %v327
      %v437 = vunpack.c.h.b16 %v327
      %v438 = vunpack.c.l.b16 %v328
      %v439 = vunpack.c.h.b16 %v328
      %v440 = vunpack.c.l.b16 %v329
      %v441 = vunpack.c.h.b16 %v329
      %v442 = vunpack.c.l.b16 %v330
      %v443 = vunpack.c.h.b16 %v330
      %v444 = vunpack.c.l.b16 %v331
      %v445 = vunpack.c.h.b16 %v331
      %v446 = vunpack.c.l.b16 %v332
      %v447 = vunpack.c.h.b16 %v332
      %v448 = vunpack.c.l.b16 %v333
      %v449 = vunpack.c.h.b16 %v333
      %v450 = vunpack.c.l.b16 %v334
      %v451 = vunpack.c.h.b16 %v334
      %v452 = vunpack.c.l.b16 %v335
      %v453 = vunpack.c.h.b16 %v335
      %v454 = vunpack.c.l.b16 %v336
      %v455 = vunpack.c.h.b16 %v336
      %v456 = vunpack.c.l.b16 %v337
      %v457 = vunpack.c.h.b16 %v337
      %v458 = vunpack.c.l.b16 %v338
      %v459 = vunpack.c.h.b16 %v338
      %v460 = vunpack.c.l.b16 %v339
      %v461 = vunpack.c.h.b16 %v339
      %v462 = vunpack.c.l.b16 %v340
      %v463 = vunpack.c.h.b16 %v340
      %v464 = vunpack.c.l.b16 %v341
      %v465 = vunpack.c.h.b16 %v341
      %v466 = vunpack.c.l.b16 %v342
      %v467 = vunpack.c.h.b16 %v342
      %v468 = vunpack.c.l.b16 %v343
      %v469 = vunpack.c.h.b16 %v343
      %v470 = vunpack.c.l.b16 %v344
      %v471 = vunpack.c.h.b16 %v344
      %v472 = vunpack.c.l.b16 %v345
      %v473 = vunpack.c.h.b16 %v345
      %v474 = vunpack.c.l.b16 %v346
      %v475 = vunpack.c.h.b16 %v346
      %v476 = vunpack.c.l.b16 %v347
      %v477 = vunpack.c.h.b16 %v347
      %v478 = vunpack.c.l.b16 %v348
      %v479 = vunpack.c.h.b16 %v348
      %v480 = vunpack.c.l.b16 %v349
      %v481 = vunpack.c.h.b16 %v349
      %v482 = vunpack.c.l.b16 %v350
      %v483 = vunpack.c.h.b16 %v350
      %v484 = vunpack.c.l.b16 %v351
      %v485 = vunpack.c.h.b16 %v351
      %v486 = vunpack.c.l.b16 %v352
      %v487 = vunpack.c.h.b16 %v352
      %v488 = vunpack.c.l.b16 %v353
      %v489 = vunpack.c.h.b16 %v353
      %v490 = vunpack.c.l.b16 %v354
      %v491 = vunpack.c.h.b16 %v354
      %v492 = vunpack.c.l.b16 %v355
      %v493 = vunpack.c.h.b16 %v355
      %v494 = vunpack.c.l.b16 %v356
      %v495 = vunpack.c.h.b16 %v356
      %v496 = vunpack.c.l.b16 %v357
      %v497 = vunpack.c.h.b16 %v357
      %v498 = vunpack.c.l.b16 %v358
      %v499 = vunpack.c.h.b16 %v358
      %v500 = vunpack.c.l.b16 %v359
      %v501 = vunpack.c.h.b16 %v359
      %v502 = vunpack.c.l.b16 %v360
      %v503 = vunpack.c.h.b16 %v360
      %v504 = vunpack.c.l.b16 %v361
      %v505 = vunpack.c.h.b16 %v361
      %v506 = vunpack.c.l.b16 %v362
      %v507 = vunpack.c.h.b16 %v362
      %v508 = vunpack.c.l.b16 %v363
      %v509 = vunpack.c.h.b16 %v363
      %v510 = vunpack.c.l.b16 %v364
      %v511 = vunpack.c.h.b16 %v364
      %v512 = vunpack.c.l.b16 %v365
      %v513 = vunpack.c.h.b16 %v365
      %v514 = vunpack.c.l.b16 %v366
      %v515 = vunpack.c.h.b16 %v366
      %v516 = vunpack.c.l.b16 %v367
      %v517 = vunpack.c.h.b16 %v367
      %v518 = vunpack.c.l.b16 %v368
      %v519 = vunpack.c.h.b16 %v368
      %v520 = vunpack.c.l.b16 %v369
      %v521 = vunpack.c.h.b16 %v369
      %v522 = vunpack.c.l.b16 %v370
      %v523 = vunpack.c.h.b16 %v370
      %v524 = vunpack.c.l.b16 %v371
      %v525 = vunpack.c.h.b16 %v371
      %v526 = vunpack.c.l.b16 %v372
      %v527 = vunpack.c.h.b16 %v372
      %v528 = vpack.c.b16 %v434, %v432
      %v529 = vpack.c.b16 %v435, %v433
      %v530 = vpack.c.b16 %v438, %v436
      %v531 = vpack.c.b16 %v439, %v437
      %v532 = vpack.c.b16 %v442, %v440
      %v533 = vpack.c.b16 %v443, %v441
      %v534 = vpack.c.b16 %v446, %v444
      %v535 = vpack.c.b16 %v447, %v445
      %v536 = vpack.c.b16 %v450, %v448
      %v537 = vpack.c.b16 %v451, %v449
      %v538 = vpack.c.b16 %v454, %v452
      %v539 = vpack.c.b16 %v455, %v453
      %v540 = vpack.c.b16 %v458, %v456
      %v541 = vpack.c.b16 %v459, %v457
      %v542 = vpack.c.b16 %v462, %v460
      %v543 = vpack.c.b16 %v463, %v461
      %v544 = vpack.c.b16 %v466, %v464
      %v545 = vpack.c.b16 %v467, %v465
      %v546 = vpack.c.b16 %v470, %v468
      %v547 = vpack.c.b16 %v471, %v469
      %v548 = vpack.c.b16 %v474, %v472
      %v549 = vpack.c.b16 %v475, %v473
      %v550 = vpack.c.b16 %v478, %v476
      %v551 = vpack.c.b16 %v479, %v477
      %v552 = vpack.c.b16 %v482, %v480
      %v553 = vpack.c.b16 %v483, %v481
      %v554 = vpack.c.b16 %v486, %v484
      %v555 = vpack.c.b16 %v487, %v485
      %v556 = vpack.c.b16 %v490, %v488
      %v557 = vpack.c.b16 %v491, %v489
      %v558 = vpack.c.b16 %v494, %v492
      %v559 = vpack.c.b16 %v495, %v493
      %v560 = vpack.c.b16 %v498, %v496
      %v561 = vpack.c.b16 %v499, %v497
      %v562 = vpack.c.b16 %v502, %v500
      %v563 = vpack.c.b16 %v503, %v501
      %v564 = vpack.c.b16 %v506, %v504
      %v565 = vpack.c.b16 %v507, %v505
      %v566 = vpack.c.b16 %v510, %v508
      %v567 = vpack.c.b16 %v511, %v509
      %v568 = vpack.c.b16 %v514, %v512
      %v569 = vpack.c.b16 %v515, %v513
      %v570 = vpack.c.b16 %v518, %v516
      %v571 = vpack.c.b16 %v519, %v517
      %v572 = vpack.c.b16 %v522, %v520
      %v573 = vpack.c.b16 %v523, %v521
      %v574 = vpack.c.b16 %v526, %v524
      %v575 = vpack.c.b16 %v527, %v525
      %624 = vmatpush.bf16.msra.mxu0 %v542
      %625 = vmatpush.bf16.msra.mxu0 %v540
      %626 = vmatpush.bf16.msra.mxu0 %v538
      %627 = vmatpush.bf16.msra.mxu0 %v536
      %628 = vmatpush.bf16.msra.mxu0 %v534
      %629 = vmatpush.bf16.msra.mxu0 %v532
      %630 = vmatpush.bf16.msra.mxu0 %v530
      %631 = vmatpush.bf16.msra.mxu0 %v528
      %632 = vmatmul.bf16.gmra.mxu0 %v378
      %v633 = vpop.f32.mrf.mxu0
      %v634 = vadd.f32 0.0, %v633
      %v635 = vpop.f32.mrf.mxu0
      %636 = vdwg.mxu0
      %637 = vmatpush.bf16.msra.mxu0 %v558
      %638 = vmatpush.bf16.msra.mxu0 %v556
      %639 = vmatpush.bf16.msra.mxu0 %v554
      %640 = vmatpush.bf16.msra.mxu0 %v552
      %641 = vmatpush.bf16.msra.mxu0 %v550
      %642 = vmatpush.bf16.msra.mxu0 %v548
      %643 = vmatpush.bf16.msra.mxu0 %v546
      %644 = vmatpush.bf16.msra.mxu0 %v544
      %645 = vmatmul.bf16.gmra.mxu0 %v379
      %v646 = vpop.f32.mrf.mxu0
      %v647 = vadd.f32 %v634, %v646
      %v648 = vpop.f32.mrf.mxu0
      %649 = vdwg.mxu0
      %650 = vmatpush.bf16.msra.mxu0 %v574
      %651 = vmatpush.bf16.msra.mxu0 %v572
      %652 = vmatpush.bf16.msra.mxu0 %v570
      %653 = vmatpush.bf16.msra.mxu0 %v568
      %654 = vmatpush.bf16.msra.mxu0 %v566
      %655 = vmatpush.bf16.msra.mxu0 %v564
      %656 = vmatpush.bf16.msra.mxu0 %v562
      %657 = vmatpush.bf16.msra.mxu0 %v560
      %658 = vmatmul.bf16.gmra.mxu0 %v380
      %v659 = vpop.f32.mrf.mxu0
      %v660 = vadd.f32 %v647, %v659
      %v661 = vpop.f32.mrf.mxu0
      %662 = vdwg.mxu0
      %663 = vmatpush.bf16.msra.mxu0 %v543
      %664 = vmatpush.bf16.msra.mxu0 %v541
      %665 = vmatpush.bf16.msra.mxu0 %v539
      %666 = vmatpush.bf16.msra.mxu0 %v537
      %667 = vmatpush.bf16.msra.mxu0 %v535
      %668 = vmatpush.bf16.msra.mxu0 %v533
      %669 = vmatpush.bf16.msra.mxu0 %v531
      %670 = vmatpush.bf16.msra.mxu0 %v529
      %671 = vmatmul.bf16.gmra.mxu0 %v378
      %v672 = vpop.f32.mrf.mxu0
      %v673 = vadd.f32 0.0, %v672
      %v674 = vpop.f32.mrf.mxu0
      %675 = vdwg.mxu0
      %676 = vmatpush.bf16.msra.mxu0 %v559
      %677 = vmatpush.bf16.msra.mxu0 %v557
      %678 = vmatpush.bf16.msra.mxu0 %v555
      %679 = vmatpush.bf16.msra.mxu0 %v553
      %680 = vmatpush.bf16.msra.mxu0 %v551
      %681 = vmatpush.bf16.msra.mxu0 %v549
      %682 = vmatpush.bf16.msra.mxu0 %v547
      %683 = vmatpush.bf16.msra.mxu0 %v545
      %684 = vmatmul.bf16.gmra.mxu0 %v379
      %v685 = vpop.f32.mrf.mxu0
      %v686 = vadd.f32 %v673, %v685
      %v687 = vpop.f32.mrf.mxu0
      %688 = vdwg.mxu0
      %689 = vmatpush.bf16.msra.mxu0 %v575
      %690 = vmatpush.bf16.msra.mxu0 %v573
      %691 = vmatpush.bf16.msra.mxu0 %v571
      %692 = vmatpush.bf16.msra.mxu0 %v569
      %693 = vmatpush.bf16.msra.mxu0 %v567
      %694 = vmatpush.bf16.msra.mxu0 %v565
      %695 = vmatpush.bf16.msra.mxu0 %v563
      %696 = vmatpush.bf16.msra.mxu0 %v561
      %697 = vmatmul.bf16.gmra.mxu0 %v380
      %v698 = vpop.f32.mrf.mxu0
      %v699 = vadd.f32 %v686, %v698
      %v700 = vpop.f32.mrf.mxu0
      %701 = vdwg.mxu0
      %p702 = scmp.eq.s32.totalorder %s22, 0
      // Predicated region
      $region37: #{resnet_forward.20} parent=35 // pred_check
        %p703 = pneg %p702
      $region38: #{resnet_forward.20} parent=35 // pred_check_branch
        %705 = sbr.rel (%p703) target = $region40
      $region39: #{resnet_forward.20} parent=35 // pred_region
        %706 = vst [vmem:[%s321] sm:$0xff] %v660
        %707 = vst [vmem:[%s321 + $0x8] sm:$0xff] %v699
      $region40: #{resnet_forward.20} parent=35 // pred_fallthru
        _
      %p708 = scmp.gt.s32.totalorder %s22, 0
      %p709 = scmp.lt.s32.totalorder %s22, 2
      %p710 = pnand %p708, %p709
      %p711 = pneg %p710
      // Predicated region
      $region41: #{resnet_forward.20} parent=35 // pred_check
        _
      $region42: #{resnet_forward.20} parent=35 // pred_check_branch
        %713 = sbr.rel (%p710) target = $region44
      $region43: #{resnet_forward.20} parent=35 // pred_region
        %v714 = vld [vmem:[%s321] sm:$0xff]
        %v715 = vld [vmem:[%s321 + $0x8] sm:$0xff]
        %v716 = vadd.f32 %v714, %v660
        %v717 = vadd.f32 %v715, %v699
        %718 = vst [vmem:[%s321] sm:$0xff] %v716
        %719 = vst [vmem:[%s321 + $0x8] sm:$0xff] %v717
      $region44: #{resnet_forward.20} parent=35 // pred_fallthru
        _
      %p720 = scmp.eq.s32.totalorder %s22, 2
      // Predicated region
      $region45: #{resnet_forward.20} parent=35 // pred_check
        %p721 = pneg %p720
      $region46: #{resnet_forward.20} parent=35 // pred_check_branch
        %723 = sbr.rel (%p721) target = $region48
      $region47: #{resnet_forward.20} parent=35 // pred_region
        %v724 = vld [vmem:[%s321] sm:$0xff]
        %v725 = vld [vmem:[%s321 + $0x8] sm:$0xff]
        %v726 = vadd.f32 %v724, %v660
        %v727 = vadd.f32 %v725, %v699
        %v728 = vld [vmem:[%s306] sm:$0x3]
        %v730 = vperm.slane %v728, 0
        %v731 = vperm.slane %v728, 1
        %v734 = vmul.f32 %v726, %v730
        %v735 = vmul.f32 %v727, %v731
        %v736 = vld [vmem:[%s311] sm:$0x3]
        %v738 = vperm.slane %v736, 0
        %v739 = vperm.slane %v736, 1
        %v742 = vadd.f32 %v734, %v738
        %v743 = vadd.f32 %v735, %v739
        %v744 = vmax.f32 %v742, 0.0
        %v745 = vmax.f32 %v743, 0.0
        %746 = vst [vmem:[%s321] sm:$0xff] %v744
        %747 = vst [vmem:[%s321 + $0x8] sm:$0xff] %v745
      $region48: #{resnet_forward.20} parent=35 // pred_fallthru
        _
      %s748 = smul.u32 2, %s21
      %p749 = scmp.lt.s32.totalorder %s20, 0
      %s750 = scalar_select %p749, %s20, 0
      %p751 = scmp.lt.s32.totalorder %s748, 1
      %s752 = scalar_select %p751, %s748, 1
      %s753 = smul.addr %s750, 2
      %s754 = sadd.s32 %s752, %s753
      %s755 = smul.addr %s754, 8
      %s756 = scalar_lea.vmem %s4, %s755
      // Predicated region
      $region49: #{resnet_forward.20} parent=35 // pred_check
        %p757 = pneg %p162
      $region50: #{resnet_forward.20} parent=35 // pred_check_branch
        %759 = sbr.rel (%p757) target = $region52
      $region51: #{resnet_forward.20} parent=35 // pred_region
        %s760 = smul.u32 2, %s21
      $region52: #{resnet_forward.20} parent=35 // pred_fallthru
        _
      // Predicated region
      $region53: #{resnet_forward.20} parent=35 // pred_check
        %p761 = pneg %p162
      $region54: #{resnet_forward.20} parent=35 // pred_check_branch
        %763 = sbr.rel (%p761) target = $region56
      $region55: #{resnet_forward.20} parent=35 // pred_region
        %s764 = smul.u32 2, %s21
        %p765 = scmp.lt.s32.totalorder %s20, 0
        %s766 = scalar_select %p765, %s20, 0
        %p767 = scmp.lt.s32.totalorder %s764, 1
        %s768 = scalar_select %p767, %s764, 1
        %s769 = smul.addr %s766, 2
        %s770 = sadd.s32 %s768, %s769
        %s771 = smul.addr %s770, 8
        %s772 = scalar_lea.vmem %s4, %s771
      $region56: #{resnet_forward.20} parent=35 // pred_fallthru
        _
    $region36: #{resnet_forward.20} parent=5 // pred_fallthru
      _
    %p773 = scmp.le.s32.totalorder 2, %s10
    // Predicated region
    $region57: #{resnet_forward.20} parent=5 // pred_check
      %p774 = pneg %p773
    $region58: #{resnet_forward.20} parent=5 // pred_check_branch
      %776 = sbr.rel (%p774) target = $region60
    $region59: #{resnet_forward.20} parent=5 // pred_region
      %s777 = ssub.s32 %s10, 2
    $region60: #{resnet_forward.20} parent=5 // pred_fallthru
      _
  $region6: #{resnet_forward.20} parent=0 // loop_footer
    %s14 = sadd.s32 1, %s10
  $region7: #{resnet_forward.20} parent=0 // loop_footer_branch
    %9 = sbr.rel target = $region3
  $region8: #{resnet_forward.20} parent=0 // loop_exit
    _

// kernel: resnet_forward.22
$region0: #{resnet_forward.22}
  #allocation0 [shape = 'u32[]', space=smem, size = 0x4, offset = 0x4, fixed_abs, tag = 'smem constant byte address 0x4 - core index']
  #allocation1 [shape = 'u32[72,128]{1,0:T(1,128)}', space=vmem, size = 0x9000, scoped, tag = 'internal scratch']
  %s0 = inlined_call_operand.vmem [shape: bf16[8,2304], index: 0, kind: input, shape index: {}]
  %s1 = inlined_call_operand.vmem [shape: bf16[2304,256], index: 1, kind: input, shape index: {}]
  %s2 = inlined_call_operand.vmem [shape: f32[1,256], index: 2, kind: input, shape index: {}]
  %s3 = inlined_call_operand.vmem [shape: f32[1,256], index: 3, kind: input, shape index: {}]
  %s4 = inlined_call_operand.vmem [shape: f32[8,256], index: 4, kind: input, shape index: {}]
  %s5 = inlined_call_operand.vmem [shape: f32[8,256], index: 5, kind: output, shape index: {}]
  %s6 = sld [smem:[#allocation0]]
  $region65: #{resnet_forward.22} parent=0
    _
  %s8 = ssub.s32 1, %s6
  %s9 = scalar_select 0, %s8, %s6
  loop: start=0, step=1, limit=5
  $region2: #{resnet_forward.22} parent=0 // loop_pre_header
    _
  $region3: #{resnet_forward.22} parent=0 // loop_header
    %s11 = sphi 0, %s15
    %p12 = scmp.ge.s32.totalorder %s11, 5
    %s18 = sphi 0, %s37
    %s19 = sphi 0, %s33
    %s20 = sphi 0, %s29
    %s21 = sphi 0, %s18
    %s22 = sphi 0, %s19
    %s23 = sphi 0, %s20
    %s24 = sphi 0, %s21
    %s25 = sphi 0, %s22
    %s26 = sphi 0, %s23
    %s42 = sphi 0, %s44
    %s45 = sphi 0, %s42
    %s46 = sphi 0, %s45
    %s62 = sphi 0, %s46
    %s70 = sphi 0, %s72
    %s73 = sphi 0, %s70
    %s74 = sphi 0, %s73
    %s90 = sphi 0, %s74
    %s96 = sphi 0, %s98
    %s99 = sphi 0, %s96
    %s100 = sphi 0, %s99
    %s116 = sphi 0, %s100
    %s122 = sphi 0, %s124
    %s125 = sphi 0, %s122
    %s126 = sphi 0, %s125
    %s142 = sphi 0, %s126
    %s150 = sphi 0, %s152
    %s153 = sphi 0, %s150
    %s154 = sphi 0, %s153
    %s170 = sphi 0, %s154
    %s178 = sphi 0, %s180
    %s181 = sphi 0, %s178
    %s182 = sphi 0, %s181
    %s198 = sphi 0, %s182
  $region4: #{resnet_forward.22} parent=0 // loop_header_branch
    %14 = sbr.rel (%p12) target = $region8
  $region5: #{resnet_forward.22} parent=0 // loop_body
    %s16 = ssub.s32 %s11, 1
    %s17 = ssub.s32 %s11, 2
    %s27 = sadd.s32 1, %s20
    %p28 = scmp.ge.s32.totalorder %s27, 3
    %s29 = scalar_select %p28, 0, %s27
    %s30 = sadd.s32 1, %s19
    %s31 = scalar_select %p28, %s30, %s19
    %p32 = scmp.ge.s32.totalorder %s31, 1
    %s33 = scalar_select %p32, 0, %s31
    %s34 = sadd.s32 1, %s18
    %s35 = scalar_select %p32, %s34, %s18
    %p36 = scmp.ge.s32.totalorder %s35, 1
    %s37 = scalar_select %p36, 0, %s35
    %s38 = ssub.s32 %s18, %s37
    %s39 = ssub.s32 %s20, %s29
    %s40 = sor.u32 %s38, %s39
    %p41 = scmp.eq.s32.totalorder %s40, 0
    %s43 = sadd.s32 %s42, 1
    %s44 = scalar_select %p41, %s42, %s43
    %p47 = pneg %p41
    %p48 = scmp.eq.s32.totalorder %s11, 2
    %p49 = por %p47, %p48
    %p50 = scmp.ne.s32.totalorder %s42, %s45
    %p51 = scmp.eq.s32.totalorder %s11, 0
    %p52 = por %p50, %p51
    %p53 = scmp.ne.s32.totalorder %s42, %s45
    %p54 = scmp.eq.s32.totalorder %s16, 2
    %p55 = por %p53, %p54
    %p56 = scmp.ne.s32.totalorder %s45, %s46
    %p57 = scmp.eq.s32.totalorder %s16, 0
    %p58 = por %p56, %p57
    %p59 = scmp.ne.s32.totalorder %s45, %s46
    %p60 = scmp.eq.s32.totalorder %s17, 2
    %p61 = por %p59, %p60
    %p63 = scmp.ne.s32.totalorder %s46, %s62
    %p64 = scmp.eq.s32.totalorder %s17, 0
    %p65 = por %p63, %p64
    %s66 = ssub.s32 %s20, %s29
    %s67 = ssub.s32 %s19, %s33
    %s68 = sor.u32 %s66, %s67
    %p69 = scmp.eq.s32.totalorder %s68, 0
    %s71 = sadd.s32 %s70, 1
    %s72 = scalar_select %p69, %s70, %s71
    %p75 = pneg %p69
    %p76 = scmp.eq.s32.totalorder %s11, 2
    %p77 = por %p75, %p76
    %p78 = scmp.ne.s32.totalorder %s70, %s73
    %p79 = scmp.eq.s32.totalorder %s11, 0
    %p80 = por %p78, %p79
    %p81 = scmp.ne.s32.totalorder %s70, %s73
    %p82 = scmp.eq.s32.totalorder %s16, 2
    %p83 = por %p81, %p82
    %p84 = scmp.ne.s32.totalorder %s73, %s74
    %p85 = scmp.eq.s32.totalorder %s16, 0
    %p86 = por %p84, %p85
    %p87 = scmp.ne.s32.totalorder %s73, %s74
    %p88 = scmp.eq.s32.totalorder %s17, 2
    %p89 = por %p87, %p88
    %p91 = scmp.ne.s32.totalorder %s74, %s90
    %p92 = scmp.eq.s32.totalorder %s17, 0
    %p93 = por %p91, %p92
    %s94 = ssub.s32 %s19, %s33
    %p95 = scmp.eq.s32.totalorder %s94, 0
    %s97 = sadd.s32 %s96, 1
    %s98 = scalar_select %p95, %s96, %s97
    %p101 = pneg %p95
    %p102 = scmp.eq.s32.totalorder %s11, 2
    %p103 = por %p101, %p102
    %p104 = scmp.ne.s32.totalorder %s96, %s99
    %p105 = scmp.eq.s32.totalorder %s11, 0
    %p106 = por %p104, %p105
    %p107 = scmp.ne.s32.totalorder %s96, %s99
    %p108 = scmp.eq.s32.totalorder %s16, 2
    %p109 = por %p107, %p108
    %p110 = scmp.ne.s32.totalorder %s99, %s100
    %p111 = scmp.eq.s32.totalorder %s16, 0
    %p112 = por %p110, %p111
    %p113 = scmp.ne.s32.totalorder %s99, %s100
    %p114 = scmp.eq.s32.totalorder %s17, 2
    %p115 = por %p113, %p114
    %p117 = scmp.ne.s32.totalorder %s100, %s116
    %p118 = scmp.eq.s32.totalorder %s17, 0
    %p119 = por %p117, %p118
    %s120 = ssub.s32 %s19, %s33
    %p121 = scmp.eq.s32.totalorder %s120, 0
    %s123 = sadd.s32 %s122, 1
    %s124 = scalar_select %p121, %s122, %s123
    %p127 = pneg %p121
    %p128 = scmp.eq.s32.totalorder %s11, 2
    %p129 = por %p127, %p128
    %p130 = scmp.ne.s32.totalorder %s122, %s125
    %p131 = scmp.eq.s32.totalorder %s11, 0
    %p132 = por %p130, %p131
    %p133 = scmp.ne.s32.totalorder %s122, %s125
    %p134 = scmp.eq.s32.totalorder %s16, 2
    %p135 = por %p133, %p134
    %p136 = scmp.ne.s32.totalorder %s125, %s126
    %p137 = scmp.eq.s32.totalorder %s16, 0
    %p138 = por %p136, %p137
    %p139 = scmp.ne.s32.totalorder %s125, %s126
    %p140 = scmp.eq.s32.totalorder %s17, 2
    %p141 = por %p139, %p140
    %p143 = scmp.ne.s32.totalorder %s126, %s142
    %p144 = scmp.eq.s32.totalorder %s17, 0
    %p145 = por %p143, %p144
    %s146 = ssub.s32 %s18, %s37
    %s147 = ssub.s32 %s19, %s33
    %s148 = sor.u32 %s146, %s147
    %p149 = scmp.eq.s32.totalorder %s148, 0
    %s151 = sadd.s32 %s150, 1
    %s152 = scalar_select %p149, %s150, %s151
    %p155 = pneg %p149
    %p156 = scmp.eq.s32.totalorder %s11, 2
    %p157 = por %p155, %p156
    %p158 = scmp.ne.s32.totalorder %s150, %s153
    %p159 = scmp.eq.s32.totalorder %s11, 0
    %p160 = por %p158, %p159
    %p161 = scmp.ne.s32.totalorder %s150, %s153
    %p162 = scmp.eq.s32.totalorder %s16, 2
    %p163 = por %p161, %p162
    %p164 = scmp.ne.s32.totalorder %s153, %s154
    %p165 = scmp.eq.s32.totalorder %s16, 0
    %p166 = por %p164, %p165
    %p167 = scmp.ne.s32.totalorder %s153, %s154
    %p168 = scmp.eq.s32.totalorder %s17, 2
    %p169 = por %p167, %p168
    %p171 = scmp.ne.s32.totalorder %s154, %s170
    %p172 = scmp.eq.s32.totalorder %s17, 0
    %p173 = por %p171, %p172
    %s174 = ssub.s32 %s18, %s37
    %s175 = ssub.s32 %s19, %s33
    %s176 = sor.u32 %s174, %s175
    %p177 = scmp.eq.s32.totalorder %s176, 0
    %s179 = sadd.s32 %s178, 1
    %s180 = scalar_select %p177, %s178, %s179
    %p183 = pneg %p177
    %p184 = scmp.eq.s32.totalorder %s11, 2
    %p185 = por %p183, %p184
    %p186 = scmp.ne.s32.totalorder %s178, %s181
    %p187 = scmp.eq.s32.totalorder %s11, 0
    %p188 = por %p186, %p187
    %p189 = scmp.ne.s32.totalorder %s178, %s181
    %p190 = scmp.eq.s32.totalorder %s16, 2
    %p191 = por %p189, %p190
    %p192 = scmp.ne.s32.totalorder %s181, %s182
    %p193 = scmp.eq.s32.totalorder %s16, 0
    %p194 = por %p192, %p193
    %p195 = scmp.ne.s32.totalorder %s181, %s182
    %p196 = scmp.eq.s32.totalorder %s17, 2
    %p197 = por %p195, %p196
    %p199 = scmp.ne.s32.totalorder %s182, %s198
    %p200 = scmp.eq.s32.totalorder %s17, 0
    %p201 = por %p199, %p200
    %p202 = scmp.le.s32.totalorder 1, %s11
    %p203 = scmp.lt.s32.totalorder %s11, 4
    %p204 = pnand %p202, %p203
    %p205 = pneg %p204
    // Predicated region
    $region9: #{resnet_forward.22} parent=5 // pred_check
      _
    $region10: #{resnet_forward.22} parent=5 // pred_check_branch
      %207 = sbr.rel (%p204) target = $region12
    $region11: #{resnet_forward.22} parent=5 // pred_region
      %s208 = ssub.s32 %s11, 1
      // Predicated region
      $region13: #{resnet_forward.22} parent=11 // pred_check
        %p209 = pneg %p112
      $region14: #{resnet_forward.22} parent=11 // pred_check_branch
        %211 = sbr.rel (%p209) target = $region16
      $region15: #{resnet_forward.22} parent=11 // pred_region
        %s212 = smul.u32 2, %s22
        %p213 = scmp.lt.s32.totalorder %s212, 1
        %s214 = scalar_select %p213, %s212, 1
        %s215 = scalar_lea.vmem %s2, %s214
        %s216 = smul.u32 2, %s22
      $region16: #{resnet_forward.22} parent=11 // pred_fallthru
        _
      // Predicated region
      $region17: #{resnet_forward.22} parent=11 // pred_check
        %p217 = pneg %p138
      $region18: #{resnet_forward.22} parent=11 // pred_check_branch
        %219 = sbr.rel (%p217) target = $region20
      $region19: #{resnet_forward.22} parent=11 // pred_region
        %s220 = smul.u32 2, %s22
        %p221 = scmp.lt.s32.totalorder %s220, 1
        %s222 = scalar_select %p221, %s220, 1
        %s223 = scalar_lea.vmem %s3, %s222
        %s224 = smul.u32 2, %s22
      $region20: #{resnet_forward.22} parent=11 // pred_fallthru
        _
      // Predicated region
      $region21: #{resnet_forward.22} parent=11 // pred_check
        %p225 = pneg %p166
      $region22: #{resnet_forward.22} parent=11 // pred_check_branch
        %227 = sbr.rel (%p225) target = $region24
      $region23: #{resnet_forward.22} parent=11 // pred_region
        %s228 = smul.u32 2, %s22
        %p229 = scmp.lt.s32.totalorder %s21, 0
        %s230 = scalar_select %p229, %s21, 0
        %p231 = scmp.lt.s32.totalorder %s228, 1
        %s232 = scalar_select %p231, %s228, 1
        %s233 = smul.addr %s230, 2
        %s234 = sadd.s32 %s232, %s233
        %s235 = smul.addr %s234, 8
        %s236 = scalar_lea.vmem %s4, %s235
        %s237 = smul.u32 2, %s22
      $region24: #{resnet_forward.22} parent=11 // pred_fallthru
        _
    $region12: #{resnet_forward.22} parent=5 // pred_fallthru
      _
    %p238 = scmp.lt.s32.totalorder %s11, 3
    // Predicated region
    $region25: #{resnet_forward.22} parent=5 // pred_check
      %p239 = pneg %p238
    $region26: #{resnet_forward.22} parent=5 // pred_check_branch
      %241 = sbr.rel (%p239) target = $region28
    $region27: #{resnet_forward.22} parent=5 // pred_region
      // Predicated region
      $region29: #{resnet_forward.22} parent=27 // pred_check
        %p242 = pneg %p52
      $region30: #{resnet_forward.22} parent=27 // pred_check_branch
        %244 = sbr.rel (%p242) target = $region32
      $region31: #{resnet_forward.22} parent=27 // pred_region
        %s245 = smul.u32 6, %s20
        %p246 = scmp.lt.s32.totalorder %s18, 0
        %s247 = scalar_select %p246, %s18, 0
        %p248 = scmp.lt.s32.totalorder %s245, 17
        %s249 = scalar_select %p248, %s245, 17
        %s250 = smul.addr %s247, 18
        %s251 = sadd.s32 %s249, %s250
        %s252 = smul.addr %s251, 4
        %s253 = scalar_lea.vmem %s0, %s252
        %s254 = smul.u32 6, %s20
      $region32: #{resnet_forward.22} parent=27 // pred_fallthru
        _
      // Predicated region
      $region33: #{resnet_forward.22} parent=27 // pred_check
        %p255 = pneg %p80
      $region34: #{resnet_forward.22} parent=27 // pred_check_branch
        %257 = sbr.rel (%p255) target = $region36
      $region35: #{resnet_forward.22} parent=27 // pred_region
        %s258 = smul.u32 96, %s20
        %s259 = smul.u32 2, %s19
        %p260 = scmp.lt.s32.totalorder %s258, 287
        %s261 = scalar_select %p260, %s258, 287
        %p262 = scmp.lt.s32.totalorder %s259, 1
        %s263 = scalar_select %p262, %s259, 1
        %s264 = smul.addr %s261, 2
        %s265 = sadd.s32 %s263, %s264
        %s266 = smul.addr %s265, 4
        %s267 = scalar_lea.vmem %s1, %s266
        %s268 = smul.u32 96, %s20
        %s269 = smul.u32 2, %s19
      $region36: #{resnet_forward.22} parent=27 // pred_fallthru
        _
    $region28: #{resnet_forward.22} parent=5 // pred_fallthru
      _
    %p270 = scmp.le.s32.totalorder 1, %s11
    %p271 = scmp.lt.s32.totalorder %s11, 4
    %p272 = pnand %p270, %p271
    %p273 = pneg %p272
    // Predicated region
    $region37: #{resnet_forward.22} parent=5 // pred_check
      _
    $region38: #{resnet_forward.22} parent=5 // pred_check_branch
      %275 = sbr.rel (%p272) target = $region40
    $region39: #{resnet_forward.22} parent=5 // pred_region
      %s276 = ssub.s32 %s11, 1
      %s277 = smul.u32 6, %s23
      %p278 = scmp.lt.s32.totalorder %s21, 0
      %s279 = scalar_select %p278, %s21, 0
      %p280 = scmp.lt.s32.totalorder %s277, 17
      %s281 = scalar_select %p280, %s277, 17
      %s282 = smul.addr %s279, 18
      %s283 = sadd.s32 %s281, %s282
      %s284 = smul.addr %s283, 4
      %s285 = scalar_lea.vmem %s0, %s284
      %p286 = pneg %p58
      %p287 = pneg %p55
      %s288 = smul.u32 96, %s23
      %s289 = smul.u32 2, %s22
      %p290 = scmp.lt.s32.totalorder %s288, 287
      %s291 = scalar_select %p290, %s288, 287
      %p292 = scmp.lt.s32.totalorder %s289, 1
      %s293 = scalar_select %p292, %s289, 1
      %s294 = smul.addr %s291, 2
      %s295 = sadd.s32 %s293, %s294
      %s296 = smul.addr %s295, 4
      %s297 = scalar_lea.vmem %s1, %s296
      %p298 = pneg %p86
      %p299 = pneg %p83
      %s300 = smul.u32 2, %s22
      %p301 = scmp.lt.s32.totalorder %s300, 1
      %s302 = scalar_select %p301, %s300, 1
      %s303 = scalar_lea.vmem %s2, %s302
      %p304 = pneg %p112
      %p305 = pneg %p109
      %s306 = smul.u32 2, %s22
      %p307 = scmp.lt.s32.totalorder %s306, 1
      %s308 = scalar_select %p307, %s306, 1
      %s309 = scalar_lea.vmem %s3, %s308
      %p310 = pneg %p138
      %p311 = pneg %p135
      %s312 = smul.u32 2, %s22
      %p313 = scmp.lt.s32.totalorder %s21, 0
      %s314 = scalar_select %p313, %s21, 0
      %p315 = scmp.lt.s32.totalorder %s312, 1
      %s316 = scalar_select %p315, %s312, 1
      %s317 = smul.addr %s314, 2
      %s318 = sadd.s32 %s316, %s317
      %s319 = smul.addr %s318, 8
      %s320 = scalar_lea.vmem %s4, %s319
      %p321 = pneg %p166
      %p322 = pneg %p163
      %p323 = pneg %p194
      %p324 = pneg %p191
      %s325 = smul.u32 2, %s22
      %p326 = scmp.lt.s32.totalorder %s21, 0
      %s327 = scalar_select %p326, %s21, 0
      %p328 = scmp.lt.s32.totalorder %s325, 1
      %s329 = scalar_select %p328, %s325, 1
      %s330 = smul.addr %s327, 2
      %s331 = sadd.s32 %s329, %s330
      %s332 = smul.addr %s331, 8
      %s333 = scalar_lea.vmem %s5, %s332
      %s334 = smul.u32 6, %s23
      %p335 = scmp.lt.s32.totalorder %s21, 0
      %s336 = scalar_select %p335, %s21, 0
      %p337 = scmp.lt.s32.totalorder %s334, 17
      %s338 = scalar_select %p337, %s334, 17
      %s339 = smul.addr %s336, 18
      %s340 = sadd.s32 %s338, %s339
      %s341 = smul.addr %s340, 4
      %s342 = scalar_lea.vmem %s0, %s341
      %s343 = smul.u32 6, %s23
      %s344 = smul.u32 96, %s23
      %s345 = smul.u32 2, %s22
      %p346 = scmp.lt.s32.totalorder %s344, 287
      %s347 = scalar_select %p346, %s344, 287
      %p348 = scmp.lt.s32.totalorder %s345, 1
      %s349 = scalar_select %p348, %s345, 1
      %s350 = smul.addr %s347, 2
      %s351 = sadd.s32 %s349, %s350
      %s352 = smul.addr %s351, 4
      %s353 = scalar_lea.vmem %s1, %s352
      %s354 = smul.u32 96, %s23
      %s355 = smul.u32 2, %s22
      %s356 = smul.u32 2, %s22
      %p357 = scmp.lt.s32.totalorder %s356, 1
      %s358 = scalar_select %p357, %s356, 1
      %s359 = scalar_lea.vmem %s2, %s358
      %s360 = smul.u32 2, %s22
      %s361 = smul.u32 2, %s22
      %p362 = scmp.lt.s32.totalorder %s361, 1
      %s363 = scalar_select %p362, %s361, 1
      %s364 = scalar_lea.vmem %s3, %s363
      %s365 = smul.u32 2, %s22
      %s366 = smul.u32 2, %s22
      %p367 = scmp.lt.s32.totalorder %s21, 0
      %s368 = scalar_select %p367, %s21, 0
      %p369 = scmp.lt.s32.totalorder %s366, 1
      %s370 = scalar_select %p369, %s366, 1
      %s371 = smul.addr %s368, 2
      %s372 = sadd.s32 %s370, %s371
      %s373 = smul.addr %s372, 8
      %s374 = scalar_lea.vmem %s4, %s373
      %s375 = smul.u32 2, %s22
      %s376 = smul.u32 2, %s22
      %p377 = scmp.lt.s32.totalorder %s21, 0
      %s378 = scalar_select %p377, %s21, 0
      %p379 = scmp.lt.s32.totalorder %s376, 1
      %s380 = scalar_select %p379, %s376, 1
      %s381 = smul.addr %s378, 2
      %s382 = sadd.s32 %s380, %s381
      %s383 = smul.addr %s382, 8
      %s384 = scalar_lea.vmem %s5, %s383
      %s385 = smul.u32 2, %s22
      %v386 = vld [vmem:[%s342] sm:$0xff]
      %v387 = vld [vmem:[%s342 + $0x8] sm:$0xff]
      %v388 = vld [vmem:[%s342 + $0x10] sm:$0xff]
      %v389 = vld [vmem:[%s353] sm:$0xff]
      %v390 = vld [vmem:[%s353 + $0x8] sm:$0xff]
      %v391 = vld [vmem:[%s353 + $0x10] sm:$0xff]
      %v392 = vld [vmem:[%s353 + $0x18] sm:$0xff]
      %v393 = vld [vmem:[%s353 + $0x20] sm:$0xff]
      %v394 = vld [vmem:[%s353 + $0x28] sm:$0xff]
      %v395 = vld [vmem:[%s353 + $0x30] sm:$0xff]
      %v396 = vld [vmem:[%s353 + $0x38] sm:$0xff]
      %v397 = vld [vmem:[%s353 + $0x40] sm:$0xff]
      %v398 = vld [vmem:[%s353 + $0x48] sm:$0xff]
      %v399 = vld [vmem:[%s353 + $0x50] sm:$0xff]
      %v400 = vld [vmem:[%s353 + $0x58] sm:$0xff]
      %v401 = vld [vmem:[%s353 + $0x60] sm:$0xff]
      %v402 = vld [vmem:[%s353 + $0x68] sm:$0xff]
      %v403 = vld [vmem:[%s353 + $0x70] sm:$0xff]
      %v404 = vld [vmem:[%s353 + $0x78] sm:$0xff]
      %v405 = vld [vmem:[%s353 + $0x80] sm:$0xff]
      %v406 = vld [vmem:[%s353 + $0x88] sm:$0xff]
      %v407 = vld [vmem:[%s353 + $0x90] sm:$0xff]
      %v408 = vld [vmem:[%s353 + $0x98] sm:$0xff]
      %v409 = vld [vmem:[%s353 + $0xa0] sm:$0xff]
      %v410 = vld [vmem:[%s353 + $0xa8] sm:$0xff]
      %v411 = vld [vmem:[%s353 + $0xb0] sm:$0xff]
      %v412 = vld [vmem:[%s353 + $0xb8] sm:$0xff]
      %v413 = vld [vmem:[%s353 + $0xc0] sm:$0xff]
      %v414 = vld [vmem:[%s353 + $0xc8] sm:$0xff]
      %v415 = vld [vmem:[%s353 + $0xd0] sm:$0xff]
      %v416 = vld [vmem:[%s353 + $0xd8] sm:$0xff]
      %v417 = vld [vmem:[%s353 + $0xe0] sm:$0xff]
      %v418 = vld [vmem:[%s353 + $0xe8] sm:$0xff]
      %v419 = vld [vmem:[%s353 + $0xf0] sm:$0xff]
      %v420 = vld [vmem:[%s353 + $0xf8] sm:$0xff]
      %v421 = vld [vmem:[%s353 + $0x100] sm:$0xff]
      %v422 = vld [vmem:[%s353 + $0x108] sm:$0xff]
      %v423 = vld [vmem:[%s353 + $0x110] sm:$0xff]
      %v424 = vld [vmem:[%s353 + $0x118] sm:$0xff]
      %v425 = vld [vmem:[%s353 + $0x120] sm:$0xff]
      %v426 = vld [vmem:[%s353 + $0x128] sm:$0xff]
      %v427 = vld [vmem:[%s353 + $0x130] sm:$0xff]
      %v428 = vld [vmem:[%s353 + $0x138] sm:$0xff]
      %v429 = vld [vmem:[%s353 + $0x140] sm:$0xff]
      %v430 = vld [vmem:[%s353 + $0x148] sm:$0xff]
      %v431 = vld [vmem:[%s353 + $0x150] sm:$0xff]
      %v432 = vld [vmem:[%s353 + $0x158] sm:$0xff]
      %v433 = vld [vmem:[%s353 + $0x160] sm:$0xff]
      %v434 = vld [vmem:[%s353 + $0x168] sm:$0xff]
      %v435 = vld [vmem:[%s353 + $0x170] sm:$0xff]
      %v436 = vld [vmem:[%s353 + $0x178] sm:$0xff]
      %v437 = vld [vmem:[%s353 + $0x180] sm:$0xff]
      %v438 = vld [vmem:[%s353 + $0x188] sm:$0xff]
      %v439 = vld [vmem:[%s353 + $0x190] sm:$0xff]
      %v440 = vld [vmem:[%s353 + $0x198] sm:$0xff]
      %v441 = vld [vmem:[%s353 + $0x1a0] sm:$0xff]
      %v442 = vld [vmem:[%s353 + $0x1a8] sm:$0xff]
      %v443 = vld [vmem:[%s353 + $0x1b0] sm:$0xff]
      %v444 = vld [vmem:[%s353 + $0x1b8] sm:$0xff]
      %v445 = vld [vmem:[%s353 + $0x1c0] sm:$0xff]
      %v446 = vld [vmem:[%s353 + $0x1c8] sm:$0xff]
      %v447 = vld [vmem:[%s353 + $0x1d0] sm:$0xff]
      %v448 = vld [vmem:[%s353 + $0x1d8] sm:$0xff]
      %v449 = vld [vmem:[%s353 + $0x1e0] sm:$0xff]
      %v450 = vld [vmem:[%s353 + $0x1e8] sm:$0xff]
      %v451 = vld [vmem:[%s353 + $0x1f0] sm:$0xff]
      %v452 = vld [vmem:[%s353 + $0x1f8] sm:$0xff]
      %v453 = vld [vmem:[%s353 + $0x200] sm:$0xff]
      %v454 = vld [vmem:[%s353 + $0x208] sm:$0xff]
      %v455 = vld [vmem:[%s353 + $0x210] sm:$0xff]
      %v456 = vld [vmem:[%s353 + $0x218] sm:$0xff]
      %v457 = vld [vmem:[%s353 + $0x220] sm:$0xff]
      %v458 = vld [vmem:[%s353 + $0x228] sm:$0xff]
      %v459 = vld [vmem:[%s353 + $0x230] sm:$0xff]
      %v460 = vld [vmem:[%s353 + $0x238] sm:$0xff]
      %v461 = vld [vmem:[%s353 + $0x240] sm:$0xff]
      %v462 = vld [vmem:[%s353 + $0x248] sm:$0xff]
      %v463 = vld [vmem:[%s353 + $0x250] sm:$0xff]
      %v464 = vld [vmem:[%s353 + $0x258] sm:$0xff]
      %v465 = vld [vmem:[%s353 + $0x260] sm:$0xff]
      %v466 = vld [vmem:[%s353 + $0x268] sm:$0xff]
      %v467 = vld [vmem:[%s353 + $0x270] sm:$0xff]
      %v468 = vld [vmem:[%s353 + $0x278] sm:$0xff]
      %v469 = vld [vmem:[%s353 + $0x280] sm:$0xff]
      %v470 = vld [vmem:[%s353 + $0x288] sm:$0xff]
      %v471 = vld [vmem:[%s353 + $0x290] sm:$0xff]
      %v472 = vld [vmem:[%s353 + $0x298] sm:$0xff]
      %v473 = vld [vmem:[%s353 + $0x2a0] sm:$0xff]
      %v474 = vld [vmem:[%s353 + $0x2a8] sm:$0xff]
      %v475 = vld [vmem:[%s353 + $0x2b0] sm:$0xff]
      %v476 = vld [vmem:[%s353 + $0x2b8] sm:$0xff]
      %v477 = vld [vmem:[%s353 + $0x2c0] sm:$0xff]
      %v478 = vld [vmem:[%s353 + $0x2c8] sm:$0xff]
      %v479 = vld [vmem:[%s353 + $0x2d0] sm:$0xff]
      %v480 = vld [vmem:[%s353 + $0x2d8] sm:$0xff]
      %v481 = vld [vmem:[%s353 + $0x2e0] sm:$0xff]
      %v482 = vld [vmem:[%s353 + $0x2e8] sm:$0xff]
      %v483 = vld [vmem:[%s353 + $0x2f0] sm:$0xff]
      %v484 = vld [vmem:[%s353 + $0x2f8] sm:$0xff]
      %v488 = vunpack.c.l.b16 %v386
      %v489 = vunpack.c.h.b16 %v386
      %v490 = vunpack.c.l.b16 %v387
      %v491 = vunpack.c.h.b16 %v387
      %v492 = vunpack.c.l.b16 %v388
      %v493 = vunpack.c.h.b16 %v388
      %v494 = vpack.c.b16 %v488, %v488
      %v495 = vpack.c.b16 %v489, %v489
      %v496 = vpack.c.b16 %v490, %v490
      %v497 = vpack.c.b16 %v491, %v491
      %v498 = vpack.c.b16 %v492, %v492
      %v499 = vpack.c.b16 %v493, %v493
      %v602 = vunpack.c.l.b16 %v389
      %v603 = vunpack.c.h.b16 %v389
      %v604 = vunpack.c.l.b16 %v390
      %v605 = vunpack.c.h.b16 %v390
      %v606 = vunpack.c.l.b16 %v391
      %v607 = vunpack.c.h.b16 %v391
      %v608 = vunpack.c.l.b16 %v392
      %v609 = vunpack.c.h.b16 %v392
      %v610 = vunpack.c.l.b16 %v393
      %v611 = vunpack.c.h.b16 %v393
      %v612 = vunpack.c.l.b16 %v394
      %v613 = vunpack.c.h.b16 %v394
      %v614 = vunpack.c.l.b16 %v395
      %v615 = vunpack.c.h.b16 %v395
      %v616 = vunpack.c.l.b16 %v396
      %v617 = vunpack.c.h.b16 %v396
      %v618 = vunpack.c.l.b16 %v397
      %v619 = vunpack.c.h.b16 %v397
      %v620 = vunpack.c.l.b16 %v398
      %v621 = vunpack.c.h.b16 %v398
      %v622 = vunpack.c.l.b16 %v399
      %v623 = vunpack.c.h.b16 %v399
      %v624 = vunpack.c.l.b16 %v400
      %v625 = vunpack.c.h.b16 %v400
      %v626 = vunpack.c.l.b16 %v401
      %v627 = vunpack.c.h.b16 %v401
      %v628 = vunpack.c.l.b16 %v402
      %v629 = vunpack.c.h.b16 %v402
      %v630 = vunpack.c.l.b16 %v403
      %v631 = vunpack.c.h.b16 %v403
      %v632 = vunpack.c.l.b16 %v404
      %v633 = vunpack.c.h.b16 %v404
      %v634 = vunpack.c.l.b16 %v405
      %v635 = vunpack.c.h.b16 %v405
      %v636 = vunpack.c.l.b16 %v406
      %v637 = vunpack.c.h.b16 %v406
      %v638 = vunpack.c.l.b16 %v407
      %v639 = vunpack.c.h.b16 %v407
      %v640 = vunpack.c.l.b16 %v408
      %v641 = vunpack.c.h.b16 %v408
      %v642 = vunpack.c.l.b16 %v409
      %v643 = vunpack.c.h.b16 %v409
      %v644 = vunpack.c.l.b16 %v410
      %v645 = vunpack.c.h.b16 %v410
      %v646 = vunpack.c.l.b16 %v411
      %v647 = vunpack.c.h.b16 %v411
      %v648 = vunpack.c.l.b16 %v412
      %v649 = vunpack.c.h.b16 %v412
      %v650 = vunpack.c.l.b16 %v413
      %v651 = vunpack.c.h.b16 %v413
      %v652 = vunpack.c.l.b16 %v414
      %v653 = vunpack.c.h.b16 %v414
      %v654 = vunpack.c.l.b16 %v415
      %v655 = vunpack.c.h.b16 %v415
      %v656 = vunpack.c.l.b16 %v416
      %v657 = vunpack.c.h.b16 %v416
      %v658 = vunpack.c.l.b16 %v417
      %v659 = vunpack.c.h.b16 %v417
      %v660 = vunpack.c.l.b16 %v418
      %v661 = vunpack.c.h.b16 %v418
      %v662 = vunpack.c.l.b16 %v419
      %v663 = vunpack.c.h.b16 %v419
      %v664 = vunpack.c.l.b16 %v420
      %v665 = vunpack.c.h.b16 %v420
      %v666 = vunpack.c.l.b16 %v421
      %v667 = vunpack.c.h.b16 %v421
      %v668 = vunpack.c.l.b16 %v422
      %v669 = vunpack.c.h.b16 %v422
      %v670 = vunpack.c.l.b16 %v423
      %v671 = vunpack.c.h.b16 %v423
      %v672 = vunpack.c.l.b16 %v424
      %v673 = vunpack.c.h.b16 %v424
      %v674 = vunpack.c.l.b16 %v425
      %v675 = vunpack.c.h.b16 %v425
      %v676 = vunpack.c.l.b16 %v426
      %v677 = vunpack.c.h.b16 %v426
      %v678 = vunpack.c.l.b16 %v427
      %v679 = vunpack.c.h.b16 %v427
      %v680 = vunpack.c.l.b16 %v428
      %v681 = vunpack.c.h.b16 %v428
      %v682 = vunpack.c.l.b16 %v429
      %v683 = vunpack.c.h.b16 %v429
      %v684 = vunpack.c.l.b16 %v430
      %v685 = vunpack.c.h.b16 %v430
      %v686 = vunpack.c.l.b16 %v431
      %v687 = vunpack.c.h.b16 %v431
      %v688 = vunpack.c.l.b16 %v432
      %v689 = vunpack.c.h.b16 %v432
      %v690 = vunpack.c.l.b16 %v433
      %v691 = vunpack.c.h.b16 %v433
      %v692 = vunpack.c.l.b16 %v434
      %v693 = vunpack.c.h.b16 %v434
      %v694 = vunpack.c.l.b16 %v435
      %v695 = vunpack.c.h.b16 %v435
      %v696 = vunpack.c.l.b16 %v436
      %v697 = vunpack.c.h.b16 %v436
      %v698 = vunpack.c.l.b16 %v437
      %v699 = vunpack.c.h.b16 %v437
      %v700 = vunpack.c.l.b16 %v438
      %v701 = vunpack.c.h.b16 %v438
      %v702 = vunpack.c.l.b16 %v439
      %v703 = vunpack.c.h.b16 %v439
      %v704 = vunpack.c.l.b16 %v440
      %v705 = vunpack.c.h.b16 %v440
      %v706 = vunpack.c.l.b16 %v441
      %v707 = vunpack.c.h.b16 %v441
      %v708 = vunpack.c.l.b16 %v442
      %v709 = vunpack.c.h.b16 %v442
      %v710 = vunpack.c.l.b16 %v443
      %v711 = vunpack.c.h.b16 %v443
      %v712 = vunpack.c.l.b16 %v444
      %v713 = vunpack.c.h.b16 %v444
      %v714 = vunpack.c.l.b16 %v445
      %v715 = vunpack.c.h.b16 %v445
      %v716 = vunpack.c.l.b16 %v446
      %v717 = vunpack.c.h.b16 %v446
      %v718 = vunpack.c.l.b16 %v447
      %v719 = vunpack.c.h.b16 %v447
      %v720 = vunpack.c.l.b16 %v448
      %v721 = vunpack.c.h.b16 %v448
      %v722 = vunpack.c.l.b16 %v449
      %v723 = vunpack.c.h.b16 %v449
      %v724 = vunpack.c.l.b16 %v450
      %v725 = vunpack.c.h.b16 %v450
      %v726 = vunpack.c.l.b16 %v451
      %v727 = vunpack.c.h.b16 %v451
      %v728 = vunpack.c.l.b16 %v452
      %v729 = vunpack.c.h.b16 %v452
      %v730 = vunpack.c.l.b16 %v453
      %v731 = vunpack.c.h.b16 %v453
      %v732 = vunpack.c.l.b16 %v454
      %v733 = vunpack.c.h.b16 %v454
      %v734 = vunpack.c.l.b16 %v455
      %v735 = vunpack.c.h.b16 %v455
      %v736 = vunpack.c.l.b16 %v456
      %v737 = vunpack.c.h.b16 %v456
      %v738 = vunpack.c.l.b16 %v457
      %v739 = vunpack.c.h.b16 %v457
      %v740 = vunpack.c.l.b16 %v458
      %v741 = vunpack.c.h.b16 %v458
      %v742 = vunpack.c.l.b16 %v459
      %v743 = vunpack.c.h.b16 %v459
      %v744 = vunpack.c.l.b16 %v460
      %v745 = vunpack.c.h.b16 %v460
      %v746 = vunpack.c.l.b16 %v461
      %v747 = vunpack.c.h.b16 %v461
      %v748 = vunpack.c.l.b16 %v462
      %v749 = vunpack.c.h.b16 %v462
      %v750 = vunpack.c.l.b16 %v463
      %v751 = vunpack.c.h.b16 %v463
      %v752 = vunpack.c.l.b16 %v464
      %v753 = vunpack.c.h.b16 %v464
      %v754 = vunpack.c.l.b16 %v465
      %v755 = vunpack.c.h.b16 %v465
      %v756 = vunpack.c.l.b16 %v466
      %v757 = vunpack.c.h.b16 %v466
      %v758 = vunpack.c.l.b16 %v467
      %v759 = vunpack.c.h.b16 %v467
      %v760 = vunpack.c.l.b16 %v468
      %v761 = vunpack.c.h.b16 %v468
      %v762 = vunpack.c.l.b16 %v469
      %v763 = vunpack.c.h.b16 %v469
      %v764 = vunpack.c.l.b16 %v470
      %v765 = vunpack.c.h.b16 %v470
      %v766 = vunpack.c.l.b16 %v471
      %v767 = vunpack.c.h.b16 %v471
      %v768 = vunpack.c.l.b16 %v472
      %v769 = vunpack.c.h.b16 %v472
      %v770 = vunpack.c.l.b16 %v473
      %v771 = vunpack.c.h.b16 %v473
      %v772 = vunpack.c.l.b16 %v474
      %v773 = vunpack.c.h.b16 %v474
      %v774 = vunpack.c.l.b16 %v475
      %v775 = vunpack.c.h.b16 %v475
      %v776 = vunpack.c.l.b16 %v476
      %v777 = vunpack.c.h.b16 %v476
      %v778 = vunpack.c.l.b16 %v477
      %v779 = vunpack.c.h.b16 %v477
      %v780 = vunpack.c.l.b16 %v478
      %v781 = vunpack.c.h.b16 %v478
      %v782 = vunpack.c.l.b16 %v479
      %v783 = vunpack.c.h.b16 %v479
      %v784 = vunpack.c.l.b16 %v480
      %v785 = vunpack.c.h.b16 %v480
      %v786 = vunpack.c.l.b16 %v481
      %v787 = vunpack.c.h.b16 %v481
      %v788 = vunpack.c.l.b16 %v482
      %v789 = vunpack.c.h.b16 %v482
      %v790 = vunpack.c.l.b16 %v483
      %v791 = vunpack.c.h.b16 %v483
      %v792 = vunpack.c.l.b16 %v484
      %v793 = vunpack.c.h.b16 %v484
      %v794 = vpack.c.b16 %v604, %v602
      %v795 = vpack.c.b16 %v605, %v603
      %v796 = vpack.c.b16 %v608, %v606
      %v797 = vpack.c.b16 %v609, %v607
      %v798 = vpack.c.b16 %v612, %v610
      %v799 = vpack.c.b16 %v613, %v611
      %v800 = vpack.c.b16 %v616, %v614
      %v801 = vpack.c.b16 %v617, %v615
      %v802 = vpack.c.b16 %v620, %v618
      %v803 = vpack.c.b16 %v621, %v619
      %v804 = vpack.c.b16 %v624, %v622
      %v805 = vpack.c.b16 %v625, %v623
      %v806 = vpack.c.b16 %v628, %v626
      %v807 = vpack.c.b16 %v629, %v627
      %v808 = vpack.c.b16 %v632, %v630
      %v809 = vpack.c.b16 %v633, %v631
      %v810 = vpack.c.b16 %v636, %v634
      %v811 = vpack.c.b16 %v637, %v635
      %v812 = vpack.c.b16 %v640, %v638
      %v813 = vpack.c.b16 %v641, %v639
      %v814 = vpack.c.b16 %v644, %v642
      %v815 = vpack.c.b16 %v645, %v643
      %v816 = vpack.c.b16 %v648, %v646
      %v817 = vpack.c.b16 %v649, %v647
      %v818 = vpack.c.b16 %v652, %v650
      %v819 = vpack.c.b16 %v653, %v651
      %v820 = vpack.c.b16 %v656, %v654
      %v821 = vpack.c.b16 %v657, %v655
      %v822 = vpack.c.b16 %v660, %v658
      %v823 = vpack.c.b16 %v661, %v659
      %v824 = vpack.c.b16 %v664, %v662
      %v825 = vpack.c.b16 %v665, %v663
      %v826 = vpack.c.b16 %v668, %v666
      %v827 = vpack.c.b16 %v669, %v667
      %v828 = vpack.c.b16 %v672, %v670
      %v829 = vpack.c.b16 %v673, %v671
      %v830 = vpack.c.b16 %v676, %v674
      %v831 = vpack.c.b16 %v677, %v675
      %v832 = vpack.c.b16 %v680, %v678
      %v833 = vpack.c.b16 %v681, %v679
      %v834 = vpack.c.b16 %v684, %v682
      %v835 = vpack.c.b16 %v685, %v683
      %v836 = vpack.c.b16 %v688, %v686
      %v837 = vpack.c.b16 %v689, %v687
      %v838 = vpack.c.b16 %v692, %v690
      %v839 = vpack.c.b16 %v693, %v691
      %v840 = vpack.c.b16 %v696, %v694
      %v841 = vpack.c.b16 %v697, %v695
      %v842 = vpack.c.b16 %v700, %v698
      %v843 = vpack.c.b16 %v701, %v699
      %v844 = vpack.c.b16 %v704, %v702
      %v845 = vpack.c.b16 %v705, %v703
      %v846 = vpack.c.b16 %v708, %v706
      %v847 = vpack.c.b16 %v709, %v707
      %v848 = vpack.c.b16 %v712, %v710
      %v849 = vpack.c.b16 %v713, %v711
      %v850 = vpack.c.b16 %v716, %v714
      %v851 = vpack.c.b16 %v717, %v715
      %v852 = vpack.c.b16 %v720, %v718
      %v853 = vpack.c.b16 %v721, %v719
      %v854 = vpack.c.b16 %v724, %v722
      %v855 = vpack.c.b16 %v725, %v723
      %v856 = vpack.c.b16 %v728, %v726
      %v857 = vpack.c.b16 %v729, %v727
      %v858 = vpack.c.b16 %v732, %v730
      %v859 = vpack.c.b16 %v733, %v731
      %v860 = vpack.c.b16 %v736, %v734
      %v861 = vpack.c.b16 %v737, %v735
      %v862 = vpack.c.b16 %v740, %v738
      %v863 = vpack.c.b16 %v741, %v739
      %v864 = vpack.c.b16 %v744, %v742
      %v865 = vpack.c.b16 %v745, %v743
      %v866 = vpack.c.b16 %v748, %v746
      %v867 = vpack.c.b16 %v749, %v747
      %v868 = vpack.c.b16 %v752, %v750
      %v869 = vpack.c.b16 %v753, %v751
      %v870 = vpack.c.b16 %v756, %v754
      %v871 = vpack.c.b16 %v757, %v755
      %v872 = vpack.c.b16 %v760, %v758
      %v873 = vpack.c.b16 %v761, %v759
      %v874 = vpack.c.b16 %v764, %v762
      %v875 = vpack.c.b16 %v765, %v763
      %v876 = vpack.c.b16 %v768, %v766
      %v877 = vpack.c.b16 %v769, %v767
      %v878 = vpack.c.b16 %v772, %v770
      %v879 = vpack.c.b16 %v773, %v771
      %v880 = vpack.c.b16 %v776, %v774
      %v881 = vpack.c.b16 %v777, %v775
      %v882 = vpack.c.b16 %v780, %v778
      %v883 = vpack.c.b16 %v781, %v779
      %v884 = vpack.c.b16 %v784, %v782
      %v885 = vpack.c.b16 %v785, %v783
      %v886 = vpack.c.b16 %v788, %v786
      %v887 = vpack.c.b16 %v789, %v787
      %v888 = vpack.c.b16 %v792, %v790
      %v889 = vpack.c.b16 %v793, %v791
      %986 = vmatpush.bf16.msra.mxu0 %v808
      %987 = vmatpush.bf16.msra.mxu0 %v806
      %988 = vmatpush.bf16.msra.mxu0 %v804
      %989 = vmatpush.bf16.msra.mxu0 %v802
      %990 = vmatpush.bf16.msra.mxu0 %v800
      %991 = vmatpush.bf16.msra.mxu0 %v798
      %992 = vmatpush.bf16.msra.mxu0 %v796
      %993 = vmatpush.bf16.msra.mxu0 %v794
      %994 = vmatmul.bf16.gmra.mxu0 %v494
      %v995 = vpop.f32.mrf.mxu0
      %v996 = vadd.f32 0.0, %v995
      %v997 = vpop.f32.mrf.mxu0
      %998 = vdwg.mxu0
      %999 = vmatpush.bf16.msra.mxu0 %v824
      %1000 = vmatpush.bf16.msra.mxu0 %v822
      %1001 = vmatpush.bf16.msra.mxu0 %v820
      %1002 = vmatpush.bf16.msra.mxu0 %v818
      %1003 = vmatpush.bf16.msra.mxu0 %v816
      %1004 = vmatpush.bf16.msra.mxu0 %v814
      %1005 = vmatpush.bf16.msra.mxu0 %v812
      %1006 = vmatpush.bf16.msra.mxu0 %v810
      %1007 = vmatmul.bf16.gmra.mxu0 %v495
      %v1008 = vpop.f32.mrf.mxu0
      %v1009 = vadd.f32 %v996, %v1008
      %v1010 = vpop.f32.mrf.mxu0
      %1011 = vdwg.mxu0
      %1012 = vmatpush.bf16.msra.mxu0 %v840
      %1013 = vmatpush.bf16.msra.mxu0 %v838
      %1014 = vmatpush.bf16.msra.mxu0 %v836
      %1015 = vmatpush.bf16.msra.mxu0 %v834
      %1016 = vmatpush.bf16.msra.mxu0 %v832
      %1017 = vmatpush.bf16.msra.mxu0 %v830
      %1018 = vmatpush.bf16.msra.mxu0 %v828
      %1019 = vmatpush.bf16.msra.mxu0 %v826
      %1020 = vmatmul.bf16.gmra.mxu0 %v496
      %v1021 = vpop.f32.mrf.mxu0
      %v1022 = vadd.f32 %v1009, %v1021
      %v1023 = vpop.f32.mrf.mxu0
      %1024 = vdwg.mxu0
      %1025 = vmatpush.bf16.msra.mxu0 %v856
      %1026 = vmatpush.bf16.msra.mxu0 %v854
      %1027 = vmatpush.bf16.msra.mxu0 %v852
      %1028 = vmatpush.bf16.msra.mxu0 %v850
      %1029 = vmatpush.bf16.msra.mxu0 %v848
      %1030 = vmatpush.bf16.msra.mxu0 %v846
      %1031 = vmatpush.bf16.msra.mxu0 %v844
      %1032 = vmatpush.bf16.msra.mxu0 %v842
      %1033 = vmatmul.bf16.gmra.mxu0 %v497
      %v1034 = vpop.f32.mrf.mxu0
      %v1035 = vadd.f32 %v1022, %v1034
      %v1036 = vpop.f32.mrf.mxu0
      %1037 = vdwg.mxu0
      %1038 = vmatpush.bf16.msra.mxu0 %v872
      %1039 = vmatpush.bf16.msra.mxu0 %v870
      %1040 = vmatpush.bf16.msra.mxu0 %v868
      %1041 = vmatpush.bf16.msra.mxu0 %v866
      %1042 = vmatpush.bf16.msra.mxu0 %v864
      %1043 = vmatpush.bf16.msra.mxu0 %v862
      %1044 = vmatpush.bf16.msra.mxu0 %v860
      %1045 = vmatpush.bf16.msra.mxu0 %v858
      %1046 = vmatmul.bf16.gmra.mxu0 %v498
      %v1047 = vpop.f32.mrf.mxu0
      %v1048 = vadd.f32 %v1035, %v1047
      %v1049 = vpop.f32.mrf.mxu0
      %1050 = vdwg.mxu0
      %1051 = vmatpush.bf16.msra.mxu0 %v888
      %1052 = vmatpush.bf16.msra.mxu0 %v886
      %1053 = vmatpush.bf16.msra.mxu0 %v884
      %1054 = vmatpush.bf16.msra.mxu0 %v882
      %1055 = vmatpush.bf16.msra.mxu0 %v880
      %1056 = vmatpush.bf16.msra.mxu0 %v878
      %1057 = vmatpush.bf16.msra.mxu0 %v876
      %1058 = vmatpush.bf16.msra.mxu0 %v874
      %1059 = vmatmul.bf16.gmra.mxu0 %v499
      %v1060 = vpop.f32.mrf.mxu0
      %v1061 = vadd.f32 %v1048, %v1060
      %v1062 = vpop.f32.mrf.mxu0
      %1063 = vdwg.mxu0
      %1064 = vmatpush.bf16.msra.mxu0 %v809
      %1065 = vmatpush.bf16.msra.mxu0 %v807
      %1066 = vmatpush.bf16.msra.mxu0 %v805
      %1067 = vmatpush.bf16.msra.mxu0 %v803
      %1068 = vmatpush.bf16.msra.mxu0 %v801
      %1069 = vmatpush.bf16.msra.mxu0 %v799
      %1070 = vmatpush.bf16.msra.mxu0 %v797
      %1071 = vmatpush.bf16.msra.mxu0 %v795
      %1072 = vmatmul.bf16.gmra.mxu0 %v494
      %v1073 = vpop.f32.mrf.mxu0
      %v1074 = vadd.f32 0.0, %v1073
      %v1075 = vpop.f32.mrf.mxu0
      %1076 = vdwg.mxu0
      %1077 = vmatpush.bf16.msra.mxu0 %v825
      %1078 = vmatpush.bf16.msra.mxu0 %v823
      %1079 = vmatpush.bf16.msra.mxu0 %v821
      %1080 = vmatpush.bf16.msra.mxu0 %v819
      %1081 = vmatpush.bf16.msra.mxu0 %v817
      %1082 = vmatpush.bf16.msra.mxu0 %v815
      %1083 = vmatpush.bf16.msra.mxu0 %v813
      %1084 = vmatpush.bf16.msra.mxu0 %v811
      %1085 = vmatmul.bf16.gmra.mxu0 %v495
      %v1086 = vpop.f32.mrf.mxu0
      %v1087 = vadd.f32 %v1074, %v1086
      %v1088 = vpop.f32.mrf.mxu0
      %1089 = vdwg.mxu0
      %1090 = vmatpush.bf16.msra.mxu0 %v841
      %1091 = vmatpush.bf16.msra.mxu0 %v839
      %1092 = vmatpush.bf16.msra.mxu0 %v837
      %1093 = vmatpush.bf16.msra.mxu0 %v835
      %1094 = vmatpush.bf16.msra.mxu0 %v833
      %1095 = vmatpush.bf16.msra.mxu0 %v831
      %1096 = vmatpush.bf16.msra.mxu0 %v829
      %1097 = vmatpush.bf16.msra.mxu0 %v827
      %1098 = vmatmul.bf16.gmra.mxu0 %v496
      %v1099 = vpop.f32.mrf.mxu0
      %v1100 = vadd.f32 %v1087, %v1099
      %v1101 = vpop.f32.mrf.mxu0
      %1102 = vdwg.mxu0
      %1103 = vmatpush.bf16.msra.mxu0 %v857
      %1104 = vmatpush.bf16.msra.mxu0 %v855
      %1105 = vmatpush.bf16.msra.mxu0 %v853
      %1106 = vmatpush.bf16.msra.mxu0 %v851
      %1107 = vmatpush.bf16.msra.mxu0 %v849
      %1108 = vmatpush.bf16.msra.mxu0 %v847
      %1109 = vmatpush.bf16.msra.mxu0 %v845
      %1110 = vmatpush.bf16.msra.mxu0 %v843
      %1111 = vmatmul.bf16.gmra.mxu0 %v497
      %v1112 = vpop.f32.mrf.mxu0
      %v1113 = vadd.f32 %v1100, %v1112
      %v1114 = vpop.f32.mrf.mxu0
      %1115 = vdwg.mxu0
      %1116 = vmatpush.bf16.msra.mxu0 %v873
      %1117 = vmatpush.bf16.msra.mxu0 %v871
      %1118 = vmatpush.bf16.msra.mxu0 %v869
      %1119 = vmatpush.bf16.msra.mxu0 %v867
      %1120 = vmatpush.bf16.msra.mxu0 %v865
      %1121 = vmatpush.bf16.msra.mxu0 %v863
      %1122 = vmatpush.bf16.msra.mxu0 %v861
      %1123 = vmatpush.bf16.msra.mxu0 %v859
      %1124 = vmatmul.bf16.gmra.mxu0 %v498
      %v1125 = vpop.f32.mrf.mxu0
      %v1126 = vadd.f32 %v1113, %v1125
      %v1127 = vpop.f32.mrf.mxu0
      %1128 = vdwg.mxu0
      %1129 = vmatpush.bf16.msra.mxu0 %v889
      %1130 = vmatpush.bf16.msra.mxu0 %v887
      %1131 = vmatpush.bf16.msra.mxu0 %v885
      %1132 = vmatpush.bf16.msra.mxu0 %v883
      %1133 = vmatpush.bf16.msra.mxu0 %v881
      %1134 = vmatpush.bf16.msra.mxu0 %v879
      %1135 = vmatpush.bf16.msra.mxu0 %v877
      %1136 = vmatpush.bf16.msra.mxu0 %v875
      %1137 = vmatmul.bf16.gmra.mxu0 %v499
      %v1138 = vpop.f32.mrf.mxu0
      %v1139 = vadd.f32 %v1126, %v1138
      %v1140 = vpop.f32.mrf.mxu0
      %1141 = vdwg.mxu0
      %p1142 = scmp.eq.s32.totalorder %s23, 0
      // Predicated region
      $region41: #{resnet_forward.22} parent=39 // pred_check
        %p1143 = pneg %p1142
      $region42: #{resnet_forward.22} parent=39 // pred_check_branch
        %1145 = sbr.rel (%p1143) target = $region44
      $region43: #{resnet_forward.22} parent=39 // pred_region
        %1146 = vst [vmem:[%s384] sm:$0xff] %v1061
        %1147 = vst [vmem:[%s384 + $0x8] sm:$0xff] %v1139
      $region44: #{resnet_forward.22} parent=39 // pred_fallthru
        _
      %p1148 = scmp.gt.s32.totalorder %s23, 0
      %p1149 = scmp.lt.s32.totalorder %s23, 2
      %p1150 = pnand %p1148, %p1149
      %p1151 = pneg %p1150
      // Predicated region
      $region45: #{resnet_forward.22} parent=39 // pred_check
        _
      $region46: #{resnet_forward.22} parent=39 // pred_check_branch
        %1153 = sbr.rel (%p1150) target = $region48
      $region47: #{resnet_forward.22} parent=39 // pred_region
        %v1154 = vld [vmem:[%s384] sm:$0xff]
        %v1155 = vld [vmem:[%s384 + $0x8] sm:$0xff]
        %v1156 = vadd.f32 %v1154, %v1061
        %v1157 = vadd.f32 %v1155, %v1139
        %1158 = vst [vmem:[%s384] sm:$0xff] %v1156
        %1159 = vst [vmem:[%s384 + $0x8] sm:$0xff] %v1157
      $region48: #{resnet_forward.22} parent=39 // pred_fallthru
        _
      %p1160 = scmp.eq.s32.totalorder %s23, 2
      // Predicated region
      $region49: #{resnet_forward.22} parent=39 // pred_check
        %p1161 = pneg %p1160
      $region50: #{resnet_forward.22} parent=39 // pred_check_branch
        %1163 = sbr.rel (%p1161) target = $region52
      $region51: #{resnet_forward.22} parent=39 // pred_region
        %v1164 = vld [vmem:[%s384] sm:$0xff]
        %v1165 = vld [vmem:[%s384 + $0x8] sm:$0xff]
        %v1166 = vadd.f32 %v1164, %v1061
        %v1167 = vadd.f32 %v1165, %v1139
        %v1168 = vld [vmem:[%s359] sm:$0x3]
        %v1170 = vperm.slane %v1168, 0
        %v1171 = vperm.slane %v1168, 1
        %v1174 = vmul.f32 %v1166, %v1170
        %v1175 = vmul.f32 %v1167, %v1171
        %v1176 = vld [vmem:[%s364] sm:$0x3]
        %v1178 = vperm.slane %v1176, 0
        %v1179 = vperm.slane %v1176, 1
        %v1182 = vadd.f32 %v1174, %v1178
        %v1183 = vadd.f32 %v1175, %v1179
        %v1184 = vld [vmem:[%s374] sm:$0xff]
        %v1185 = vld [vmem:[%s374 + $0x8] sm:$0xff]
        %v1186 = vadd.f32 %v1182, %v1184
        %v1187 = vadd.f32 %v1183, %v1185
        %v1188 = vmax.f32 %v1186, 0.0
        %v1189 = vmax.f32 %v1187, 0.0
        %1190 = vst [vmem:[%s384] sm:$0xff] %v1188
        %1191 = vst [vmem:[%s384 + $0x8] sm:$0xff] %v1189
      $region52: #{resnet_forward.22} parent=39 // pred_fallthru
        _
      %s1192 = smul.u32 2, %s22
      %p1193 = scmp.lt.s32.totalorder %s21, 0
      %s1194 = scalar_select %p1193, %s21, 0
      %p1195 = scmp.lt.s32.totalorder %s1192, 1
      %s1196 = scalar_select %p1195, %s1192, 1
      %s1197 = smul.addr %s1194, 2
      %s1198 = sadd.s32 %s1196, %s1197
      %s1199 = smul.addr %s1198, 8
      %s1200 = scalar_lea.vmem %s5, %s1199
      // Predicated region
      $region53: #{resnet_forward.22} parent=39 // pred_check
        %p1201 = pneg %p191
      $region54: #{resnet_forward.22} parent=39 // pred_check_branch
        %1203 = sbr.rel (%p1201) target = $region56
      $region55: #{resnet_forward.22} parent=39 // pred_region
        %s1204 = smul.u32 2, %s22
      $region56: #{resnet_forward.22} parent=39 // pred_fallthru
        _
      // Predicated region
      $region57: #{resnet_forward.22} parent=39 // pred_check
        %p1205 = pneg %p191
      $region58: #{resnet_forward.22} parent=39 // pred_check_branch
        %1207 = sbr.rel (%p1205) target = $region60
      $region59: #{resnet_forward.22} parent=39 // pred_region
        %s1208 = smul.u32 2, %s22
        %p1209 = scmp.lt.s32.totalorder %s21, 0
        %s1210 = scalar_select %p1209, %s21, 0
        %p1211 = scmp.lt.s32.totalorder %s1208, 1
        %s1212 = scalar_select %p1211, %s1208, 1
        %s1213 = smul.addr %s1210, 2
        %s1214 = sadd.s32 %s1212, %s1213
        %s1215 = smul.addr %s1214, 8
        %s1216 = scalar_lea.vmem %s5, %s1215
      $region60: #{resnet_forward.22} parent=39 // pred_fallthru
        _
    $region40: #{resnet_forward.22} parent=5 // pred_fallthru
      _
    %p1217 = scmp.le.s32.totalorder 2, %s11
    // Predicated region
    $region61: #{resnet_forward.22} parent=5 // pred_check
      %p1218 = pneg %p1217
    $region62: #{resnet_forward.22} parent=5 // pred_check_branch
      %1220 = sbr.rel (%p1218) target = $region64
    $region63: #{resnet_forward.22} parent=5 // pred_region
      %s1221 = ssub.s32 %s11, 2
    $region64: #{resnet_forward.22} parent=5 // pred_fallthru
      _
  $region6: #{resnet_forward.22} parent=0 // loop_footer
    %s15 = sadd.s32 1, %s11
  $region7: #{resnet_forward.22} parent=0 // loop_footer_branch
    %10 = sbr.rel target = $region3
  $region8: #{resnet_forward.22} parent=0 // loop_exit
    _

// kernel: resnet_forward.24
$region0: #{resnet_forward.24}
  #allocation0 [shape = 'u32[]', space=smem, size = 0x4, offset = 0x4, fixed_abs, tag = 'smem constant byte address 0x4 - core index']
  #allocation1 [shape = 'u32[72,128]{1,0:T(1,128)}', space=vmem, size = 0x9000, scoped, tag = 'internal scratch']
  %s0 = inlined_call_operand.vmem [shape: bf16[2,256], index: 0, kind: input, shape index: {}]
  %s1 = inlined_call_operand.vmem [shape: bf16[256,512], index: 1, kind: input, shape index: {}]
  %s2 = inlined_call_operand.vmem [shape: f32[1,512], index: 2, kind: input, shape index: {}]
  %s3 = inlined_call_operand.vmem [shape: f32[1,512], index: 3, kind: input, shape index: {}]
  %s4 = inlined_call_operand.vmem [shape: f32[2,512], index: 4, kind: output, shape index: {}]
  %s5 = sld [smem:[#allocation0]]
  $region87: #{resnet_forward.24} parent=0
    _
  %s7 = ssub.s32 1, %s5
  %s8 = scalar_select 0, %s7, %s5
  $region1: #{resnet_forward.24} parent=0
    #allocation2 [shape = 'u8[262144]{0}', space=vmem, size = 0x40000, scoped, tag = 'input window, operand 1']
    loop: start=0, step=1, limit=4
    $region2: #{resnet_forward.24} parent=1 // loop_pre_header
      _
    $region3: #{resnet_forward.24} parent=1 // loop_header
      %s10 = sphi 0, %s14
      %p11 = scmp.ge.s32.totalorder %s10, 4
      %s17 = sphi 0, %s36
      %s18 = sphi 0, %s32
      %s19 = sphi 0, %s28
      %s20 = sphi 0, %s17
      %s21 = sphi 0, %s18
      %s22 = sphi 0, %s19
      %s23 = sphi 0, %s20
      %s24 = sphi 0, %s21
      %s25 = sphi 0, %s22
      %s41 = sphi 0, %s43
      %s44 = sphi 0, %s41
      %s45 = sphi 0, %s44
      %s61 = sphi 0, %s45
      %s69 = sphi 0, %s71
      %s72 = sphi 0, %s69
      %s73 = sphi 0, %s72
      %s89 = sphi 0, %s73
      %s95 = sphi 0, %s97
      %s98 = sphi 0, %s95
      %s99 = sphi 0, %s98
      %s115 = sphi 0, %s99
      %s121 = sphi 0, %s123
      %s124 = sphi 0, %s121
      %s125 = sphi 0, %s124
      %s141 = sphi 0, %s125
      %s149 = sphi 0, %s151
      %s152 = sphi 0, %s149
      %s153 = sphi 0, %s152
      %s169 = sphi 0, %s153
    $region4: #{resnet_forward.24} parent=1 // loop_header_branch
      %13 = sbr.rel (%p11) target = $region8
    $region5: #{resnet_forward.24} parent=1 // loop_body
      %s15 = ssub.s32 %s10, 1
      %s16 = ssub.s32 %s10, 2
      %s26 = sadd.s32 1, %s19
      %p27 = scmp.ge.s32.totalorder %s26, 1
      %s28 = scalar_select %p27, 0, %s26
      %s29 = sadd.s32 1, %s18
      %s30 = scalar_select %p27, %s29, %s18
      %p31 = scmp.ge.s32.totalorder %s30, 2
      %s32 = scalar_select %p31, 0, %s30
      %s33 = sadd.s32 1, %s17
      %s34 = scalar_select %p31, %s33, %s17
      %p35 = scmp.ge.s32.totalorder %s34, 1
      %s36 = scalar_select %p35, 0, %s34
      %s37 = ssub.s32 %s17, %s36
      %s38 = ssub.s32 %s19, %s28
      %s39 = sor.u32 %s37, %s38
      %p40 = scmp.eq.s32.totalorder %s39, 0
      %s42 = sadd.s32 %s41, 1
      %s43 = scalar_select %p40, %s41, %s42
      %p46 = pneg %p40
      %p47 = scmp.eq.s32.totalorder %s10, 1
      %p48 = por %p46, %p47
      %p49 = scmp.ne.s32.totalorder %s41, %s44
      %p50 = scmp.eq.s32.totalorder %s10, 0
      %p51 = por %p49, %p50
      %p52 = scmp.ne.s32.totalorder %s41, %s44
      %p53 = scmp.eq.s32.totalorder %s15, 1
      %p54 = por %p52, %p53
      %p55 = scmp.ne.s32.totalorder %s44, %s45
      %p56 = scmp.eq.s32.totalorder %s15, 0
      %p57 = por %p55, %p56
      %p58 = scmp.ne.s32.totalorder %s44, %s45
      %p59 = scmp.eq.s32.totalorder %s16, 1
      %p60 = por %p58, %p59
      %p62 = scmp.ne.s32.totalorder %s45, %s61
      %p63 = scmp.eq.s32.totalorder %s16, 0
      %p64 = por %p62, %p63
      %s65 = ssub.s32 %s19, %s28
      %s66 = ssub.s32 %s18, %s32
      %s67 = sor.u32 %s65, %s66
      %p68 = scmp.eq.s32.totalorder %s67, 0
      %s70 = sadd.s32 %s69, 1
      %s71 = scalar_select %p68, %s69, %s70
      %p74 = pneg %p68
      %p75 = scmp.eq.s32.totalorder %s10, 1
      %p76 = por %p74, %p75
      %p77 = scmp.ne.s32.totalorder %s69, %s72
      %p78 = scmp.eq.s32.totalorder %s10, 0
      %p79 = por %p77, %p78
      %p80 = scmp.ne.s32.totalorder %s69, %s72
      %p81 = scmp.eq.s32.totalorder %s15, 1
      %p82 = por %p80, %p81
      %p83 = scmp.ne.s32.totalorder %s72, %s73
      %p84 = scmp.eq.s32.totalorder %s15, 0
      %p85 = por %p83, %p84
      %p86 = scmp.ne.s32.totalorder %s72, %s73
      %p87 = scmp.eq.s32.totalorder %s16, 1
      %p88 = por %p86, %p87
      %p90 = scmp.ne.s32.totalorder %s73, %s89
      %p91 = scmp.eq.s32.totalorder %s16, 0
      %p92 = por %p90, %p91
      %s93 = ssub.s32 %s18, %s32
      %p94 = scmp.eq.s32.totalorder %s93, 0
      %s96 = sadd.s32 %s95, 1
      %s97 = scalar_select %p94, %s95, %s96
      %p100 = pneg %p94
      %p101 = scmp.eq.s32.totalorder %s10, 1
      %p102 = por %p100, %p101
      %p103 = scmp.ne.s32.totalorder %s95, %s98
      %p104 = scmp.eq.s32.totalorder %s10, 0
      %p105 = por %p103, %p104
      %p106 = scmp.ne.s32.totalorder %s95, %s98
      %p107 = scmp.eq.s32.totalorder %s15, 1
      %p108 = por %p106, %p107
      %p109 = scmp.ne.s32.totalorder %s98, %s99
      %p110 = scmp.eq.s32.totalorder %s15, 0
      %p111 = por %p109, %p110
      %p112 = scmp.ne.s32.totalorder %s98, %s99
      %p113 = scmp.eq.s32.totalorder %s16, 1
      %p114 = por %p112, %p113
      %p116 = scmp.ne.s32.totalorder %s99, %s115
      %p117 = scmp.eq.s32.totalorder %s16, 0
      %p118 = por %p116, %p117
      %s119 = ssub.s32 %s18, %s32
      %p120 = scmp.eq.s32.totalorder %s119, 0
      %s122 = sadd.s32 %s121, 1
      %s123 = scalar_select %p120, %s121, %s122
      %p126 = pneg %p120
      %p127 = scmp.eq.s32.totalorder %s10, 1
      %p128 = por %p126, %p127
      %p129 = scmp.ne.s32.totalorder %s121, %s124
      %p130 = scmp.eq.s32.totalorder %s10, 0
      %p131 = por %p129, %p130
      %p132 = scmp.ne.s32.totalorder %s121, %s124
      %p133 = scmp.eq.s32.totalorder %s15, 1
      %p134 = por %p132, %p133
      %p135 = scmp.ne.s32.totalorder %s124, %s125
      %p136 = scmp.eq.s32.totalorder %s15, 0
      %p137 = por %p135, %p136
      %p138 = scmp.ne.s32.totalorder %s124, %s125
      %p139 = scmp.eq.s32.totalorder %s16, 1
      %p140 = por %p138, %p139
      %p142 = scmp.ne.s32.totalorder %s125, %s141
      %p143 = scmp.eq.s32.totalorder %s16, 0
      %p144 = por %p142, %p143
      %s145 = ssub.s32 %s17, %s36
      %s146 = ssub.s32 %s18, %s32
      %s147 = sor.u32 %s145, %s146
      %p148 = scmp.eq.s32.totalorder %s147, 0
      %s150 = sadd.s32 %s149, 1
      %s151 = scalar_select %p148, %s149, %s150
      %p154 = pneg %p148
      %p155 = scmp.eq.s32.totalorder %s10, 1
      %p156 = por %p154, %p155
      %p157 = scmp.ne.s32.totalorder %s149, %s152
      %p158 = scmp.eq.s32.totalorder %s10, 0
      %p159 = por %p157, %p158
      %p160 = scmp.ne.s32.totalorder %s149, %s152
      %p161 = scmp.eq.s32.totalorder %s15, 1
      %p162 = por %p160, %p161
      %p163 = scmp.ne.s32.totalorder %s152, %s153
      %p164 = scmp.eq.s32.totalorder %s15, 0
      %p165 = por %p163, %p164
      %p166 = scmp.ne.s32.totalorder %s152, %s153
      %p167 = scmp.eq.s32.totalorder %s16, 1
      %p168 = por %p166, %p167
      %p170 = scmp.ne.s32.totalorder %s153, %s169
      %p171 = scmp.eq.s32.totalorder %s16, 0
      %p172 = por %p170, %p171
      %p173 = scmp.le.s32.totalorder 1, %s10
      %p174 = scmp.lt.s32.totalorder %s10, 3
      %p175 = pnand %p173, %p174
      %p176 = pneg %p175
      // Predicated region
      $region9: #{resnet_forward.24} parent=5 // pred_check
        _
      $region10: #{resnet_forward.24} parent=5 // pred_check_branch
        %178 = sbr.rel (%p175) target = $region12
      $region11: #{resnet_forward.24} parent=5 // pred_region
        %s179 = ssub.s32 %s10, 1
        // Predicated region
        $region13: #{resnet_forward.24} parent=11 // pred_check
          %p180 = pneg %p57
        $region14: #{resnet_forward.24} parent=11 // pred_check_branch
          %182 = sbr.rel (%p180) target = $region16
        $region15: #{resnet_forward.24} parent=11 // pred_region
          %s183 = smul.u32 2, %s22
          %p184 = scmp.lt.s32.totalorder %s20, 0
          %s185 = scalar_select %p184, %s20, 0
          %p186 = scmp.lt.s32.totalorder %s183, 1
          %s187 = scalar_select %p186, %s183, 1
          %s188 = smul.addr %s185, 2
          %s189 = sadd.s32 %s187, %s188
          %s190 = scalar_lea.vmem %s0, %s189
          %s191 = smul.u32 2, %s22
        $region16: #{resnet_forward.24} parent=11 // pred_fallthru
          _
      $region12: #{resnet_forward.24} parent=5 // pred_fallthru
        _
      %p192 = scmp.lt.s32.totalorder %s10, 2
      // Predicated region
      $region17: #{resnet_forward.24} parent=5 // pred_check
        %p193 = pneg %p192
      $region18: #{resnet_forward.24} parent=5 // pred_check_branch
        %195 = sbr.rel (%p193) target = $region20
      $region19: #{resnet_forward.24} parent=5 // pred_region
        // Predicated region
        $region21: #{resnet_forward.24} parent=19 // pred_check
          %p196 = pneg %p79
        $region22: #{resnet_forward.24} parent=19 // pred_check_branch
          %198 = sbr.rel (%p196) target = $region24
        $region23: #{resnet_forward.24} parent=19 // pred_region
          %s199 = sand.u32 %s69, 1
          %s200 = sand.u32 %s69, 1
          %s201 = smul.addr %s200, 256
          %s202 = scalar_lea.vmem [#allocation2], %s201
          %s203 = smul.u32 32, %s19
          %s204 = smul.u32 2, %s18
          %s205 = smul.addr %s203, 4
          %s206 = sadd.s32 %s204, %s205
          %s207 = smul.addr %s206, 4
          %s208 = scalar_lea.vmem %s1, %s207
          // Predicated region
          $region25: #{resnet_forward.24} parent=23 // pred_check
            _
          $region26: #{resnet_forward.24} parent=23 // pred_check_branch
            %210 = sbr.rel (0) target = $region28
          $region27: #{resnet_forward.24} parent=23 // pred_region
            // Predicated region
            $region29: #{resnet_forward.24} parent=27 // pred_check
              _
            $region30: #{resnet_forward.24} parent=27 // pred_check_branch
              %212 = sbr.rel (0) target = $region32
            $region31: #{resnet_forward.24} parent=27 // pred_region
              // Predicated region
              $region44: #{resnet_forward.24} parent=31 // pred_check
                _
              $region45: #{resnet_forward.24} parent=31 // pred_check_branch
                %290 = sbr.rel (0) target = $region47
              $region46: #{resnet_forward.24} parent=31 // pred_region
                loop: start=0, step=1, limit=1
                $region48: #{resnet_forward.24} parent=46 // loop_pre_header
                  _
                $region49: #{resnet_forward.24} parent=46 // loop_header
                  %s292 = sphi 0, %s296
                  %p293 = scmp.ge.s32.totalorder %s292, 1
                  %s297 = sphi %s208, %s208
                  %s298 = sphi %s202, %s202
                $region50: #{resnet_forward.24} parent=46 // loop_header_branch
                  %295 = sbr.rel (%p293) target = $region54
                $region51: #{resnet_forward.24} parent=46 // loop_body
                  %v299 = vld [vmem:[%s297] sm:$0xff]
                  %300 = vst [vmem:[%s298] sm:$0xff] %v299
                  %v301 = vld [vmem:[%s297 + $0x10] sm:$0xff]
                  %302 = vst [vmem:[%s298 + $0x8] sm:$0xff] %v301
                  %v303 = vld [vmem:[%s297 + $0x20] sm:$0xff]
                  %304 = vst [vmem:[%s298 + $0x10] sm:$0xff] %v303
                  %v305 = vld [vmem:[%s297 + $0x30] sm:$0xff]
                  %306 = vst [vmem:[%s298 + $0x18] sm:$0xff] %v305
                  %v307 = vld [vmem:[%s297 + $0x40] sm:$0xff]
                  %308 = vst [vmem:[%s298 + $0x20] sm:$0xff] %v307
                  %v309 = vld [vmem:[%s297 + $0x50] sm:$0xff]
                  %310 = vst [vmem:[%s298 + $0x28] sm:$0xff] %v309
                  %v311 = vld [vmem:[%s297 + $0x60] sm:$0xff]
                  %312 = vst [vmem:[%s298 + $0x30] sm:$0xff] %v311
                  %v313 = vld [vmem:[%s297 + $0x70] sm:$0xff]
                  %314 = vst [vmem:[%s298 + $0x38] sm:$0xff] %v313
                  %v315 = vld [vmem:[%s297 + $0x80] sm:$0xff]
                  %316 = vst [vmem:[%s298 + $0x40] sm:$0xff] %v315
                  %v317 = vld [vmem:[%s297 + $0x90] sm:$0xff]
                  %318 = vst [vmem:[%s298 + $0x48] sm:$0xff] %v317
                  %v319 = vld [vmem:[%s297 + $0xa0] sm:$0xff]
                  %320 = vst [vmem:[%s298 + $0x50] sm:$0xff] %v319
                  %v321 = vld [vmem:[%s297 + $0xb0] sm:$0xff]
                  %322 = vst [vmem:[%s298 + $0x58] sm:$0xff] %v321
                  %v323 = vld [vmem:[%s297 + $0xc0] sm:$0xff]
                  %324 = vst [vmem:[%s298 + $0x60] sm:$0xff] %v323
                  %v325 = vld [vmem:[%s297 + $0xd0] sm:$0xff]
                  %326 = vst [vmem:[%s298 + $0x68] sm:$0xff] %v325
                  %v327 = vld [vmem:[%s297 + $0xe0] sm:$0xff]
                  %328 = vst [vmem:[%s298 + $0x70] sm:$0xff] %v327
                  %v329 = vld [vmem:[%s297 + $0xf0] sm:$0xff]
                  %330 = vst [vmem:[%s298 + $0x78] sm:$0xff] %v329
                  %v331 = vld [vmem:[%s297 + $0x100] sm:$0xff]
                  %332 = vst [vmem:[%s298 + $0x80] sm:$0xff] %v331
                  %v333 = vld [vmem:[%s297 + $0x110] sm:$0xff]
                  %334 = vst [vmem:[%s298 + $0x88] sm:$0xff] %v333
                  %v335 = vld [vmem:[%s297 + $0x120] sm:$0xff]
                  %336 = vst [vmem:[%s298 + $0x90] sm:$0xff] %v335
                  %v337 = vld [vmem:[%s297 + $0x130] sm:$0xff]
                  %338 = vst [vmem:[%s298 + $0x98] sm:$0xff] %v337
                  %v339 = vld [vmem:[%s297 + $0x140] sm:$0xff]
                  %340 = vst [vmem:[%s298 + $0xa0] sm:$0xff] %v339
                  %v341 = vld [vmem:[%s297 + $0x150] sm:$0xff]
                  %342 = vst [vmem:[%s298 + $0xa8] sm:$0xff] %v341
                  %v343 = vld [vmem:[%s297 + $0x160] sm:$0xff]
                  %344 = vst [vmem:[%s298 + $0xb0] sm:$0xff] %v343
                  %v345 = vld [vmem:[%s297 + $0x170] sm:$0xff]
                  %346 = vst [vmem:[%s298 + $0xb8] sm:$0xff] %v345
                  %v347 = vld [vmem:[%s297 + $0x180] sm:$0xff]
                  %348 = vst [vmem:[%s298 + $0xc0] sm:$0xff] %v347
                  %v349 = vld [vmem:[%s297 + $0x190] sm:$0xff]
                  %350 = vst [vmem:[%s298 + $0xc8] sm:$0xff] %v349
                  %v351 = vld [vmem:[%s297 + $0x1a0] sm:$0xff]
                  %352 = vst [vmem:[%s298 + $0xd0] sm:$0xff] %v351
                  %v353 = vld [vmem:[%s297 + $0x1b0] sm:$0xff]
                  %354 = vst [vmem:[%s298 + $0xd8] sm:$0xff] %v353
                  %v355 = vld [vmem:[%s297 + $0x1c0] sm:$0xff]
                  %356 = vst [vmem:[%s298 + $0xe0] sm:$0xff] %v355
                  %v357 = vld [vmem:[%s297 + $0x1d0] sm:$0xff]
                  %358 = vst [vmem:[%s298 + $0xe8] sm:$0xff] %v357
                  %v359 = vld [vmem:[%s297 + $0x1e0] sm:$0xff]
                  %360 = vst [vmem:[%s298 + $0xf0] sm:$0xff] %v359
                  %v361 = vld [vmem:[%s297 + $0x1f0] sm:$0xff]
                  %362 = vst [vmem:[%s298 + $0xf8] sm:$0xff] %v361
                $region52: #{resnet_forward.24} parent=46 // loop_footer
                  %s296 = sadd.s32 1, %s292
                $region53: #{resnet_forward.24} parent=46 // loop_footer_branch
                  %291 = sbr.rel target = $region49
                $region54: #{resnet_forward.24} parent=46 // loop_exit
                  _
              $region47: #{resnet_forward.24} parent=31 // pred_fallthru
                _
              // Predicated region
              $region55: #{resnet_forward.24} parent=31 // pred_check
                _
              $region56: #{resnet_forward.24} parent=31 // pred_check_branch
                %364 = sbr.rel target = $region58
              $region57: #{resnet_forward.24} parent=31 // pred_region
                _
              $region58: #{resnet_forward.24} parent=31 // pred_fallthru
                _
            $region32: #{resnet_forward.24} parent=27 // pred_fallthru
              _
            // Predicated region
            $region33: #{resnet_forward.24} parent=27 // pred_check
              _
            $region34: #{resnet_forward.24} parent=27 // pred_check_branch
              %214 = sbr.rel target = $region36
            $region35: #{resnet_forward.24} parent=27 // pred_region
              %s216 = ssub.s32 256, 1
              loop: start=0, step=1, limit=1
              $region37: #{resnet_forward.24} parent=35 // loop_pre_header
                _
              $region38: #{resnet_forward.24} parent=35 // loop_header
                %s218 = sphi 0, %s222
                %p219 = scmp.ge.s32.totalorder %s218, 1
                %s223 = sphi %s208, %s208
                %s224 = sphi %s202, %s202
              $region39: #{resnet_forward.24} parent=35 // loop_header_branch
                %221 = sbr.rel (%p219) target = $region43
              $region40: #{resnet_forward.24} parent=35 // loop_body
                %v225 = vld [vmem:[%s223] sm:%s216]
                %226 = vst [vmem:[%s224] sm:%s216] %v225
                %v227 = vld [vmem:[%s223 + $0x10] sm:%s216]
                %228 = vst [vmem:[%s224 + $0x8] sm:%s216] %v227
                %v229 = vld [vmem:[%s223 + $0x20] sm:%s216]
                %230 = vst [vmem:[%s224 + $0x10] sm:%s216] %v229
                %v231 = vld [vmem:[%s223 + $0x30] sm:%s216]
                %232 = vst [vmem:[%s224 + $0x18] sm:%s216] %v231
                %v233 = vld [vmem:[%s223 + $0x40] sm:%s216]
                %234 = vst [vmem:[%s224 + $0x20] sm:%s216] %v233
                %v235 = vld [vmem:[%s223 + $0x50] sm:%s216]
                %236 = vst [vmem:[%s224 + $0x28] sm:%s216] %v235
                %v237 = vld [vmem:[%s223 + $0x60] sm:%s216]
                %238 = vst [vmem:[%s224 + $0x30] sm:%s216] %v237
                %v239 = vld [vmem:[%s223 + $0x70] sm:%s216]
                %240 = vst [vmem:[%s224 + $0x38] sm:%s216] %v239
                %v241 = vld [vmem:[%s223 + $0x80] sm:%s216]
                %242 = vst [vmem:[%s224 + $0x40] sm:%s216] %v241
                %v243 = vld [vmem:[%s223 + $0x90] sm:%s216]
                %244 = vst [vmem:[%s224 + $0x48] sm:%s216] %v243
                %v245 = vld [vmem:[%s223 + $0xa0] sm:%s216]
                %246 = vst [vmem:[%s224 + $0x50] sm:%s216] %v245
                %v247 = vld [vmem:[%s223 + $0xb0] sm:%s216]
                %248 = vst [vmem:[%s224 + $0x58] sm:%s216] %v247
                %v249 = vld [vmem:[%s223 + $0xc0] sm:%s216]
                %250 = vst [vmem:[%s224 + $0x60] sm:%s216] %v249
                %v251 = vld [vmem:[%s223 + $0xd0] sm:%s216]
                %252 = vst [vmem:[%s224 + $0x68] sm:%s216] %v251
                %v253 = vld [vmem:[%s223 + $0xe0] sm:%s216]
                %254 = vst [vmem:[%s224 + $0x70] sm:%s216] %v253
                %v255 = vld [vmem:[%s223 + $0xf0] sm:%s216]
                %256 = vst [vmem:[%s224 + $0x78] sm:%s216] %v255
                %v257 = vld [vmem:[%s223 + $0x100] sm:%s216]
                %258 = vst [vmem:[%s224 + $0x80] sm:%s216] %v257
                %v259 = vld [vmem:[%s223 + $0x110] sm:%s216]
                %260 = vst [vmem:[%s224 + $0x88] sm:%s216] %v259
                %v261 = vld [vmem:[%s223 + $0x120] sm:%s216]
                %262 = vst [vmem:[%s224 + $0x90] sm:%s216] %v261
                %v263 = vld [vmem:[%s223 + $0x130] sm:%s216]
                %264 = vst [vmem:[%s224 + $0x98] sm:%s216] %v263
                %v265 = vld [vmem:[%s223 + $0x140] sm:%s216]
                %266 = vst [vmem:[%s224 + $0xa0] sm:%s216] %v265
                %v267 = vld [vmem:[%s223 + $0x150] sm:%s216]
                %268 = vst [vmem:[%s224 + $0xa8] sm:%s216] %v267
                %v269 = vld [vmem:[%s223 + $0x160] sm:%s216]
                %270 = vst [vmem:[%s224 + $0xb0] sm:%s216] %v269
                %v271 = vld [vmem:[%s223 + $0x170] sm:%s216]
                %272 = vst [vmem:[%s224 + $0xb8] sm:%s216] %v271
                %v273 = vld [vmem:[%s223 + $0x180] sm:%s216]
                %274 = vst [vmem:[%s224 + $0xc0] sm:%s216] %v273
                %v275 = vld [vmem:[%s223 + $0x190] sm:%s216]
                %276 = vst [vmem:[%s224 + $0xc8] sm:%s216] %v275
                %v277 = vld [vmem:[%s223 + $0x1a0] sm:%s216]
                %278 = vst [vmem:[%s224 + $0xd0] sm:%s216] %v277
                %v279 = vld [vmem:[%s223 + $0x1b0] sm:%s216]
                %280 = vst [vmem:[%s224 + $0xd8] sm:%s216] %v279
                %v281 = vld [vmem:[%s223 + $0x1c0] sm:%s216]
                %282 = vst [vmem:[%s224 + $0xe0] sm:%s216] %v281
                %v283 = vld [vmem:[%s223 + $0x1d0] sm:%s216]
                %284 = vst [vmem:[%s224 + $0xe8] sm:%s216] %v283
                %v285 = vld [vmem:[%s223 + $0x1e0] sm:%s216]
                %286 = vst [vmem:[%s224 + $0xf0] sm:%s216] %v285
                %v287 = vld [vmem:[%s223 + $0x1f0] sm:%s216]
                %288 = vst [vmem:[%s224 + $0xf8] sm:%s216] %v287
              $region41: #{resnet_forward.24} parent=35 // loop_footer
                %s222 = sadd.s32 1, %s218
              $region42: #{resnet_forward.24} parent=35 // loop_footer_branch
                %217 = sbr.rel target = $region38
              $region43: #{resnet_forward.24} parent=35 // loop_exit
                _
            $region36: #{resnet_forward.24} parent=27 // pred_fallthru
              _
          $region28: #{resnet_forward.24} parent=23 // pred_fallthru
            _
          %365 = vnop
        $region24: #{resnet_forward.24} parent=19 // pred_fallthru
          _
        // Predicated region
        $region59: #{resnet_forward.24} parent=19 // pred_check
          %p366 = pneg %p105
        $region60: #{resnet_forward.24} parent=19 // pred_check_branch
          %368 = sbr.rel (%p366) target = $region62
        $region61: #{resnet_forward.24} parent=19 // pred_region
          %s369 = smul.u32 2, %s18
          %p370 = scmp.lt.s32.totalorder %s369, 3
          %s371 = scalar_select %p370, %s369, 3
          %s372 = scalar_lea.vmem %s2, %s371
          %s373 = smul.u32 2, %s18
        $region62: #{resnet_forward.24} parent=19 // pred_fallthru
          _
        // Predicated region
        $region63: #{resnet_forward.24} parent=19 // pred_check
          %p374 = pneg %p131
        $region64: #{resnet_forward.24} parent=19 // pred_check_branch
          %376 = sbr.rel (%p374) target = $region66
        $region65: #{resnet_forward.24} parent=19 // pred_region
          %s377 = smul.u32 2, %s18
          %p378 = scmp.lt.s32.totalorder %s377, 3
          %s379 = scalar_select %p378, %s377, 3
          %s380 = scalar_lea.vmem %s3, %s379
          %s381 = smul.u32 2, %s18
        $region66: #{resnet_forward.24} parent=19 // pred_fallthru
          _
      $region20: #{resnet_forward.24} parent=5 // pred_fallthru
        _
      %p382 = scmp.le.s32.totalorder 1, %s10
      %p383 = scmp.lt.s32.totalorder %s10, 3
      %p384 = pnand %p382, %p383
      %p385 = pneg %p384
      // Predicated region
      $region67: #{resnet_forward.24} parent=5 // pred_check
        _
      $region68: #{resnet_forward.24} parent=5 // pred_check_branch
        %387 = sbr.rel (%p384) target = $region70
      $region69: #{resnet_forward.24} parent=5 // pred_region
        %s388 = ssub.s32 %s10, 1
        %s389 = sand.u32 %s72, 1
        %s390 = sand.u32 %s72, 1
        %s391 = smul.addr %s390, 256
        %s392 = scalar_lea.vmem [#allocation2], %s391
        // Predicated region
        $region71: #{resnet_forward.24} parent=69 // pred_check
          %p393 = pneg %p85
        $region72: #{resnet_forward.24} parent=69 // pred_check_branch
          %395 = sbr.rel (%p393) target = $region74
        $region73: #{resnet_forward.24} parent=69 // pred_region
          _
        $region74: #{resnet_forward.24} parent=69 // pred_fallthru
          _
        %s396 = smul.u32 2, %s22
        %p397 = scmp.lt.s32.totalorder %s20, 0
        %s398 = scalar_select %p397, %s20, 0
        %p399 = scmp.lt.s32.totalorder %s396, 1
        %s400 = scalar_select %p399, %s396, 1
        %s401 = smul.addr %s398, 2
        %s402 = sadd.s32 %s400, %s401
        %s403 = scalar_lea.vmem %s0, %s402
        %p404 = pneg %p57
        %p405 = pneg %p54
        %s406 = sand.u32 %s72, 1
        %s407 = sand.u32 %s72, 1
        %s408 = smul.addr %s407, 256
        %s409 = scalar_lea.vmem [#allocation2], %s408
        %p410 = pneg %p85
        %p411 = pneg %p82
        %s412 = smul.u32 2, %s21
        %p413 = scmp.lt.s32.totalorder %s412, 3
        %s414 = scalar_select %p413, %s412, 3
        %s415 = scalar_lea.vmem %s2, %s414
        %p416 = pneg %p111
        %p417 = pneg %p108
        %s418 = smul.u32 2, %s21
        %p419 = scmp.lt.s32.totalorder %s418, 3
        %s420 = scalar_select %p419, %s418, 3
        %s421 = scalar_lea.vmem %s3, %s420
        %p422 = pneg %p137
        %p423 = pneg %p134
        %p424 = pneg %p165
        %p425 = pneg %p162
        %s426 = smul.u32 2, %s21
        %p427 = scmp.lt.s32.totalorder %s20, 0
        %s428 = scalar_select %p427, %s20, 0
        %p429 = scmp.lt.s32.totalorder %s426, 3
        %s430 = scalar_select %p429, %s426, 3
        %s431 = smul.addr %s428, 4
        %s432 = sadd.s32 %s430, %s431
        %s433 = smul.addr %s432, 2
        %s434 = scalar_lea.vmem %s4, %s433
        %s435 = smul.u32 2, %s22
        %p436 = scmp.lt.s32.totalorder %s20, 0
        %s437 = scalar_select %p436, %s20, 0
        %p438 = scmp.lt.s32.totalorder %s435, 1
        %s439 = scalar_select %p438, %s435, 1
        %s440 = smul.addr %s437, 2
        %s441 = sadd.s32 %s439, %s440
        %s442 = scalar_lea.vmem %s0, %s441
        %s443 = smul.u32 2, %s22
        %s444 = smul.u32 32, %s22
        %s445 = smul.u32 2, %s21
        %s446 = smul.u32 2, %s21
        %p447 = scmp.lt.s32.totalorder %s446, 3
        %s448 = scalar_select %p447, %s446, 3
        %s449 = scalar_lea.vmem %s2, %s448
        %s450 = smul.u32 2, %s21
        %s451 = smul.u32 2, %s21
        %p452 = scmp.lt.s32.totalorder %s451, 3
        %s453 = scalar_select %p452, %s451, 3
        %s454 = scalar_lea.vmem %s3, %s453
        %s455 = smul.u32 2, %s21
        %s456 = smul.u32 2, %s21
        %p457 = scmp.lt.s32.totalorder %s20, 0
        %s458 = scalar_select %p457, %s20, 0
        %p459 = scmp.lt.s32.totalorder %s456, 3
        %s460 = scalar_select %p459, %s456, 3
        %s461 = smul.addr %s458, 4
        %s462 = sadd.s32 %s460, %s461
        %s463 = smul.addr %s462, 2
        %s464 = scalar_lea.vmem %s4, %s463
        %s465 = smul.u32 2, %s21
        %v466 = vld [vmem:[%s442] sm:$0x3]
        %v467 = vld [vmem:[%s392] sm:$0xff]
        %v468 = vld [vmem:[%s392 + $0x8] sm:$0xff]
        %v469 = vld [vmem:[%s392 + $0x10] sm:$0xff]
        %v470 = vld [vmem:[%s392 + $0x18] sm:$0xff]
        %v471 = vld [vmem:[%s392 + $0x20] sm:$0xff]
        %v472 = vld [vmem:[%s392 + $0x28] sm:$0xff]
        %v473 = vld [vmem:[%s392 + $0x30] sm:$0xff]
        %v474 = vld [vmem:[%s392 + $0x38] sm:$0xff]
        %v475 = vld [vmem:[%s392 + $0x40] sm:$0xff]
        %v476 = vld [vmem:[%s392 + $0x48] sm:$0xff]
        %v477 = vld [vmem:[%s392 + $0x50] sm:$0xff]
        %v478 = vld [vmem:[%s392 + $0x58] sm:$0xff]
        %v479 = vld [vmem:[%s392 + $0x60] sm:$0xff]
        %v480 = vld [vmem:[%s392 + $0x68] sm:$0xff]
        %v481 = vld [vmem:[%s392 + $0x70] sm:$0xff]
        %v482 = vld [vmem:[%s392 + $0x78] sm:$0xff]
        %v483 = vld [vmem:[%s392 + $0x80] sm:$0xff]
        %v484 = vld [vmem:[%s392 + $0x88] sm:$0xff]
        %v485 = vld [vmem:[%s392 + $0x90] sm:$0xff]
        %v486 = vld [vmem:[%s392 + $0x98] sm:$0xff]
        %v487 = vld [vmem:[%s392 + $0xa0] sm:$0xff]
        %v488 = vld [vmem:[%s392 + $0xa8] sm:$0xff]
        %v489 = vld [vmem:[%s392 + $0xb0] sm:$0xff]
        %v490 = vld [vmem:[%s392 + $0xb8] sm:$0xff]
        %v491 = vld [vmem:[%s392 + $0xc0] sm:$0xff]
        %v492 = vld [vmem:[%s392 + $0xc8] sm:$0xff]
        %v493 = vld [vmem:[%s392 + $0xd0] sm:$0xff]
        %v494 = vld [vmem:[%s392 + $0xd8] sm:$0xff]
        %v495 = vld [vmem:[%s392 + $0xe0] sm:$0xff]
        %v496 = vld [vmem:[%s392 + $0xe8] sm:$0xff]
        %v497 = vld [vmem:[%s392 + $0xf0] sm:$0xff]
        %v498 = vld [vmem:[%s392 + $0xf8] sm:$0xff]
        %500 = vst [vmem:[#allocation1] ss:$9 sm:$0xff] %v466
        %v501 = vld [vmem:[#allocation1] sm:$0xff]
        %v502 = vld [vmem:[#allocation1 + $0x9] sm:$0xff]
        %v537 = vunpack.c.l.b16 %v467
        %v538 = vunpack.c.h.b16 %v467
        %v539 = vunpack.c.l.b16 %v468
        %v540 = vunpack.c.h.b16 %v468
        %v541 = vunpack.c.l.b16 %v469
        %v542 = vunpack.c.h.b16 %v469
        %v543 = vunpack.c.l.b16 %v470
        %v544 = vunpack.c.h.b16 %v470
        %v545 = vunpack.c.l.b16 %v471
        %v546 = vunpack.c.h.b16 %v471
        %v547 = vunpack.c.l.b16 %v472
        %v548 = vunpack.c.h.b16 %v472
        %v549 = vunpack.c.l.b16 %v473
        %v550 = vunpack.c.h.b16 %v473
        %v551 = vunpack.c.l.b16 %v474
        %v552 = vunpack.c.h.b16 %v474
        %v553 = vunpack.c.l.b16 %v475
        %v554 = vunpack.c.h.b16 %v475
        %v555 = vunpack.c.l.b16 %v476
        %v556 = vunpack.c.h.b16 %v476
        %v557 = vunpack.c.l.b16 %v477
        %v558 = vunpack.c.h.b16 %v477
        %v559 = vunpack.c.l.b16 %v478
        %v560 = vunpack.c.h.b16 %v478
        %v561 = vunpack.c.l.b16 %v479
        %v562 = vunpack.c.h.b16 %v479
        %v563 = vunpack.c.l.b16 %v480
        %v564 = vunpack.c.h.b16 %v480
        %v565 = vunpack.c.l.b16 %v481
        %v566 = vunpack.c.h.b16 %v481
        %v567 = vunpack.c.l.b16 %v482
        %v568 = vunpack.c.h.b16 %v482
        %v569 = vunpack.c.l.b16 %v483
        %v570 = vunpack.c.h.b16 %v483
        %v571 = vunpack.c.l.b16 %v484
        %v572 = vunpack.c.h.b16 %v484
        %v573 = vunpack.c.l.b16 %v485
        %v574 = vunpack.c.h.b16 %v485
        %v575 = vunpack.c.l.b16 %v486
        %v576 = vunpack.c.h.b16 %v486
        %v577 = vunpack.c.l.b16 %v487
        %v578 = vunpack.c.h.b16 %v487
        %v579 = vunpack.c.l.b16 %v488
        %v580 = vunpack.c.h.b16 %v488
        %v581 = vunpack.c.l.b16 %v489
        %v582 = vunpack.c.h.b16 %v489
        %v583 = vunpack.c.l.b16 %v490
        %v584 = vunpack.c.h.b16 %v490
        %v585 = vunpack.c.l.b16 %v491
        %v586 = vunpack.c.h.b16 %v491
        %v587 = vunpack.c.l.b16 %v492
        %v588 = vunpack.c.h.b16 %v492
        %v589 = vunpack.c.l.b16 %v493
        %v590 = vunpack.c.h.b16 %v493
        %v591 = vunpack.c.l.b16 %v494
        %v592 = vunpack.c.h.b16 %v494
        %v593 = vunpack.c.l.b16 %v495
        %v594 = vunpack.c.h.b16 %v495
        %v595 = vunpack.c.l.b16 %v496
        %v596 = vunpack.c.h.b16 %v496
        %v597 = vunpack.c.l.b16 %v497
        %v598 = vunpack.c.h.b16 %v497
        %v599 = vunpack.c.l.b16 %v498
        %v600 = vunpack.c.h.b16 %v498
        %v601 = vpack.c.b16 %v539, %v537
        %v602 = vpack.c.b16 %v540, %v538
        %v603 = vpack.c.b16 %v543, %v541
        %v604 = vpack.c.b16 %v544, %v542
        %v605 = vpack.c.b16 %v547, %v545
        %v606 = vpack.c.b16 %v548, %v546
        %v607 = vpack.c.b16 %v551, %v549
        %v608 = vpack.c.b16 %v552, %v550
        %v609 = vpack.c.b16 %v555, %v553
        %v610 = vpack.c.b16 %v556, %v554
        %v611 = vpack.c.b16 %v559, %v557
        %v612 = vpack.c.b16 %v560, %v558
        %v613 = vpack.c.b16 %v563, %v561
        %v614 = vpack.c.b16 %v564, %v562
        %v615 = vpack.c.b16 %v567, %v565
        %v616 = vpack.c.b16 %v568, %v566
        %v617 = vpack.c.b16 %v571, %v569
        %v618 = vpack.c.b16 %v572, %v570
        %v619 = vpack.c.b16 %v575, %v573
        %v620 = vpack.c.b16 %v576, %v574
        %v621 = vpack.c.b16 %v579, %v577
        %v622 = vpack.c.b16 %v580, %v578
        %v623 = vpack.c.b16 %v583, %v581
        %v624 = vpack.c.b16 %v584, %v582
        %v625 = vpack.c.b16 %v587, %v585
        %v626 = vpack.c.b16 %v588, %v586
        %v627 = vpack.c.b16 %v591, %v589
        %v628 = vpack.c.b16 %v592, %v590
        %v629 = vpack.c.b16 %v595, %v593
        %v630 = vpack.c.b16 %v596, %v594
        %v631 = vpack.c.b16 %v599, %v597
        %v632 = vpack.c.b16 %v600, %v598
        %665 = vmatpush.bf16.msra.mxu0 %v615
        %666 = vmatpush.bf16.msra.mxu0 %v613
        %667 = vmatpush.bf16.msra.mxu0 %v611
        %668 = vmatpush.bf16.msra.mxu0 %v609
        %669 = vmatpush.bf16.msra.mxu0 %v607
        %670 = vmatpush.bf16.msra.mxu0 %v605
        %671 = vmatpush.bf16.msra.mxu0 %v603
        %672 = vmatpush.bf16.msra.mxu0 %v601
        %673 = vmatmul.bf16.gmra.mxu0 %v501
        %v674 = vpop.f32.mrf.mxu0
        %v675 = vadd.f32 0.0, %v674
        %v676 = vpop.f32.mrf.mxu0
        %677 = vdwg.mxu0
        %678 = vmatpush.bf16.msra.mxu0 %v631
        %679 = vmatpush.bf16.msra.mxu0 %v629
        %680 = vmatpush.bf16.msra.mxu0 %v627
        %681 = vmatpush.bf16.msra.mxu0 %v625
        %682 = vmatpush.bf16.msra.mxu0 %v623
        %683 = vmatpush.bf16.msra.mxu0 %v621
        %684 = vmatpush.bf16.msra.mxu0 %v619
        %685 = vmatpush.bf16.msra.mxu0 %v617
        %686 = vmatmul.bf16.gmra.mxu0 %v502
        %v687 = vpop.f32.mrf.mxu0
        %v688 = vadd.f32 %v675, %v687
        %v689 = vpop.f32.mrf.mxu0
        %690 = vdwg.mxu0
        %691 = vmatpush.bf16.msra.mxu0 %v616
        %692 = vmatpush.bf16.msra.mxu0 %v614
        %693 = vmatpush.bf16.msra.mxu0 %v612
        %694 = vmatpush.bf16.msra.mxu0 %v610
        %695 = vmatpush.bf16.msra.mxu0 %v608
        %696 = vmatpush.bf16.msra.mxu0 %v606
        %697 = vmatpush.bf16.msra.mxu0 %v604
        %698 = vmatpush.bf16.msra.mxu0 %v602
        %699 = vmatmul.bf16.gmra.mxu0 %v501
        %v700 = vpop.f32.mrf.mxu0
        %v701 = vadd.f32 0.0, %v700
        %v702 = vpop.f32.mrf.mxu0
        %703 = vdwg.mxu0
        %704 = vmatpush.bf16.msra.mxu0 %v632
        %705 = vmatpush.bf16.msra.mxu0 %v630
        %706 = vmatpush.bf16.msra.mxu0 %v628
        %707 = vmatpush.bf16.msra.mxu0 %v626
        %708 = vmatpush.bf16.msra.mxu0 %v624
        %709 = vmatpush.bf16.msra.mxu0 %v622
        %710 = vmatpush.bf16.msra.mxu0 %v620
        %711 = vmatpush.bf16.msra.mxu0 %v618
        %712 = vmatmul.bf16.gmra.mxu0 %v502
        %v713 = vpop.f32.mrf.mxu0
        %v714 = vadd.f32 %v701, %v713
        %v715 = vpop.f32.mrf.mxu0
        %716 = vdwg.mxu0
        %v717 = vld [vmem:[%s449] sm:$0x3]
        %v719 = vperm.slane %v717, 0
        %v720 = vperm.slane %v717, 1
        %v723 = vmul.f32 %v688, %v719
        %v724 = vmul.f32 %v714, %v720
        %v725 = vld [vmem:[%s454] sm:$0x3]
        %v727 = vperm.slane %v725, 0
        %v728 = vperm.slane %v725, 1
        %v731 = vadd.f32 %v723, %v727
        %v732 = vadd.f32 %v724, %v728
        %v735 = vrot.slane %v732, 6
        %vm736 = vcmask 1041408
        %v737 = vsel %vm736, %v731, %v735
        %739 = vst [vmem:[%s464] sm:$0xf] %v737
        %s740 = smul.u32 2, %s21
        %p741 = scmp.lt.s32.totalorder %s20, 0
        %s742 = scalar_select %p741, %s20, 0
        %p743 = scmp.lt.s32.totalorder %s740, 3
        %s744 = scalar_select %p743, %s740, 3
        %s745 = smul.addr %s742, 4
        %s746 = sadd.s32 %s744, %s745
        %s747 = smul.addr %s746, 2
        %s748 = scalar_lea.vmem %s4, %s747
        // Predicated region
        $region75: #{resnet_forward.24} parent=69 // pred_check
          %p749 = pneg %p162
        $region76: #{resnet_forward.24} parent=69 // pred_check_branch
          %751 = sbr.rel (%p749) target = $region78
        $region77: #{resnet_forward.24} parent=69 // pred_region
          %s752 = smul.u32 2, %s21
        $region78: #{resnet_forward.24} parent=69 // pred_fallthru
          _
      $region70: #{resnet_forward.24} parent=5 // pred_fallthru
        _
      %p753 = scmp.le.s32.totalorder 2, %s10
      // Predicated region
      $region79: #{resnet_forward.24} parent=5 // pred_check
        %p754 = pneg %p753
      $region80: #{resnet_forward.24} parent=5 // pred_check_branch
        %756 = sbr.rel (%p754) target = $region82
      $region81: #{resnet_forward.24} parent=5 // pred_region
        %s757 = ssub.s32 %s10, 2
        // Predicated region
        $region83: #{resnet_forward.24} parent=81 // pred_check
          %p758 = pneg %p168
        $region84: #{resnet_forward.24} parent=81 // pred_check_branch
          %760 = sbr.rel (%p758) target = $region86
        $region85: #{resnet_forward.24} parent=81 // pred_region
          %s761 = smul.u32 2, %s24
          %p762 = scmp.lt.s32.totalorder %s23, 0
          %s763 = scalar_select %p762, %s23, 0
          %p764 = scmp.lt.s32.totalorder %s761, 3
          %s765 = scalar_select %p764, %s761, 3
          %s766 = smul.addr %s763, 4
          %s767 = sadd.s32 %s765, %s766
          %s768 = smul.addr %s767, 2
          %s769 = scalar_lea.vmem %s4, %s768
        $region86: #{resnet_forward.24} parent=81 // pred_fallthru
          _
      $region82: #{resnet_forward.24} parent=5 // pred_fallthru
        _
    $region6: #{resnet_forward.24} parent=1 // loop_footer
      %s14 = sadd.s32 1, %s10
    $region7: #{resnet_forward.24} parent=1 // loop_footer_branch
      %9 = sbr.rel target = $region3
    $region8: #{resnet_forward.24} parent=1 // loop_exit
      _

// kernel: resnet_forward.23
$region0: #{resnet_forward.23}
  #allocation0 [shape = 'u32[]', space=smem, size = 0x4, offset = 0x4, fixed_abs, tag = 'smem constant byte address 0x4 - core index']
  #allocation1 [shape = 'u32[72,128]{1,0:T(1,128)}', space=vmem, size = 0x9000, scoped, tag = 'internal scratch']
  %s0 = inlined_call_operand.vmem [shape: bf16[2,2304], index: 0, kind: input, shape index: {}]
  %s1 = inlined_call_operand.vmem [shape: bf16[2304,512], index: 1, kind: input, shape index: {}]
  %s2 = inlined_call_operand.vmem [shape: f32[1,512], index: 2, kind: input, shape index: {}]
  %s3 = inlined_call_operand.vmem [shape: f32[1,512], index: 3, kind: input, shape index: {}]
  %s4 = inlined_call_operand.vmem [shape: f32[2,512], index: 4, kind: output, shape index: {}]
  %s5 = sld [smem:[#allocation0]]
  $region99: #{resnet_forward.23} parent=0
    _
  %s7 = ssub.s32 1, %s5
  %s8 = scalar_select 0, %s7, %s5
  $region1: #{resnet_forward.23} parent=0
    #allocation2 [shape = 'u8[786432]{0}', space=vmem, size = 0xc0000, scoped, tag = 'input window, operand 1']
    loop: start=0, step=1, limit=8
    $region2: #{resnet_forward.23} parent=1 // loop_pre_header
      _
    $region3: #{resnet_forward.23} parent=1 // loop_header
      %s10 = sphi 0, %s14
      %p11 = scmp.ge.s32.totalorder %s10, 8
      %s17 = sphi 0, %s36
      %s18 = sphi 0, %s32
      %s19 = sphi 0, %s28
      %s20 = sphi 0, %s17
      %s21 = sphi 0, %s18
      %s22 = sphi 0, %s19
      %s23 = sphi 0, %s20
      %s24 = sphi 0, %s21
      %s25 = sphi 0, %s22
      %s41 = sphi 0, %s43
      %s44 = sphi 0, %s41
      %s45 = sphi 0, %s44
      %s61 = sphi 0, %s45
      %s69 = sphi 0, %s71
      %s72 = sphi 0, %s69
      %s73 = sphi 0, %s72
      %s89 = sphi 0, %s73
      %s95 = sphi 0, %s97
      %s98 = sphi 0, %s95
      %s99 = sphi 0, %s98
      %s115 = sphi 0, %s99
      %s121 = sphi 0, %s123
      %s124 = sphi 0, %s121
      %s125 = sphi 0, %s124
      %s141 = sphi 0, %s125
      %s149 = sphi 0, %s151
      %s152 = sphi 0, %s149
      %s153 = sphi 0, %s152
      %s169 = sphi 0, %s153
    $region4: #{resnet_forward.23} parent=1 // loop_header_branch
      %13 = sbr.rel (%p11) target = $region8
    $region5: #{resnet_forward.23} parent=1 // loop_body
      %s15 = ssub.s32 %s10, 1
      %s16 = ssub.s32 %s10, 2
      %s26 = sadd.s32 1, %s19
      %p27 = scmp.ge.s32.totalorder %s26, 3
      %s28 = scalar_select %p27, 0, %s26
      %s29 = sadd.s32 1, %s18
      %s30 = scalar_select %p27, %s29, %s18
      %p31 = scmp.ge.s32.totalorder %s30, 2
      %s32 = scalar_select %p31, 0, %s30
      %s33 = sadd.s32 1, %s17
      %s34 = scalar_select %p31, %s33, %s17
      %p35 = scmp.ge.s32.totalorder %s34, 1
      %s36 = scalar_select %p35, 0, %s34
      %s37 = ssub.s32 %s17, %s36
      %s38 = ssub.s32 %s19, %s28
      %s39 = sor.u32 %s37, %s38
      %p40 = scmp.eq.s32.totalorder %s39, 0
      %s42 = sadd.s32 %s41, 1
      %s43 = scalar_select %p40, %s41, %s42
      %p46 = pneg %p40
      %p47 = scmp.eq.s32.totalorder %s10, 5
      %p48 = por %p46, %p47
      %p49 = scmp.ne.s32.totalorder %s41, %s44
      %p50 = scmp.eq.s32.totalorder %s10, 0
      %p51 = por %p49, %p50
      %p52 = scmp.ne.s32.totalorder %s41, %s44
      %p53 = scmp.eq.s32.totalorder %s15, 5
      %p54 = por %p52, %p53
      %p55 = scmp.ne.s32.totalorder %s44, %s45
      %p56 = scmp.eq.s32.totalorder %s15, 0
      %p57 = por %p55, %p56
      %p58 = scmp.ne.s32.totalorder %s44, %s45
      %p59 = scmp.eq.s32.totalorder %s16, 5
      %p60 = por %p58, %p59
      %p62 = scmp.ne.s32.totalorder %s45, %s61
      %p63 = scmp.eq.s32.totalorder %s16, 0
      %p64 = por %p62, %p63
      %s65 = ssub.s32 %s19, %s28
      %s66 = ssub.s32 %s18, %s32
      %s67 = sor.u32 %s65, %s66
      %p68 = scmp.eq.s32.totalorder %s67, 0
      %s70 = sadd.s32 %s69, 1
      %s71 = scalar_select %p68, %s69, %s70
      %p74 = pneg %p68
      %p75 = scmp.eq.s32.totalorder %s10, 5
      %p76 = por %p74, %p75
      %p77 = scmp.ne.s32.totalorder %s69, %s72
      %p78 = scmp.eq.s32.totalorder %s10, 0
      %p79 = por %p77, %p78
      %p80 = scmp.ne.s32.totalorder %s69, %s72
      %p81 = scmp.eq.s32.totalorder %s15, 5
      %p82 = por %p80, %p81
      %p83 = scmp.ne.s32.totalorder %s72, %s73
      %p84 = scmp.eq.s32.totalorder %s15, 0
      %p85 = por %p83, %p84
      %p86 = scmp.ne.s32.totalorder %s72, %s73
      %p87 = scmp.eq.s32.totalorder %s16, 5
      %p88 = por %p86, %p87
      %p90 = scmp.ne.s32.totalorder %s73, %s89
      %p91 = scmp.eq.s32.totalorder %s16, 0
      %p92 = por %p90, %p91
      %s93 = ssub.s32 %s18, %s32
      %p94 = scmp.eq.s32.totalorder %s93, 0
      %s96 = sadd.s32 %s95, 1
      %s97 = scalar_select %p94, %s95, %s96
      %p100 = pneg %p94
      %p101 = scmp.eq.s32.totalorder %s10, 5
      %p102 = por %p100, %p101
      %p103 = scmp.ne.s32.totalorder %s95, %s98
      %p104 = scmp.eq.s32.totalorder %s10, 0
      %p105 = por %p103, %p104
      %p106 = scmp.ne.s32.totalorder %s95, %s98
      %p107 = scmp.eq.s32.totalorder %s15, 5
      %p108 = por %p106, %p107
      %p109 = scmp.ne.s32.totalorder %s98, %s99
      %p110 = scmp.eq.s32.totalorder %s15, 0
      %p111 = por %p109, %p110
      %p112 = scmp.ne.s32.totalorder %s98, %s99
      %p113 = scmp.eq.s32.totalorder %s16, 5
      %p114 = por %p112, %p113
      %p116 = scmp.ne.s32.totalorder %s99, %s115
      %p117 = scmp.eq.s32.totalorder %s16, 0
      %p118 = por %p116, %p117
      %s119 = ssub.s32 %s18, %s32
      %p120 = scmp.eq.s32.totalorder %s119, 0
      %s122 = sadd.s32 %s121, 1
      %s123 = scalar_select %p120, %s121, %s122
      %p126 = pneg %p120
      %p127 = scmp.eq.s32.totalorder %s10, 5
      %p128 = por %p126, %p127
      %p129 = scmp.ne.s32.totalorder %s121, %s124
      %p130 = scmp.eq.s32.totalorder %s10, 0
      %p131 = por %p129, %p130
      %p132 = scmp.ne.s32.totalorder %s121, %s124
      %p133 = scmp.eq.s32.totalorder %s15, 5
      %p134 = por %p132, %p133
      %p135 = scmp.ne.s32.totalorder %s124, %s125
      %p136 = scmp.eq.s32.totalorder %s15, 0
      %p137 = por %p135, %p136
      %p138 = scmp.ne.s32.totalorder %s124, %s125
      %p139 = scmp.eq.s32.totalorder %s16, 5
      %p140 = por %p138, %p139
      %p142 = scmp.ne.s32.totalorder %s125, %s141
      %p143 = scmp.eq.s32.totalorder %s16, 0
      %p144 = por %p142, %p143
      %s145 = ssub.s32 %s17, %s36
      %s146 = ssub.s32 %s18, %s32
      %s147 = sor.u32 %s145, %s146
      %p148 = scmp.eq.s32.totalorder %s147, 0
      %s150 = sadd.s32 %s149, 1
      %s151 = scalar_select %p148, %s149, %s150
      %p154 = pneg %p148
      %p155 = scmp.eq.s32.totalorder %s10, 5
      %p156 = por %p154, %p155
      %p157 = scmp.ne.s32.totalorder %s149, %s152
      %p158 = scmp.eq.s32.totalorder %s10, 0
      %p159 = por %p157, %p158
      %p160 = scmp.ne.s32.totalorder %s149, %s152
      %p161 = scmp.eq.s32.totalorder %s15, 5
      %p162 = por %p160, %p161
      %p163 = scmp.ne.s32.totalorder %s152, %s153
      %p164 = scmp.eq.s32.totalorder %s15, 0
      %p165 = por %p163, %p164
      %p166 = scmp.ne.s32.totalorder %s152, %s153
      %p167 = scmp.eq.s32.totalorder %s16, 5
      %p168 = por %p166, %p167
      %p170 = scmp.ne.s32.totalorder %s153, %s169
      %p171 = scmp.eq.s32.totalorder %s16, 0
      %p172 = por %p170, %p171
      %p173 = scmp.le.s32.totalorder 1, %s10
      %p174 = scmp.lt.s32.totalorder %s10, 7
      %p175 = pnand %p173, %p174
      %p176 = pneg %p175
      // Predicated region
      $region9: #{resnet_forward.23} parent=5 // pred_check
        _
      $region10: #{resnet_forward.23} parent=5 // pred_check_branch
        %178 = sbr.rel (%p175) target = $region12
      $region11: #{resnet_forward.23} parent=5 // pred_region
        %s179 = ssub.s32 %s10, 1
      $region12: #{resnet_forward.23} parent=5 // pred_fallthru
        _
      %p180 = scmp.lt.s32.totalorder %s10, 6
      // Predicated region
      $region13: #{resnet_forward.23} parent=5 // pred_check
        %p181 = pneg %p180
      $region14: #{resnet_forward.23} parent=5 // pred_check_branch
        %183 = sbr.rel (%p181) target = $region16
      $region15: #{resnet_forward.23} parent=5 // pred_region
        // Predicated region
        $region17: #{resnet_forward.23} parent=15 // pred_check
          %p184 = pneg %p51
        $region18: #{resnet_forward.23} parent=15 // pred_check_branch
          %186 = sbr.rel (%p184) target = $region20
        $region19: #{resnet_forward.23} parent=15 // pred_region
          %s187 = smul.u32 6, %s19
          %p188 = scmp.lt.s32.totalorder %s17, 0
          %s189 = scalar_select %p188, %s17, 0
          %p190 = scmp.lt.s32.totalorder %s187, 17
          %s191 = scalar_select %p190, %s187, 17
          %s192 = smul.addr %s189, 18
          %s193 = sadd.s32 %s191, %s192
          %s194 = scalar_lea.vmem %s0, %s193
          %s195 = smul.u32 6, %s19
        $region20: #{resnet_forward.23} parent=15 // pred_fallthru
          _
        // Predicated region
        $region21: #{resnet_forward.23} parent=15 // pred_check
          %p196 = pneg %p79
        $region22: #{resnet_forward.23} parent=15 // pred_check_branch
          %198 = sbr.rel (%p196) target = $region24
        $region23: #{resnet_forward.23} parent=15 // pred_region
          %s199 = sand.u32 %s69, 1
          %s200 = sand.u32 %s69, 1
          %s201 = smul.addr %s200, 768
          %s202 = scalar_lea.vmem [#allocation2], %s201
          %s203 = smul.u32 96, %s19
          %s204 = smul.u32 2, %s18
          %s205 = smul.addr %s203, 4
          %s206 = sadd.s32 %s204, %s205
          %s207 = smul.addr %s206, 4
          %s208 = scalar_lea.vmem %s1, %s207
          // Predicated region
          $region25: #{resnet_forward.23} parent=23 // pred_check
            _
          $region26: #{resnet_forward.23} parent=23 // pred_check_branch
            %210 = sbr.rel (0) target = $region28
          $region27: #{resnet_forward.23} parent=23 // pred_region
            // Predicated region
            $region29: #{resnet_forward.23} parent=27 // pred_check
              _
            $region30: #{resnet_forward.23} parent=27 // pred_check_branch
              %212 = sbr.rel (0) target = $region32
            $region31: #{resnet_forward.23} parent=27 // pred_region
              // Predicated region
              $region44: #{resnet_forward.23} parent=31 // pred_check
                _
              $region45: #{resnet_forward.23} parent=31 // pred_check_branch
                %418 = sbr.rel (0) target = $region47
              $region46: #{resnet_forward.23} parent=31 // pred_region
                loop: start=0, step=1, limit=1
                $region48: #{resnet_forward.23} parent=46 // loop_pre_header
                  _
                $region49: #{resnet_forward.23} parent=46 // loop_header
                  %s420 = sphi 0, %s424
                  %p421 = scmp.ge.s32.totalorder %s420, 1
                  %s425 = sphi %s208, %s208
                  %s426 = sphi %s202, %s202
                $region50: #{resnet_forward.23} parent=46 // loop_header_branch
                  %423 = sbr.rel (%p421) target = $region54
                $region51: #{resnet_forward.23} parent=46 // loop_body
                  %v427 = vld [vmem:[%s425] sm:$0xff]
                  %428 = vst [vmem:[%s426] sm:$0xff] %v427
                  %v429 = vld [vmem:[%s425 + $0x10] sm:$0xff]
                  %430 = vst [vmem:[%s426 + $0x8] sm:$0xff] %v429
                  %v431 = vld [vmem:[%s425 + $0x20] sm:$0xff]
                  %432 = vst [vmem:[%s426 + $0x10] sm:$0xff] %v431
                  %v433 = vld [vmem:[%s425 + $0x30] sm:$0xff]
                  %434 = vst [vmem:[%s426 + $0x18] sm:$0xff] %v433
                  %v435 = vld [vmem:[%s425 + $0x40] sm:$0xff]
                  %436 = vst [vmem:[%s426 + $0x20] sm:$0xff] %v435
                  %v437 = vld [vmem:[%s425 + $0x50] sm:$0xff]
                  %438 = vst [vmem:[%s426 + $0x28] sm:$0xff] %v437
                  %v439 = vld [vmem:[%s425 + $0x60] sm:$0xff]
                  %440 = vst [vmem:[%s426 + $0x30] sm:$0xff] %v439
                  %v441 = vld [vmem:[%s425 + $0x70] sm:$0xff]
                  %442 = vst [vmem:[%s426 + $0x38] sm:$0xff] %v441
                  %v443 = vld [vmem:[%s425 + $0x80] sm:$0xff]
                  %444 = vst [vmem:[%s426 + $0x40] sm:$0xff] %v443
                  %v445 = vld [vmem:[%s425 + $0x90] sm:$0xff]
                  %446 = vst [vmem:[%s426 + $0x48] sm:$0xff] %v445
                  %v447 = vld [vmem:[%s425 + $0xa0] sm:$0xff]
                  %448 = vst [vmem:[%s426 + $0x50] sm:$0xff] %v447
                  %v449 = vld [vmem:[%s425 + $0xb0] sm:$0xff]
                  %450 = vst [vmem:[%s426 + $0x58] sm:$0xff] %v449
                  %v451 = vld [vmem:[%s425 + $0xc0] sm:$0xff]
                  %452 = vst [vmem:[%s426 + $0x60] sm:$0xff] %v451
                  %v453 = vld [vmem:[%s425 + $0xd0] sm:$0xff]
                  %454 = vst [vmem:[%s426 + $0x68] sm:$0xff] %v453
                  %v455 = vld [vmem:[%s425 + $0xe0] sm:$0xff]
                  %456 = vst [vmem:[%s426 + $0x70] sm:$0xff] %v455
                  %v457 = vld [vmem:[%s425 + $0xf0] sm:$0xff]
                  %458 = vst [vmem:[%s426 + $0x78] sm:$0xff] %v457
                  %v459 = vld [vmem:[%s425 + $0x100] sm:$0xff]
                  %460 = vst [vmem:[%s426 + $0x80] sm:$0xff] %v459
                  %v461 = vld [vmem:[%s425 + $0x110] sm:$0xff]
                  %462 = vst [vmem:[%s426 + $0x88] sm:$0xff] %v461
                  %v463 = vld [vmem:[%s425 + $0x120] sm:$0xff]
                  %464 = vst [vmem:[%s426 + $0x90] sm:$0xff] %v463
                  %v465 = vld [vmem:[%s425 + $0x130] sm:$0xff]
                  %466 = vst [vmem:[%s426 + $0x98] sm:$0xff] %v465
                  %v467 = vld [vmem:[%s425 + $0x140] sm:$0xff]
                  %468 = vst [vmem:[%s426 + $0xa0] sm:$0xff] %v467
                  %v469 = vld [vmem:[%s425 + $0x150] sm:$0xff]
                  %470 = vst [vmem:[%s426 + $0xa8] sm:$0xff] %v469
                  %v471 = vld [vmem:[%s425 + $0x160] sm:$0xff]
                  %472 = vst [vmem:[%s426 + $0xb0] sm:$0xff] %v471
                  %v473 = vld [vmem:[%s425 + $0x170] sm:$0xff]
                  %474 = vst [vmem:[%s426 + $0xb8] sm:$0xff] %v473
                  %v475 = vld [vmem:[%s425 + $0x180] sm:$0xff]
                  %476 = vst [vmem:[%s426 + $0xc0] sm:$0xff] %v475
                  %v477 = vld [vmem:[%s425 + $0x190] sm:$0xff]
                  %478 = vst [vmem:[%s426 + $0xc8] sm:$0xff] %v477
                  %v479 = vld [vmem:[%s425 + $0x1a0] sm:$0xff]
                  %480 = vst [vmem:[%s426 + $0xd0] sm:$0xff] %v479
                  %v481 = vld [vmem:[%s425 + $0x1b0] sm:$0xff]
                  %482 = vst [vmem:[%s426 + $0xd8] sm:$0xff] %v481
                  %v483 = vld [vmem:[%s425 + $0x1c0] sm:$0xff]
                  %484 = vst [vmem:[%s426 + $0xe0] sm:$0xff] %v483
                  %v485 = vld [vmem:[%s425 + $0x1d0] sm:$0xff]
                  %486 = vst [vmem:[%s426 + $0xe8] sm:$0xff] %v485
                  %v487 = vld [vmem:[%s425 + $0x1e0] sm:$0xff]
                  %488 = vst [vmem:[%s426 + $0xf0] sm:$0xff] %v487
                  %v489 = vld [vmem:[%s425 + $0x1f0] sm:$0xff]
                  %490 = vst [vmem:[%s426 + $0xf8] sm:$0xff] %v489
                  %v491 = vld [vmem:[%s425 + $0x200] sm:$0xff]
                  %492 = vst [vmem:[%s426 + $0x100] sm:$0xff] %v491
                  %v493 = vld [vmem:[%s425 + $0x210] sm:$0xff]
                  %494 = vst [vmem:[%s426 + $0x108] sm:$0xff] %v493
                  %v495 = vld [vmem:[%s425 + $0x220] sm:$0xff]
                  %496 = vst [vmem:[%s426 + $0x110] sm:$0xff] %v495
                  %v497 = vld [vmem:[%s425 + $0x230] sm:$0xff]
                  %498 = vst [vmem:[%s426 + $0x118] sm:$0xff] %v497
                  %v499 = vld [vmem:[%s425 + $0x240] sm:$0xff]
                  %500 = vst [vmem:[%s426 + $0x120] sm:$0xff] %v499
                  %v501 = vld [vmem:[%s425 + $0x250] sm:$0xff]
                  %502 = vst [vmem:[%s426 + $0x128] sm:$0xff] %v501
                  %v503 = vld [vmem:[%s425 + $0x260] sm:$0xff]
                  %504 = vst [vmem:[%s426 + $0x130] sm:$0xff] %v503
                  %v505 = vld [vmem:[%s425 + $0x270] sm:$0xff]
                  %506 = vst [vmem:[%s426 + $0x138] sm:$0xff] %v505
                  %v507 = vld [vmem:[%s425 + $0x280] sm:$0xff]
                  %508 = vst [vmem:[%s426 + $0x140] sm:$0xff] %v507
                  %v509 = vld [vmem:[%s425 + $0x290] sm:$0xff]
                  %510 = vst [vmem:[%s426 + $0x148] sm:$0xff] %v509
                  %v511 = vld [vmem:[%s425 + $0x2a0] sm:$0xff]
                  %512 = vst [vmem:[%s426 + $0x150] sm:$0xff] %v511
                  %v513 = vld [vmem:[%s425 + $0x2b0] sm:$0xff]
                  %514 = vst [vmem:[%s426 + $0x158] sm:$0xff] %v513
                  %v515 = vld [vmem:[%s425 + $0x2c0] sm:$0xff]
                  %516 = vst [vmem:[%s426 + $0x160] sm:$0xff] %v515
                  %v517 = vld [vmem:[%s425 + $0x2d0] sm:$0xff]
                  %518 = vst [vmem:[%s426 + $0x168] sm:$0xff] %v517
                  %v519 = vld [vmem:[%s425 + $0x2e0] sm:$0xff]
                  %520 = vst [vmem:[%s426 + $0x170] sm:$0xff] %v519
                  %v521 = vld [vmem:[%s425 + $0x2f0] sm:$0xff]
                  %522 = vst [vmem:[%s426 + $0x178] sm:$0xff] %v521
                  %v523 = vld [vmem:[%s425 + $0x300] sm:$0xff]
                  %524 = vst [vmem:[%s426 + $0x180] sm:$0xff] %v523
                  %v525 = vld [vmem:[%s425 + $0x310] sm:$0xff]
                  %526 = vst [vmem:[%s426 + $0x188] sm:$0xff] %v525
                  %v527 = vld [vmem:[%s425 + $0x320] sm:$0xff]
                  %528 = vst [vmem:[%s426 + $0x190] sm:$0xff] %v527
                  %v529 = vld [vmem:[%s425 + $0x330] sm:$0xff]
                  %530 = vst [vmem:[%s426 + $0x198] sm:$0xff] %v529
                  %v531 = vld [vmem:[%s425 + $0x340] sm:$0xff]
                  %532 = vst [vmem:[%s426 + $0x1a0] sm:$0xff] %v531
                  %v533 = vld [vmem:[%s425 + $0x350] sm:$0xff]
                  %534 = vst [vmem:[%s426 + $0x1a8] sm:$0xff] %v533
                  %v535 = vld [vmem:[%s425 + $0x360] sm:$0xff]
                  %536 = vst [vmem:[%s426 + $0x1b0] sm:$0xff] %v535
                  %v537 = vld [vmem:[%s425 + $0x370] sm:$0xff]
                  %538 = vst [vmem:[%s426 + $0x1b8] sm:$0xff] %v537
                  %v539 = vld [vmem:[%s425 + $0x380] sm:$0xff]
                  %540 = vst [vmem:[%s426 + $0x1c0] sm:$0xff] %v539
                  %v541 = vld [vmem:[%s425 + $0x390] sm:$0xff]
                  %542 = vst [vmem:[%s426 + $0x1c8] sm:$0xff] %v541
                  %v543 = vld [vmem:[%s425 + $0x3a0] sm:$0xff]
                  %544 = vst [vmem:[%s426 + $0x1d0] sm:$0xff] %v543
                  %v545 = vld [vmem:[%s425 + $0x3b0] sm:$0xff]
                  %546 = vst [vmem:[%s426 + $0x1d8] sm:$0xff] %v545
                  %v547 = vld [vmem:[%s425 + $0x3c0] sm:$0xff]
                  %548 = vst [vmem:[%s426 + $0x1e0] sm:$0xff] %v547
                  %v549 = vld [vmem:[%s425 + $0x3d0] sm:$0xff]
                  %550 = vst [vmem:[%s426 + $0x1e8] sm:$0xff] %v549
                  %v551 = vld [vmem:[%s425 + $0x3e0] sm:$0xff]
                  %552 = vst [vmem:[%s426 + $0x1f0] sm:$0xff] %v551
                  %v553 = vld [vmem:[%s425 + $0x3f0] sm:$0xff]
                  %554 = vst [vmem:[%s426 + $0x1f8] sm:$0xff] %v553
                  %v555 = vld [vmem:[%s425 + $0x400] sm:$0xff]
                  %556 = vst [vmem:[%s426 + $0x200] sm:$0xff] %v555
                  %v557 = vld [vmem:[%s425 + $0x410] sm:$0xff]
                  %558 = vst [vmem:[%s426 + $0x208] sm:$0xff] %v557
                  %v559 = vld [vmem:[%s425 + $0x420] sm:$0xff]
                  %560 = vst [vmem:[%s426 + $0x210] sm:$0xff] %v559
                  %v561 = vld [vmem:[%s425 + $0x430] sm:$0xff]
                  %562 = vst [vmem:[%s426 + $0x218] sm:$0xff] %v561
                  %v563 = vld [vmem:[%s425 + $0x440] sm:$0xff]
                  %564 = vst [vmem:[%s426 + $0x220] sm:$0xff] %v563
                  %v565 = vld [vmem:[%s425 + $0x450] sm:$0xff]
                  %566 = vst [vmem:[%s426 + $0x228] sm:$0xff] %v565
                  %v567 = vld [vmem:[%s425 + $0x460] sm:$0xff]
                  %568 = vst [vmem:[%s426 + $0x230] sm:$0xff] %v567
                  %v569 = vld [vmem:[%s425 + $0x470] sm:$0xff]
                  %570 = vst [vmem:[%s426 + $0x238] sm:$0xff] %v569
                  %v571 = vld [vmem:[%s425 + $0x480] sm:$0xff]
                  %572 = vst [vmem:[%s426 + $0x240] sm:$0xff] %v571
                  %v573 = vld [vmem:[%s425 + $0x490] sm:$0xff]
                  %574 = vst [vmem:[%s426 + $0x248] sm:$0xff] %v573
                  %v575 = vld [vmem:[%s425 + $0x4a0] sm:$0xff]
                  %576 = vst [vmem:[%s426 + $0x250] sm:$0xff] %v575
                  %v577 = vld [vmem:[%s425 + $0x4b0] sm:$0xff]
                  %578 = vst [vmem:[%s426 + $0x258] sm:$0xff] %v577
                  %v579 = vld [vmem:[%s425 + $0x4c0] sm:$0xff]
                  %580 = vst [vmem:[%s426 + $0x260] sm:$0xff] %v579
                  %v581 = vld [vmem:[%s425 + $0x4d0] sm:$0xff]
                  %582 = vst [vmem:[%s426 + $0x268] sm:$0xff] %v581
                  %v583 = vld [vmem:[%s425 + $0x4e0] sm:$0xff]
                  %584 = vst [vmem:[%s426 + $0x270] sm:$0xff] %v583
                  %v585 = vld [vmem:[%s425 + $0x4f0] sm:$0xff]
                  %586 = vst [vmem:[%s426 + $0x278] sm:$0xff] %v585
                  %v587 = vld [vmem:[%s425 + $0x500] sm:$0xff]
                  %588 = vst [vmem:[%s426 + $0x280] sm:$0xff] %v587
                  %v589 = vld [vmem:[%s425 + $0x510] sm:$0xff]
                  %590 = vst [vmem:[%s426 + $0x288] sm:$0xff] %v589
                  %v591 = vld [vmem:[%s425 + $0x520] sm:$0xff]
                  %592 = vst [vmem:[%s426 + $0x290] sm:$0xff] %v591
                  %v593 = vld [vmem:[%s425 + $0x530] sm:$0xff]
                  %594 = vst [vmem:[%s426 + $0x298] sm:$0xff] %v593
                  %v595 = vld [vmem:[%s425 + $0x540] sm:$0xff]
                  %596 = vst [vmem:[%s426 + $0x2a0] sm:$0xff] %v595
                  %v597 = vld [vmem:[%s425 + $0x550] sm:$0xff]
                  %598 = vst [vmem:[%s426 + $0x2a8] sm:$0xff] %v597
                  %v599 = vld [vmem:[%s425 + $0x560] sm:$0xff]
                  %600 = vst [vmem:[%s426 + $0x2b0] sm:$0xff] %v599
                  %v601 = vld [vmem:[%s425 + $0x570] sm:$0xff]
                  %602 = vst [vmem:[%s426 + $0x2b8] sm:$0xff] %v601
                  %v603 = vld [vmem:[%s425 + $0x580] sm:$0xff]
                  %604 = vst [vmem:[%s426 + $0x2c0] sm:$0xff] %v603
                  %v605 = vld [vmem:[%s425 + $0x590] sm:$0xff]
                  %606 = vst [vmem:[%s426 + $0x2c8] sm:$0xff] %v605
                  %v607 = vld [vmem:[%s425 + $0x5a0] sm:$0xff]
                  %608 = vst [vmem:[%s426 + $0x2d0] sm:$0xff] %v607
                  %v609 = vld [vmem:[%s425 + $0x5b0] sm:$0xff]
                  %610 = vst [vmem:[%s426 + $0x2d8] sm:$0xff] %v609
                  %v611 = vld [vmem:[%s425 + $0x5c0] sm:$0xff]
                  %612 = vst [vmem:[%s426 + $0x2e0] sm:$0xff] %v611
                  %v613 = vld [vmem:[%s425 + $0x5d0] sm:$0xff]
                  %614 = vst [vmem:[%s426 + $0x2e8] sm:$0xff] %v613
                  %v615 = vld [vmem:[%s425 + $0x5e0] sm:$0xff]
                  %616 = vst [vmem:[%s426 + $0x2f0] sm:$0xff] %v615
                  %v617 = vld [vmem:[%s425 + $0x5f0] sm:$0xff]
                  %618 = vst [vmem:[%s426 + $0x2f8] sm:$0xff] %v617
                $region52: #{resnet_forward.23} parent=46 // loop_footer
                  %s424 = sadd.s32 1, %s420
                $region53: #{resnet_forward.23} parent=46 // loop_footer_branch
                  %419 = sbr.rel target = $region49
                $region54: #{resnet_forward.23} parent=46 // loop_exit
                  _
              $region47: #{resnet_forward.23} parent=31 // pred_fallthru
                _
              // Predicated region
              $region55: #{resnet_forward.23} parent=31 // pred_check
                _
              $region56: #{resnet_forward.23} parent=31 // pred_check_branch
                %620 = sbr.rel target = $region58
              $region57: #{resnet_forward.23} parent=31 // pred_region
                _
              $region58: #{resnet_forward.23} parent=31 // pred_fallthru
                _
            $region32: #{resnet_forward.23} parent=27 // pred_fallthru
              _
            // Predicated region
            $region33: #{resnet_forward.23} parent=27 // pred_check
              _
            $region34: #{resnet_forward.23} parent=27 // pred_check_branch
              %214 = sbr.rel target = $region36
            $region35: #{resnet_forward.23} parent=27 // pred_region
              %s216 = ssub.s32 256, 1
              loop: start=0, step=1, limit=1
              $region37: #{resnet_forward.23} parent=35 // loop_pre_header
                _
              $region38: #{resnet_forward.23} parent=35 // loop_header
                %s218 = sphi 0, %s222
                %p219 = scmp.ge.s32.totalorder %s218, 1
                %s223 = sphi %s208, %s208
                %s224 = sphi %s202, %s202
              $region39: #{resnet_forward.23} parent=35 // loop_header_branch
                %221 = sbr.rel (%p219) target = $region43
              $region40: #{resnet_forward.23} parent=35 // loop_body
                %v225 = vld [vmem:[%s223] sm:%s216]
                %226 = vst [vmem:[%s224] sm:%s216] %v225
                %v227 = vld [vmem:[%s223 + $0x10] sm:%s216]
                %228 = vst [vmem:[%s224 + $0x8] sm:%s216] %v227
                %v229 = vld [vmem:[%s223 + $0x20] sm:%s216]
                %230 = vst [vmem:[%s224 + $0x10] sm:%s216] %v229
                %v231 = vld [vmem:[%s223 + $0x30] sm:%s216]
                %232 = vst [vmem:[%s224 + $0x18] sm:%s216] %v231
                %v233 = vld [vmem:[%s223 + $0x40] sm:%s216]
                %234 = vst [vmem:[%s224 + $0x20] sm:%s216] %v233
                %v235 = vld [vmem:[%s223 + $0x50] sm:%s216]
                %236 = vst [vmem:[%s224 + $0x28] sm:%s216] %v235
                %v237 = vld [vmem:[%s223 + $0x60] sm:%s216]
                %238 = vst [vmem:[%s224 + $0x30] sm:%s216] %v237
                %v239 = vld [vmem:[%s223 + $0x70] sm:%s216]
                %240 = vst [vmem:[%s224 + $0x38] sm:%s216] %v239
                %v241 = vld [vmem:[%s223 + $0x80] sm:%s216]
                %242 = vst [vmem:[%s224 + $0x40] sm:%s216] %v241
                %v243 = vld [vmem:[%s223 + $0x90] sm:%s216]
                %244 = vst [vmem:[%s224 + $0x48] sm:%s216] %v243
                %v245 = vld [vmem:[%s223 + $0xa0] sm:%s216]
                %246 = vst [vmem:[%s224 + $0x50] sm:%s216] %v245
                %v247 = vld [vmem:[%s223 + $0xb0] sm:%s216]
                %248 = vst [vmem:[%s224 + $0x58] sm:%s216] %v247
                %v249 = vld [vmem:[%s223 + $0xc0] sm:%s216]
                %250 = vst [vmem:[%s224 + $0x60] sm:%s216] %v249
                %v251 = vld [vmem:[%s223 + $0xd0] sm:%s216]
                %252 = vst [vmem:[%s224 + $0x68] sm:%s216] %v251
                %v253 = vld [vmem:[%s223 + $0xe0] sm:%s216]
                %254 = vst [vmem:[%s224 + $0x70] sm:%s216] %v253
                %v255 = vld [vmem:[%s223 + $0xf0] sm:%s216]
                %256 = vst [vmem:[%s224 + $0x78] sm:%s216] %v255
                %v257 = vld [vmem:[%s223 + $0x100] sm:%s216]
                %258 = vst [vmem:[%s224 + $0x80] sm:%s216] %v257
                %v259 = vld [vmem:[%s223 + $0x110] sm:%s216]
                %260 = vst [vmem:[%s224 + $0x88] sm:%s216] %v259
                %v261 = vld [vmem:[%s223 + $0x120] sm:%s216]
                %262 = vst [vmem:[%s224 + $0x90] sm:%s216] %v261
                %v263 = vld [vmem:[%s223 + $0x130] sm:%s216]
                %264 = vst [vmem:[%s224 + $0x98] sm:%s216] %v263
                %v265 = vld [vmem:[%s223 + $0x140] sm:%s216]
                %266 = vst [vmem:[%s224 + $0xa0] sm:%s216] %v265
                %v267 = vld [vmem:[%s223 + $0x150] sm:%s216]
                %268 = vst [vmem:[%s224 + $0xa8] sm:%s216] %v267
                %v269 = vld [vmem:[%s223 + $0x160] sm:%s216]
                %270 = vst [vmem:[%s224 + $0xb0] sm:%s216] %v269
                %v271 = vld [vmem:[%s223 + $0x170] sm:%s216]
                %272 = vst [vmem:[%s224 + $0xb8] sm:%s216] %v271
                %v273 = vld [vmem:[%s223 + $0x180] sm:%s216]
                %274 = vst [vmem:[%s224 + $0xc0] sm:%s216] %v273
                %v275 = vld [vmem:[%s223 + $0x190] sm:%s216]
                %276 = vst [vmem:[%s224 + $0xc8] sm:%s216] %v275
                %v277 = vld [vmem:[%s223 + $0x1a0] sm:%s216]
                %278 = vst [vmem:[%s224 + $0xd0] sm:%s216] %v277
                %v279 = vld [vmem:[%s223 + $0x1b0] sm:%s216]
                %280 = vst [vmem:[%s224 + $0xd8] sm:%s216] %v279
                %v281 = vld [vmem:[%s223 + $0x1c0] sm:%s216]
                %282 = vst [vmem:[%s224 + $0xe0] sm:%s216] %v281
                %v283 = vld [vmem:[%s223 + $0x1d0] sm:%s216]
                %284 = vst [vmem:[%s224 + $0xe8] sm:%s216] %v283
                %v285 = vld [vmem:[%s223 + $0x1e0] sm:%s216]
                %286 = vst [vmem:[%s224 + $0xf0] sm:%s216] %v285
                %v287 = vld [vmem:[%s223 + $0x1f0] sm:%s216]
                %288 = vst [vmem:[%s224 + $0xf8] sm:%s216] %v287
                %v289 = vld [vmem:[%s223 + $0x200] sm:%s216]
                %290 = vst [vmem:[%s224 + $0x100] sm:%s216] %v289
                %v291 = vld [vmem:[%s223 + $0x210] sm:%s216]
                %292 = vst [vmem:[%s224 + $0x108] sm:%s216] %v291
                %v293 = vld [vmem:[%s223 + $0x220] sm:%s216]
                %294 = vst [vmem:[%s224 + $0x110] sm:%s216] %v293
                %v295 = vld [vmem:[%s223 + $0x230] sm:%s216]
                %296 = vst [vmem:[%s224 + $0x118] sm:%s216] %v295
                %v297 = vld [vmem:[%s223 + $0x240] sm:%s216]
                %298 = vst [vmem:[%s224 + $0x120] sm:%s216] %v297
                %v299 = vld [vmem:[%s223 + $0x250] sm:%s216]
                %300 = vst [vmem:[%s224 + $0x128] sm:%s216] %v299
                %v301 = vld [vmem:[%s223 + $0x260] sm:%s216]
                %302 = vst [vmem:[%s224 + $0x130] sm:%s216] %v301
                %v303 = vld [vmem:[%s223 + $0x270] sm:%s216]
                %304 = vst [vmem:[%s224 + $0x138] sm:%s216] %v303
                %v305 = vld [vmem:[%s223 + $0x280] sm:%s216]
                %306 = vst [vmem:[%s224 + $0x140] sm:%s216] %v305
                %v307 = vld [vmem:[%s223 + $0x290] sm:%s216]
                %308 = vst [vmem:[%s224 + $0x148] sm:%s216] %v307
                %v309 = vld [vmem:[%s223 + $0x2a0] sm:%s216]
                %310 = vst [vmem:[%s224 + $0x150] sm:%s216] %v309
                %v311 = vld [vmem:[%s223 + $0x2b0] sm:%s216]
                %312 = vst [vmem:[%s224 + $0x158] sm:%s216] %v311
                %v313 = vld [vmem:[%s223 + $0x2c0] sm:%s216]
                %314 = vst [vmem:[%s224 + $0x160] sm:%s216] %v313
                %v315 = vld [vmem:[%s223 + $0x2d0] sm:%s216]
                %316 = vst [vmem:[%s224 + $0x168] sm:%s216] %v315
                %v317 = vld [vmem:[%s223 + $0x2e0] sm:%s216]
                %318 = vst [vmem:[%s224 + $0x170] sm:%s216] %v317
                %v319 = vld [vmem:[%s223 + $0x2f0] sm:%s216]
                %320 = vst [vmem:[%s224 + $0x178] sm:%s216] %v319
                %v321 = vld [vmem:[%s223 + $0x300] sm:%s216]
                %322 = vst [vmem:[%s224 + $0x180] sm:%s216] %v321
                %v323 = vld [vmem:[%s223 + $0x310] sm:%s216]
                %324 = vst [vmem:[%s224 + $0x188] sm:%s216] %v323
                %v325 = vld [vmem:[%s223 + $0x320] sm:%s216]
                %326 = vst [vmem:[%s224 + $0x190] sm:%s216] %v325
                %v327 = vld [vmem:[%s223 + $0x330] sm:%s216]
                %328 = vst [vmem:[%s224 + $0x198] sm:%s216] %v327
                %v329 = vld [vmem:[%s223 + $0x340] sm:%s216]
                %330 = vst [vmem:[%s224 + $0x1a0] sm:%s216] %v329
                %v331 = vld [vmem:[%s223 + $0x350] sm:%s216]
                %332 = vst [vmem:[%s224 + $0x1a8] sm:%s216] %v331
                %v333 = vld [vmem:[%s223 + $0x360] sm:%s216]
                %334 = vst [vmem:[%s224 + $0x1b0] sm:%s216] %v333
                %v335 = vld [vmem:[%s223 + $0x370] sm:%s216]
                %336 = vst [vmem:[%s224 + $0x1b8] sm:%s216] %v335
                %v337 = vld [vmem:[%s223 + $0x380] sm:%s216]
                %338 = vst [vmem:[%s224 + $0x1c0] sm:%s216] %v337
                %v339 = vld [vmem:[%s223 + $0x390] sm:%s216]
                %340 = vst [vmem:[%s224 + $0x1c8] sm:%s216] %v339
                %v341 = vld [vmem:[%s223 + $0x3a0] sm:%s216]
                %342 = vst [vmem:[%s224 + $0x1d0] sm:%s216] %v341
                %v343 = vld [vmem:[%s223 + $0x3b0] sm:%s216]
                %344 = vst [vmem:[%s224 + $0x1d8] sm:%s216] %v343
                %v345 = vld [vmem:[%s223 + $0x3c0] sm:%s216]
                %346 = vst [vmem:[%s224 + $0x1e0] sm:%s216] %v345
                %v347 = vld [vmem:[%s223 + $0x3d0] sm:%s216]
                %348 = vst [vmem:[%s224 + $0x1e8] sm:%s216] %v347
                %v349 = vld [vmem:[%s223 + $0x3e0] sm:%s216]
                %350 = vst [vmem:[%s224 + $0x1f0] sm:%s216] %v349
                %v351 = vld [vmem:[%s223 + $0x3f0] sm:%s216]
                %352 = vst [vmem:[%s224 + $0x1f8] sm:%s216] %v351
                %v353 = vld [vmem:[%s223 + $0x400] sm:%s216]
                %354 = vst [vmem:[%s224 + $0x200] sm:%s216] %v353
                %v355 = vld [vmem:[%s223 + $0x410] sm:%s216]
                %356 = vst [vmem:[%s224 + $0x208] sm:%s216] %v355
                %v357 = vld [vmem:[%s223 + $0x420] sm:%s216]
                %358 = vst [vmem:[%s224 + $0x210] sm:%s216] %v357
                %v359 = vld [vmem:[%s223 + $0x430] sm:%s216]
                %360 = vst [vmem:[%s224 + $0x218] sm:%s216] %v359
                %v361 = vld [vmem:[%s223 + $0x440] sm:%s216]
                %362 = vst [vmem:[%s224 + $0x220] sm:%s216] %v361
                %v363 = vld [vmem:[%s223 + $0x450] sm:%s216]
                %364 = vst [vmem:[%s224 + $0x228] sm:%s216] %v363
                %v365 = vld [vmem:[%s223 + $0x460] sm:%s216]
                %366 = vst [vmem:[%s224 + $0x230] sm:%s216] %v365
                %v367 = vld [vmem:[%s223 + $0x470] sm:%s216]
                %368 = vst [vmem:[%s224 + $0x238] sm:%s216] %v367
                %v369 = vld [vmem:[%s223 + $0x480] sm:%s216]
                %370 = vst [vmem:[%s224 + $0x240] sm:%s216] %v369
                %v371 = vld [vmem:[%s223 + $0x490] sm:%s216]
                %372 = vst [vmem:[%s224 + $0x248] sm:%s216] %v371
                %v373 = vld [vmem:[%s223 + $0x4a0] sm:%s216]
                %374 = vst [vmem:[%s224 + $0x250] sm:%s216] %v373
                %v375 = vld [vmem:[%s223 + $0x4b0] sm:%s216]
                %376 = vst [vmem:[%s224 + $0x258] sm:%s216] %v375
                %v377 = vld [vmem:[%s223 + $0x4c0] sm:%s216]
                %378 = vst [vmem:[%s224 + $0x260] sm:%s216] %v377
                %v379 = vld [vmem:[%s223 + $0x4d0] sm:%s216]
                %380 = vst [vmem:[%s224 + $0x268] sm:%s216] %v379
                %v381 = vld [vmem:[%s223 + $0x4e0] sm:%s216]
                %382 = vst [vmem:[%s224 + $0x270] sm:%s216] %v381
                %v383 = vld [vmem:[%s223 + $0x4f0] sm:%s216]
                %384 = vst [vmem:[%s224 + $0x278] sm:%s216] %v383
                %v385 = vld [vmem:[%s223 + $0x500] sm:%s216]
                %386 = vst [vmem:[%s224 + $0x280] sm:%s216] %v385
                %v387 = vld [vmem:[%s223 + $0x510] sm:%s216]
                %388 = vst [vmem:[%s224 + $0x288] sm:%s216] %v387
                %v389 = vld [vmem:[%s223 + $0x520] sm:%s216]
                %390 = vst [vmem:[%s224 + $0x290] sm:%s216] %v389
                %v391 = vld [vmem:[%s223 + $0x530] sm:%s216]
                %392 = vst [vmem:[%s224 + $0x298] sm:%s216] %v391
                %v393 = vld [vmem:[%s223 + $0x540] sm:%s216]
                %394 = vst [vmem:[%s224 + $0x2a0] sm:%s216] %v393
                %v395 = vld [vmem:[%s223 + $0x550] sm:%s216]
                %396 = vst [vmem:[%s224 + $0x2a8] sm:%s216] %v395
                %v397 = vld [vmem:[%s223 + $0x560] sm:%s216]
                %398 = vst [vmem:[%s224 + $0x2b0] sm:%s216] %v397
                %v399 = vld [vmem:[%s223 + $0x570] sm:%s216]
                %400 = vst [vmem:[%s224 + $0x2b8] sm:%s216] %v399
                %v401 = vld [vmem:[%s223 + $0x580] sm:%s216]
                %402 = vst [vmem:[%s224 + $0x2c0] sm:%s216] %v401
                %v403 = vld [vmem:[%s223 + $0x590] sm:%s216]
                %404 = vst [vmem:[%s224 + $0x2c8] sm:%s216] %v403
                %v405 = vld [vmem:[%s223 + $0x5a0] sm:%s216]
                %406 = vst [vmem:[%s224 + $0x2d0] sm:%s216] %v405
                %v407 = vld [vmem:[%s223 + $0x5b0] sm:%s216]
                %408 = vst [vmem:[%s224 + $0x2d8] sm:%s216] %v407
                %v409 = vld [vmem:[%s223 + $0x5c0] sm:%s216]
                %410 = vst [vmem:[%s224 + $0x2e0] sm:%s216] %v409
                %v411 = vld [vmem:[%s223 + $0x5d0] sm:%s216]
                %412 = vst [vmem:[%s224 + $0x2e8] sm:%s216] %v411
                %v413 = vld [vmem:[%s223 + $0x5e0] sm:%s216]
                %414 = vst [vmem:[%s224 + $0x2f0] sm:%s216] %v413
                %v415 = vld [vmem:[%s223 + $0x5f0] sm:%s216]
                %416 = vst [vmem:[%s224 + $0x2f8] sm:%s216] %v415
              $region41: #{resnet_forward.23} parent=35 // loop_footer
                %s222 = sadd.s32 1, %s218
              $region42: #{resnet_forward.23} parent=35 // loop_footer_branch
                %217 = sbr.rel target = $region38
              $region43: #{resnet_forward.23} parent=35 // loop_exit
                _
            $region36: #{resnet_forward.23} parent=27 // pred_fallthru
              _
          $region28: #{resnet_forward.23} parent=23 // pred_fallthru
            _
          %621 = vnop
        $region24: #{resnet_forward.23} parent=15 // pred_fallthru
          _
        // Predicated region
        $region59: #{resnet_forward.23} parent=15 // pred_check
          %p622 = pneg %p105
        $region60: #{resnet_forward.23} parent=15 // pred_check_branch
          %624 = sbr.rel (%p622) target = $region62
        $region61: #{resnet_forward.23} parent=15 // pred_region
          %s625 = smul.u32 2, %s18
          %p626 = scmp.lt.s32.totalorder %s625, 3
          %s627 = scalar_select %p626, %s625, 3
          %s628 = scalar_lea.vmem %s2, %s627
          %s629 = smul.u32 2, %s18
        $region62: #{resnet_forward.23} parent=15 // pred_fallthru
          _
        // Predicated region
        $region63: #{resnet_forward.23} parent=15 // pred_check
          %p630 = pneg %p131
        $region64: #{resnet_forward.23} parent=15 // pred_check_branch
          %632 = sbr.rel (%p630) target = $region66
        $region65: #{resnet_forward.23} parent=15 // pred_region
          %s633 = smul.u32 2, %s18
          %p634 = scmp.lt.s32.totalorder %s633, 3
          %s635 = scalar_select %p634, %s633, 3
          %s636 = scalar_lea.vmem %s3, %s635
          %s637 = smul.u32 2, %s18
        $region66: #{resnet_forward.23} parent=15 // pred_fallthru
          _
      $region16: #{resnet_forward.23} parent=5 // pred_fallthru
        _
      %p638 = scmp.le.s32.totalorder 1, %s10
      %p639 = scmp.lt.s32.totalorder %s10, 7
      %p640 = pnand %p638, %p639
      %p641 = pneg %p640
      // Predicated region
      $region67: #{resnet_forward.23} parent=5 // pred_check
        _
      $region68: #{resnet_forward.23} parent=5 // pred_check_branch
        %643 = sbr.rel (%p640) target = $region70
      $region69: #{resnet_forward.23} parent=5 // pred_region
        %s644 = ssub.s32 %s10, 1
        %s645 = sand.u32 %s72, 1
        %s646 = sand.u32 %s72, 1
        %s647 = smul.addr %s646, 768
        %s648 = scalar_lea.vmem [#allocation2], %s647
        // Predicated region
        $region71: #{resnet_forward.23} parent=69 // pred_check
          %p649 = pneg %p85
        $region72: #{resnet_forward.23} parent=69 // pred_check_branch
          %651 = sbr.rel (%p649) target = $region74
        $region73: #{resnet_forward.23} parent=69 // pred_region
          _
        $region74: #{resnet_forward.23} parent=69 // pred_fallthru
          _
        %s652 = smul.u32 6, %s22
        %p653 = scmp.lt.s32.totalorder %s20, 0
        %s654 = scalar_select %p653, %s20, 0
        %p655 = scmp.lt.s32.totalorder %s652, 17
        %s656 = scalar_select %p655, %s652, 17
        %s657 = smul.addr %s654, 18
        %s658 = sadd.s32 %s656, %s657
        %s659 = scalar_lea.vmem %s0, %s658
        %p660 = pneg %p57
        %p661 = pneg %p54
        %s662 = sand.u32 %s72, 1
        %s663 = sand.u32 %s72, 1
        %s664 = smul.addr %s663, 768
        %s665 = scalar_lea.vmem [#allocation2], %s664
        %p666 = pneg %p85
        %p667 = pneg %p82
        %s668 = smul.u32 2, %s21
        %p669 = scmp.lt.s32.totalorder %s668, 3
        %s670 = scalar_select %p669, %s668, 3
        %s671 = scalar_lea.vmem %s2, %s670
        %p672 = pneg %p111
        %p673 = pneg %p108
        %s674 = smul.u32 2, %s21
        %p675 = scmp.lt.s32.totalorder %s674, 3
        %s676 = scalar_select %p675, %s674, 3
        %s677 = scalar_lea.vmem %s3, %s676
        %p678 = pneg %p137
        %p679 = pneg %p134
        %p680 = pneg %p165
        %p681 = pneg %p162
        %s682 = smul.u32 2, %s21
        %p683 = scmp.lt.s32.totalorder %s20, 0
        %s684 = scalar_select %p683, %s20, 0
        %p685 = scmp.lt.s32.totalorder %s682, 3
        %s686 = scalar_select %p685, %s682, 3
        %s687 = smul.addr %s684, 4
        %s688 = sadd.s32 %s686, %s687
        %s689 = smul.addr %s688, 2
        %s690 = scalar_lea.vmem %s4, %s689
        %s691 = smul.u32 6, %s22
        %p692 = scmp.lt.s32.totalorder %s20, 0
        %s693 = scalar_select %p692, %s20, 0
        %p694 = scmp.lt.s32.totalorder %s691, 17
        %s695 = scalar_select %p694, %s691, 17
        %s696 = smul.addr %s693, 18
        %s697 = sadd.s32 %s695, %s696
        %s698 = scalar_lea.vmem %s0, %s697
        %s699 = smul.u32 6, %s22
        %s700 = smul.u32 96, %s22
        %s701 = smul.u32 2, %s21
        %s702 = smul.u32 2, %s21
        %p703 = scmp.lt.s32.totalorder %s702, 3
        %s704 = scalar_select %p703, %s702, 3
        %s705 = scalar_lea.vmem %s2, %s704
        %s706 = smul.u32 2, %s21
        %s707 = smul.u32 2, %s21
        %p708 = scmp.lt.s32.totalorder %s707, 3
        %s709 = scalar_select %p708, %s707, 3
        %s710 = scalar_lea.vmem %s3, %s709
        %s711 = smul.u32 2, %s21
        %s712 = smul.u32 2, %s21
        %p713 = scmp.lt.s32.totalorder %s20, 0
        %s714 = scalar_select %p713, %s20, 0
        %p715 = scmp.lt.s32.totalorder %s712, 3
        %s716 = scalar_select %p715, %s712, 3
        %s717 = smul.addr %s714, 4
        %s718 = sadd.s32 %s716, %s717
        %s719 = smul.addr %s718, 2
        %s720 = scalar_lea.vmem %s4, %s719
        %s721 = smul.u32 2, %s21
        %v722 = vld [vmem:[%s698] sm:$0x3f]
        %v723 = vld [vmem:[%s648] sm:$0xff]
        %v724 = vld [vmem:[%s648 + $0x8] sm:$0xff]
        %v725 = vld [vmem:[%s648 + $0x10] sm:$0xff]
        %v726 = vld [vmem:[%s648 + $0x18] sm:$0xff]
        %v727 = vld [vmem:[%s648 + $0x20] sm:$0xff]
        %v728 = vld [vmem:[%s648 + $0x28] sm:$0xff]
        %v729 = vld [vmem:[%s648 + $0x30] sm:$0xff]
        %v730 = vld [vmem:[%s648 + $0x38] sm:$0xff]
        %v731 = vld [vmem:[%s648 + $0x40] sm:$0xff]
        %v732 = vld [vmem:[%s648 + $0x48] sm:$0xff]
        %v733 = vld [vmem:[%s648 + $0x50] sm:$0xff]
        %v734 = vld [vmem:[%s648 + $0x58] sm:$0xff]
        %v735 = vld [vmem:[%s648 + $0x60] sm:$0xff]
        %v736 = vld [vmem:[%s648 + $0x68] sm:$0xff]
        %v737 = vld [vmem:[%s648 + $0x70] sm:$0xff]
        %v738 = vld [vmem:[%s648 + $0x78] sm:$0xff]
        %v739 = vld [vmem:[%s648 + $0x80] sm:$0xff]
        %v740 = vld [vmem:[%s648 + $0x88] sm:$0xff]
        %v741 = vld [vmem:[%s648 + $0x90] sm:$0xff]
        %v742 = vld [vmem:[%s648 + $0x98] sm:$0xff]
        %v743 = vld [vmem:[%s648 + $0xa0] sm:$0xff]
        %v744 = vld [vmem:[%s648 + $0xa8] sm:$0xff]
        %v745 = vld [vmem:[%s648 + $0xb0] sm:$0xff]
        %v746 = vld [vmem:[%s648 + $0xb8] sm:$0xff]
        %v747 = vld [vmem:[%s648 + $0xc0] sm:$0xff]
        %v748 = vld [vmem:[%s648 + $0xc8] sm:$0xff]
        %v749 = vld [vmem:[%s648 + $0xd0] sm:$0xff]
        %v750 = vld [vmem:[%s648 + $0xd8] sm:$0xff]
        %v751 = vld [vmem:[%s648 + $0xe0] sm:$0xff]
        %v752 = vld [vmem:[%s648 + $0xe8] sm:$0xff]
        %v753 = vld [vmem:[%s648 + $0xf0] sm:$0xff]
        %v754 = vld [vmem:[%s648 + $0xf8] sm:$0xff]
        %v755 = vld [vmem:[%s648 + $0x100] sm:$0xff]
        %v756 = vld [vmem:[%s648 + $0x108] sm:$0xff]
        %v757 = vld [vmem:[%s648 + $0x110] sm:$0xff]
        %v758 = vld [vmem:[%s648 + $0x118] sm:$0xff]
        %v759 = vld [vmem:[%s648 + $0x120] sm:$0xff]
        %v760 = vld [vmem:[%s648 + $0x128] sm:$0xff]
        %v761 = vld [vmem:[%s648 + $0x130] sm:$0xff]
        %v762 = vld [vmem:[%s648 + $0x138] sm:$0xff]
        %v763 = vld [vmem:[%s648 + $0x140] sm:$0xff]
        %v764 = vld [vmem:[%s648 + $0x148] sm:$0xff]
        %v765 = vld [vmem:[%s648 + $0x150] sm:$0xff]
        %v766 = vld [vmem:[%s648 + $0x158] sm:$0xff]
        %v767 = vld [vmem:[%s648 + $0x160] sm:$0xff]
        %v768 = vld [vmem:[%s648 + $0x168] sm:$0xff]
        %v769 = vld [vmem:[%s648 + $0x170] sm:$0xff]
        %v770 = vld [vmem:[%s648 + $0x178] sm:$0xff]
        %v771 = vld [vmem:[%s648 + $0x180] sm:$0xff]
        %v772 = vld [vmem:[%s648 + $0x188] sm:$0xff]
        %v773 = vld [vmem:[%s648 + $0x190] sm:$0xff]
        %v774 = vld [vmem:[%s648 + $0x198] sm:$0xff]
        %v775 = vld [vmem:[%s648 + $0x1a0] sm:$0xff]
        %v776 = vld [vmem:[%s648 + $0x1a8] sm:$0xff]
        %v777 = vld [vmem:[%s648 + $0x1b0] sm:$0xff]
        %v778 = vld [vmem:[%s648 + $0x1b8] sm:$0xff]
        %v779 = vld [vmem:[%s648 + $0x1c0] sm:$0xff]
        %v780 = vld [vmem:[%s648 + $0x1c8] sm:$0xff]
        %v781 = vld [vmem:[%s648 + $0x1d0] sm:$0xff]
        %v782 = vld [vmem:[%s648 + $0x1d8] sm:$0xff]
        %v783 = vld [vmem:[%s648 + $0x1e0] sm:$0xff]
        %v784 = vld [vmem:[%s648 + $0x1e8] sm:$0xff]
        %v785 = vld [vmem:[%s648 + $0x1f0] sm:$0xff]
        %v786 = vld [vmem:[%s648 + $0x1f8] sm:$0xff]
        %v787 = vld [vmem:[%s648 + $0x200] sm:$0xff]
        %v788 = vld [vmem:[%s648 + $0x208] sm:$0xff]
        %v789 = vld [vmem:[%s648 + $0x210] sm:$0xff]
        %v790 = vld [vmem:[%s648 + $0x218] sm:$0xff]
        %v791 = vld [vmem:[%s648 + $0x220] sm:$0xff]
        %v792 = vld [vmem:[%s648 + $0x228] sm:$0xff]
        %v793 = vld [vmem:[%s648 + $0x230] sm:$0xff]
        %v794 = vld [vmem:[%s648 + $0x238] sm:$0xff]
        %v795 = vld [vmem:[%s648 + $0x240] sm:$0xff]
        %v796 = vld [vmem:[%s648 + $0x248] sm:$0xff]
        %v797 = vld [vmem:[%s648 + $0x250] sm:$0xff]
        %v798 = vld [vmem:[%s648 + $0x258] sm:$0xff]
        %v799 = vld [vmem:[%s648 + $0x260] sm:$0xff]
        %v800 = vld [vmem:[%s648 + $0x268] sm:$0xff]
        %v801 = vld [vmem:[%s648 + $0x270] sm:$0xff]
        %v802 = vld [vmem:[%s648 + $0x278] sm:$0xff]
        %v803 = vld [vmem:[%s648 + $0x280] sm:$0xff]
        %v804 = vld [vmem:[%s648 + $0x288] sm:$0xff]
        %v805 = vld [vmem:[%s648 + $0x290] sm:$0xff]
        %v806 = vld [vmem:[%s648 + $0x298] sm:$0xff]
        %v807 = vld [vmem:[%s648 + $0x2a0] sm:$0xff]
        %v808 = vld [vmem:[%s648 + $0x2a8] sm:$0xff]
        %v809 = vld [vmem:[%s648 + $0x2b0] sm:$0xff]
        %v810 = vld [vmem:[%s648 + $0x2b8] sm:$0xff]
        %v811 = vld [vmem:[%s648 + $0x2c0] sm:$0xff]
        %v812 = vld [vmem:[%s648 + $0x2c8] sm:$0xff]
        %v813 = vld [vmem:[%s648 + $0x2d0] sm:$0xff]
        %v814 = vld [vmem:[%s648 + $0x2d8] sm:$0xff]
        %v815 = vld [vmem:[%s648 + $0x2e0] sm:$0xff]
        %v816 = vld [vmem:[%s648 + $0x2e8] sm:$0xff]
        %v817 = vld [vmem:[%s648 + $0x2f0] sm:$0xff]
        %v818 = vld [vmem:[%s648 + $0x2f8] sm:$0xff]
        %820 = vst [vmem:[#allocation1] ss:$9 sm:$0xff] %v722
        %v821 = vld [vmem:[#allocation1] sm:$0xff]
        %v822 = vld [vmem:[#allocation1 + $0x9] sm:$0xff]
        %v823 = vld [vmem:[#allocation1 + $0x12] sm:$0xff]
        %v824 = vld [vmem:[#allocation1 + $0x1b] sm:$0xff]
        %v825 = vld [vmem:[#allocation1 + $0x24] sm:$0xff]
        %v826 = vld [vmem:[#allocation1 + $0x2d] sm:$0xff]
        %v929 = vunpack.c.l.b16 %v723
        %v930 = vunpack.c.h.b16 %v723
        %v931 = vunpack.c.l.b16 %v724
        %v932 = vunpack.c.h.b16 %v724
        %v933 = vunpack.c.l.b16 %v725
        %v934 = vunpack.c.h.b16 %v725
        %v935 = vunpack.c.l.b16 %v726
        %v936 = vunpack.c.h.b16 %v726
        %v937 = vunpack.c.l.b16 %v727
        %v938 = vunpack.c.h.b16 %v727
        %v939 = vunpack.c.l.b16 %v728
        %v940 = vunpack.c.h.b16 %v728
        %v941 = vunpack.c.l.b16 %v729
        %v942 = vunpack.c.h.b16 %v729
        %v943 = vunpack.c.l.b16 %v730
        %v944 = vunpack.c.h.b16 %v730
        %v945 = vunpack.c.l.b16 %v731
        %v946 = vunpack.c.h.b16 %v731
        %v947 = vunpack.c.l.b16 %v732
        %v948 = vunpack.c.h.b16 %v732
        %v949 = vunpack.c.l.b16 %v733
        %v950 = vunpack.c.h.b16 %v733
        %v951 = vunpack.c.l.b16 %v734
        %v952 = vunpack.c.h.b16 %v734
        %v953 = vunpack.c.l.b16 %v735
        %v954 = vunpack.c.h.b16 %v735
        %v955 = vunpack.c.l.b16 %v736
        %v956 = vunpack.c.h.b16 %v736
        %v957 = vunpack.c.l.b16 %v737
        %v958 = vunpack.c.h.b16 %v737
        %v959 = vunpack.c.l.b16 %v738
        %v960 = vunpack.c.h.b16 %v738
        %v961 = vunpack.c.l.b16 %v739
        %v962 = vunpack.c.h.b16 %v739
        %v963 = vunpack.c.l.b16 %v740
        %v964 = vunpack.c.h.b16 %v740
        %v965 = vunpack.c.l.b16 %v741
        %v966 = vunpack.c.h.b16 %v741
        %v967 = vunpack.c.l.b16 %v742
        %v968 = vunpack.c.h.b16 %v742
        %v969 = vunpack.c.l.b16 %v743
        %v970 = vunpack.c.h.b16 %v743
        %v971 = vunpack.c.l.b16 %v744
        %v972 = vunpack.c.h.b16 %v744
        %v973 = vunpack.c.l.b16 %v745
        %v974 = vunpack.c.h.b16 %v745
        %v975 = vunpack.c.l.b16 %v746
        %v976 = vunpack.c.h.b16 %v746
        %v977 = vunpack.c.l.b16 %v747
        %v978 = vunpack.c.h.b16 %v747
        %v979 = vunpack.c.l.b16 %v748
        %v980 = vunpack.c.h.b16 %v748
        %v981 = vunpack.c.l.b16 %v749
        %v982 = vunpack.c.h.b16 %v749
        %v983 = vunpack.c.l.b16 %v750
        %v984 = vunpack.c.h.b16 %v750
        %v985 = vunpack.c.l.b16 %v751
        %v986 = vunpack.c.h.b16 %v751
        %v987 = vunpack.c.l.b16 %v752
        %v988 = vunpack.c.h.b16 %v752
        %v989 = vunpack.c.l.b16 %v753
        %v990 = vunpack.c.h.b16 %v753
        %v991 = vunpack.c.l.b16 %v754
        %v992 = vunpack.c.h.b16 %v754
        %v993 = vunpack.c.l.b16 %v755
        %v994 = vunpack.c.h.b16 %v755
        %v995 = vunpack.c.l.b16 %v756
        %v996 = vunpack.c.h.b16 %v756
        %v997 = vunpack.c.l.b16 %v757
        %v998 = vunpack.c.h.b16 %v757
        %v999 = vunpack.c.l.b16 %v758
        %v1000 = vunpack.c.h.b16 %v758
        %v1001 = vunpack.c.l.b16 %v759
        %v1002 = vunpack.c.h.b16 %v759
        %v1003 = vunpack.c.l.b16 %v760
        %v1004 = vunpack.c.h.b16 %v760
        %v1005 = vunpack.c.l.b16 %v761
        %v1006 = vunpack.c.h.b16 %v761
        %v1007 = vunpack.c.l.b16 %v762
        %v1008 = vunpack.c.h.b16 %v762
        %v1009 = vunpack.c.l.b16 %v763
        %v1010 = vunpack.c.h.b16 %v763
        %v1011 = vunpack.c.l.b16 %v764
        %v1012 = vunpack.c.h.b16 %v764
        %v1013 = vunpack.c.l.b16 %v765
        %v1014 = vunpack.c.h.b16 %v765
        %v1015 = vunpack.c.l.b16 %v766
        %v1016 = vunpack.c.h.b16 %v766
        %v1017 = vunpack.c.l.b16 %v767
        %v1018 = vunpack.c.h.b16 %v767
        %v1019 = vunpack.c.l.b16 %v768
        %v1020 = vunpack.c.h.b16 %v768
        %v1021 = vunpack.c.l.b16 %v769
        %v1022 = vunpack.c.h.b16 %v769
        %v1023 = vunpack.c.l.b16 %v770
        %v1024 = vunpack.c.h.b16 %v770
        %v1025 = vunpack.c.l.b16 %v771
        %v1026 = vunpack.c.h.b16 %v771
        %v1027 = vunpack.c.l.b16 %v772
        %v1028 = vunpack.c.h.b16 %v772
        %v1029 = vunpack.c.l.b16 %v773
        %v1030 = vunpack.c.h.b16 %v773
        %v1031 = vunpack.c.l.b16 %v774
        %v1032 = vunpack.c.h.b16 %v774
        %v1033 = vunpack.c.l.b16 %v775
        %v1034 = vunpack.c.h.b16 %v775
        %v1035 = vunpack.c.l.b16 %v776
        %v1036 = vunpack.c.h.b16 %v776
        %v1037 = vunpack.c.l.b16 %v777
        %v1038 = vunpack.c.h.b16 %v777
        %v1039 = vunpack.c.l.b16 %v778
        %v1040 = vunpack.c.h.b16 %v778
        %v1041 = vunpack.c.l.b16 %v779
        %v1042 = vunpack.c.h.b16 %v779
        %v1043 = vunpack.c.l.b16 %v780
        %v1044 = vunpack.c.h.b16 %v780
        %v1045 = vunpack.c.l.b16 %v781
        %v1046 = vunpack.c.h.b16 %v781
        %v1047 = vunpack.c.l.b16 %v782
        %v1048 = vunpack.c.h.b16 %v782
        %v1049 = vunpack.c.l.b16 %v783
        %v1050 = vunpack.c.h.b16 %v783
        %v1051 = vunpack.c.l.b16 %v784
        %v1052 = vunpack.c.h.b16 %v784
        %v1053 = vunpack.c.l.b16 %v785
        %v1054 = vunpack.c.h.b16 %v785
        %v1055 = vunpack.c.l.b16 %v786
        %v1056 = vunpack.c.h.b16 %v786
        %v1057 = vunpack.c.l.b16 %v787
        %v1058 = vunpack.c.h.b16 %v787
        %v1059 = vunpack.c.l.b16 %v788
        %v1060 = vunpack.c.h.b16 %v788
        %v1061 = vunpack.c.l.b16 %v789
        %v1062 = vunpack.c.h.b16 %v789
        %v1063 = vunpack.c.l.b16 %v790
        %v1064 = vunpack.c.h.b16 %v790
        %v1065 = vunpack.c.l.b16 %v791
        %v1066 = vunpack.c.h.b16 %v791
        %v1067 = vunpack.c.l.b16 %v792
        %v1068 = vunpack.c.h.b16 %v792
        %v1069 = vunpack.c.l.b16 %v793
        %v1070 = vunpack.c.h.b16 %v793
        %v1071 = vunpack.c.l.b16 %v794
        %v1072 = vunpack.c.h.b16 %v794
        %v1073 = vunpack.c.l.b16 %v795
        %v1074 = vunpack.c.h.b16 %v795
        %v1075 = vunpack.c.l.b16 %v796
        %v1076 = vunpack.c.h.b16 %v796
        %v1077 = vunpack.c.l.b16 %v797
        %v1078 = vunpack.c.h.b16 %v797
        %v1079 = vunpack.c.l.b16 %v798
        %v1080 = vunpack.c.h.b16 %v798
        %v1081 = vunpack.c.l.b16 %v799
        %v1082 = vunpack.c.h.b16 %v799
        %v1083 = vunpack.c.l.b16 %v800
        %v1084 = vunpack.c.h.b16 %v800
        %v1085 = vunpack.c.l.b16 %v801
        %v1086 = vunpack.c.h.b16 %v801
        %v1087 = vunpack.c.l.b16 %v802
        %v1088 = vunpack.c.h.b16 %v802
        %v1089 = vunpack.c.l.b16 %v803
        %v1090 = vunpack.c.h.b16 %v803
        %v1091 = vunpack.c.l.b16 %v804
        %v1092 = vunpack.c.h.b16 %v804
        %v1093 = vunpack.c.l.b16 %v805
        %v1094 = vunpack.c.h.b16 %v805
        %v1095 = vunpack.c.l.b16 %v806
        %v1096 = vunpack.c.h.b16 %v806
        %v1097 = vunpack.c.l.b16 %v807
        %v1098 = vunpack.c.h.b16 %v807
        %v1099 = vunpack.c.l.b16 %v808
        %v1100 = vunpack.c.h.b16 %v808
        %v1101 = vunpack.c.l.b16 %v809
        %v1102 = vunpack.c.h.b16 %v809
        %v1103 = vunpack.c.l.b16 %v810
        %v1104 = vunpack.c.h.b16 %v810
        %v1105 = vunpack.c.l.b16 %v811
        %v1106 = vunpack.c.h.b16 %v811
        %v1107 = vunpack.c.l.b16 %v812
        %v1108 = vunpack.c.h.b16 %v812
        %v1109 = vunpack.c.l.b16 %v813
        %v1110 = vunpack.c.h.b16 %v813
        %v1111 = vunpack.c.l.b16 %v814
        %v1112 = vunpack.c.h.b16 %v814
        %v1113 = vunpack.c.l.b16 %v815
        %v1114 = vunpack.c.h.b16 %v815
        %v1115 = vunpack.c.l.b16 %v816
        %v1116 = vunpack.c.h.b16 %v816
        %v1117 = vunpack.c.l.b16 %v817
        %v1118 = vunpack.c.h.b16 %v817
        %v1119 = vunpack.c.l.b16 %v818
        %v1120 = vunpack.c.h.b16 %v818
        %v1121 = vpack.c.b16 %v931, %v929
        %v1122 = vpack.c.b16 %v932, %v930
        %v1123 = vpack.c.b16 %v935, %v933
        %v1124 = vpack.c.b16 %v936, %v934
        %v1125 = vpack.c.b16 %v939, %v937
        %v1126 = vpack.c.b16 %v940, %v938
        %v1127 = vpack.c.b16 %v943, %v941
        %v1128 = vpack.c.b16 %v944, %v942
        %v1129 = vpack.c.b16 %v947, %v945
        %v1130 = vpack.c.b16 %v948, %v946
        %v1131 = vpack.c.b16 %v951, %v949
        %v1132 = vpack.c.b16 %v952, %v950
        %v1133 = vpack.c.b16 %v955, %v953
        %v1134 = vpack.c.b16 %v956, %v954
        %v1135 = vpack.c.b16 %v959, %v957
        %v1136 = vpack.c.b16 %v960, %v958
        %v1137 = vpack.c.b16 %v963, %v961
        %v1138 = vpack.c.b16 %v964, %v962
        %v1139 = vpack.c.b16 %v967, %v965
        %v1140 = vpack.c.b16 %v968, %v966
        %v1141 = vpack.c.b16 %v971, %v969
        %v1142 = vpack.c.b16 %v972, %v970
        %v1143 = vpack.c.b16 %v975, %v973
        %v1144 = vpack.c.b16 %v976, %v974
        %v1145 = vpack.c.b16 %v979, %v977
        %v1146 = vpack.c.b16 %v980, %v978
        %v1147 = vpack.c.b16 %v983, %v981
        %v1148 = vpack.c.b16 %v984, %v982
        %v1149 = vpack.c.b16 %v987, %v985
        %v1150 = vpack.c.b16 %v988, %v986
        %v1151 = vpack.c.b16 %v991, %v989
        %v1152 = vpack.c.b16 %v992, %v990
        %v1153 = vpack.c.b16 %v995, %v993
        %v1154 = vpack.c.b16 %v996, %v994
        %v1155 = vpack.c.b16 %v999, %v997
        %v1156 = vpack.c.b16 %v1000, %v998
        %v1157 = vpack.c.b16 %v1003, %v1001
        %v1158 = vpack.c.b16 %v1004, %v1002
        %v1159 = vpack.c.b16 %v1007, %v1005
        %v1160 = vpack.c.b16 %v1008, %v1006
        %v1161 = vpack.c.b16 %v1011, %v1009
        %v1162 = vpack.c.b16 %v1012, %v1010
        %v1163 = vpack.c.b16 %v1015, %v1013
        %v1164 = vpack.c.b16 %v1016, %v1014
        %v1165 = vpack.c.b16 %v1019, %v1017
        %v1166 = vpack.c.b16 %v1020, %v1018
        %v1167 = vpack.c.b16 %v1023, %v1021
        %v1168 = vpack.c.b16 %v1024, %v1022
        %v1169 = vpack.c.b16 %v1027, %v1025
        %v1170 = vpack.c.b16 %v1028, %v1026
        %v1171 = vpack.c.b16 %v1031, %v1029
        %v1172 = vpack.c.b16 %v1032, %v1030
        %v1173 = vpack.c.b16 %v1035, %v1033
        %v1174 = vpack.c.b16 %v1036, %v1034
        %v1175 = vpack.c.b16 %v1039, %v1037
        %v1176 = vpack.c.b16 %v1040, %v1038
        %v1177 = vpack.c.b16 %v1043, %v1041
        %v1178 = vpack.c.b16 %v1044, %v1042
        %v1179 = vpack.c.b16 %v1047, %v1045
        %v1180 = vpack.c.b16 %v1048, %v1046
        %v1181 = vpack.c.b16 %v1051, %v1049
        %v1182 = vpack.c.b16 %v1052, %v1050
        %v1183 = vpack.c.b16 %v1055, %v1053
        %v1184 = vpack.c.b16 %v1056, %v1054
        %v1185 = vpack.c.b16 %v1059, %v1057
        %v1186 = vpack.c.b16 %v1060, %v1058
        %v1187 = vpack.c.b16 %v1063, %v1061
        %v1188 = vpack.c.b16 %v1064, %v1062
        %v1189 = vpack.c.b16 %v1067, %v1065
        %v1190 = vpack.c.b16 %v1068, %v1066
        %v1191 = vpack.c.b16 %v1071, %v1069
        %v1192 = vpack.c.b16 %v1072, %v1070
        %v1193 = vpack.c.b16 %v1075, %v1073
        %v1194 = vpack.c.b16 %v1076, %v1074
        %v1195 = vpack.c.b16 %v1079, %v1077
        %v1196 = vpack.c.b16 %v1080, %v1078
        %v1197 = vpack.c.b16 %v1083, %v1081
        %v1198 = vpack.c.b16 %v1084, %v1082
        %v1199 = vpack.c.b16 %v1087, %v1085
        %v1200 = vpack.c.b16 %v1088, %v1086
        %v1201 = vpack.c.b16 %v1091, %v1089
        %v1202 = vpack.c.b16 %v1092, %v1090
        %v1203 = vpack.c.b16 %v1095, %v1093
        %v1204 = vpack.c.b16 %v1096, %v1094
        %v1205 = vpack.c.b16 %v1099, %v1097
        %v1206 = vpack.c.b16 %v1100, %v1098
        %v1207 = vpack.c.b16 %v1103, %v1101
        %v1208 = vpack.c.b16 %v1104, %v1102
        %v1209 = vpack.c.b16 %v1107, %v1105
        %v1210 = vpack.c.b16 %v1108, %v1106
        %v1211 = vpack.c.b16 %v1111, %v1109
        %v1212 = vpack.c.b16 %v1112, %v1110
        %v1213 = vpack.c.b16 %v1115, %v1113
        %v1214 = vpack.c.b16 %v1116, %v1114
        %v1215 = vpack.c.b16 %v1119, %v1117
        %v1216 = vpack.c.b16 %v1120, %v1118
        %1313 = vmatpush.bf16.msra.mxu0 %v1135
        %1314 = vmatpush.bf16.msra.mxu0 %v1133
        %1315 = vmatpush.bf16.msra.mxu0 %v1131
        %1316 = vmatpush.bf16.msra.mxu0 %v1129
        %1317 = vmatpush.bf16.msra.mxu0 %v1127
        %1318 = vmatpush.bf16.msra.mxu0 %v1125
        %1319 = vmatpush.bf16.msra.mxu0 %v1123
        %1320 = vmatpush.bf16.msra.mxu0 %v1121
        %1321 = vmatmul.bf16.gmra.mxu0 %v821
        %v1322 = vpop.f32.mrf.mxu0
        %v1323 = vadd.f32 0.0, %v1322
        %v1324 = vpop.f32.mrf.mxu0
        %1325 = vdwg.mxu0
        %1326 = vmatpush.bf16.msra.mxu0 %v1151
        %1327 = vmatpush.bf16.msra.mxu0 %v1149
        %1328 = vmatpush.bf16.msra.mxu0 %v1147
        %1329 = vmatpush.bf16.msra.mxu0 %v1145
        %1330 = vmatpush.bf16.msra.mxu0 %v1143
        %1331 = vmatpush.bf16.msra.mxu0 %v1141
        %1332 = vmatpush.bf16.msra.mxu0 %v1139
        %1333 = vmatpush.bf16.msra.mxu0 %v1137
        %1334 = vmatmul.bf16.gmra.mxu0 %v822
        %v1335 = vpop.f32.mrf.mxu0
        %v1336 = vadd.f32 %v1323, %v1335
        %v1337 = vpop.f32.mrf.mxu0
        %1338 = vdwg.mxu0
        %1339 = vmatpush.bf16.msra.mxu0 %v1167
        %1340 = vmatpush.bf16.msra.mxu0 %v1165
        %1341 = vmatpush.bf16.msra.mxu0 %v1163
        %1342 = vmatpush.bf16.msra.mxu0 %v1161
        %1343 = vmatpush.bf16.msra.mxu0 %v1159
        %1344 = vmatpush.bf16.msra.mxu0 %v1157
        %1345 = vmatpush.bf16.msra.mxu0 %v1155
        %1346 = vmatpush.bf16.msra.mxu0 %v1153
        %1347 = vmatmul.bf16.gmra.mxu0 %v823
        %v1348 = vpop.f32.mrf.mxu0
        %v1349 = vadd.f32 %v1336, %v1348
        %v1350 = vpop.f32.mrf.mxu0
        %1351 = vdwg.mxu0
        %1352 = vmatpush.bf16.msra.mxu0 %v1183
        %1353 = vmatpush.bf16.msra.mxu0 %v1181
        %1354 = vmatpush.bf16.msra.mxu0 %v1179
        %1355 = vmatpush.bf16.msra.mxu0 %v1177
        %1356 = vmatpush.bf16.msra.mxu0 %v1175
        %1357 = vmatpush.bf16.msra.mxu0 %v1173
        %1358 = vmatpush.bf16.msra.mxu0 %v1171
        %1359 = vmatpush.bf16.msra.mxu0 %v1169
        %1360 = vmatmul.bf16.gmra.mxu0 %v824
        %v1361 = vpop.f32.mrf.mxu0
        %v1362 = vadd.f32 %v1349, %v1361
        %v1363 = vpop.f32.mrf.mxu0
        %1364 = vdwg.mxu0
        %1365 = vmatpush.bf16.msra.mxu0 %v1199
        %1366 = vmatpush.bf16.msra.mxu0 %v1197
        %1367 = vmatpush.bf16.msra.mxu0 %v1195
        %1368 = vmatpush.bf16.msra.mxu0 %v1193
        %1369 = vmatpush.bf16.msra.mxu0 %v1191
        %1370 = vmatpush.bf16.msra.mxu0 %v1189
        %1371 = vmatpush.bf16.msra.mxu0 %v1187
        %1372 = vmatpush.bf16.msra.mxu0 %v1185
        %1373 = vmatmul.bf16.gmra.mxu0 %v825
        %v1374 = vpop.f32.mrf.mxu0
        %v1375 = vadd.f32 %v1362, %v1374
        %v1376 = vpop.f32.mrf.mxu0
        %1377 = vdwg.mxu0
        %1378 = vmatpush.bf16.msra.mxu0 %v1215
        %1379 = vmatpush.bf16.msra.mxu0 %v1213
        %1380 = vmatpush.bf16.msra.mxu0 %v1211
        %1381 = vmatpush.bf16.msra.mxu0 %v1209
        %1382 = vmatpush.bf16.msra.mxu0 %v1207
        %1383 = vmatpush.bf16.msra.mxu0 %v1205
        %1384 = vmatpush.bf16.msra.mxu0 %v1203
        %1385 = vmatpush.bf16.msra.mxu0 %v1201
        %1386 = vmatmul.bf16.gmra.mxu0 %v826
        %v1387 = vpop.f32.mrf.mxu0
        %v1388 = vadd.f32 %v1375, %v1387
        %v1389 = vpop.f32.mrf.mxu0
        %1390 = vdwg.mxu0
        %1391 = vmatpush.bf16.msra.mxu0 %v1136
        %1392 = vmatpush.bf16.msra.mxu0 %v1134
        %1393 = vmatpush.bf16.msra.mxu0 %v1132
        %1394 = vmatpush.bf16.msra.mxu0 %v1130
        %1395 = vmatpush.bf16.msra.mxu0 %v1128
        %1396 = vmatpush.bf16.msra.mxu0 %v1126
        %1397 = vmatpush.bf16.msra.mxu0 %v1124
        %1398 = vmatpush.bf16.msra.mxu0 %v1122
        %1399 = vmatmul.bf16.gmra.mxu0 %v821
        %v1400 = vpop.f32.mrf.mxu0
        %v1401 = vadd.f32 0.0, %v1400
        %v1402 = vpop.f32.mrf.mxu0
        %1403 = vdwg.mxu0
        %1404 = vmatpush.bf16.msra.mxu0 %v1152
        %1405 = vmatpush.bf16.msra.mxu0 %v1150
        %1406 = vmatpush.bf16.msra.mxu0 %v1148
        %1407 = vmatpush.bf16.msra.mxu0 %v1146
        %1408 = vmatpush.bf16.msra.mxu0 %v1144
        %1409 = vmatpush.bf16.msra.mxu0 %v1142
        %1410 = vmatpush.bf16.msra.mxu0 %v1140
        %1411 = vmatpush.bf16.msra.mxu0 %v1138
        %1412 = vmatmul.bf16.gmra.mxu0 %v822
        %v1413 = vpop.f32.mrf.mxu0
        %v1414 = vadd.f32 %v1401, %v1413
        %v1415 = vpop.f32.mrf.mxu0
        %1416 = vdwg.mxu0
        %1417 = vmatpush.bf16.msra.mxu0 %v1168
        %1418 = vmatpush.bf16.msra.mxu0 %v1166
        %1419 = vmatpush.bf16.msra.mxu0 %v1164
        %1420 = vmatpush.bf16.msra.mxu0 %v1162
        %1421 = vmatpush.bf16.msra.mxu0 %v1160
        %1422 = vmatpush.bf16.msra.mxu0 %v1158
        %1423 = vmatpush.bf16.msra.mxu0 %v1156
        %1424 = vmatpush.bf16.msra.mxu0 %v1154
        %1425 = vmatmul.bf16.gmra.mxu0 %v823
        %v1426 = vpop.f32.mrf.mxu0
        %v1427 = vadd.f32 %v1414, %v1426
        %v1428 = vpop.f32.mrf.mxu0
        %1429 = vdwg.mxu0
        %1430 = vmatpush.bf16.msra.mxu0 %v1184
        %1431 = vmatpush.bf16.msra.mxu0 %v1182
        %1432 = vmatpush.bf16.msra.mxu0 %v1180
        %1433 = vmatpush.bf16.msra.mxu0 %v1178
        %1434 = vmatpush.bf16.msra.mxu0 %v1176
        %1435 = vmatpush.bf16.msra.mxu0 %v1174
        %1436 = vmatpush.bf16.msra.mxu0 %v1172
        %1437 = vmatpush.bf16.msra.mxu0 %v1170
        %1438 = vmatmul.bf16.gmra.mxu0 %v824
        %v1439 = vpop.f32.mrf.mxu0
        %v1440 = vadd.f32 %v1427, %v1439
        %v1441 = vpop.f32.mrf.mxu0
        %1442 = vdwg.mxu0
        %1443 = vmatpush.bf16.msra.mxu0 %v1200
        %1444 = vmatpush.bf16.msra.mxu0 %v1198
        %1445 = vmatpush.bf16.msra.mxu0 %v1196
        %1446 = vmatpush.bf16.msra.mxu0 %v1194
        %1447 = vmatpush.bf16.msra.mxu0 %v1192
        %1448 = vmatpush.bf16.msra.mxu0 %v1190
        %1449 = vmatpush.bf16.msra.mxu0 %v1188
        %1450 = vmatpush.bf16.msra.mxu0 %v1186
        %1451 = vmatmul.bf16.gmra.mxu0 %v825
        %v1452 = vpop.f32.mrf.mxu0
        %v1453 = vadd.f32 %v1440, %v1452
        %v1454 = vpop.f32.mrf.mxu0
        %1455 = vdwg.mxu0
        %1456 = vmatpush.bf16.msra.mxu0 %v1216
        %1457 = vmatpush.bf16.msra.mxu0 %v1214
        %1458 = vmatpush.bf16.msra.mxu0 %v1212
        %1459 = vmatpush.bf16.msra.mxu0 %v1210
        %1460 = vmatpush.bf16.msra.mxu0 %v1208
        %1461 = vmatpush.bf16.msra.mxu0 %v1206
        %1462 = vmatpush.bf16.msra.mxu0 %v1204
        %1463 = vmatpush.bf16.msra.mxu0 %v1202
        %1464 = vmatmul.bf16.gmra.mxu0 %v826
        %v1465 = vpop.f32.mrf.mxu0
        %v1466 = vadd.f32 %v1453, %v1465
        %v1467 = vpop.f32.mrf.mxu0
        %1468 = vdwg.mxu0
        %p1469 = scmp.eq.s32.totalorder %s22, 0
        // Predicated region
        $region75: #{resnet_forward.23} parent=69 // pred_check
          %p1470 = pneg %p1469
        $region76: #{resnet_forward.23} parent=69 // pred_check_branch
          %1472 = sbr.rel (%p1470) target = $region78
        $region77: #{resnet_forward.23} parent=69 // pred_region
          %v1475 = vrot.slane %v1466, 6
          %vm1476 = vcmask 1041408
          %v1477 = vsel %vm1476, %v1388, %v1475
          %1479 = vst [vmem:[%s720] sm:$0xf] %v1477
        $region78: #{resnet_forward.23} parent=69 // pred_fallthru
          _
        %p1480 = scmp.gt.s32.totalorder %s22, 0
        %p1481 = scmp.lt.s32.totalorder %s22, 2
        %p1482 = pnand %p1480, %p1481
        %p1483 = pneg %p1482
        // Predicated region
        $region79: #{resnet_forward.23} parent=69 // pred_check
          _
        $region80: #{resnet_forward.23} parent=69 // pred_check_branch
          %1485 = sbr.rel (%p1482) target = $region82
        $region81: #{resnet_forward.23} parent=69 // pred_region
          %v1486 = vld [vmem:[%s720] sm:$0xf]
          %v1489 = vrot.slane %v1466, 6
          %vm1490 = vcmask 1041408
          %v1491 = vsel %vm1490, %v1388, %v1489
          %v1493 = vadd.f32 %v1486, %v1491
          %1494 = vst [vmem:[%s720] sm:$0xf] %v1493
        $region82: #{resnet_forward.23} parent=69 // pred_fallthru
          _
        %p1495 = scmp.eq.s32.totalorder %s22, 2
        // Predicated region
        $region83: #{resnet_forward.23} parent=69 // pred_check
          %p1496 = pneg %p1495
        $region84: #{resnet_forward.23} parent=69 // pred_check_branch
          %1498 = sbr.rel (%p1496) target = $region86
        $region85: #{resnet_forward.23} parent=69 // pred_region
          %v1499 = vld [vmem:[%s720] sm:$0xf]
          %v1502 = vrot.slane %v1466, 6
          %vm1503 = vcmask 1041408
          %v1504 = vsel %vm1503, %v1388, %v1502
          %v1506 = vadd.f32 %v1499, %v1504
          %v1507 = vld [vmem:[%s705] sm:$0x3]
          %v1509 = vperm.slane %v1507, 0
          %v1510 = vperm.slane %v1507, 1
          %v1511 = vrot.slane %v1510, 6
          %v1512 = vsel %vm1503, %v1509, %v1511
          %v1514 = vmul.f32 %v1506, %v1512
          %v1515 = vld [vmem:[%s710] sm:$0x3]
          %v1517 = vperm.slane %v1515, 0
          %v1518 = vperm.slane %v1515, 1
          %v1519 = vrot.slane %v1518, 6
          %v1520 = vsel %vm1503, %v1517, %v1519
          %v1522 = vadd.f32 %v1514, %v1520
          %v1523 = vmax.f32 %v1522, 0.0
          %1524 = vst [vmem:[%s720] sm:$0xf] %v1523
        $region86: #{resnet_forward.23} parent=69 // pred_fallthru
          _
        %s1525 = smul.u32 2, %s21
        %p1526 = scmp.lt.s32.totalorder %s20, 0
        %s1527 = scalar_select %p1526, %s20, 0
        %p1528 = scmp.lt.s32.totalorder %s1525, 3
        %s1529 = scalar_select %p1528, %s1525, 3
        %s1530 = smul.addr %s1527, 4
        %s1531 = sadd.s32 %s1529, %s1530
        %s1532 = smul.addr %s1531, 2
        %s1533 = scalar_lea.vmem %s4, %s1532
        // Predicated region
        $region87: #{resnet_forward.23} parent=69 // pred_check
          %p1534 = pneg %p162
        $region88: #{resnet_forward.23} parent=69 // pred_check_branch
          %1536 = sbr.rel (%p1534) target = $region90
        $region89: #{resnet_forward.23} parent=69 // pred_region
          %s1537 = smul.u32 2, %s21
        $region90: #{resnet_forward.23} parent=69 // pred_fallthru
          _
      $region70: #{resnet_forward.23} parent=5 // pred_fallthru
        _
      %p1538 = scmp.le.s32.totalorder 2, %s10
      // Predicated region
      $region91: #{resnet_forward.23} parent=5 // pred_check
        %p1539 = pneg %p1538
      $region92: #{resnet_forward.23} parent=5 // pred_check_branch
        %1541 = sbr.rel (%p1539) target = $region94
      $region93: #{resnet_forward.23} parent=5 // pred_region
        %s1542 = ssub.s32 %s10, 2
        // Predicated region
        $region95: #{resnet_forward.23} parent=93 // pred_check
          %p1543 = pneg %p168
        $region96: #{resnet_forward.23} parent=93 // pred_check_branch
          %1545 = sbr.rel (%p1543) target = $region98
        $region97: #{resnet_forward.23} parent=93 // pred_region
          %s1546 = smul.u32 2, %s24
          %p1547 = scmp.lt.s32.totalorder %s23, 0
          %s1548 = scalar_select %p1547, %s23, 0
          %p1549 = scmp.lt.s32.totalorder %s1546, 3
          %s1550 = scalar_select %p1549, %s1546, 3
          %s1551 = smul.addr %s1548, 4
          %s1552 = sadd.s32 %s1550, %s1551
          %s1553 = smul.addr %s1552, 2
          %s1554 = scalar_lea.vmem %s4, %s1553
        $region98: #{resnet_forward.23} parent=93 // pred_fallthru
          _
      $region94: #{resnet_forward.23} parent=5 // pred_fallthru
        _
    $region6: #{resnet_forward.23} parent=1 // loop_footer
      %s14 = sadd.s32 1, %s10
    $region7: #{resnet_forward.23} parent=1 // loop_footer_branch
      %9 = sbr.rel target = $region3
    $region8: #{resnet_forward.23} parent=1 // loop_exit
      _

// kernel: resnet_forward.25
$region0: #{resnet_forward.25}
  #allocation0 [shape = 'u32[]', space=smem, size = 0x4, offset = 0x4, fixed_abs, tag = 'smem constant byte address 0x4 - core index']
  #allocation1 [shape = 'u32[72,128]{1,0:T(1,128)}', space=vmem, size = 0x9000, scoped, tag = 'internal scratch']
  %s0 = inlined_call_operand.vmem [shape: bf16[2,4608], index: 0, kind: input, shape index: {}]
  %s1 = inlined_call_operand.vmem [shape: bf16[4608,512], index: 1, kind: input, shape index: {}]
  %s2 = inlined_call_operand.vmem [shape: f32[1,512], index: 2, kind: input, shape index: {}]
  %s3 = inlined_call_operand.vmem [shape: f32[1,512], index: 3, kind: input, shape index: {}]
  %s4 = inlined_call_operand.vmem [shape: f32[2,512], index: 4, kind: input, shape index: {}]
  %s5 = inlined_call_operand.vmem [shape: f32[2,512], index: 5, kind: output, shape index: {}]
  %s6 = sld [smem:[#allocation0]]
  $region103: #{resnet_forward.25} parent=0
    _
  %s8 = ssub.s32 1, %s6
  %s9 = scalar_select 0, %s8, %s6
  $region1: #{resnet_forward.25} parent=0
    #allocation2 [shape = 'u8[786432]{0}', space=vmem, size = 0xc0000, scoped, tag = 'input window, operand 1']
    loop: start=0, step=1, limit=14
    $region2: #{resnet_forward.25} parent=1 // loop_pre_header
      _
    $region3: #{resnet_forward.25} parent=1 // loop_header
      %s11 = sphi 0, %s15
      %p12 = scmp.ge.s32.totalorder %s11, 14
      %s18 = sphi 0, %s37
      %s19 = sphi 0, %s33
      %s20 = sphi 0, %s29
      %s21 = sphi 0, %s18
      %s22 = sphi 0, %s19
      %s23 = sphi 0, %s20
      %s24 = sphi 0, %s21
      %s25 = sphi 0, %s22
      %s26 = sphi 0, %s23
      %s42 = sphi 0, %s44
      %s45 = sphi 0, %s42
      %s46 = sphi 0, %s45
      %s62 = sphi 0, %s46
      %s70 = sphi 0, %s72
      %s73 = sphi 0, %s70
      %s74 = sphi 0, %s73
      %s90 = sphi 0, %s74
      %s96 = sphi 0, %s98
      %s99 = sphi 0, %s96
      %s100 = sphi 0, %s99
      %s116 = sphi 0, %s100
      %s122 = sphi 0, %s124
      %s125 = sphi 0, %s122
      %s126 = sphi 0, %s125
      %s142 = sphi 0, %s126
      %s150 = sphi 0, %s152
      %s153 = sphi 0, %s150
      %s154 = sphi 0, %s153
      %s170 = sphi 0, %s154
      %s178 = sphi 0, %s180
      %s181 = sphi 0, %s178
      %s182 = sphi 0, %s181
      %s198 = sphi 0, %s182
    $region4: #{resnet_forward.25} parent=1 // loop_header_branch
      %14 = sbr.rel (%p12) target = $region8
    $region5: #{resnet_forward.25} parent=1 // loop_body
      %s16 = ssub.s32 %s11, 1
      %s17 = ssub.s32 %s11, 2
      %s27 = sadd.s32 1, %s20
      %p28 = scmp.ge.s32.totalorder %s27, 6
      %s29 = scalar_select %p28, 0, %s27
      %s30 = sadd.s32 1, %s19
      %s31 = scalar_select %p28, %s30, %s19
      %p32 = scmp.ge.s32.totalorder %s31, 2
      %s33 = scalar_select %p32, 0, %s31
      %s34 = sadd.s32 1, %s18
      %s35 = scalar_select %p32, %s34, %s18
      %p36 = scmp.ge.s32.totalorder %s35, 1
      %s37 = scalar_select %p36, 0, %s35
      %s38 = ssub.s32 %s18, %s37
      %s39 = ssub.s32 %s20, %s29
      %s40 = sor.u32 %s38, %s39
      %p41 = scmp.eq.s32.totalorder %s40, 0
      %s43 = sadd.s32 %s42, 1
      %s44 = scalar_select %p41, %s42, %s43
      %p47 = pneg %p41
      %p48 = scmp.eq.s32.totalorder %s11, 11
      %p49 = por %p47, %p48
      %p50 = scmp.ne.s32.totalorder %s42, %s45
      %p51 = scmp.eq.s32.totalorder %s11, 0
      %p52 = por %p50, %p51
      %p53 = scmp.ne.s32.totalorder %s42, %s45
      %p54 = scmp.eq.s32.totalorder %s16, 11
      %p55 = por %p53, %p54
      %p56 = scmp.ne.s32.totalorder %s45, %s46
      %p57 = scmp.eq.s32.totalorder %s16, 0
      %p58 = por %p56, %p57
      %p59 = scmp.ne.s32.totalorder %s45, %s46
      %p60 = scmp.eq.s32.totalorder %s17, 11
      %p61 = por %p59, %p60
      %p63 = scmp.ne.s32.totalorder %s46, %s62
      %p64 = scmp.eq.s32.totalorder %s17, 0
      %p65 = por %p63, %p64
      %s66 = ssub.s32 %s20, %s29
      %s67 = ssub.s32 %s19, %s33
      %s68 = sor.u32 %s66, %s67
      %p69 = scmp.eq.s32.totalorder %s68, 0
      %s71 = sadd.s32 %s70, 1
      %s72 = scalar_select %p69, %s70, %s71
      %p75 = pneg %p69
      %p76 = scmp.eq.s32.totalorder %s11, 11
      %p77 = por %p75, %p76
      %p78 = scmp.ne.s32.totalorder %s70, %s73
      %p79 = scmp.eq.s32.totalorder %s11, 0
      %p80 = por %p78, %p79
      %p81 = scmp.ne.s32.totalorder %s70, %s73
      %p82 = scmp.eq.s32.totalorder %s16, 11
      %p83 = por %p81, %p82
      %p84 = scmp.ne.s32.totalorder %s73, %s74
      %p85 = scmp.eq.s32.totalorder %s16, 0
      %p86 = por %p84, %p85
      %p87 = scmp.ne.s32.totalorder %s73, %s74
      %p88 = scmp.eq.s32.totalorder %s17, 11
      %p89 = por %p87, %p88
      %p91 = scmp.ne.s32.totalorder %s74, %s90
      %p92 = scmp.eq.s32.totalorder %s17, 0
      %p93 = por %p91, %p92
      %s94 = ssub.s32 %s19, %s33
      %p95 = scmp.eq.s32.totalorder %s94, 0
      %s97 = sadd.s32 %s96, 1
      %s98 = scalar_select %p95, %s96, %s97
      %p101 = pneg %p95
      %p102 = scmp.eq.s32.totalorder %s11, 11
      %p103 = por %p101, %p102
      %p104 = scmp.ne.s32.totalorder %s96, %s99
      %p105 = scmp.eq.s32.totalorder %s11, 0
      %p106 = por %p104, %p105
      %p107 = scmp.ne.s32.totalorder %s96, %s99
      %p108 = scmp.eq.s32.totalorder %s16, 11
      %p109 = por %p107, %p108
      %p110 = scmp.ne.s32.totalorder %s99, %s100
      %p111 = scmp.eq.s32.totalorder %s16, 0
      %p112 = por %p110, %p111
      %p113 = scmp.ne.s32.totalorder %s99, %s100
      %p114 = scmp.eq.s32.totalorder %s17, 11
      %p115 = por %p113, %p114
      %p117 = scmp.ne.s32.totalorder %s100, %s116
      %p118 = scmp.eq.s32.totalorder %s17, 0
      %p119 = por %p117, %p118
      %s120 = ssub.s32 %s19, %s33
      %p121 = scmp.eq.s32.totalorder %s120, 0
      %s123 = sadd.s32 %s122, 1
      %s124 = scalar_select %p121, %s122, %s123
      %p127 = pneg %p121
      %p128 = scmp.eq.s32.totalorder %s11, 11
      %p129 = por %p127, %p128
      %p130 = scmp.ne.s32.totalorder %s122, %s125
      %p131 = scmp.eq.s32.totalorder %s11, 0
      %p132 = por %p130, %p131
      %p133 = scmp.ne.s32.totalorder %s122, %s125
      %p134 = scmp.eq.s32.totalorder %s16, 11
      %p135 = por %p133, %p134
      %p136 = scmp.ne.s32.totalorder %s125, %s126
      %p137 = scmp.eq.s32.totalorder %s16, 0
      %p138 = por %p136, %p137
      %p139 = scmp.ne.s32.totalorder %s125, %s126
      %p140 = scmp.eq.s32.totalorder %s17, 11
      %p141 = por %p139, %p140
      %p143 = scmp.ne.s32.totalorder %s126, %s142
      %p144 = scmp.eq.s32.totalorder %s17, 0
      %p145 = por %p143, %p144
      %s146 = ssub.s32 %s18, %s37
      %s147 = ssub.s32 %s19, %s33
      %s148 = sor.u32 %s146, %s147
      %p149 = scmp.eq.s32.totalorder %s148, 0
      %s151 = sadd.s32 %s150, 1
      %s152 = scalar_select %p149, %s150, %s151
      %p155 = pneg %p149
      %p156 = scmp.eq.s32.totalorder %s11, 11
      %p157 = por %p155, %p156
      %p158 = scmp.ne.s32.totalorder %s150, %s153
      %p159 = scmp.eq.s32.totalorder %s11, 0
      %p160 = por %p158, %p159
      %p161 = scmp.ne.s32.totalorder %s150, %s153
      %p162 = scmp.eq.s32.totalorder %s16, 11
      %p163 = por %p161, %p162
      %p164 = scmp.ne.s32.totalorder %s153, %s154
      %p165 = scmp.eq.s32.totalorder %s16, 0
      %p166 = por %p164, %p165
      %p167 = scmp.ne.s32.totalorder %s153, %s154
      %p168 = scmp.eq.s32.totalorder %s17, 11
      %p169 = por %p167, %p168
      %p171 = scmp.ne.s32.totalorder %s154, %s170
      %p172 = scmp.eq.s32.totalorder %s17, 0
      %p173 = por %p171, %p172
      %s174 = ssub.s32 %s18, %s37
      %s175 = ssub.s32 %s19, %s33
      %s176 = sor.u32 %s174, %s175
      %p177 = scmp.eq.s32.totalorder %s176, 0
      %s179 = sadd.s32 %s178, 1
      %s180 = scalar_select %p177, %s178, %s179
      %p183 = pneg %p177
      %p184 = scmp.eq.s32.totalorder %s11, 11
      %p185 = por %p183, %p184
      %p186 = scmp.ne.s32.totalorder %s178, %s181
      %p187 = scmp.eq.s32.totalorder %s11, 0
      %p188 = por %p186, %p187
      %p189 = scmp.ne.s32.totalorder %s178, %s181
      %p190 = scmp.eq.s32.totalorder %s16, 11
      %p191 = por %p189, %p190
      %p192 = scmp.ne.s32.totalorder %s181, %s182
      %p193 = scmp.eq.s32.totalorder %s16, 0
      %p194 = por %p192, %p193
      %p195 = scmp.ne.s32.totalorder %s181, %s182
      %p196 = scmp.eq.s32.totalorder %s17, 11
      %p197 = por %p195, %p196
      %p199 = scmp.ne.s32.totalorder %s182, %s198
      %p200 = scmp.eq.s32.totalorder %s17, 0
      %p201 = por %p199, %p200
      %p202 = scmp.le.s32.totalorder 1, %s11
      %p203 = scmp.lt.s32.totalorder %s11, 13
      %p204 = pnand %p202, %p203
      %p205 = pneg %p204
      // Predicated region
      $region9: #{resnet_forward.25} parent=5 // pred_check
        _
      $region10: #{resnet_forward.25} parent=5 // pred_check_branch
        %207 = sbr.rel (%p204) target = $region12
      $region11: #{resnet_forward.25} parent=5 // pred_region
        %s208 = ssub.s32 %s11, 1
      $region12: #{resnet_forward.25} parent=5 // pred_fallthru
        _
      %p209 = scmp.lt.s32.totalorder %s11, 12
      // Predicated region
      $region13: #{resnet_forward.25} parent=5 // pred_check
        %p210 = pneg %p209
      $region14: #{resnet_forward.25} parent=5 // pred_check_branch
        %212 = sbr.rel (%p210) target = $region16
      $region15: #{resnet_forward.25} parent=5 // pred_region
        // Predicated region
        $region17: #{resnet_forward.25} parent=15 // pred_check
          %p213 = pneg %p52
        $region18: #{resnet_forward.25} parent=15 // pred_check_branch
          %215 = sbr.rel (%p213) target = $region20
        $region19: #{resnet_forward.25} parent=15 // pred_region
          %s216 = smul.u32 6, %s20
          %p217 = scmp.lt.s32.totalorder %s18, 0
          %s218 = scalar_select %p217, %s18, 0
          %p219 = scmp.lt.s32.totalorder %s216, 35
          %s220 = scalar_select %p219, %s216, 35
          %s221 = smul.addr %s218, 36
          %s222 = sadd.s32 %s220, %s221
          %s223 = scalar_lea.vmem %s0, %s222
          %s224 = smul.u32 6, %s20
        $region20: #{resnet_forward.25} parent=15 // pred_fallthru
          _
        // Predicated region
        $region21: #{resnet_forward.25} parent=15 // pred_check
          %p225 = pneg %p80
        $region22: #{resnet_forward.25} parent=15 // pred_check_branch
          %227 = sbr.rel (%p225) target = $region24
        $region23: #{resnet_forward.25} parent=15 // pred_region
          %s228 = sand.u32 %s70, 1
          %s229 = sand.u32 %s70, 1
          %s230 = smul.addr %s229, 768
          %s231 = scalar_lea.vmem [#allocation2], %s230
          %s232 = smul.u32 96, %s20
          %s233 = smul.u32 2, %s19
          %s234 = smul.addr %s232, 4
          %s235 = sadd.s32 %s233, %s234
          %s236 = smul.addr %s235, 4
          %s237 = scalar_lea.vmem %s1, %s236
          // Predicated region
          $region25: #{resnet_forward.25} parent=23 // pred_check
            _
          $region26: #{resnet_forward.25} parent=23 // pred_check_branch
            %239 = sbr.rel (0) target = $region28
          $region27: #{resnet_forward.25} parent=23 // pred_region
            // Predicated region
            $region29: #{resnet_forward.25} parent=27 // pred_check
              _
            $region30: #{resnet_forward.25} parent=27 // pred_check_branch
              %241 = sbr.rel (0) target = $region32
            $region31: #{resnet_forward.25} parent=27 // pred_region
              // Predicated region
              $region44: #{resnet_forward.25} parent=31 // pred_check
                _
              $region45: #{resnet_forward.25} parent=31 // pred_check_branch
                %447 = sbr.rel (0) target = $region47
              $region46: #{resnet_forward.25} parent=31 // pred_region
                loop: start=0, step=1, limit=1
                $region48: #{resnet_forward.25} parent=46 // loop_pre_header
                  _
                $region49: #{resnet_forward.25} parent=46 // loop_header
                  %s449 = sphi 0, %s453
                  %p450 = scmp.ge.s32.totalorder %s449, 1
                  %s454 = sphi %s237, %s237
                  %s455 = sphi %s231, %s231
                $region50: #{resnet_forward.25} parent=46 // loop_header_branch
                  %452 = sbr.rel (%p450) target = $region54
                $region51: #{resnet_forward.25} parent=46 // loop_body
                  %v456 = vld [vmem:[%s454] sm:$0xff]
                  %457 = vst [vmem:[%s455] sm:$0xff] %v456
                  %v458 = vld [vmem:[%s454 + $0x10] sm:$0xff]
                  %459 = vst [vmem:[%s455 + $0x8] sm:$0xff] %v458
                  %v460 = vld [vmem:[%s454 + $0x20] sm:$0xff]
                  %461 = vst [vmem:[%s455 + $0x10] sm:$0xff] %v460
                  %v462 = vld [vmem:[%s454 + $0x30] sm:$0xff]
                  %463 = vst [vmem:[%s455 + $0x18] sm:$0xff] %v462
                  %v464 = vld [vmem:[%s454 + $0x40] sm:$0xff]
                  %465 = vst [vmem:[%s455 + $0x20] sm:$0xff] %v464
                  %v466 = vld [vmem:[%s454 + $0x50] sm:$0xff]
                  %467 = vst [vmem:[%s455 + $0x28] sm:$0xff] %v466
                  %v468 = vld [vmem:[%s454 + $0x60] sm:$0xff]
                  %469 = vst [vmem:[%s455 + $0x30] sm:$0xff] %v468
                  %v470 = vld [vmem:[%s454 + $0x70] sm:$0xff]
                  %471 = vst [vmem:[%s455 + $0x38] sm:$0xff] %v470
                  %v472 = vld [vmem:[%s454 + $0x80] sm:$0xff]
                  %473 = vst [vmem:[%s455 + $0x40] sm:$0xff] %v472
                  %v474 = vld [vmem:[%s454 + $0x90] sm:$0xff]
                  %475 = vst [vmem:[%s455 + $0x48] sm:$0xff] %v474
                  %v476 = vld [vmem:[%s454 + $0xa0] sm:$0xff]
                  %477 = vst [vmem:[%s455 + $0x50] sm:$0xff] %v476
                  %v478 = vld [vmem:[%s454 + $0xb0] sm:$0xff]
                  %479 = vst [vmem:[%s455 + $0x58] sm:$0xff] %v478
                  %v480 = vld [vmem:[%s454 + $0xc0] sm:$0xff]
                  %481 = vst [vmem:[%s455 + $0x60] sm:$0xff] %v480
                  %v482 = vld [vmem:[%s454 + $0xd0] sm:$0xff]
                  %483 = vst [vmem:[%s455 + $0x68] sm:$0xff] %v482
                  %v484 = vld [vmem:[%s454 + $0xe0] sm:$0xff]
                  %485 = vst [vmem:[%s455 + $0x70] sm:$0xff] %v484
                  %v486 = vld [vmem:[%s454 + $0xf0] sm:$0xff]
                  %487 = vst [vmem:[%s455 + $0x78] sm:$0xff] %v486
                  %v488 = vld [vmem:[%s454 + $0x100] sm:$0xff]
                  %489 = vst [vmem:[%s455 + $0x80] sm:$0xff] %v488
                  %v490 = vld [vmem:[%s454 + $0x110] sm:$0xff]
                  %491 = vst [vmem:[%s455 + $0x88] sm:$0xff] %v490
                  %v492 = vld [vmem:[%s454 + $0x120] sm:$0xff]
                  %493 = vst [vmem:[%s455 + $0x90] sm:$0xff] %v492
                  %v494 = vld [vmem:[%s454 + $0x130] sm:$0xff]
                  %495 = vst [vmem:[%s455 + $0x98] sm:$0xff] %v494
                  %v496 = vld [vmem:[%s454 + $0x140] sm:$0xff]
                  %497 = vst [vmem:[%s455 + $0xa0] sm:$0xff] %v496
                  %v498 = vld [vmem:[%s454 + $0x150] sm:$0xff]
                  %499 = vst [vmem:[%s455 + $0xa8] sm:$0xff] %v498
                  %v500 = vld [vmem:[%s454 + $0x160] sm:$0xff]
                  %501 = vst [vmem:[%s455 + $0xb0] sm:$0xff] %v500
                  %v502 = vld [vmem:[%s454 + $0x170] sm:$0xff]
                  %503 = vst [vmem:[%s455 + $0xb8] sm:$0xff] %v502
                  %v504 = vld [vmem:[%s454 + $0x180] sm:$0xff]
                  %505 = vst [vmem:[%s455 + $0xc0] sm:$0xff] %v504
                  %v506 = vld [vmem:[%s454 + $0x190] sm:$0xff]
                  %507 = vst [vmem:[%s455 + $0xc8] sm:$0xff] %v506
                  %v508 = vld [vmem:[%s454 + $0x1a0] sm:$0xff]
                  %509 = vst [vmem:[%s455 + $0xd0] sm:$0xff] %v508
                  %v510 = vld [vmem:[%s454 + $0x1b0] sm:$0xff]
                  %511 = vst [vmem:[%s455 + $0xd8] sm:$0xff] %v510
                  %v512 = vld [vmem:[%s454 + $0x1c0] sm:$0xff]
                  %513 = vst [vmem:[%s455 + $0xe0] sm:$0xff] %v512
                  %v514 = vld [vmem:[%s454 + $0x1d0] sm:$0xff]
                  %515 = vst [vmem:[%s455 + $0xe8] sm:$0xff] %v514
                  %v516 = vld [vmem:[%s454 + $0x1e0] sm:$0xff]
                  %517 = vst [vmem:[%s455 + $0xf0] sm:$0xff] %v516
                  %v518 = vld [vmem:[%s454 + $0x1f0] sm:$0xff]
                  %519 = vst [vmem:[%s455 + $0xf8] sm:$0xff] %v518
                  %v520 = vld [vmem:[%s454 + $0x200] sm:$0xff]
                  %521 = vst [vmem:[%s455 + $0x100] sm:$0xff] %v520
                  %v522 = vld [vmem:[%s454 + $0x210] sm:$0xff]
                  %523 = vst [vmem:[%s455 + $0x108] sm:$0xff] %v522
                  %v524 = vld [vmem:[%s454 + $0x220] sm:$0xff]
                  %525 = vst [vmem:[%s455 + $0x110] sm:$0xff] %v524
                  %v526 = vld [vmem:[%s454 + $0x230] sm:$0xff]
                  %527 = vst [vmem:[%s455 + $0x118] sm:$0xff] %v526
                  %v528 = vld [vmem:[%s454 + $0x240] sm:$0xff]
                  %529 = vst [vmem:[%s455 + $0x120] sm:$0xff] %v528
                  %v530 = vld [vmem:[%s454 + $0x250] sm:$0xff]
                  %531 = vst [vmem:[%s455 + $0x128] sm:$0xff] %v530
                  %v532 = vld [vmem:[%s454 + $0x260] sm:$0xff]
                  %533 = vst [vmem:[%s455 + $0x130] sm:$0xff] %v532
                  %v534 = vld [vmem:[%s454 + $0x270] sm:$0xff]
                  %535 = vst [vmem:[%s455 + $0x138] sm:$0xff] %v534
                  %v536 = vld [vmem:[%s454 + $0x280] sm:$0xff]
                  %537 = vst [vmem:[%s455 + $0x140] sm:$0xff] %v536
                  %v538 = vld [vmem:[%s454 + $0x290] sm:$0xff]
                  %539 = vst [vmem:[%s455 + $0x148] sm:$0xff] %v538
                  %v540 = vld [vmem:[%s454 + $0x2a0] sm:$0xff]
                  %541 = vst [vmem:[%s455 + $0x150] sm:$0xff] %v540
                  %v542 = vld [vmem:[%s454 + $0x2b0] sm:$0xff]
                  %543 = vst [vmem:[%s455 + $0x158] sm:$0xff] %v542
                  %v544 = vld [vmem:[%s454 + $0x2c0] sm:$0xff]
                  %545 = vst [vmem:[%s455 + $0x160] sm:$0xff] %v544
                  %v546 = vld [vmem:[%s454 + $0x2d0] sm:$0xff]
                  %547 = vst [vmem:[%s455 + $0x168] sm:$0xff] %v546
                  %v548 = vld [vmem:[%s454 + $0x2e0] sm:$0xff]
                  %549 = vst [vmem:[%s455 + $0x170] sm:$0xff] %v548
                  %v550 = vld [vmem:[%s454 + $0x2f0] sm:$0xff]
                  %551 = vst [vmem:[%s455 + $0x178] sm:$0xff] %v550
                  %v552 = vld [vmem:[%s454 + $0x300] sm:$0xff]
                  %553 = vst [vmem:[%s455 + $0x180] sm:$0xff] %v552
                  %v554 = vld [vmem:[%s454 + $0x310] sm:$0xff]
                  %555 = vst [vmem:[%s455 + $0x188] sm:$0xff] %v554
                  %v556 = vld [vmem:[%s454 + $0x320] sm:$0xff]
                  %557 = vst [vmem:[%s455 + $0x190] sm:$0xff] %v556
                  %v558 = vld [vmem:[%s454 + $0x330] sm:$0xff]
                  %559 = vst [vmem:[%s455 + $0x198] sm:$0xff] %v558
                  %v560 = vld [vmem:[%s454 + $0x340] sm:$0xff]
                  %561 = vst [vmem:[%s455 + $0x1a0] sm:$0xff] %v560
                  %v562 = vld [vmem:[%s454 + $0x350] sm:$0xff]
                  %563 = vst [vmem:[%s455 + $0x1a8] sm:$0xff] %v562
                  %v564 = vld [vmem:[%s454 + $0x360] sm:$0xff]
                  %565 = vst [vmem:[%s455 + $0x1b0] sm:$0xff] %v564
                  %v566 = vld [vmem:[%s454 + $0x370] sm:$0xff]
                  %567 = vst [vmem:[%s455 + $0x1b8] sm:$0xff] %v566
                  %v568 = vld [vmem:[%s454 + $0x380] sm:$0xff]
                  %569 = vst [vmem:[%s455 + $0x1c0] sm:$0xff] %v568
                  %v570 = vld [vmem:[%s454 + $0x390] sm:$0xff]
                  %571 = vst [vmem:[%s455 + $0x1c8] sm:$0xff] %v570
                  %v572 = vld [vmem:[%s454 + $0x3a0] sm:$0xff]
                  %573 = vst [vmem:[%s455 + $0x1d0] sm:$0xff] %v572
                  %v574 = vld [vmem:[%s454 + $0x3b0] sm:$0xff]
                  %575 = vst [vmem:[%s455 + $0x1d8] sm:$0xff] %v574
                  %v576 = vld [vmem:[%s454 + $0x3c0] sm:$0xff]
                  %577 = vst [vmem:[%s455 + $0x1e0] sm:$0xff] %v576
                  %v578 = vld [vmem:[%s454 + $0x3d0] sm:$0xff]
                  %579 = vst [vmem:[%s455 + $0x1e8] sm:$0xff] %v578
                  %v580 = vld [vmem:[%s454 + $0x3e0] sm:$0xff]
                  %581 = vst [vmem:[%s455 + $0x1f0] sm:$0xff] %v580
                  %v582 = vld [vmem:[%s454 + $0x3f0] sm:$0xff]
                  %583 = vst [vmem:[%s455 + $0x1f8] sm:$0xff] %v582
                  %v584 = vld [vmem:[%s454 + $0x400] sm:$0xff]
                  %585 = vst [vmem:[%s455 + $0x200] sm:$0xff] %v584
                  %v586 = vld [vmem:[%s454 + $0x410] sm:$0xff]
                  %587 = vst [vmem:[%s455 + $0x208] sm:$0xff] %v586
                  %v588 = vld [vmem:[%s454 + $0x420] sm:$0xff]
                  %589 = vst [vmem:[%s455 + $0x210] sm:$0xff] %v588
                  %v590 = vld [vmem:[%s454 + $0x430] sm:$0xff]
                  %591 = vst [vmem:[%s455 + $0x218] sm:$0xff] %v590
                  %v592 = vld [vmem:[%s454 + $0x440] sm:$0xff]
                  %593 = vst [vmem:[%s455 + $0x220] sm:$0xff] %v592
                  %v594 = vld [vmem:[%s454 + $0x450] sm:$0xff]
                  %595 = vst [vmem:[%s455 + $0x228] sm:$0xff] %v594
                  %v596 = vld [vmem:[%s454 + $0x460] sm:$0xff]
                  %597 = vst [vmem:[%s455 + $0x230] sm:$0xff] %v596
                  %v598 = vld [vmem:[%s454 + $0x470] sm:$0xff]
                  %599 = vst [vmem:[%s455 + $0x238] sm:$0xff] %v598
                  %v600 = vld [vmem:[%s454 + $0x480] sm:$0xff]
                  %601 = vst [vmem:[%s455 + $0x240] sm:$0xff] %v600
                  %v602 = vld [vmem:[%s454 + $0x490] sm:$0xff]
                  %603 = vst [vmem:[%s455 + $0x248] sm:$0xff] %v602
                  %v604 = vld [vmem:[%s454 + $0x4a0] sm:$0xff]
                  %605 = vst [vmem:[%s455 + $0x250] sm:$0xff] %v604
                  %v606 = vld [vmem:[%s454 + $0x4b0] sm:$0xff]
                  %607 = vst [vmem:[%s455 + $0x258] sm:$0xff] %v606
                  %v608 = vld [vmem:[%s454 + $0x4c0] sm:$0xff]
                  %609 = vst [vmem:[%s455 + $0x260] sm:$0xff] %v608
                  %v610 = vld [vmem:[%s454 + $0x4d0] sm:$0xff]
                  %611 = vst [vmem:[%s455 + $0x268] sm:$0xff] %v610
                  %v612 = vld [vmem:[%s454 + $0x4e0] sm:$0xff]
                  %613 = vst [vmem:[%s455 + $0x270] sm:$0xff] %v612
                  %v614 = vld [vmem:[%s454 + $0x4f0] sm:$0xff]
                  %615 = vst [vmem:[%s455 + $0x278] sm:$0xff] %v614
                  %v616 = vld [vmem:[%s454 + $0x500] sm:$0xff]
                  %617 = vst [vmem:[%s455 + $0x280] sm:$0xff] %v616
                  %v618 = vld [vmem:[%s454 + $0x510] sm:$0xff]
                  %619 = vst [vmem:[%s455 + $0x288] sm:$0xff] %v618
                  %v620 = vld [vmem:[%s454 + $0x520] sm:$0xff]
                  %621 = vst [vmem:[%s455 + $0x290] sm:$0xff] %v620
                  %v622 = vld [vmem:[%s454 + $0x530] sm:$0xff]
                  %623 = vst [vmem:[%s455 + $0x298] sm:$0xff] %v622
                  %v624 = vld [vmem:[%s454 + $0x540] sm:$0xff]
                  %625 = vst [vmem:[%s455 + $0x2a0] sm:$0xff] %v624
                  %v626 = vld [vmem:[%s454 + $0x550] sm:$0xff]
                  %627 = vst [vmem:[%s455 + $0x2a8] sm:$0xff] %v626
                  %v628 = vld [vmem:[%s454 + $0x560] sm:$0xff]
                  %629 = vst [vmem:[%s455 + $0x2b0] sm:$0xff] %v628
                  %v630 = vld [vmem:[%s454 + $0x570] sm:$0xff]
                  %631 = vst [vmem:[%s455 + $0x2b8] sm:$0xff] %v630
                  %v632 = vld [vmem:[%s454 + $0x580] sm:$0xff]
                  %633 = vst [vmem:[%s455 + $0x2c0] sm:$0xff] %v632
                  %v634 = vld [vmem:[%s454 + $0x590] sm:$0xff]
                  %635 = vst [vmem:[%s455 + $0x2c8] sm:$0xff] %v634
                  %v636 = vld [vmem:[%s454 + $0x5a0] sm:$0xff]
                  %637 = vst [vmem:[%s455 + $0x2d0] sm:$0xff] %v636
                  %v638 = vld [vmem:[%s454 + $0x5b0] sm:$0xff]
                  %639 = vst [vmem:[%s455 + $0x2d8] sm:$0xff] %v638
                  %v640 = vld [vmem:[%s454 + $0x5c0] sm:$0xff]
                  %641 = vst [vmem:[%s455 + $0x2e0] sm:$0xff] %v640
                  %v642 = vld [vmem:[%s454 + $0x5d0] sm:$0xff]
                  %643 = vst [vmem:[%s455 + $0x2e8] sm:$0xff] %v642
                  %v644 = vld [vmem:[%s454 + $0x5e0] sm:$0xff]
                  %645 = vst [vmem:[%s455 + $0x2f0] sm:$0xff] %v644
                  %v646 = vld [vmem:[%s454 + $0x5f0] sm:$0xff]
                  %647 = vst [vmem:[%s455 + $0x2f8] sm:$0xff] %v646
                $region52: #{resnet_forward.25} parent=46 // loop_footer
                  %s453 = sadd.s32 1, %s449
                $region53: #{resnet_forward.25} parent=46 // loop_footer_branch
                  %448 = sbr.rel target = $region49
                $region54: #{resnet_forward.25} parent=46 // loop_exit
                  _
              $region47: #{resnet_forward.25} parent=31 // pred_fallthru
                _
              // Predicated region
              $region55: #{resnet_forward.25} parent=31 // pred_check
                _
              $region56: #{resnet_forward.25} parent=31 // pred_check_branch
                %649 = sbr.rel target = $region58
              $region57: #{resnet_forward.25} parent=31 // pred_region
                _
              $region58: #{resnet_forward.25} parent=31 // pred_fallthru
                _
            $region32: #{resnet_forward.25} parent=27 // pred_fallthru
              _
            // Predicated region
            $region33: #{resnet_forward.25} parent=27 // pred_check
              _
            $region34: #{resnet_forward.25} parent=27 // pred_check_branch
              %243 = sbr.rel target = $region36
            $region35: #{resnet_forward.25} parent=27 // pred_region
              %s245 = ssub.s32 256, 1
              loop: start=0, step=1, limit=1
              $region37: #{resnet_forward.25} parent=35 // loop_pre_header
                _
              $region38: #{resnet_forward.25} parent=35 // loop_header
                %s247 = sphi 0, %s251
                %p248 = scmp.ge.s32.totalorder %s247, 1
                %s252 = sphi %s237, %s237
                %s253 = sphi %s231, %s231
              $region39: #{resnet_forward.25} parent=35 // loop_header_branch
                %250 = sbr.rel (%p248) target = $region43
              $region40: #{resnet_forward.25} parent=35 // loop_body
                %v254 = vld [vmem:[%s252] sm:%s245]
                %255 = vst [vmem:[%s253] sm:%s245] %v254
                %v256 = vld [vmem:[%s252 + $0x10] sm:%s245]
                %257 = vst [vmem:[%s253 + $0x8] sm:%s245] %v256
                %v258 = vld [vmem:[%s252 + $0x20] sm:%s245]
                %259 = vst [vmem:[%s253 + $0x10] sm:%s245] %v258
                %v260 = vld [vmem:[%s252 + $0x30] sm:%s245]
                %261 = vst [vmem:[%s253 + $0x18] sm:%s245] %v260
                %v262 = vld [vmem:[%s252 + $0x40] sm:%s245]
                %263 = vst [vmem:[%s253 + $0x20] sm:%s245] %v262
                %v264 = vld [vmem:[%s252 + $0x50] sm:%s245]
                %265 = vst [vmem:[%s253 + $0x28] sm:%s245] %v264
                %v266 = vld [vmem:[%s252 + $0x60] sm:%s245]
                %267 = vst [vmem:[%s253 + $0x30] sm:%s245] %v266
                %v268 = vld [vmem:[%s252 + $0x70] sm:%s245]
                %269 = vst [vmem:[%s253 + $0x38] sm:%s245] %v268
                %v270 = vld [vmem:[%s252 + $0x80] sm:%s245]
                %271 = vst [vmem:[%s253 + $0x40] sm:%s245] %v270
                %v272 = vld [vmem:[%s252 + $0x90] sm:%s245]
                %273 = vst [vmem:[%s253 + $0x48] sm:%s245] %v272
                %v274 = vld [vmem:[%s252 + $0xa0] sm:%s245]
                %275 = vst [vmem:[%s253 + $0x50] sm:%s245] %v274
                %v276 = vld [vmem:[%s252 + $0xb0] sm:%s245]
                %277 = vst [vmem:[%s253 + $0x58] sm:%s245] %v276
                %v278 = vld [vmem:[%s252 + $0xc0] sm:%s245]
                %279 = vst [vmem:[%s253 + $0x60] sm:%s245] %v278
                %v280 = vld [vmem:[%s252 + $0xd0] sm:%s245]
                %281 = vst [vmem:[%s253 + $0x68] sm:%s245] %v280
                %v282 = vld [vmem:[%s252 + $0xe0] sm:%s245]
                %283 = vst [vmem:[%s253 + $0x70] sm:%s245] %v282
                %v284 = vld [vmem:[%s252 + $0xf0] sm:%s245]
                %285 = vst [vmem:[%s253 + $0x78] sm:%s245] %v284
                %v286 = vld [vmem:[%s252 + $0x100] sm:%s245]
                %287 = vst [vmem:[%s253 + $0x80] sm:%s245] %v286
                %v288 = vld [vmem:[%s252 + $0x110] sm:%s245]
                %289 = vst [vmem:[%s253 + $0x88] sm:%s245] %v288
                %v290 = vld [vmem:[%s252 + $0x120] sm:%s245]
                %291 = vst [vmem:[%s253 + $0x90] sm:%s245] %v290
                %v292 = vld [vmem:[%s252 + $0x130] sm:%s245]
                %293 = vst [vmem:[%s253 + $0x98] sm:%s245] %v292
                %v294 = vld [vmem:[%s252 + $0x140] sm:%s245]
                %295 = vst [vmem:[%s253 + $0xa0] sm:%s245] %v294
                %v296 = vld [vmem:[%s252 + $0x150] sm:%s245]
                %297 = vst [vmem:[%s253 + $0xa8] sm:%s245] %v296
                %v298 = vld [vmem:[%s252 + $0x160] sm:%s245]
                %299 = vst [vmem:[%s253 + $0xb0] sm:%s245] %v298
                %v300 = vld [vmem:[%s252 + $0x170] sm:%s245]
                %301 = vst [vmem:[%s253 + $0xb8] sm:%s245] %v300
                %v302 = vld [vmem:[%s252 + $0x180] sm:%s245]
                %303 = vst [vmem:[%s253 + $0xc0] sm:%s245] %v302
                %v304 = vld [vmem:[%s252 + $0x190] sm:%s245]
                %305 = vst [vmem:[%s253 + $0xc8] sm:%s245] %v304
                %v306 = vld [vmem:[%s252 + $0x1a0] sm:%s245]
                %307 = vst [vmem:[%s253 + $0xd0] sm:%s245] %v306
                %v308 = vld [vmem:[%s252 + $0x1b0] sm:%s245]
                %309 = vst [vmem:[%s253 + $0xd8] sm:%s245] %v308
                %v310 = vld [vmem:[%s252 + $0x1c0] sm:%s245]
                %311 = vst [vmem:[%s253 + $0xe0] sm:%s245] %v310
                %v312 = vld [vmem:[%s252 + $0x1d0] sm:%s245]
                %313 = vst [vmem:[%s253 + $0xe8] sm:%s245] %v312
                %v314 = vld [vmem:[%s252 + $0x1e0] sm:%s245]
                %315 = vst [vmem:[%s253 + $0xf0] sm:%s245] %v314
                %v316 = vld [vmem:[%s252 + $0x1f0] sm:%s245]
                %317 = vst [vmem:[%s253 + $0xf8] sm:%s245] %v316
                %v318 = vld [vmem:[%s252 + $0x200] sm:%s245]
                %319 = vst [vmem:[%s253 + $0x100] sm:%s245] %v318
                %v320 = vld [vmem:[%s252 + $0x210] sm:%s245]
                %321 = vst [vmem:[%s253 + $0x108] sm:%s245] %v320
                %v322 = vld [vmem:[%s252 + $0x220] sm:%s245]
                %323 = vst [vmem:[%s253 + $0x110] sm:%s245] %v322
                %v324 = vld [vmem:[%s252 + $0x230] sm:%s245]
                %325 = vst [vmem:[%s253 + $0x118] sm:%s245] %v324
                %v326 = vld [vmem:[%s252 + $0x240] sm:%s245]
                %327 = vst [vmem:[%s253 + $0x120] sm:%s245] %v326
                %v328 = vld [vmem:[%s252 + $0x250] sm:%s245]
                %329 = vst [vmem:[%s253 + $0x128] sm:%s245] %v328
                %v330 = vld [vmem:[%s252 + $0x260] sm:%s245]
                %331 = vst [vmem:[%s253 + $0x130] sm:%s245] %v330
                %v332 = vld [vmem:[%s252 + $0x270] sm:%s245]
                %333 = vst [vmem:[%s253 + $0x138] sm:%s245] %v332
                %v334 = vld [vmem:[%s252 + $0x280] sm:%s245]
                %335 = vst [vmem:[%s253 + $0x140] sm:%s245] %v334
                %v336 = vld [vmem:[%s252 + $0x290] sm:%s245]
                %337 = vst [vmem:[%s253 + $0x148] sm:%s245] %v336
                %v338 = vld [vmem:[%s252 + $0x2a0] sm:%s245]
                %339 = vst [vmem:[%s253 + $0x150] sm:%s245] %v338
                %v340 = vld [vmem:[%s252 + $0x2b0] sm:%s245]
                %341 = vst [vmem:[%s253 + $0x158] sm:%s245] %v340
                %v342 = vld [vmem:[%s252 + $0x2c0] sm:%s245]
                %343 = vst [vmem:[%s253 + $0x160] sm:%s245] %v342
                %v344 = vld [vmem:[%s252 + $0x2d0] sm:%s245]
                %345 = vst [vmem:[%s253 + $0x168] sm:%s245] %v344
                %v346 = vld [vmem:[%s252 + $0x2e0] sm:%s245]
                %347 = vst [vmem:[%s253 + $0x170] sm:%s245] %v346
                %v348 = vld [vmem:[%s252 + $0x2f0] sm:%s245]
                %349 = vst [vmem:[%s253 + $0x178] sm:%s245] %v348
                %v350 = vld [vmem:[%s252 + $0x300] sm:%s245]
                %351 = vst [vmem:[%s253 + $0x180] sm:%s245] %v350
                %v352 = vld [vmem:[%s252 + $0x310] sm:%s245]
                %353 = vst [vmem:[%s253 + $0x188] sm:%s245] %v352
                %v354 = vld [vmem:[%s252 + $0x320] sm:%s245]
                %355 = vst [vmem:[%s253 + $0x190] sm:%s245] %v354
                %v356 = vld [vmem:[%s252 + $0x330] sm:%s245]
                %357 = vst [vmem:[%s253 + $0x198] sm:%s245] %v356
                %v358 = vld [vmem:[%s252 + $0x340] sm:%s245]
                %359 = vst [vmem:[%s253 + $0x1a0] sm:%s245] %v358
                %v360 = vld [vmem:[%s252 + $0x350] sm:%s245]
                %361 = vst [vmem:[%s253 + $0x1a8] sm:%s245] %v360
                %v362 = vld [vmem:[%s252 + $0x360] sm:%s245]
                %363 = vst [vmem:[%s253 + $0x1b0] sm:%s245] %v362
                %v364 = vld [vmem:[%s252 + $0x370] sm:%s245]
                %365 = vst [vmem:[%s253 + $0x1b8] sm:%s245] %v364
                %v366 = vld [vmem:[%s252 + $0x380] sm:%s245]
                %367 = vst [vmem:[%s253 + $0x1c0] sm:%s245] %v366
                %v368 = vld [vmem:[%s252 + $0x390] sm:%s245]
                %369 = vst [vmem:[%s253 + $0x1c8] sm:%s245] %v368
                %v370 = vld [vmem:[%s252 + $0x3a0] sm:%s245]
                %371 = vst [vmem:[%s253 + $0x1d0] sm:%s245] %v370
                %v372 = vld [vmem:[%s252 + $0x3b0] sm:%s245]
                %373 = vst [vmem:[%s253 + $0x1d8] sm:%s245] %v372
                %v374 = vld [vmem:[%s252 + $0x3c0] sm:%s245]
                %375 = vst [vmem:[%s253 + $0x1e0] sm:%s245] %v374
                %v376 = vld [vmem:[%s252 + $0x3d0] sm:%s245]
                %377 = vst [vmem:[%s253 + $0x1e8] sm:%s245] %v376
                %v378 = vld [vmem:[%s252 + $0x3e0] sm:%s245]
                %379 = vst [vmem:[%s253 + $0x1f0] sm:%s245] %v378
                %v380 = vld [vmem:[%s252 + $0x3f0] sm:%s245]
                %381 = vst [vmem:[%s253 + $0x1f8] sm:%s245] %v380
                %v382 = vld [vmem:[%s252 + $0x400] sm:%s245]
                %383 = vst [vmem:[%s253 + $0x200] sm:%s245] %v382
                %v384 = vld [vmem:[%s252 + $0x410] sm:%s245]
                %385 = vst [vmem:[%s253 + $0x208] sm:%s245] %v384
                %v386 = vld [vmem:[%s252 + $0x420] sm:%s245]
                %387 = vst [vmem:[%s253 + $0x210] sm:%s245] %v386
                %v388 = vld [vmem:[%s252 + $0x430] sm:%s245]
                %389 = vst [vmem:[%s253 + $0x218] sm:%s245] %v388
                %v390 = vld [vmem:[%s252 + $0x440] sm:%s245]
                %391 = vst [vmem:[%s253 + $0x220] sm:%s245] %v390
                %v392 = vld [vmem:[%s252 + $0x450] sm:%s245]
                %393 = vst [vmem:[%s253 + $0x228] sm:%s245] %v392
                %v394 = vld [vmem:[%s252 + $0x460] sm:%s245]
                %395 = vst [vmem:[%s253 + $0x230] sm:%s245] %v394
                %v396 = vld [vmem:[%s252 + $0x470] sm:%s245]
                %397 = vst [vmem:[%s253 + $0x238] sm:%s245] %v396
                %v398 = vld [vmem:[%s252 + $0x480] sm:%s245]
                %399 = vst [vmem:[%s253 + $0x240] sm:%s245] %v398
                %v400 = vld [vmem:[%s252 + $0x490] sm:%s245]
                %401 = vst [vmem:[%s253 + $0x248] sm:%s245] %v400
                %v402 = vld [vmem:[%s252 + $0x4a0] sm:%s245]
                %403 = vst [vmem:[%s253 + $0x250] sm:%s245] %v402
                %v404 = vld [vmem:[%s252 + $0x4b0] sm:%s245]
                %405 = vst [vmem:[%s253 + $0x258] sm:%s245] %v404
                %v406 = vld [vmem:[%s252 + $0x4c0] sm:%s245]
                %407 = vst [vmem:[%s253 + $0x260] sm:%s245] %v406
                %v408 = vld [vmem:[%s252 + $0x4d0] sm:%s245]
                %409 = vst [vmem:[%s253 + $0x268] sm:%s245] %v408
                %v410 = vld [vmem:[%s252 + $0x4e0] sm:%s245]
                %411 = vst [vmem:[%s253 + $0x270] sm:%s245] %v410
                %v412 = vld [vmem:[%s252 + $0x4f0] sm:%s245]
                %413 = vst [vmem:[%s253 + $0x278] sm:%s245] %v412
                %v414 = vld [vmem:[%s252 + $0x500] sm:%s245]
                %415 = vst [vmem:[%s253 + $0x280] sm:%s245] %v414
                %v416 = vld [vmem:[%s252 + $0x510] sm:%s245]
                %417 = vst [vmem:[%s253 + $0x288] sm:%s245] %v416
                %v418 = vld [vmem:[%s252 + $0x520] sm:%s245]
                %419 = vst [vmem:[%s253 + $0x290] sm:%s245] %v418
                %v420 = vld [vmem:[%s252 + $0x530] sm:%s245]
                %421 = vst [vmem:[%s253 + $0x298] sm:%s245] %v420
                %v422 = vld [vmem:[%s252 + $0x540] sm:%s245]
                %423 = vst [vmem:[%s253 + $0x2a0] sm:%s245] %v422
                %v424 = vld [vmem:[%s252 + $0x550] sm:%s245]
                %425 = vst [vmem:[%s253 + $0x2a8] sm:%s245] %v424
                %v426 = vld [vmem:[%s252 + $0x560] sm:%s245]
                %427 = vst [vmem:[%s253 + $0x2b0] sm:%s245] %v426
                %v428 = vld [vmem:[%s252 + $0x570] sm:%s245]
                %429 = vst [vmem:[%s253 + $0x2b8] sm:%s245] %v428
                %v430 = vld [vmem:[%s252 + $0x580] sm:%s245]
                %431 = vst [vmem:[%s253 + $0x2c0] sm:%s245] %v430
                %v432 = vld [vmem:[%s252 + $0x590] sm:%s245]
                %433 = vst [vmem:[%s253 + $0x2c8] sm:%s245] %v432
                %v434 = vld [vmem:[%s252 + $0x5a0] sm:%s245]
                %435 = vst [vmem:[%s253 + $0x2d0] sm:%s245] %v434
                %v436 = vld [vmem:[%s252 + $0x5b0] sm:%s245]
                %437 = vst [vmem:[%s253 + $0x2d8] sm:%s245] %v436
                %v438 = vld [vmem:[%s252 + $0x5c0] sm:%s245]
                %439 = vst [vmem:[%s253 + $0x2e0] sm:%s245] %v438
                %v440 = vld [vmem:[%s252 + $0x5d0] sm:%s245]
                %441 = vst [vmem:[%s253 + $0x2e8] sm:%s245] %v440
                %v442 = vld [vmem:[%s252 + $0x5e0] sm:%s245]
                %443 = vst [vmem:[%s253 + $0x2f0] sm:%s245] %v442
                %v444 = vld [vmem:[%s252 + $0x5f0] sm:%s245]
                %445 = vst [vmem:[%s253 + $0x2f8] sm:%s245] %v444
              $region41: #{resnet_forward.25} parent=35 // loop_footer
                %s251 = sadd.s32 1, %s247
              $region42: #{resnet_forward.25} parent=35 // loop_footer_branch
                %246 = sbr.rel target = $region38
              $region43: #{resnet_forward.25} parent=35 // loop_exit
                _
            $region36: #{resnet_forward.25} parent=27 // pred_fallthru
              _
          $region28: #{resnet_forward.25} parent=23 // pred_fallthru
            _
          %650 = vnop
        $region24: #{resnet_forward.25} parent=15 // pred_fallthru
          _
        // Predicated region
        $region59: #{resnet_forward.25} parent=15 // pred_check
          %p651 = pneg %p106
        $region60: #{resnet_forward.25} parent=15 // pred_check_branch
          %653 = sbr.rel (%p651) target = $region62
        $region61: #{resnet_forward.25} parent=15 // pred_region
          %s654 = smul.u32 2, %s19
          %p655 = scmp.lt.s32.totalorder %s654, 3
          %s656 = scalar_select %p655, %s654, 3
          %s657 = scalar_lea.vmem %s2, %s656
          %s658 = smul.u32 2, %s19
        $region62: #{resnet_forward.25} parent=15 // pred_fallthru
          _
        // Predicated region
        $region63: #{resnet_forward.25} parent=15 // pred_check
          %p659 = pneg %p132
        $region64: #{resnet_forward.25} parent=15 // pred_check_branch
          %661 = sbr.rel (%p659) target = $region66
        $region65: #{resnet_forward.25} parent=15 // pred_region
          %s662 = smul.u32 2, %s19
          %p663 = scmp.lt.s32.totalorder %s662, 3
          %s664 = scalar_select %p663, %s662, 3
          %s665 = scalar_lea.vmem %s3, %s664
          %s666 = smul.u32 2, %s19
        $region66: #{resnet_forward.25} parent=15 // pred_fallthru
          _
        // Predicated region
        $region67: #{resnet_forward.25} parent=15 // pred_check
          %p667 = pneg %p160
        $region68: #{resnet_forward.25} parent=15 // pred_check_branch
          %669 = sbr.rel (%p667) target = $region70
        $region69: #{resnet_forward.25} parent=15 // pred_region
          %s670 = smul.u32 2, %s19
          %p671 = scmp.lt.s32.totalorder %s18, 0
          %s672 = scalar_select %p671, %s18, 0
          %p673 = scmp.lt.s32.totalorder %s670, 3
          %s674 = scalar_select %p673, %s670, 3
          %s675 = smul.addr %s672, 4
          %s676 = sadd.s32 %s674, %s675
          %s677 = smul.addr %s676, 2
          %s678 = scalar_lea.vmem %s4, %s677
          %s679 = smul.u32 2, %s19
        $region70: #{resnet_forward.25} parent=15 // pred_fallthru
          _
      $region16: #{resnet_forward.25} parent=5 // pred_fallthru
        _
      %p680 = scmp.le.s32.totalorder 1, %s11
      %p681 = scmp.lt.s32.totalorder %s11, 13
      %p682 = pnand %p680, %p681
      %p683 = pneg %p682
      // Predicated region
      $region71: #{resnet_forward.25} parent=5 // pred_check
        _
      $region72: #{resnet_forward.25} parent=5 // pred_check_branch
        %685 = sbr.rel (%p682) target = $region74
      $region73: #{resnet_forward.25} parent=5 // pred_region
        %s686 = ssub.s32 %s11, 1
        %s687 = sand.u32 %s73, 1
        %s688 = sand.u32 %s73, 1
        %s689 = smul.addr %s688, 768
        %s690 = scalar_lea.vmem [#allocation2], %s689
        // Predicated region
        $region75: #{resnet_forward.25} parent=73 // pred_check
          %p691 = pneg %p86
        $region76: #{resnet_forward.25} parent=73 // pred_check_branch
          %693 = sbr.rel (%p691) target = $region78
        $region77: #{resnet_forward.25} parent=73 // pred_region
          _
        $region78: #{resnet_forward.25} parent=73 // pred_fallthru
          _
        %s694 = smul.u32 6, %s23
        %p695 = scmp.lt.s32.totalorder %s21, 0
        %s696 = scalar_select %p695, %s21, 0
        %p697 = scmp.lt.s32.totalorder %s694, 35
        %s698 = scalar_select %p697, %s694, 35
        %s699 = smul.addr %s696, 36
        %s700 = sadd.s32 %s698, %s699
        %s701 = scalar_lea.vmem %s0, %s700
        %p702 = pneg %p58
        %p703 = pneg %p55
        %s704 = sand.u32 %s73, 1
        %s705 = sand.u32 %s73, 1
        %s706 = smul.addr %s705, 768
        %s707 = scalar_lea.vmem [#allocation2], %s706
        %p708 = pneg %p86
        %p709 = pneg %p83
        %s710 = smul.u32 2, %s22
        %p711 = scmp.lt.s32.totalorder %s710, 3
        %s712 = scalar_select %p711, %s710, 3
        %s713 = scalar_lea.vmem %s2, %s712
        %p714 = pneg %p112
        %p715 = pneg %p109
        %s716 = smul.u32 2, %s22
        %p717 = scmp.lt.s32.totalorder %s716, 3
        %s718 = scalar_select %p717, %s716, 3
        %s719 = scalar_lea.vmem %s3, %s718
        %p720 = pneg %p138
        %p721 = pneg %p135
        %s722 = smul.u32 2, %s22
        %p723 = scmp.lt.s32.totalorder %s21, 0
        %s724 = scalar_select %p723, %s21, 0
        %p725 = scmp.lt.s32.totalorder %s722, 3
        %s726 = scalar_select %p725, %s722, 3
        %s727 = smul.addr %s724, 4
        %s728 = sadd.s32 %s726, %s727
        %s729 = smul.addr %s728, 2
        %s730 = scalar_lea.vmem %s4, %s729
        %p731 = pneg %p166
        %p732 = pneg %p163
        %p733 = pneg %p194
        %p734 = pneg %p191
        %s735 = smul.u32 2, %s22
        %p736 = scmp.lt.s32.totalorder %s21, 0
        %s737 = scalar_select %p736, %s21, 0
        %p738 = scmp.lt.s32.totalorder %s735, 3
        %s739 = scalar_select %p738, %s735, 3
        %s740 = smul.addr %s737, 4
        %s741 = sadd.s32 %s739, %s740
        %s742 = smul.addr %s741, 2
        %s743 = scalar_lea.vmem %s5, %s742
        %s744 = smul.u32 6, %s23
        %p745 = scmp.lt.s32.totalorder %s21, 0
        %s746 = scalar_select %p745, %s21, 0
        %p747 = scmp.lt.s32.totalorder %s744, 35
        %s748 = scalar_select %p747, %s744, 35
        %s749 = smul.addr %s746, 36
        %s750 = sadd.s32 %s748, %s749
        %s751 = scalar_lea.vmem %s0, %s750
        %s752 = smul.u32 6, %s23
        %s753 = smul.u32 96, %s23
        %s754 = smul.u32 2, %s22
        %s755 = smul.u32 2, %s22
        %p756 = scmp.lt.s32.totalorder %s755, 3
        %s757 = scalar_select %p756, %s755, 3
        %s758 = scalar_lea.vmem %s2, %s757
        %s759 = smul.u32 2, %s22
        %s760 = smul.u32 2, %s22
        %p761 = scmp.lt.s32.totalorder %s760, 3
        %s762 = scalar_select %p761, %s760, 3
        %s763 = scalar_lea.vmem %s3, %s762
        %s764 = smul.u32 2, %s22
        %s765 = smul.u32 2, %s22
        %p766 = scmp.lt.s32.totalorder %s21, 0
        %s767 = scalar_select %p766, %s21, 0
        %p768 = scmp.lt.s32.totalorder %s765, 3
        %s769 = scalar_select %p768, %s765, 3
        %s770 = smul.addr %s767, 4
        %s771 = sadd.s32 %s769, %s770
        %s772 = smul.addr %s771, 2
        %s773 = scalar_lea.vmem %s4, %s772
        %s774 = smul.u32 2, %s22
        %s775 = smul.u32 2, %s22
        %p776 = scmp.lt.s32.totalorder %s21, 0
        %s777 = scalar_select %p776, %s21, 0
        %p778 = scmp.lt.s32.totalorder %s775, 3
        %s779 = scalar_select %p778, %s775, 3
        %s780 = smul.addr %s777, 4
        %s781 = sadd.s32 %s779, %s780
        %s782 = smul.addr %s781, 2
        %s783 = scalar_lea.vmem %s5, %s782
        %s784 = smul.u32 2, %s22
        %v785 = vld [vmem:[%s751] sm:$0x3f]
        %v786 = vld [vmem:[%s690] sm:$0xff]
        %v787 = vld [vmem:[%s690 + $0x8] sm:$0xff]
        %v788 = vld [vmem:[%s690 + $0x10] sm:$0xff]
        %v789 = vld [vmem:[%s690 + $0x18] sm:$0xff]
        %v790 = vld [vmem:[%s690 + $0x20] sm:$0xff]
        %v791 = vld [vmem:[%s690 + $0x28] sm:$0xff]
        %v792 = vld [vmem:[%s690 + $0x30] sm:$0xff]
        %v793 = vld [vmem:[%s690 + $0x38] sm:$0xff]
        %v794 = vld [vmem:[%s690 + $0x40] sm:$0xff]
        %v795 = vld [vmem:[%s690 + $0x48] sm:$0xff]
        %v796 = vld [vmem:[%s690 + $0x50] sm:$0xff]
        %v797 = vld [vmem:[%s690 + $0x58] sm:$0xff]
        %v798 = vld [vmem:[%s690 + $0x60] sm:$0xff]
        %v799 = vld [vmem:[%s690 + $0x68] sm:$0xff]
        %v800 = vld [vmem:[%s690 + $0x70] sm:$0xff]
        %v801 = vld [vmem:[%s690 + $0x78] sm:$0xff]
        %v802 = vld [vmem:[%s690 + $0x80] sm:$0xff]
        %v803 = vld [vmem:[%s690 + $0x88] sm:$0xff]
        %v804 = vld [vmem:[%s690 + $0x90] sm:$0xff]
        %v805 = vld [vmem:[%s690 + $0x98] sm:$0xff]
        %v806 = vld [vmem:[%s690 + $0xa0] sm:$0xff]
        %v807 = vld [vmem:[%s690 + $0xa8] sm:$0xff]
        %v808 = vld [vmem:[%s690 + $0xb0] sm:$0xff]
        %v809 = vld [vmem:[%s690 + $0xb8] sm:$0xff]
        %v810 = vld [vmem:[%s690 + $0xc0] sm:$0xff]
        %v811 = vld [vmem:[%s690 + $0xc8] sm:$0xff]
        %v812 = vld [vmem:[%s690 + $0xd0] sm:$0xff]
        %v813 = vld [vmem:[%s690 + $0xd8] sm:$0xff]
        %v814 = vld [vmem:[%s690 + $0xe0] sm:$0xff]
        %v815 = vld [vmem:[%s690 + $0xe8] sm:$0xff]
        %v816 = vld [vmem:[%s690 + $0xf0] sm:$0xff]
        %v817 = vld [vmem:[%s690 + $0xf8] sm:$0xff]
        %v818 = vld [vmem:[%s690 + $0x100] sm:$0xff]
        %v819 = vld [vmem:[%s690 + $0x108] sm:$0xff]
        %v820 = vld [vmem:[%s690 + $0x110] sm:$0xff]
        %v821 = vld [vmem:[%s690 + $0x118] sm:$0xff]
        %v822 = vld [vmem:[%s690 + $0x120] sm:$0xff]
        %v823 = vld [vmem:[%s690 + $0x128] sm:$0xff]
        %v824 = vld [vmem:[%s690 + $0x130] sm:$0xff]
        %v825 = vld [vmem:[%s690 + $0x138] sm:$0xff]
        %v826 = vld [vmem:[%s690 + $0x140] sm:$0xff]
        %v827 = vld [vmem:[%s690 + $0x148] sm:$0xff]
        %v828 = vld [vmem:[%s690 + $0x150] sm:$0xff]
        %v829 = vld [vmem:[%s690 + $0x158] sm:$0xff]
        %v830 = vld [vmem:[%s690 + $0x160] sm:$0xff]
        %v831 = vld [vmem:[%s690 + $0x168] sm:$0xff]
        %v832 = vld [vmem:[%s690 + $0x170] sm:$0xff]
        %v833 = vld [vmem:[%s690 + $0x178] sm:$0xff]
        %v834 = vld [vmem:[%s690 + $0x180] sm:$0xff]
        %v835 = vld [vmem:[%s690 + $0x188] sm:$0xff]
        %v836 = vld [vmem:[%s690 + $0x190] sm:$0xff]
        %v837 = vld [vmem:[%s690 + $0x198] sm:$0xff]
        %v838 = vld [vmem:[%s690 + $0x1a0] sm:$0xff]
        %v839 = vld [vmem:[%s690 + $0x1a8] sm:$0xff]
        %v840 = vld [vmem:[%s690 + $0x1b0] sm:$0xff]
        %v841 = vld [vmem:[%s690 + $0x1b8] sm:$0xff]
        %v842 = vld [vmem:[%s690 + $0x1c0] sm:$0xff]
        %v843 = vld [vmem:[%s690 + $0x1c8] sm:$0xff]
        %v844 = vld [vmem:[%s690 + $0x1d0] sm:$0xff]
        %v845 = vld [vmem:[%s690 + $0x1d8] sm:$0xff]
        %v846 = vld [vmem:[%s690 + $0x1e0] sm:$0xff]
        %v847 = vld [vmem:[%s690 + $0x1e8] sm:$0xff]
        %v848 = vld [vmem:[%s690 + $0x1f0] sm:$0xff]
        %v849 = vld [vmem:[%s690 + $0x1f8] sm:$0xff]
        %v850 = vld [vmem:[%s690 + $0x200] sm:$0xff]
        %v851 = vld [vmem:[%s690 + $0x208] sm:$0xff]
        %v852 = vld [vmem:[%s690 + $0x210] sm:$0xff]
        %v853 = vld [vmem:[%s690 + $0x218] sm:$0xff]
        %v854 = vld [vmem:[%s690 + $0x220] sm:$0xff]
        %v855 = vld [vmem:[%s690 + $0x228] sm:$0xff]
        %v856 = vld [vmem:[%s690 + $0x230] sm:$0xff]
        %v857 = vld [vmem:[%s690 + $0x238] sm:$0xff]
        %v858 = vld [vmem:[%s690 + $0x240] sm:$0xff]
        %v859 = vld [vmem:[%s690 + $0x248] sm:$0xff]
        %v860 = vld [vmem:[%s690 + $0x250] sm:$0xff]
        %v861 = vld [vmem:[%s690 + $0x258] sm:$0xff]
        %v862 = vld [vmem:[%s690 + $0x260] sm:$0xff]
        %v863 = vld [vmem:[%s690 + $0x268] sm:$0xff]
        %v864 = vld [vmem:[%s690 + $0x270] sm:$0xff]
        %v865 = vld [vmem:[%s690 + $0x278] sm:$0xff]
        %v866 = vld [vmem:[%s690 + $0x280] sm:$0xff]
        %v867 = vld [vmem:[%s690 + $0x288] sm:$0xff]
        %v868 = vld [vmem:[%s690 + $0x290] sm:$0xff]
        %v869 = vld [vmem:[%s690 + $0x298] sm:$0xff]
        %v870 = vld [vmem:[%s690 + $0x2a0] sm:$0xff]
        %v871 = vld [vmem:[%s690 + $0x2a8] sm:$0xff]
        %v872 = vld [vmem:[%s690 + $0x2b0] sm:$0xff]
        %v873 = vld [vmem:[%s690 + $0x2b8] sm:$0xff]
        %v874 = vld [vmem:[%s690 + $0x2c0] sm:$0xff]
        %v875 = vld [vmem:[%s690 + $0x2c8] sm:$0xff]
        %v876 = vld [vmem:[%s690 + $0x2d0] sm:$0xff]
        %v877 = vld [vmem:[%s690 + $0x2d8] sm:$0xff]
        %v878 = vld [vmem:[%s690 + $0x2e0] sm:$0xff]
        %v879 = vld [vmem:[%s690 + $0x2e8] sm:$0xff]
        %v880 = vld [vmem:[%s690 + $0x2f0] sm:$0xff]
        %v881 = vld [vmem:[%s690 + $0x2f8] sm:$0xff]
        %883 = vst [vmem:[#allocation1] ss:$9 sm:$0xff] %v785
        %v884 = vld [vmem:[#allocation1] sm:$0xff]
        %v885 = vld [vmem:[#allocation1 + $0x9] sm:$0xff]
        %v886 = vld [vmem:[#allocation1 + $0x12] sm:$0xff]
        %v887 = vld [vmem:[#allocation1 + $0x1b] sm:$0xff]
        %v888 = vld [vmem:[#allocation1 + $0x24] sm:$0xff]
        %v889 = vld [vmem:[#allocation1 + $0x2d] sm:$0xff]
        %v992 = vunpack.c.l.b16 %v786
        %v993 = vunpack.c.h.b16 %v786
        %v994 = vunpack.c.l.b16 %v787
        %v995 = vunpack.c.h.b16 %v787
        %v996 = vunpack.c.l.b16 %v788
        %v997 = vunpack.c.h.b16 %v788
        %v998 = vunpack.c.l.b16 %v789
        %v999 = vunpack.c.h.b16 %v789
        %v1000 = vunpack.c.l.b16 %v790
        %v1001 = vunpack.c.h.b16 %v790
        %v1002 = vunpack.c.l.b16 %v791
        %v1003 = vunpack.c.h.b16 %v791
        %v1004 = vunpack.c.l.b16 %v792
        %v1005 = vunpack.c.h.b16 %v792
        %v1006 = vunpack.c.l.b16 %v793
        %v1007 = vunpack.c.h.b16 %v793
        %v1008 = vunpack.c.l.b16 %v794
        %v1009 = vunpack.c.h.b16 %v794
        %v1010 = vunpack.c.l.b16 %v795
        %v1011 = vunpack.c.h.b16 %v795
        %v1012 = vunpack.c.l.b16 %v796
        %v1013 = vunpack.c.h.b16 %v796
        %v1014 = vunpack.c.l.b16 %v797
        %v1015 = vunpack.c.h.b16 %v797
        %v1016 = vunpack.c.l.b16 %v798
        %v1017 = vunpack.c.h.b16 %v798
        %v1018 = vunpack.c.l.b16 %v799
        %v1019 = vunpack.c.h.b16 %v799
        %v1020 = vunpack.c.l.b16 %v800
        %v1021 = vunpack.c.h.b16 %v800
        %v1022 = vunpack.c.l.b16 %v801
        %v1023 = vunpack.c.h.b16 %v801
        %v1024 = vunpack.c.l.b16 %v802
        %v1025 = vunpack.c.h.b16 %v802
        %v1026 = vunpack.c.l.b16 %v803
        %v1027 = vunpack.c.h.b16 %v803
        %v1028 = vunpack.c.l.b16 %v804
        %v1029 = vunpack.c.h.b16 %v804
        %v1030 = vunpack.c.l.b16 %v805
        %v1031 = vunpack.c.h.b16 %v805
        %v1032 = vunpack.c.l.b16 %v806
        %v1033 = vunpack.c.h.b16 %v806
        %v1034 = vunpack.c.l.b16 %v807
        %v1035 = vunpack.c.h.b16 %v807
        %v1036 = vunpack.c.l.b16 %v808
        %v1037 = vunpack.c.h.b16 %v808
        %v1038 = vunpack.c.l.b16 %v809
        %v1039 = vunpack.c.h.b16 %v809
        %v1040 = vunpack.c.l.b16 %v810
        %v1041 = vunpack.c.h.b16 %v810
        %v1042 = vunpack.c.l.b16 %v811
        %v1043 = vunpack.c.h.b16 %v811
        %v1044 = vunpack.c.l.b16 %v812
        %v1045 = vunpack.c.h.b16 %v812
        %v1046 = vunpack.c.l.b16 %v813
        %v1047 = vunpack.c.h.b16 %v813
        %v1048 = vunpack.c.l.b16 %v814
        %v1049 = vunpack.c.h.b16 %v814
        %v1050 = vunpack.c.l.b16 %v815
        %v1051 = vunpack.c.h.b16 %v815
        %v1052 = vunpack.c.l.b16 %v816
        %v1053 = vunpack.c.h.b16 %v816
        %v1054 = vunpack.c.l.b16 %v817
        %v1055 = vunpack.c.h.b16 %v817
        %v1056 = vunpack.c.l.b16 %v818
        %v1057 = vunpack.c.h.b16 %v818
        %v1058 = vunpack.c.l.b16 %v819
        %v1059 = vunpack.c.h.b16 %v819
        %v1060 = vunpack.c.l.b16 %v820
        %v1061 = vunpack.c.h.b16 %v820
        %v1062 = vunpack.c.l.b16 %v821
        %v1063 = vunpack.c.h.b16 %v821
        %v1064 = vunpack.c.l.b16 %v822
        %v1065 = vunpack.c.h.b16 %v822
        %v1066 = vunpack.c.l.b16 %v823
        %v1067 = vunpack.c.h.b16 %v823
        %v1068 = vunpack.c.l.b16 %v824
        %v1069 = vunpack.c.h.b16 %v824
        %v1070 = vunpack.c.l.b16 %v825
        %v1071 = vunpack.c.h.b16 %v825
        %v1072 = vunpack.c.l.b16 %v826
        %v1073 = vunpack.c.h.b16 %v826
        %v1074 = vunpack.c.l.b16 %v827
        %v1075 = vunpack.c.h.b16 %v827
        %v1076 = vunpack.c.l.b16 %v828
        %v1077 = vunpack.c.h.b16 %v828
        %v1078 = vunpack.c.l.b16 %v829
        %v1079 = vunpack.c.h.b16 %v829
        %v1080 = vunpack.c.l.b16 %v830
        %v1081 = vunpack.c.h.b16 %v830
        %v1082 = vunpack.c.l.b16 %v831
        %v1083 = vunpack.c.h.b16 %v831
        %v1084 = vunpack.c.l.b16 %v832
        %v1085 = vunpack.c.h.b16 %v832
        %v1086 = vunpack.c.l.b16 %v833
        %v1087 = vunpack.c.h.b16 %v833
        %v1088 = vunpack.c.l.b16 %v834
        %v1089 = vunpack.c.h.b16 %v834
        %v1090 = vunpack.c.l.b16 %v835
        %v1091 = vunpack.c.h.b16 %v835
        %v1092 = vunpack.c.l.b16 %v836
        %v1093 = vunpack.c.h.b16 %v836
        %v1094 = vunpack.c.l.b16 %v837
        %v1095 = vunpack.c.h.b16 %v837
        %v1096 = vunpack.c.l.b16 %v838
        %v1097 = vunpack.c.h.b16 %v838
        %v1098 = vunpack.c.l.b16 %v839
        %v1099 = vunpack.c.h.b16 %v839
        %v1100 = vunpack.c.l.b16 %v840
        %v1101 = vunpack.c.h.b16 %v840
        %v1102 = vunpack.c.l.b16 %v841
        %v1103 = vunpack.c.h.b16 %v841
        %v1104 = vunpack.c.l.b16 %v842
        %v1105 = vunpack.c.h.b16 %v842
        %v1106 = vunpack.c.l.b16 %v843
        %v1107 = vunpack.c.h.b16 %v843
        %v1108 = vunpack.c.l.b16 %v844
        %v1109 = vunpack.c.h.b16 %v844
        %v1110 = vunpack.c.l.b16 %v845
        %v1111 = vunpack.c.h.b16 %v845
        %v1112 = vunpack.c.l.b16 %v846
        %v1113 = vunpack.c.h.b16 %v846
        %v1114 = vunpack.c.l.b16 %v847
        %v1115 = vunpack.c.h.b16 %v847
        %v1116 = vunpack.c.l.b16 %v848
        %v1117 = vunpack.c.h.b16 %v848
        %v1118 = vunpack.c.l.b16 %v849
        %v1119 = vunpack.c.h.b16 %v849
        %v1120 = vunpack.c.l.b16 %v850
        %v1121 = vunpack.c.h.b16 %v850
        %v1122 = vunpack.c.l.b16 %v851
        %v1123 = vunpack.c.h.b16 %v851
        %v1124 = vunpack.c.l.b16 %v852
        %v1125 = vunpack.c.h.b16 %v852
        %v1126 = vunpack.c.l.b16 %v853
        %v1127 = vunpack.c.h.b16 %v853
        %v1128 = vunpack.c.l.b16 %v854
        %v1129 = vunpack.c.h.b16 %v854
        %v1130 = vunpack.c.l.b16 %v855
        %v1131 = vunpack.c.h.b16 %v855
        %v1132 = vunpack.c.l.b16 %v856
        %v1133 = vunpack.c.h.b16 %v856
        %v1134 = vunpack.c.l.b16 %v857
        %v1135 = vunpack.c.h.b16 %v857
        %v1136 = vunpack.c.l.b16 %v858
        %v1137 = vunpack.c.h.b16 %v858
        %v1138 = vunpack.c.l.b16 %v859
        %v1139 = vunpack.c.h.b16 %v859
        %v1140 = vunpack.c.l.b16 %v860
        %v1141 = vunpack.c.h.b16 %v860
        %v1142 = vunpack.c.l.b16 %v861
        %v1143 = vunpack.c.h.b16 %v861
        %v1144 = vunpack.c.l.b16 %v862
        %v1145 = vunpack.c.h.b16 %v862
        %v1146 = vunpack.c.l.b16 %v863
        %v1147 = vunpack.c.h.b16 %v863
        %v1148 = vunpack.c.l.b16 %v864
        %v1149 = vunpack.c.h.b16 %v864
        %v1150 = vunpack.c.l.b16 %v865
        %v1151 = vunpack.c.h.b16 %v865
        %v1152 = vunpack.c.l.b16 %v866
        %v1153 = vunpack.c.h.b16 %v866
        %v1154 = vunpack.c.l.b16 %v867
        %v1155 = vunpack.c.h.b16 %v867
        %v1156 = vunpack.c.l.b16 %v868
        %v1157 = vunpack.c.h.b16 %v868
        %v1158 = vunpack.c.l.b16 %v869
        %v1159 = vunpack.c.h.b16 %v869
        %v1160 = vunpack.c.l.b16 %v870
        %v1161 = vunpack.c.h.b16 %v870
        %v1162 = vunpack.c.l.b16 %v871
        %v1163 = vunpack.c.h.b16 %v871
        %v1164 = vunpack.c.l.b16 %v872
        %v1165 = vunpack.c.h.b16 %v872
        %v1166 = vunpack.c.l.b16 %v873
        %v1167 = vunpack.c.h.b16 %v873
        %v1168 = vunpack.c.l.b16 %v874
        %v1169 = vunpack.c.h.b16 %v874
        %v1170 = vunpack.c.l.b16 %v875
        %v1171 = vunpack.c.h.b16 %v875
        %v1172 = vunpack.c.l.b16 %v876
        %v1173 = vunpack.c.h.b16 %v876
        %v1174 = vunpack.c.l.b16 %v877
        %v1175 = vunpack.c.h.b16 %v877
        %v1176 = vunpack.c.l.b16 %v878
        %v1177 = vunpack.c.h.b16 %v878
        %v1178 = vunpack.c.l.b16 %v879
        %v1179 = vunpack.c.h.b16 %v879
        %v1180 = vunpack.c.l.b16 %v880
        %v1181 = vunpack.c.h.b16 %v880
        %v1182 = vunpack.c.l.b16 %v881
        %v1183 = vunpack.c.h.b16 %v881
        %v1184 = vpack.c.b16 %v994, %v992
        %v1185 = vpack.c.b16 %v995, %v993
        %v1186 = vpack.c.b16 %v998, %v996
        %v1187 = vpack.c.b16 %v999, %v997
        %v1188 = vpack.c.b16 %v1002, %v1000
        %v1189 = vpack.c.b16 %v1003, %v1001
        %v1190 = vpack.c.b16 %v1006, %v1004
        %v1191 = vpack.c.b16 %v1007, %v1005
        %v1192 = vpack.c.b16 %v1010, %v1008
        %v1193 = vpack.c.b16 %v1011, %v1009
        %v1194 = vpack.c.b16 %v1014, %v1012
        %v1195 = vpack.c.b16 %v1015, %v1013
        %v1196 = vpack.c.b16 %v1018, %v1016
        %v1197 = vpack.c.b16 %v1019, %v1017
        %v1198 = vpack.c.b16 %v1022, %v1020
        %v1199 = vpack.c.b16 %v1023, %v1021
        %v1200 = vpack.c.b16 %v1026, %v1024
        %v1201 = vpack.c.b16 %v1027, %v1025
        %v1202 = vpack.c.b16 %v1030, %v1028
        %v1203 = vpack.c.b16 %v1031, %v1029
        %v1204 = vpack.c.b16 %v1034, %v1032
        %v1205 = vpack.c.b16 %v1035, %v1033
        %v1206 = vpack.c.b16 %v1038, %v1036
        %v1207 = vpack.c.b16 %v1039, %v1037
        %v1208 = vpack.c.b16 %v1042, %v1040
        %v1209 = vpack.c.b16 %v1043, %v1041
        %v1210 = vpack.c.b16 %v1046, %v1044
        %v1211 = vpack.c.b16 %v1047, %v1045
        %v1212 = vpack.c.b16 %v1050, %v1048
        %v1213 = vpack.c.b16 %v1051, %v1049
        %v1214 = vpack.c.b16 %v1054, %v1052
        %v1215 = vpack.c.b16 %v1055, %v1053
        %v1216 = vpack.c.b16 %v1058, %v1056
        %v1217 = vpack.c.b16 %v1059, %v1057
        %v1218 = vpack.c.b16 %v1062, %v1060
        %v1219 = vpack.c.b16 %v1063, %v1061
        %v1220 = vpack.c.b16 %v1066, %v1064
        %v1221 = vpack.c.b16 %v1067, %v1065
        %v1222 = vpack.c.b16 %v1070, %v1068
        %v1223 = vpack.c.b16 %v1071, %v1069
        %v1224 = vpack.c.b16 %v1074, %v1072
        %v1225 = vpack.c.b16 %v1075, %v1073
        %v1226 = vpack.c.b16 %v1078, %v1076
        %v1227 = vpack.c.b16 %v1079, %v1077
        %v1228 = vpack.c.b16 %v1082, %v1080
        %v1229 = vpack.c.b16 %v1083, %v1081
        %v1230 = vpack.c.b16 %v1086, %v1084
        %v1231 = vpack.c.b16 %v1087, %v1085
        %v1232 = vpack.c.b16 %v1090, %v1088
        %v1233 = vpack.c.b16 %v1091, %v1089
        %v1234 = vpack.c.b16 %v1094, %v1092
        %v1235 = vpack.c.b16 %v1095, %v1093
        %v1236 = vpack.c.b16 %v1098, %v1096
        %v1237 = vpack.c.b16 %v1099, %v1097
        %v1238 = vpack.c.b16 %v1102, %v1100
        %v1239 = vpack.c.b16 %v1103, %v1101
        %v1240 = vpack.c.b16 %v1106, %v1104
        %v1241 = vpack.c.b16 %v1107, %v1105
        %v1242 = vpack.c.b16 %v1110, %v1108
        %v1243 = vpack.c.b16 %v1111, %v1109
        %v1244 = vpack.c.b16 %v1114, %v1112
        %v1245 = vpack.c.b16 %v1115, %v1113
        %v1246 = vpack.c.b16 %v1118, %v1116
        %v1247 = vpack.c.b16 %v1119, %v1117
        %v1248 = vpack.c.b16 %v1122, %v1120
        %v1249 = vpack.c.b16 %v1123, %v1121
        %v1250 = vpack.c.b16 %v1126, %v1124
        %v1251 = vpack.c.b16 %v1127, %v1125
        %v1252 = vpack.c.b16 %v1130, %v1128
        %v1253 = vpack.c.b16 %v1131, %v1129
        %v1254 = vpack.c.b16 %v1134, %v1132
        %v1255 = vpack.c.b16 %v1135, %v1133
        %v1256 = vpack.c.b16 %v1138, %v1136
        %v1257 = vpack.c.b16 %v1139, %v1137
        %v1258 = vpack.c.b16 %v1142, %v1140
        %v1259 = vpack.c.b16 %v1143, %v1141
        %v1260 = vpack.c.b16 %v1146, %v1144
        %v1261 = vpack.c.b16 %v1147, %v1145
        %v1262 = vpack.c.b16 %v1150, %v1148
        %v1263 = vpack.c.b16 %v1151, %v1149
        %v1264 = vpack.c.b16 %v1154, %v1152
        %v1265 = vpack.c.b16 %v1155, %v1153
        %v1266 = vpack.c.b16 %v1158, %v1156
        %v1267 = vpack.c.b16 %v1159, %v1157
        %v1268 = vpack.c.b16 %v1162, %v1160
        %v1269 = vpack.c.b16 %v1163, %v1161
        %v1270 = vpack.c.b16 %v1166, %v1164
        %v1271 = vpack.c.b16 %v1167, %v1165
        %v1272 = vpack.c.b16 %v1170, %v1168
        %v1273 = vpack.c.b16 %v1171, %v1169
        %v1274 = vpack.c.b16 %v1174, %v1172
        %v1275 = vpack.c.b16 %v1175, %v1173
        %v1276 = vpack.c.b16 %v1178, %v1176
        %v1277 = vpack.c.b16 %v1179, %v1177
        %v1278 = vpack.c.b16 %v1182, %v1180
        %v1279 = vpack.c.b16 %v1183, %v1181
        %1376 = vmatpush.bf16.msra.mxu0 %v1198
        %1377 = vmatpush.bf16.msra.mxu0 %v1196
        %1378 = vmatpush.bf16.msra.mxu0 %v1194
        %1379 = vmatpush.bf16.msra.mxu0 %v1192
        %1380 = vmatpush.bf16.msra.mxu0 %v1190
        %1381 = vmatpush.bf16.msra.mxu0 %v1188
        %1382 = vmatpush.bf16.msra.mxu0 %v1186
        %1383 = vmatpush.bf16.msra.mxu0 %v1184
        %1384 = vmatmul.bf16.gmra.mxu0 %v884
        %v1385 = vpop.f32.mrf.mxu0
        %v1386 = vadd.f32 0.0, %v1385
        %v1387 = vpop.f32.mrf.mxu0
        %1388 = vdwg.mxu0
        %1389 = vmatpush.bf16.msra.mxu0 %v1214
        %1390 = vmatpush.bf16.msra.mxu0 %v1212
        %1391 = vmatpush.bf16.msra.mxu0 %v1210
        %1392 = vmatpush.bf16.msra.mxu0 %v1208
        %1393 = vmatpush.bf16.msra.mxu0 %v1206
        %1394 = vmatpush.bf16.msra.mxu0 %v1204
        %1395 = vmatpush.bf16.msra.mxu0 %v1202
        %1396 = vmatpush.bf16.msra.mxu0 %v1200
        %1397 = vmatmul.bf16.gmra.mxu0 %v885
        %v1398 = vpop.f32.mrf.mxu0
        %v1399 = vadd.f32 %v1386, %v1398
        %v1400 = vpop.f32.mrf.mxu0
        %1401 = vdwg.mxu0
        %1402 = vmatpush.bf16.msra.mxu0 %v1230
        %1403 = vmatpush.bf16.msra.mxu0 %v1228
        %1404 = vmatpush.bf16.msra.mxu0 %v1226
        %1405 = vmatpush.bf16.msra.mxu0 %v1224
        %1406 = vmatpush.bf16.msra.mxu0 %v1222
        %1407 = vmatpush.bf16.msra.mxu0 %v1220
        %1408 = vmatpush.bf16.msra.mxu0 %v1218
        %1409 = vmatpush.bf16.msra.mxu0 %v1216
        %1410 = vmatmul.bf16.gmra.mxu0 %v886
        %v1411 = vpop.f32.mrf.mxu0
        %v1412 = vadd.f32 %v1399, %v1411
        %v1413 = vpop.f32.mrf.mxu0
        %1414 = vdwg.mxu0
        %1415 = vmatpush.bf16.msra.mxu0 %v1246
        %1416 = vmatpush.bf16.msra.mxu0 %v1244
        %1417 = vmatpush.bf16.msra.mxu0 %v1242
        %1418 = vmatpush.bf16.msra.mxu0 %v1240
        %1419 = vmatpush.bf16.msra.mxu0 %v1238
        %1420 = vmatpush.bf16.msra.mxu0 %v1236
        %1421 = vmatpush.bf16.msra.mxu0 %v1234
        %1422 = vmatpush.bf16.msra.mxu0 %v1232
        %1423 = vmatmul.bf16.gmra.mxu0 %v887
        %v1424 = vpop.f32.mrf.mxu0
        %v1425 = vadd.f32 %v1412, %v1424
        %v1426 = vpop.f32.mrf.mxu0
        %1427 = vdwg.mxu0
        %1428 = vmatpush.bf16.msra.mxu0 %v1262
        %1429 = vmatpush.bf16.msra.mxu0 %v1260
        %1430 = vmatpush.bf16.msra.mxu0 %v1258
        %1431 = vmatpush.bf16.msra.mxu0 %v1256
        %1432 = vmatpush.bf16.msra.mxu0 %v1254
        %1433 = vmatpush.bf16.msra.mxu0 %v1252
        %1434 = vmatpush.bf16.msra.mxu0 %v1250
        %1435 = vmatpush.bf16.msra.mxu0 %v1248
        %1436 = vmatmul.bf16.gmra.mxu0 %v888
        %v1437 = vpop.f32.mrf.mxu0
        %v1438 = vadd.f32 %v1425, %v1437
        %v1439 = vpop.f32.mrf.mxu0
        %1440 = vdwg.mxu0
        %1441 = vmatpush.bf16.msra.mxu0 %v1278
        %1442 = vmatpush.bf16.msra.mxu0 %v1276
        %1443 = vmatpush.bf16.msra.mxu0 %v1274
        %1444 = vmatpush.bf16.msra.mxu0 %v1272
        %1445 = vmatpush.bf16.msra.mxu0 %v1270
        %1446 = vmatpush.bf16.msra.mxu0 %v1268
        %1447 = vmatpush.bf16.msra.mxu0 %v1266
        %1448 = vmatpush.bf16.msra.mxu0 %v1264
        %1449 = vmatmul.bf16.gmra.mxu0 %v889
        %v1450 = vpop.f32.mrf.mxu0
        %v1451 = vadd.f32 %v1438, %v1450
        %v1452 = vpop.f32.mrf.mxu0
        %1453 = vdwg.mxu0
        %1454 = vmatpush.bf16.msra.mxu0 %v1199
        %1455 = vmatpush.bf16.msra.mxu0 %v1197
        %1456 = vmatpush.bf16.msra.mxu0 %v1195
        %1457 = vmatpush.bf16.msra.mxu0 %v1193
        %1458 = vmatpush.bf16.msra.mxu0 %v1191
        %1459 = vmatpush.bf16.msra.mxu0 %v1189
        %1460 = vmatpush.bf16.msra.mxu0 %v1187
        %1461 = vmatpush.bf16.msra.mxu0 %v1185
        %1462 = vmatmul.bf16.gmra.mxu0 %v884
        %v1463 = vpop.f32.mrf.mxu0
        %v1464 = vadd.f32 0.0, %v1463
        %v1465 = vpop.f32.mrf.mxu0
        %1466 = vdwg.mxu0
        %1467 = vmatpush.bf16.msra.mxu0 %v1215
        %1468 = vmatpush.bf16.msra.mxu0 %v1213
        %1469 = vmatpush.bf16.msra.mxu0 %v1211
        %1470 = vmatpush.bf16.msra.mxu0 %v1209
        %1471 = vmatpush.bf16.msra.mxu0 %v1207
        %1472 = vmatpush.bf16.msra.mxu0 %v1205
        %1473 = vmatpush.bf16.msra.mxu0 %v1203
        %1474 = vmatpush.bf16.msra.mxu0 %v1201
        %1475 = vmatmul.bf16.gmra.mxu0 %v885
        %v1476 = vpop.f32.mrf.mxu0
        %v1477 = vadd.f32 %v1464, %v1476
        %v1478 = vpop.f32.mrf.mxu0
        %1479 = vdwg.mxu0
        %1480 = vmatpush.bf16.msra.mxu0 %v1231
        %1481 = vmatpush.bf16.msra.mxu0 %v1229
        %1482 = vmatpush.bf16.msra.mxu0 %v1227
        %1483 = vmatpush.bf16.msra.mxu0 %v1225
        %1484 = vmatpush.bf16.msra.mxu0 %v1223
        %1485 = vmatpush.bf16.msra.mxu0 %v1221
        %1486 = vmatpush.bf16.msra.mxu0 %v1219
        %1487 = vmatpush.bf16.msra.mxu0 %v1217
        %1488 = vmatmul.bf16.gmra.mxu0 %v886
        %v1489 = vpop.f32.mrf.mxu0
        %v1490 = vadd.f32 %v1477, %v1489
        %v1491 = vpop.f32.mrf.mxu0
        %1492 = vdwg.mxu0
        %1493 = vmatpush.bf16.msra.mxu0 %v1247
        %1494 = vmatpush.bf16.msra.mxu0 %v1245
        %1495 = vmatpush.bf16.msra.mxu0 %v1243
        %1496 = vmatpush.bf16.msra.mxu0 %v1241
        %1497 = vmatpush.bf16.msra.mxu0 %v1239
        %1498 = vmatpush.bf16.msra.mxu0 %v1237
        %1499 = vmatpush.bf16.msra.mxu0 %v1235
        %1500 = vmatpush.bf16.msra.mxu0 %v1233
        %1501 = vmatmul.bf16.gmra.mxu0 %v887
        %v1502 = vpop.f32.mrf.mxu0
        %v1503 = vadd.f32 %v1490, %v1502
        %v1504 = vpop.f32.mrf.mxu0
        %1505 = vdwg.mxu0
        %1506 = vmatpush.bf16.msra.mxu0 %v1263
        %1507 = vmatpush.bf16.msra.mxu0 %v1261
        %1508 = vmatpush.bf16.msra.mxu0 %v1259
        %1509 = vmatpush.bf16.msra.mxu0 %v1257
        %1510 = vmatpush.bf16.msra.mxu0 %v1255
        %1511 = vmatpush.bf16.msra.mxu0 %v1253
        %1512 = vmatpush.bf16.msra.mxu0 %v1251
        %1513 = vmatpush.bf16.msra.mxu0 %v1249
        %1514 = vmatmul.bf16.gmra.mxu0 %v888
        %v1515 = vpop.f32.mrf.mxu0
        %v1516 = vadd.f32 %v1503, %v1515
        %v1517 = vpop.f32.mrf.mxu0
        %1518 = vdwg.mxu0
        %1519 = vmatpush.bf16.msra.mxu0 %v1279
        %1520 = vmatpush.bf16.msra.mxu0 %v1277
        %1521 = vmatpush.bf16.msra.mxu0 %v1275
        %1522 = vmatpush.bf16.msra.mxu0 %v1273
        %1523 = vmatpush.bf16.msra.mxu0 %v1271
        %1524 = vmatpush.bf16.msra.mxu0 %v1269
        %1525 = vmatpush.bf16.msra.mxu0 %v1267
        %1526 = vmatpush.bf16.msra.mxu0 %v1265
        %1527 = vmatmul.bf16.gmra.mxu0 %v889
        %v1528 = vpop.f32.mrf.mxu0
        %v1529 = vadd.f32 %v1516, %v1528
        %v1530 = vpop.f32.mrf.mxu0
        %1531 = vdwg.mxu0
        %p1532 = scmp.eq.s32.totalorder %s23, 0
        // Predicated region
        $region79: #{resnet_forward.25} parent=73 // pred_check
          %p1533 = pneg %p1532
        $region80: #{resnet_forward.25} parent=73 // pred_check_branch
          %1535 = sbr.rel (%p1533) target = $region82
        $region81: #{resnet_forward.25} parent=73 // pred_region
          %v1538 = vrot.slane %v1529, 6
          %vm1539 = vcmask 1041408
          %v1540 = vsel %vm1539, %v1451, %v1538
          %1542 = vst [vmem:[%s783] sm:$0xf] %v1540
        $region82: #{resnet_forward.25} parent=73 // pred_fallthru
          _
        %p1543 = scmp.gt.s32.totalorder %s23, 0
        %p1544 = scmp.lt.s32.totalorder %s23, 5
        %p1545 = pnand %p1543, %p1544
        %p1546 = pneg %p1545
        // Predicated region
        $region83: #{resnet_forward.25} parent=73 // pred_check
          _
        $region84: #{resnet_forward.25} parent=73 // pred_check_branch
          %1548 = sbr.rel (%p1545) target = $region86
        $region85: #{resnet_forward.25} parent=73 // pred_region
          %v1549 = vld [vmem:[%s783] sm:$0xf]
          %v1552 = vrot.slane %v1529, 6
          %vm1553 = vcmask 1041408
          %v1554 = vsel %vm1553, %v1451, %v1552
          %v1556 = vadd.f32 %v1549, %v1554
          %1557 = vst [vmem:[%s783] sm:$0xf] %v1556
        $region86: #{resnet_forward.25} parent=73 // pred_fallthru
          _
        %p1558 = scmp.eq.s32.totalorder %s23, 5
        // Predicated region
        $region87: #{resnet_forward.25} parent=73 // pred_check
          %p1559 = pneg %p1558
        $region88: #{resnet_forward.25} parent=73 // pred_check_branch
          %1561 = sbr.rel (%p1559) target = $region90
        $region89: #{resnet_forward.25} parent=73 // pred_region
          %v1562 = vld [vmem:[%s783] sm:$0xf]
          %v1565 = vrot.slane %v1529, 6
          %vm1566 = vcmask 1041408
          %v1567 = vsel %vm1566, %v1451, %v1565
          %v1569 = vadd.f32 %v1562, %v1567
          %v1570 = vld [vmem:[%s758] sm:$0x3]
          %v1572 = vperm.slane %v1570, 0
          %v1573 = vperm.slane %v1570, 1
          %v1574 = vrot.slane %v1573, 6
          %v1575 = vsel %vm1566, %v1572, %v1574
          %v1577 = vmul.f32 %v1569, %v1575
          %v1578 = vld [vmem:[%s763] sm:$0x3]
          %v1580 = vperm.slane %v1578, 0
          %v1581 = vperm.slane %v1578, 1
          %v1582 = vrot.slane %v1581, 6
          %v1583 = vsel %vm1566, %v1580, %v1582
          %v1585 = vadd.f32 %v1577, %v1583
          %v1586 = vld [vmem:[%s773] sm:$0xf]
          %v1587 = vadd.f32 %v1585, %v1586
          %v1588 = vmax.f32 %v1587, 0.0
          %1589 = vst [vmem:[%s783] sm:$0xf] %v1588
        $region90: #{resnet_forward.25} parent=73 // pred_fallthru
          _
        %s1590 = smul.u32 2, %s22
        %p1591 = scmp.lt.s32.totalorder %s21, 0
        %s1592 = scalar_select %p1591, %s21, 0
        %p1593 = scmp.lt.s32.totalorder %s1590, 3
        %s1594 = scalar_select %p1593, %s1590, 3
        %s1595 = smul.addr %s1592, 4
        %s1596 = sadd.s32 %s1594, %s1595
        %s1597 = smul.addr %s1596, 2
        %s1598 = scalar_lea.vmem %s5, %s1597
        // Predicated region
        $region91: #{resnet_forward.25} parent=73 // pred_check
          %p1599 = pneg %p191
        $region92: #{resnet_forward.25} parent=73 // pred_check_branch
          %1601 = sbr.rel (%p1599) target = $region94
        $region93: #{resnet_forward.25} parent=73 // pred_region
          %s1602 = smul.u32 2, %s22
        $region94: #{resnet_forward.25} parent=73 // pred_fallthru
          _
      $region74: #{resnet_forward.25} parent=5 // pred_fallthru
        _
      %p1603 = scmp.le.s32.totalorder 2, %s11
      // Predicated region
      $region95: #{resnet_forward.25} parent=5 // pred_check
        %p1604 = pneg %p1603
      $region96: #{resnet_forward.25} parent=5 // pred_check_branch
        %1606 = sbr.rel (%p1604) target = $region98
      $region97: #{resnet_forward.25} parent=5 // pred_region
        %s1607 = ssub.s32 %s11, 2
        // Predicated region
        $region99: #{resnet_forward.25} parent=97 // pred_check
          %p1608 = pneg %p197
        $region100: #{resnet_forward.25} parent=97 // pred_check_branch
          %1610 = sbr.rel (%p1608) target = $region102
        $region101: #{resnet_forward.25} parent=97 // pred_region
          %s1611 = smul.u32 2, %s25
          %p1612 = scmp.lt.s32.totalorder %s24, 0
          %s1613 = scalar_select %p1612, %s24, 0
          %p1614 = scmp.lt.s32.totalorder %s1611, 3
          %s1615 = scalar_select %p1614, %s1611, 3
          %s1616 = smul.addr %s1613, 4
          %s1617 = sadd.s32 %s1615, %s1616
          %s1618 = smul.addr %s1617, 2
          %s1619 = scalar_lea.vmem %s5, %s1618
        $region102: #{resnet_forward.25} parent=97 // pred_fallthru
          _
      $region98: #{resnet_forward.25} parent=5 // pred_fallthru
        _
    $region6: #{resnet_forward.25} parent=1 // loop_footer
      %s15 = sadd.s32 1, %s11
    $region7: #{resnet_forward.25} parent=1 // loop_footer_branch
      %10 = sbr.rel target = $region3
    $region8: #{resnet_forward.25} parent=1 // loop_exit
      _

</llo_original>
